<compile_context>
chip_gen: v7x
topology: tpu7x:2x2x1
jax: 0.10.0
libtpu: 0.0.40
codegen_flags: <defaults>
</compile_context>

<pallas_src>
import math
from functools import partial

import jax
import jax.numpy as jnp
from jax.experimental import pallas as pl
from jax.experimental.pallas import tpu as pltpu

EPS_EMB = 1e-12   # BERT embedding / MLM-head LayerNorm eps
EPS_ENC = 1e-5    # nn.TransformerEncoderLayer default layer_norm_eps
_SQRT1_2 = 0.7071067811865476


def _vmem_limit_bytes():
    # Generation-aware budget: ~3/4 of physical VMEM, capped at 100 MiB.
    #   v7x (64 MiB/TC)  -> ~48 MiB   (leaves room for Mosaic double-buffers)
    #   v5e/v6e (128 MiB) -> ~96 MiB
    cap = 128 * 1024 * 1024
    try:
        cap = int(getattr(pltpu.get_tpu_info(), "vmem_capacity_bytes", cap))
    except Exception:
        pass
    return max(32 * 1024 * 1024, min(cap * 3 // 4, 100 * 1024 * 1024))


def _layernorm(x, g, b, eps):
    mu = jnp.mean(x, axis=-1, keepdims=True)
    var = jnp.mean((x - mu) ** 2, axis=-1, keepdims=True)
    return (x - mu) * jax.lax.rsqrt(var + eps) * g + b


def _erf(x):
    # Abramowitz & Stegun 7.1.26 rational approximation, |err| <= 1.5e-7.
    a1, a2, a3, a4, a5 = 0.254829592, -0.284496736, 1.421413741, -1.453152027, 1.061405429
    p = 0.3275911
    z = jnp.abs(x)
    t = 1.0 / (1.0 + p * z)
    poly = ((((a5 * t + a4) * t + a3) * t + a2) * t + a1) * t
    y = 1.0 - poly * jnp.exp(-z * z)
    return jnp.where(x < 0.0, -y, y)


def _gelu(x):
    # erf-exact GELU (matches PyTorch F.gelu default).
    return 0.5 * x * (1.0 + _erf(x * _SQRT1_2))


def _pick_tile(n, candidates):
    for t in candidates:
        if t <= n and n % t == 0:
            return t
    return n


def _pick_batch_tile(B, S, target_rows=512, min_rows=256):
    # Flatten as many sequences as possible into one grid step (MXU row
    # utilization + per-step overhead), but expose >=2 grid steps for v7x
    # megacore when each step would still have >= min_rows rows.
    bt = max(1, min(B, max(1, target_rows // max(S, 1))))
    while B % bt:
        bt -= 1
    while B // bt < 2 and bt > 1 and (bt // 2) * S >= min_rows and B % (bt // 2) == 0:
        bt //= 2
    return bt


def _full_spec(a):
    nd = a.ndim
    return pl.BlockSpec(a.shape, lambda *_, _nd=nd: (0,) * _nd)


# -------- embedding: resident word table + one-hot MXU gather -> LayerNorm ----
def emb_kernel(ids_ref, word_ref, pos_ref, g_ref, b_ref, o_ref, *, vocab):
    bt, S, D = o_ref.shape
    ids = ids_ref[...]                                    # (bt*S, 1) int32
    rows = ids.shape[0]
    # one-hot gather on the MXU: exact (one bf16 product per row), no tiny DMAs
    iota = jax.lax.broadcasted_iota(jnp.int32, (rows, vocab), 1)
    onehot = (iota == ids).astype(jnp.bfloat16)
    gathered = jnp.dot(onehot, word_ref[...],
                       preferred_element_type=jnp.float32)        # (rows, D)
    x = gathered.reshape(bt, S, D) + pos_ref[...]                 # pos shared over batch
    o_ref[...] = _layernorm(x, g_ref[...], b_ref[...], EPS_EMB).astype(o_ref.dtype)


def bert_embedding(token_ids, ep, vmem_limit):
    B, S = token_ids.shape
    V, D = ep["word"].shape
    b_tile = _pick_batch_tile(B, S)
    ids = token_ids.reshape(B * S, 1).astype(jnp.int32)
    pos = ep["pos"][:S]
    return pl.pallas_call(
        partial(emb_kernel, vocab=V),
        out_shape=jax.ShapeDtypeStruct((B, S, D), jnp.bfloat16),
        grid=(B // b_tile,),
        in_specs=[
            pl.BlockSpec((b_tile * S, 1), lambda i: (i, 0)),   # token ids
            _full_spec(ep["word"]),                            # bf16 word table, fetched once
            _full_spec(pos), _full_spec(ep["ln_g"]), _full_spec(ep["ln_b"]),
        ],
        out_specs=pl.BlockSpec((b_tile, S, D), lambda i: (i, 0, 0)),
        compiler_params=pltpu.CompilerParams(
            dimension_semantics=("parallel",),
            vmem_limit_bytes=vmem_limit),
    )(ids, ep["word"], pos, ep["ln_g"], ep["ln_b"])


# -------- one nn.TransformerEncoderLayer (post-norm, erf-GELU) ----------------
def encoder_layer_kernel(x_ref, wq_ref, wk_ref, wv_ref, bq_ref, bk_ref, bv_ref,
                         wo_ref, bo_ref, ln1g_ref, ln1b_ref,
                         w1_ref, b1_ref, w2_ref, b2_ref, ln2g_ref, ln2b_ref,
                         o_ref, *, heads, head_dim):
    bt, S, D = x_ref.shape
    R = bt * S
    scale = 1.0 / math.sqrt(head_dim)

    x = x_ref[...].astype(jnp.float32).reshape(R, D)      # residual stream f32
    xb = x.astype(jnp.bfloat16)

    # ---- multi-head self-attention: per-head weight slabs via leading-dim
    #      indexing only (no lane slicing / stack / concatenate / transposes)
    attn = jnp.zeros((R, D), jnp.float32)
    for h in range(heads):
        q = (jnp.dot(xb, wq_ref[h], preferred_element_type=jnp.float32)
             + bq_ref[h]) * scale                          # 1/sqrt(hd) folded into q
        k = jnp.dot(xb, wk_ref[h], preferred_element_type=jnp.float32) + bk_ref[h]
        v = jnp.dot(xb, wv_ref[h], preferred_element_type=jnp.float32) + bv_ref[h]
        q3 = q.reshape(bt, S, head_dim).astype(jnp.bfloat16)
        k3 = k.reshape(bt, S, head_dim).astype(jnp.bfloat16)
        v3 = v.reshape(bt, S, head_dim).astype(jnp.bfloat16)
        s = jnp.einsum("bqe,bke->bqk", q3, k3,
                       preferred_element_type=jnp.float32)         # (bt,S,S)
        p = jax.nn.softmax(s, axis=-1)
        ctx = jnp.einsum("bqk,bke->bqe", p.astype(jnp.bfloat16), v3,
                         preferred_element_type=jnp.float32)       # (bt,S,hd)
        # output projection accumulated per head: wo pre-reshaped to (H, hd, D)
        attn = attn + jnp.dot(ctx.reshape(R, head_dim).astype(jnp.bfloat16),
                              wo_ref[h], preferred_element_type=jnp.float32)
    attn = attn + bo_ref[...]
    x1 = _layernorm(x + attn, ln1g_ref[...], ln1b_ref[...], EPS_ENC)

    # ---- FFN: full W1/W2 resident, one pass over all rows in the tile
    h1 = _gelu(jnp.dot(x1.astype(jnp.bfloat16), w1_ref[...],
                       preferred_element_type=jnp.float32) + b1_ref[...])
    ff = jnp.dot(h1.astype(jnp.bfloat16), w2_ref[...],
                 preferred_element_type=jnp.float32) + b2_ref[...]
    x2 = _layernorm(x1 + ff, ln2g_ref[...], ln2b_ref[...], EPS_ENC)
    o_ref[...] = x2.reshape(bt, S, D).astype(o_ref.dtype)


def bert_encoder_layer(x, lp, heads, vmem_limit):
    B, S, D = x.shape
    H = heads
    hd = D // H
    b_tile = _pick_batch_tile(B, S)

    # XLA-side (zero kernel cost) per-head weight re-layout.
    wqkv = lp["wqkv"]                                      # (D, 3D) bf16
    wq = wqkv[:, :D].reshape(D, H, hd).transpose(1, 0, 2)          # (H, D, hd)
    wk = wqkv[:, D:2 * D].reshape(D, H, hd).transpose(1, 0, 2)
    wv = wqkv[:, 2 * D:].reshape(D, H, hd).transpose(1, 0, 2)
    bqkv = lp["bqkv"]                                      # (1, 3D) f32
    bq = bqkv[:, :D].reshape(H, 1, hd)
    bk = bqkv[:, D:2 * D].reshape(H, 1, hd)
    bv = bqkv[:, 2 * D:].reshape(H, 1, hd)
    wo = lp["wo"].reshape(H, hd, D)                        # row blocks per head

    args = (x, wq, wk, wv, bq, bk, bv, wo, lp["bo"], lp["ln1_g"], lp["ln1_b"],
            lp["w1"], lp["b1"], lp["w2"], lp["b2"], lp["ln2_g"], lp["ln2_b"])

    in_specs = [pl.BlockSpec((b_tile, S, D), lambda i: (i, 0, 0))]
    in_specs += [_full_spec(a) for a in args[1:]]          # weights: constant block
                                                           # index -> fetched once

    return pl.pallas_call(
        partial(encoder_layer_kernel, heads=H, head_dim=hd),
        out_shape=jax.ShapeDtypeStruct((B, S, D), jnp.bfloat16),
        grid=(B // b_tile,),
        in_specs=in_specs,
        out_specs=pl.BlockSpec((b_tile, S, D), lambda i: (i, 0, 0)),
        compiler_params=pltpu.CompilerParams(
            dimension_semantics=("parallel",),
            vmem_limit_bytes=vmem_limit),
    )(*args)


# -------- MLM head: transform kernel + vocab-outer logits matmul --------------
def mlm_transform_kernel(x_ref, w1_ref, b1_ref, g_ref, be_ref, h_ref):
    xb = x_ref[...].astype(jnp.bfloat16)
    h = jnp.dot(xb, w1_ref[...], preferred_element_type=jnp.float32) + b1_ref[...]
    h_ref[...] = _layernorm(_gelu(h), g_ref[...], be_ref[...], EPS_EMB).astype(h_ref.dtype)


def mlm_logits_kernel(h_ref, w2_ref, b2_ref, o_ref):
    o_ref[...] = (jnp.dot(h_ref[...], w2_ref[...],
                          preferred_element_type=jnp.float32)
                  + b2_ref[...]).astype(o_ref.dtype)


def bert_mlm_head(x, hp, vmem_limit):
    B, S, D = x.shape
    V = hp["w2"].shape[1]
    rows = B * S
    r_tile = _pick_tile(rows, (512, 256, 128, 64, 32, 16, 8))
    v_tile = _pick_tile(V, (1024, 512, 256, 128))
    x2 = x.reshape(rows, D)

    # 1) row-tiled transform (W1 fetched once; result cached in HBM as bf16)
    h = pl.pallas_call(
        mlm_transform_kernel,
        out_shape=jax.ShapeDtypeStruct((rows, D), jnp.bfloat16),
        grid=(rows // r_tile,),
        in_specs=[pl.BlockSpec((r_tile, D), lambda r: (r, 0)),
                  _full_spec(hp["w1"]), _full_spec(hp["b1"]),
                  _full_spec(hp["ln_g"]), _full_spec(hp["ln_b"])],
        out_specs=pl.BlockSpec((r_tile, D), lambda r: (r, 0)),
        compiler_params=pltpu.CompilerParams(
            dimension_semantics=("parallel",),
            vmem_limit_bytes=vmem_limit),
    )(x2, hp["w1"], hp["b1"], hp["ln_g"], hp["ln_b"])

    # 2) logits matmul, vocab axis OUTER -> each (D, v_tile) W2 slab streamed
    #    from HBM exactly once; bf16 logits halve the output store traffic.
    logits = pl.pallas_call(
        mlm_logits_kernel,
        out_shape=jax.ShapeDtypeStruct((rows, V), jnp.bfloat16),
        grid=(V // v_tile, rows // r_tile),
        in_specs=[pl.BlockSpec((r_tile, D), lambda v, r: (r, 0)),
                  pl.BlockSpec((D, v_tile), lambda v, r: (0, v)),
                  pl.BlockSpec((1, v_tile), lambda v, r: (0, v))],
        out_specs=pl.BlockSpec((r_tile, v_tile), lambda v, r: (r, v)),
        compiler_params=pltpu.CompilerParams(
            dimension_semantics=("parallel", "parallel"),
            vmem_limit_bytes=vmem_limit),
    )(h, hp["w2"], hp["b2"])
    return logits.reshape(B, S, V)


# -------- full BERTMLM forward ------------------------------------------------
def bert_mlm_forward(token_ids, params, heads):
    vmem = _vmem_limit_bytes()
    x = bert_embedding(token_ids, params["emb"], vmem)    # BERTEmbedding
    for lp in params["layers"]:                           # BERTEncoder
        x = bert_encoder_layer(x, lp, heads, vmem)
    return bert_mlm_head(x, params["head"], vmem)         # BERTMLMHead


# -------- deterministic synthetic parameter init ------------------------------
def init_params(key, vocab, max_pos, D, heads, hidden, layers):
    keys = iter(jax.random.split(key, 16 * layers + 16))
    nrm = lambda shape, s=0.02: (s * jax.random.normal(next(keys), shape)).astype(jnp.float32)
    bfw = lambda shape: nrm(shape).astype(jnp.bfloat16)     # matmul weights -> bf16
    ones = lambda shape: jnp.ones(shape, jnp.float32)
    zeros = lambda shape: jnp.zeros(shape, jnp.float32)

    emb = dict(word=bfw((vocab, D)), pos=nrm((max_pos, D)),
               ln_g=ones((1, D)), ln_b=zeros((1, D)))
    layer_params = []
    for _ in range(layers):
        layer_params.append(dict(
            wqkv=bfw((D, 3 * D)), bqkv=nrm((1, 3 * D)),
            wo=bfw((D, D)), bo=nrm((1, D)),
            ln1_g=ones((1, D)), ln1_b=zeros((1, D)),
            w1=bfw((D, hidden)), b1=nrm((1, hidden)),
            w2=bfw((hidden, D)), b2=nrm((1, D)),
            ln2_g=ones((1, D)), ln2_b=zeros((1, D))))
    head = dict(w1=bfw((D, D)), b1=nrm((1, D)),
                ln_g=ones((1, D)), ln_b=zeros((1, D)),
                w2=bfw((D, vocab)), b2=nrm((1, vocab)))
    return dict(emb=emb, layers=layer_params, head=head)


# -------- pure-JAX (f32) reference for a numeric sanity check -----------------
def reference_forward(token_ids, params, heads):
    ep, hp = params["emb"], params["head"]
    B, S = token_ids.shape
    D = ep["word"].shape[1]
    hd = D // heads
    f32 = lambda a: a.astype(jnp.float32)
    x = f32(ep["word"])[token_ids] + ep["pos"][:S][None]
    x = _layernorm(x, ep["ln_g"], ep["ln_b"], EPS_EMB)
    for lp in params["layers"]:
        qkv = x @ f32(lp["wqkv"]) + lp["bqkv"]
        q, k, v = jnp.split(qkv, 3, axis=-1)
        q = q.reshape(B, S, heads, hd).transpose(0, 2, 1, 3)
        k = k.reshape(B, S, heads, hd).transpose(0, 2, 1, 3)
        v = v.reshape(B, S, heads, hd).transpose(0, 2, 1, 3)
        s = jnp.einsum("bhqd,bhkd->bhqk", q, k) / math.sqrt(hd)
        p = jax.nn.softmax(s, axis=-1)
        ctx = jnp.einsum("bhqk,bhkd->bhqd", p, v).transpose(0, 2, 1, 3).reshape(B, S, D)
        attn = ctx @ f32(lp["wo"]) + lp["bo"]
        x = _layernorm(x + attn, lp["ln1_g"], lp["ln1_b"], EPS_ENC)
        h = jax.nn.gelu(x @ f32(lp["w1"]) + lp["b1"], approximate=False)
        ff = h @ f32(lp["w2"]) + lp["b2"]
        x = _layernorm(x + ff, lp["ln2_g"], lp["ln2_b"], EPS_ENC)
    h = jax.nn.gelu(x @ f32(hp["w1"]) + hp["b1"], approximate=False)
    h = _layernorm(h, hp["ln_g"], hp["ln_b"], EPS_EMB)
    return h @ f32(hp["w2"]) + hp["b2"]


if __name__ == "__main__":
    B, S = 2, 16
    VOCAB, MAX_POS, D, HEADS, HIDDEN, LAYERS = 2048, 32, 128, 2, 1024, 2

    key = jax.random.PRNGKey(0)
    pkey, ikey = jax.random.split(key)
    params = init_params(pkey, VOCAB, MAX_POS, D, HEADS, HIDDEN, LAYERS)
    token_ids = jax.random.randint(ikey, (B, S), 0, VOCAB, dtype=jnp.int32)

    fwd = jax.jit(partial(bert_mlm_forward, heads=HEADS))
    logits = fwd(token_ids, params)
    jax.block_until_ready(logits)

    assert logits.shape == (B, S, VOCAB), logits.shape
    logits_f32 = logits.astype(jnp.float32)
    assert bool(jnp.all(jnp.isfinite(logits_f32)))

    ref = reference_forward(token_ids, params, HEADS)
    err = float(jnp.max(jnp.abs(logits_f32 - ref)))
    # bf16 weights + bf16 inter-layer activations + bf16 logits vs f32 reference
    assert err < 7.5e-2, f"max abs error vs reference: {err}"
    print("KERNEL_OK")
</pallas_src>

<mosaic_0001>
module attributes {stable_mosaic.version = 11 : i64} {
  func.func @emb_kernel(%arg0: i32, %arg1: memref<32x1xi32, #tpu.memory_space<vmem>>, %arg2: memref<2048x128xbf16, #tpu.memory_space<vmem>>, %arg3: memref<16x128xf32, #tpu.memory_space<vmem>>, %arg4: memref<1x128xf32, #tpu.memory_space<vmem>>, %arg5: memref<1x128xf32, #tpu.memory_space<vmem>>, %arg6: memref<2x16x128xbf16, #tpu.memory_space<vmem>>) attributes {dimension_semantics = [#tpu.dimension_semantics<parallel>], iteration_bounds = array<i64: 1>, scalar_prefetch = 0 : i64, scratch_operands = 0 : i64, tpu.core_type = #tpu.core_type<tc>, window_params = [{transform_indices = @transform_0, window_bounds = array<i64: 32, 1>}, {pipeline_mode = #tpu.pipeline_mode<synchronous>, transform_indices = @transform_1, window_bounds = array<i64: 2048, 128>}, {pipeline_mode = #tpu.pipeline_mode<synchronous>, transform_indices = @transform_2, window_bounds = array<i64: 16, 128>}, {pipeline_mode = #tpu.pipeline_mode<synchronous>, transform_indices = @transform_3, window_bounds = array<i64: 1, 128>}, {pipeline_mode = #tpu.pipeline_mode<synchronous>, transform_indices = @transform_4, window_bounds = array<i64: 1, 128>}, {transform_indices = @transform_5, window_bounds = array<i64: 2, 16, 128>}]} {
    %c0 = arith.constant 0 : index
    %c0_0 = arith.constant 0 : index
    %0 = vector.load %arg1[%c0, %c0_0] : memref<32x1xi32, #tpu.memory_space<vmem>>, vector<32x1xi32>
    %1 = tpu.iota {dimensions = array<i32: 1>} : vector<32x2048xi32>
    %2 = vector.broadcast %0 : vector<32x1xi32> to vector<32x2048xi32>
    %3 = arith.cmpi eq, %1, %2 : vector<32x2048xi32>
    %4 = arith.extui %3 : vector<32x2048xi1> to vector<32x2048xi32>
    %5 = arith.sitofp %4 : vector<32x2048xi32> to vector<32x2048xf32>
    %6 = arith.truncf %5 : vector<32x2048xf32> to vector<32x2048xbf16>
    %c0_1 = arith.constant 0 : index
    %c0_2 = arith.constant 0 : index
    %7 = vector.load %arg2[%c0_1, %c0_2] : memref<2048x128xbf16, #tpu.memory_space<vmem>>, vector<2048x128xbf16>
    %cst = arith.constant dense<0.000000e+00> : vector<32x128xf32>
    %8 = tpu.matmul %6, %7, %cst {dimension_numbers = #tpu.dot_dimension_numbers<[1], [0], [0], [1], [0, 0, 1, 1], [], []>} : vector<32x2048xbf16>, vector<2048x128xbf16>, vector<32x128xf32> -> vector<32x128xf32>
    %9 = vector.shape_cast %8 : vector<32x128xf32> to vector<2x16x128xf32>
    %c0_3 = arith.constant 0 : index
    %c0_4 = arith.constant 0 : index
    %10 = vector.load %arg3[%c0_3, %c0_4] : memref<16x128xf32, #tpu.memory_space<vmem>>, vector<16x128xf32>
    %11 = vector.shape_cast %10 : vector<16x128xf32> to vector<1x16x128xf32>
    %12 = vector.broadcast %11 : vector<1x16x128xf32> to vector<2x16x128xf32>
    %13 = arith.addf %9, %12 : vector<2x16x128xf32>
    %c0_5 = arith.constant 0 : index
    %c0_6 = arith.constant 0 : index
    %14 = vector.load %arg4[%c0_5, %c0_6] : memref<1x128xf32, #tpu.memory_space<vmem>>, vector<1x128xf32>
    %c0_7 = arith.constant 0 : index
    %c0_8 = arith.constant 0 : index
    %15 = vector.load %arg5[%c0_7, %c0_8] : memref<1x128xf32, #tpu.memory_space<vmem>>, vector<1x128xf32>
    %cst_9 = arith.constant dense<0.000000e+00> : vector<2x16xf32>
    %16 = vector.multi_reduction <add>, %13, %cst_9 [2] : vector<2x16x128xf32> to vector<2x16xf32>
    %17 = vector.shape_cast %16 : vector<2x16xf32> to vector<2x16x1xf32>
    %cst_10 = arith.constant 1.280000e+02 : f32
    %18 = vector.broadcast %cst_10 : f32 to vector<2x16x1xf32>
    %19 = arith.divf %17, %18 : vector<2x16x1xf32>
    %20 = vector.broadcast %19 : vector<2x16x1xf32> to vector<2x16x128xf32>
    %21 = arith.subf %13, %20 : vector<2x16x128xf32>
    %22 = arith.mulf %21, %21 : vector<2x16x128xf32>
    %cst_11 = arith.constant dense<0.000000e+00> : vector<2x16xf32>
    %23 = vector.multi_reduction <add>, %22, %cst_11 [2] : vector<2x16x128xf32> to vector<2x16xf32>
    %24 = vector.shape_cast %23 : vector<2x16xf32> to vector<2x16x1xf32>
    %cst_12 = arith.constant 1.280000e+02 : f32
    %25 = vector.broadcast %cst_12 : f32 to vector<2x16x1xf32>
    %26 = arith.divf %24, %25 : vector<2x16x1xf32>
    %27 = vector.broadcast %19 : vector<2x16x1xf32> to vector<2x16x128xf32>
    %28 = arith.subf %13, %27 : vector<2x16x128xf32>
    %cst_13 = arith.constant 9.99999996E-13 : f32
    %29 = vector.broadcast %cst_13 : f32 to vector<2x16x1xf32>
    %30 = arith.addf %26, %29 : vector<2x16x1xf32>
    %31 = math.rsqrt %30 : vector<2x16x1xf32>
    %32 = vector.broadcast %31 : vector<2x16x1xf32> to vector<2x16x128xf32>
    %33 = arith.mulf %28, %32 : vector<2x16x128xf32>
    %34 = vector.shape_cast %14 : vector<1x128xf32> to vector<1x1x128xf32>
    %35 = vector.broadcast %34 : vector<1x1x128xf32> to vector<2x16x128xf32>
    %36 = arith.mulf %33, %35 : vector<2x16x128xf32>
    %37 = vector.shape_cast %15 : vector<1x128xf32> to vector<1x1x128xf32>
    %38 = vector.broadcast %37 : vector<1x1x128xf32> to vector<2x16x128xf32>
    %39 = arith.addf %36, %38 : vector<2x16x128xf32>
    %40 = arith.truncf %39 : vector<2x16x128xf32> to vector<2x16x128xbf16>
    %c0_14 = arith.constant 0 : index
    %c0_15 = arith.constant 0 : index
    %c0_16 = arith.constant 0 : index
    %41 = vector.load %arg6[%c0_14, %c0_15, %c0_16] : memref<2x16x128xbf16, #tpu.memory_space<vmem>>, vector<2x16x128xbf16>
    tpu.vector_store %arg6[%c0_14, %c0_15, %c0_16], %40 {strides = array<i32>} : memref<2x16x128xbf16, #tpu.memory_space<vmem>>, vector<2x16x128xbf16>,
    return
  }
  func.func @transform_0(%arg0: i32) -> (i32, i32) {
    %c0_i32 = arith.constant 0 : i32
    %c0_i32_0 = arith.constant 0 : i32
    return %arg0, %c0_i32 : i32, i32
  }
  func.func @transform_1(%arg0: i32) -> (i32, i32) {
    %c0_i32 = arith.constant 0 : i32
    %c0_i32_0 = arith.constant 0 : i32
    %c0_i32_1 = arith.constant 0 : i32
    return %c0_i32, %c0_i32_0 : i32, i32
  }
  func.func @transform_2(%arg0: i32) -> (i32, i32) {
    %c0_i32 = arith.constant 0 : i32
    %c0_i32_0 = arith.constant 0 : i32
    %c0_i32_1 = arith.constant 0 : i32
    return %c0_i32, %c0_i32_0 : i32, i32
  }
  func.func @transform_3(%arg0: i32) -> (i32, i32) {
    %c0_i32 = arith.constant 0 : i32
    %c0_i32_0 = arith.constant 0 : i32
    %c0_i32_1 = arith.constant 0 : i32
    return %c0_i32, %c0_i32_0 : i32, i32
  }
  func.func @transform_4(%arg0: i32) -> (i32, i32) {
    %c0_i32 = arith.constant 0 : i32
    %c0_i32_0 = arith.constant 0 : i32
    %c0_i32_1 = arith.constant 0 : i32
    return %c0_i32, %c0_i32_0 : i32, i32
  }
  func.func @transform_5(%arg0: i32) -> (i32, i32, i32) {
    %c0_i32 = arith.constant 0 : i32
    %c0_i32_0 = arith.constant 0 : i32
    %c0_i32_1 = arith.constant 0 : i32
    return %arg0, %c0_i32, %c0_i32_0 : i32, i32, i32
  }
}

module attributes {stable_mosaic.version = 11 : i64} {
  func.func @mlm_logits_kernel(%arg0: i32, %arg1: i32, %arg2: memref<32x128xbf16, #tpu.memory_space<vmem>>, %arg3: memref<128x1024xbf16, #tpu.memory_space<vmem>>, %arg4: memref<1x1024xf32, #tpu.memory_space<vmem>>, %arg5: memref<32x1024xbf16, #tpu.memory_space<vmem>>) attributes {dimension_semantics = [#tpu.dimension_semantics<parallel>, #tpu.dimension_semantics<parallel>], iteration_bounds = array<i64: 2, 1>, scalar_prefetch = 0 : i64, scratch_operands = 0 : i64, tpu.core_type = #tpu.core_type<tc>, window_params = [{transform_indices = @transform_0, window_bounds = array<i64: 32, 128>}, {transform_indices = @transform_1, window_bounds = array<i64: 128, 1024>}, {transform_indices = @transform_2, window_bounds = array<i64: 1, 1024>}, {transform_indices = @transform_3, window_bounds = array<i64: 32, 1024>}]} {
    %c0 = arith.constant 0 : index
    %c0_0 = arith.constant 0 : index
    %0 = vector.load %arg2[%c0, %c0_0] : memref<32x128xbf16, #tpu.memory_space<vmem>>, vector<32x128xbf16>
    %c0_1 = arith.constant 0 : index
    %c0_2 = arith.constant 0 : index
    %1 = vector.load %arg3[%c0_1, %c0_2] : memref<128x1024xbf16, #tpu.memory_space<vmem>>, vector<128x1024xbf16>
    %cst = arith.constant dense<0.000000e+00> : vector<32x1024xf32>
    %2 = tpu.matmul %0, %1, %cst {dimension_numbers = #tpu.dot_dimension_numbers<[1], [0], [0], [1], [0, 0, 1, 1], [], []>} : vector<32x128xbf16>, vector<128x1024xbf16>, vector<32x1024xf32> -> vector<32x1024xf32>
    %c0_3 = arith.constant 0 : index
    %c0_4 = arith.constant 0 : index
    %3 = vector.load %arg4[%c0_3, %c0_4] : memref<1x1024xf32, #tpu.memory_space<vmem>>, vector<1x1024xf32>
    %4 = vector.broadcast %3 : vector<1x1024xf32> to vector<32x1024xf32>
    %5 = arith.addf %2, %4 : vector<32x1024xf32>
    %6 = arith.truncf %5 : vector<32x1024xf32> to vector<32x1024xbf16>
    %c0_5 = arith.constant 0 : index
    %c0_6 = arith.constant 0 : index
    %7 = vector.load %arg5[%c0_5, %c0_6] : memref<32x1024xbf16, #tpu.memory_space<vmem>>, vector<32x1024xbf16>
    tpu.vector_store %arg5[%c0_5, %c0_6], %6 {strides = array<i32>} : memref<32x1024xbf16, #tpu.memory_space<vmem>>, vector<32x1024xbf16>,
    return
  }
  func.func @transform_0(%arg0: i32, %arg1: i32) -> (i32, i32) {
    %c0_i32 = arith.constant 0 : i32
    %c0_i32_0 = arith.constant 0 : i32
    return %arg1, %c0_i32 : i32, i32
  }
  func.func @transform_1(%arg0: i32, %arg1: i32) -> (i32, i32) {
    %c0_i32 = arith.constant 0 : i32
    %c0_i32_0 = arith.constant 0 : i32
    return %c0_i32, %arg0 : i32, i32
  }
  func.func @transform_2(%arg0: i32, %arg1: i32) -> (i32, i32) {
    %c0_i32 = arith.constant 0 : i32
    %c0_i32_0 = arith.constant 0 : i32
    return %c0_i32, %arg0 : i32, i32
  }
  func.func @transform_3(%arg0: i32, %arg1: i32) -> (i32, i32) {
    %c0_i32 = arith.constant 0 : i32
    return %arg1, %arg0 : i32, i32
  }
}

module attributes {stable_mosaic.version = 11 : i64} {
  func.func @mlm_transform_kernel(%arg0: i32, %arg1: memref<32x128xbf16, #tpu.memory_space<vmem>>, %arg2: memref<128x128xbf16, #tpu.memory_space<vmem>>, %arg3: memref<1x128xf32, #tpu.memory_space<vmem>>, %arg4: memref<1x128xf32, #tpu.memory_space<vmem>>, %arg5: memref<1x128xf32, #tpu.memory_space<vmem>>, %arg6: memref<32x128xbf16, #tpu.memory_space<vmem>>) attributes {dimension_semantics = [#tpu.dimension_semantics<parallel>], iteration_bounds = array<i64: 1>, scalar_prefetch = 0 : i64, scratch_operands = 0 : i64, tpu.core_type = #tpu.core_type<tc>, window_params = [{transform_indices = @transform_0, window_bounds = array<i64: 32, 128>}, {pipeline_mode = #tpu.pipeline_mode<synchronous>, transform_indices = @transform_1, window_bounds = array<i64: 128, 128>}, {pipeline_mode = #tpu.pipeline_mode<synchronous>, transform_indices = @transform_2, window_bounds = array<i64: 1, 128>}, {pipeline_mode = #tpu.pipeline_mode<synchronous>, transform_indices = @transform_3, window_bounds = array<i64: 1, 128>}, {pipeline_mode = #tpu.pipeline_mode<synchronous>, transform_indices = @transform_4, window_bounds = array<i64: 1, 128>}, {transform_indices = @transform_5, window_bounds = array<i64: 32, 128>}]} {
    %c0 = arith.constant 0 : index
    %c0_0 = arith.constant 0 : index
    %0 = vector.load %arg1[%c0, %c0_0] : memref<32x128xbf16, #tpu.memory_space<vmem>>, vector<32x128xbf16>
    %c0_1 = arith.constant 0 : index
    %c0_2 = arith.constant 0 : index
    %1 = vector.load %arg2[%c0_1, %c0_2] : memref<128x128xbf16, #tpu.memory_space<vmem>>, vector<128x128xbf16>
    %cst = arith.constant dense<0.000000e+00> : vector<32x128xf32>
    %2 = tpu.matmul %0, %1, %cst {dimension_numbers = #tpu.dot_dimension_numbers<[1], [0], [0], [1], [0, 0, 1, 1], [], []>} : vector<32x128xbf16>, vector<128x128xbf16>, vector<32x128xf32> -> vector<32x128xf32>
    %c0_3 = arith.constant 0 : index
    %c0_4 = arith.constant 0 : index
    %3 = vector.load %arg3[%c0_3, %c0_4] : memref<1x128xf32, #tpu.memory_space<vmem>>, vector<1x128xf32>
    %4 = vector.broadcast %3 : vector<1x128xf32> to vector<32x128xf32>
    %5 = arith.addf %2, %4 : vector<32x128xf32>
    %cst_5 = arith.constant 5.000000e-01 : f32
    %6 = vector.broadcast %cst_5 : f32 to vector<32x128xf32>
    %7 = arith.mulf %6, %5 : vector<32x128xf32>
    %cst_6 = arith.constant 0.707106769 : f32
    %8 = vector.broadcast %cst_6 : f32 to vector<32x128xf32>
    %9 = arith.mulf %5, %8 : vector<32x128xf32>
    %10 = math.absf %9 : vector<32x128xf32>
    %cst_7 = arith.constant 0.327591091 : f32
    %11 = vector.broadcast %cst_7 : f32 to vector<32x128xf32>
    %12 = arith.mulf %11, %10 : vector<32x128xf32>
    %cst_8 = arith.constant 1.000000e+00 : f32
    %13 = vector.broadcast %cst_8 : f32 to vector<32x128xf32>
    %14 = arith.addf %13, %12 : vector<32x128xf32>
    %cst_9 = arith.constant 1.000000e+00 : f32
    %15 = vector.broadcast %cst_9 : f32 to vector<32x128xf32>
    %16 = arith.divf %15, %14 : vector<32x128xf32>
    %cst_10 = arith.constant 1.06140542 : f32
    %17 = vector.broadcast %cst_10 : f32 to vector<32x128xf32>
    %18 = arith.mulf %17, %16 : vector<32x128xf32>
    %cst_11 = arith.constant -1.45315206 : f32
    %19 = vector.broadcast %cst_11 : f32 to vector<32x128xf32>
    %20 = arith.addf %18, %19 : vector<32x128xf32>
    %21 = arith.mulf %20, %16 : vector<32x128xf32>
    %cst_12 = arith.constant 1.42141378 : f32
    %22 = vector.broadcast %cst_12 : f32 to vector<32x128xf32>
    %23 = arith.addf %21, %22 : vector<32x128xf32>
    %24 = arith.mulf %23, %16 : vector<32x128xf32>
    %cst_13 = arith.constant -0.284496725 : f32
    %25 = vector.broadcast %cst_13 : f32 to vector<32x128xf32>
    %26 = arith.addf %24, %25 : vector<32x128xf32>
    %27 = arith.mulf %26, %16 : vector<32x128xf32>
    %cst_14 = arith.constant 0.254829586 : f32
    %28 = vector.broadcast %cst_14 : f32 to vector<32x128xf32>
    %29 = arith.addf %27, %28 : vector<32x128xf32>
    %30 = arith.mulf %29, %16 : vector<32x128xf32>
    %cst_15 = arith.constant 0.000000e+00 : f32
    %31 = vector.broadcast %cst_15 : f32 to vector<32x128xf32>
    %32 = arith.subf %31, %10 : vector<32x128xf32>
    %33 = arith.mulf %32, %10 : vector<32x128xf32>
    %34 = math.exp %33 : vector<32x128xf32>
    %35 = arith.mulf %30, %34 : vector<32x128xf32>
    %cst_16 = arith.constant 1.000000e+00 : f32
    %36 = vector.broadcast %cst_16 : f32 to vector<32x128xf32>
    %37 = arith.subf %36, %35 : vector<32x128xf32>
    %cst_17 = arith.constant 0.000000e+00 : f32
    %38 = vector.broadcast %cst_17 : f32 to vector<32x128xf32>
    %39 = arith.cmpf olt, %9, %38 : vector<32x128xf32>
    %cst_18 = arith.constant 0.000000e+00 : f32
    %40 = vector.broadcast %cst_18 : f32 to vector<32x128xf32>
    %41 = arith.subf %40, %37 : vector<32x128xf32>
    %42 = arith.select %39, %41, %37 : vector<32x128xi1>, vector<32x128xf32>
    %cst_19 = arith.constant 1.000000e+00 : f32
    %43 = vector.broadcast %cst_19 : f32 to vector<32x128xf32>
    %44 = arith.addf %43, %42 : vector<32x128xf32>
    %45 = arith.mulf %7, %44 : vector<32x128xf32>
    %c0_20 = arith.constant 0 : index
    %c0_21 = arith.constant 0 : index
    %46 = vector.load %arg4[%c0_20, %c0_21] : memref<1x128xf32, #tpu.memory_space<vmem>>, vector<1x128xf32>
    %c0_22 = arith.constant 0 : index
    %c0_23 = arith.constant 0 : index
    %47 = vector.load %arg5[%c0_22, %c0_23] : memref<1x128xf32, #tpu.memory_space<vmem>>, vector<1x128xf32>
    %cst_24 = arith.constant dense<0.000000e+00> : vector<32xf32>
    %48 = vector.multi_reduction <add>, %45, %cst_24 [1] : vector<32x128xf32> to vector<32xf32>
    %49 = vector.shape_cast %48 : vector<32xf32> to vector<32x1xf32>
    %cst_25 = arith.constant 1.280000e+02 : f32
    %50 = vector.broadcast %cst_25 : f32 to vector<32x1xf32>
    %51 = arith.divf %49, %50 : vector<32x1xf32>
    %52 = vector.broadcast %51 : vector<32x1xf32> to vector<32x128xf32>
    %53 = arith.subf %45, %52 : vector<32x128xf32>
    %54 = arith.mulf %53, %53 : vector<32x128xf32>
    %cst_26 = arith.constant dense<0.000000e+00> : vector<32xf32>
    %55 = vector.multi_reduction <add>, %54, %cst_26 [1] : vector<32x128xf32> to vector<32xf32>
    %56 = vector.shape_cast %55 : vector<32xf32> to vector<32x1xf32>
    %cst_27 = arith.constant 1.280000e+02 : f32
    %57 = vector.broadcast %cst_27 : f32 to vector<32x1xf32>
    %58 = arith.divf %56, %57 : vector<32x1xf32>
    %59 = vector.broadcast %51 : vector<32x1xf32> to vector<32x128xf32>
    %60 = arith.subf %45, %59 : vector<32x128xf32>
    %cst_28 = arith.constant 9.99999996E-13 : f32
    %61 = vector.broadcast %cst_28 : f32 to vector<32x1xf32>
    %62 = arith.addf %58, %61 : vector<32x1xf32>
    %63 = math.rsqrt %62 : vector<32x1xf32>
    %64 = vector.broadcast %63 : vector<32x1xf32> to vector<32x128xf32>
    %65 = arith.mulf %60, %64 : vector<32x128xf32>
    %66 = vector.broadcast %46 : vector<1x128xf32> to vector<32x128xf32>
    %67 = arith.mulf %65, %66 : vector<32x128xf32>
    %68 = vector.broadcast %47 : vector<1x128xf32> to vector<32x128xf32>
    %69 = arith.addf %67, %68 : vector<32x128xf32>
    %70 = arith.truncf %69 : vector<32x128xf32> to vector<32x128xbf16>
    %c0_29 = arith.constant 0 : index
    %c0_30 = arith.constant 0 : index
    %71 = vector.load %arg6[%c0_29, %c0_30] : memref<32x128xbf16, #tpu.memory_space<vmem>>, vector<32x128xbf16>
    tpu.vector_store %arg6[%c0_29, %c0_30], %70 {strides = array<i32>} : memref<32x128xbf16, #tpu.memory_space<vmem>>, vector<32x128xbf16>,
    return
  }
  func.func @transform_0(%arg0: i32) -> (i32, i32) {
    %c0_i32 = arith.constant 0 : i32
    %c0_i32_0 = arith.constant 0 : i32
    return %arg0, %c0_i32 : i32, i32
  }
  func.func @transform_1(%arg0: i32) -> (i32, i32) {
    %c0_i32 = arith.constant 0 : i32
    %c0_i32_0 = arith.constant 0 : i32
    %c0_i32_1 = arith.constant 0 : i32
    return %c0_i32, %c0_i32_0 : i32, i32
  }
  func.func @transform_2(%arg0: i32) -> (i32, i32) {
    %c0_i32 = arith.constant 0 : i32
    %c0_i32_0 = arith.constant 0 : i32
    %c0_i32_1 = arith.constant 0 : i32
    return %c0_i32, %c0_i32_0 : i32, i32
  }
  func.func @transform_3(%arg0: i32) -> (i32, i32) {
    %c0_i32 = arith.constant 0 : i32
    %c0_i32_0 = arith.constant 0 : i32
    %c0_i32_1 = arith.constant 0 : i32
    return %c0_i32, %c0_i32_0 : i32, i32
  }
  func.func @transform_4(%arg0: i32) -> (i32, i32) {
    %c0_i32 = arith.constant 0 : i32
    %c0_i32_0 = arith.constant 0 : i32
    %c0_i32_1 = arith.constant 0 : i32
    return %c0_i32, %c0_i32_0 : i32, i32
  }
  func.func @transform_5(%arg0: i32) -> (i32, i32) {
    %c0_i32 = arith.constant 0 : i32
    %c0_i32_0 = arith.constant 0 : i32
    return %arg0, %c0_i32 : i32, i32
  }
}

module attributes {stable_mosaic.version = 11 : i64} {
  func.func @encoder_layer_kernel(%arg0: i32, %arg1: memref<2x16x128xbf16, #tpu.memory_space<vmem>>, %arg2: memref<2x128x64xbf16, #tpu.memory_space<vmem>>, %arg3: memref<2x128x64xbf16, #tpu.memory_space<vmem>>, %arg4: memref<2x128x64xbf16, #tpu.memory_space<vmem>>, %arg5: memref<2x1x64xf32, #tpu.memory_space<vmem>>, %arg6: memref<2x1x64xf32, #tpu.memory_space<vmem>>, %arg7: memref<2x1x64xf32, #tpu.memory_space<vmem>>, %arg8: memref<2x64x128xbf16, #tpu.memory_space<vmem>>, %arg9: memref<1x128xf32, #tpu.memory_space<vmem>>, %arg10: memref<1x128xf32, #tpu.memory_space<vmem>>, %arg11: memref<1x128xf32, #tpu.memory_space<vmem>>, %arg12: memref<128x1024xbf16, #tpu.memory_space<vmem>>, %arg13: memref<1x1024xf32, #tpu.memory_space<vmem>>, %arg14: memref<1024x128xbf16, #tpu.memory_space<vmem>>, %arg15: memref<1x128xf32, #tpu.memory_space<vmem>>, %arg16: memref<1x128xf32, #tpu.memory_space<vmem>>, %arg17: memref<1x128xf32, #tpu.memory_space<vmem>>, %arg18: memref<2x16x128xbf16, #tpu.memory_space<vmem>>) attributes {dimension_semantics = [#tpu.dimension_semantics<parallel>], iteration_bounds = array<i64: 1>, scalar_prefetch = 0 : i64, scratch_operands = 0 : i64, tpu.core_type = #tpu.core_type<tc>, window_params = [{transform_indices = @transform_0, window_bounds = array<i64: 2, 16, 128>}, {pipeline_mode = #tpu.pipeline_mode<synchronous>, transform_indices = @transform_1, window_bounds = array<i64: 2, 128, 64>}, {pipeline_mode = #tpu.pipeline_mode<synchronous>, transform_indices = @transform_2, window_bounds = array<i64: 2, 128, 64>}, {pipeline_mode = #tpu.pipeline_mode<synchronous>, transform_indices = @transform_3, window_bounds = array<i64: 2, 128, 64>}, {pipeline_mode = #tpu.pipeline_mode<synchronous>, transform_indices = @transform_4, window_bounds = array<i64: 2, 1, 64>}, {pipeline_mode = #tpu.pipeline_mode<synchronous>, transform_indices = @transform_5, window_bounds = array<i64: 2, 1, 64>}, {pipeline_mode = #tpu.pipeline_mode<synchronous>, transform_indices = @transform_6, window_bounds = array<i64: 2, 1, 64>}, {pipeline_mode = #tpu.pipeline_mode<synchronous>, transform_indices = @transform_7, window_bounds = array<i64: 2, 64, 128>}, {pipeline_mode = #tpu.pipeline_mode<synchronous>, transform_indices = @transform_8, window_bounds = array<i64: 1, 128>}, {pipeline_mode = #tpu.pipeline_mode<synchronous>, transform_indices = @transform_9, window_bounds = array<i64: 1, 128>}, {pipeline_mode = #tpu.pipeline_mode<synchronous>, transform_indices = @transform_10, window_bounds = array<i64: 1, 128>}, {pipeline_mode = #tpu.pipeline_mode<synchronous>, transform_indices = @transform_11, window_bounds = array<i64: 128, 1024>}, {pipeline_mode = #tpu.pipeline_mode<synchronous>, transform_indices = @transform_12, window_bounds = array<i64: 1, 1024>}, {pipeline_mode = #tpu.pipeline_mode<synchronous>, transform_indices = @transform_13, window_bounds = array<i64: 1024, 128>}, {pipeline_mode = #tpu.pipeline_mode<synchronous>, transform_indices = @transform_14, window_bounds = array<i64: 1, 128>}, {pipeline_mode = #tpu.pipeline_mode<synchronous>, transform_indices = @transform_15, window_bounds = array<i64: 1, 128>}, {pipeline_mode = #tpu.pipeline_mode<synchronous>, transform_indices = @transform_16, window_bounds = array<i64: 1, 128>}, {transform_indices = @transform_17, window_bounds = array<i64: 2, 16, 128>}]} {
    %c0 = arith.constant 0 : index
    %c0_0 = arith.constant 0 : index
    %c0_1 = arith.constant 0 : index
    %0 = vector.load %arg1[%c0, %c0_0, %c0_1] : memref<2x16x128xbf16, #tpu.memory_space<vmem>>, vector<2x16x128xbf16>
    %1 = arith.extf %0 : vector<2x16x128xbf16> to vector<2x16x128xf32>
    %2 = vector.shape_cast %1 : vector<2x16x128xf32> to vector<32x128xf32>
    %3 = arith.truncf %2 : vector<32x128xf32> to vector<32x128xbf16>
    %cst = arith.constant 0.000000e+00 : f32
    %4 = vector.broadcast %cst : f32 to vector<32x128xf32>
    %c0_2 = arith.constant 0 : index
    %c0_3 = arith.constant 0 : index
    %c0_4 = arith.constant 0 : index
    %5 = vector.load %arg2[%c0_2, %c0_3, %c0_4] : memref<2x128x64xbf16, #tpu.memory_space<vmem>>, vector<1x128x64xbf16>
    %6 = vector.shape_cast %5 : vector<1x128x64xbf16> to vector<128x64xbf16>
    %cst_5 = arith.constant dense<0.000000e+00> : vector<32x64xf32>
    %7 = tpu.matmul %3, %6, %cst_5 {dimension_numbers = #tpu.dot_dimension_numbers<[1], [0], [0], [1], [0, 0, 1, 1], [], []>} : vector<32x128xbf16>, vector<128x64xbf16>, vector<32x64xf32> -> vector<32x64xf32>
    %c0_6 = arith.constant 0 : index
    %c0_7 = arith.constant 0 : index
    %c0_8 = arith.constant 0 : index
    %8 = vector.load %arg5[%c0_6, %c0_7, %c0_8] : memref<2x1x64xf32, #tpu.memory_space<vmem>>, vector<1x1x64xf32>
    %9 = vector.shape_cast %8 : vector<1x1x64xf32> to vector<1x64xf32>
    %10 = vector.broadcast %9 : vector<1x64xf32> to vector<32x64xf32>
    %11 = arith.addf %7, %10 : vector<32x64xf32>
    %cst_9 = arith.constant 1.250000e-01 : f32
    %12 = vector.broadcast %cst_9 : f32 to vector<32x64xf32>
    %13 = arith.mulf %11, %12 : vector<32x64xf32>
    %c0_10 = arith.constant 0 : index
    %c0_11 = arith.constant 0 : index
    %c0_12 = arith.constant 0 : index
    %14 = vector.load %arg3[%c0_10, %c0_11, %c0_12] : memref<2x128x64xbf16, #tpu.memory_space<vmem>>, vector<1x128x64xbf16>
    %15 = vector.shape_cast %14 : vector<1x128x64xbf16> to vector<128x64xbf16>
    %cst_13 = arith.constant dense<0.000000e+00> : vector<32x64xf32>
    %16 = tpu.matmul %3, %15, %cst_13 {dimension_numbers = #tpu.dot_dimension_numbers<[1], [0], [0], [1], [0, 0, 1, 1], [], []>} : vector<32x128xbf16>, vector<128x64xbf16>, vector<32x64xf32> -> vector<32x64xf32>
    %c0_14 = arith.constant 0 : index
    %c0_15 = arith.constant 0 : index
    %c0_16 = arith.constant 0 : index
    %17 = vector.load %arg6[%c0_14, %c0_15, %c0_16] : memref<2x1x64xf32, #tpu.memory_space<vmem>>, vector<1x1x64xf32>
    %18 = vector.shape_cast %17 : vector<1x1x64xf32> to vector<1x64xf32>
    %19 = vector.broadcast %18 : vector<1x64xf32> to vector<32x64xf32>
    %20 = arith.addf %16, %19 : vector<32x64xf32>
    %c0_17 = arith.constant 0 : index
    %c0_18 = arith.constant 0 : index
    %c0_19 = arith.constant 0 : index
    %21 = vector.load %arg4[%c0_17, %c0_18, %c0_19] : memref<2x128x64xbf16, #tpu.memory_space<vmem>>, vector<1x128x64xbf16>
    %22 = vector.shape_cast %21 : vector<1x128x64xbf16> to vector<128x64xbf16>
    %cst_20 = arith.constant dense<0.000000e+00> : vector<32x64xf32>
    %23 = tpu.matmul %3, %22, %cst_20 {dimension_numbers = #tpu.dot_dimension_numbers<[1], [0], [0], [1], [0, 0, 1, 1], [], []>} : vector<32x128xbf16>, vector<128x64xbf16>, vector<32x64xf32> -> vector<32x64xf32>
    %c0_21 = arith.constant 0 : index
    %c0_22 = arith.constant 0 : index
    %c0_23 = arith.constant 0 : index
    %24 = vector.load %arg7[%c0_21, %c0_22, %c0_23] : memref<2x1x64xf32, #tpu.memory_space<vmem>>, vector<1x1x64xf32>
    %25 = vector.shape_cast %24 : vector<1x1x64xf32> to vector<1x64xf32>
    %26 = vector.broadcast %25 : vector<1x64xf32> to vector<32x64xf32>
    %27 = arith.addf %23, %26 : vector<32x64xf32>
    %28 = vector.shape_cast %13 : vector<32x64xf32> to vector<2x16x64xf32>
    %29 = arith.truncf %28 : vector<2x16x64xf32> to vector<2x16x64xbf16>
    %30 = vector.shape_cast %20 : vector<32x64xf32> to vector<2x16x64xf32>
    %31 = arith.truncf %30 : vector<2x16x64xf32> to vector<2x16x64xbf16>
    %32 = vector.shape_cast %27 : vector<32x64xf32> to vector<2x16x64xf32>
    %33 = arith.truncf %32 : vector<2x16x64xf32> to vector<2x16x64xbf16>
    "tpu.trace_start"() <{level = 10 : i32, message = "bqe,bke->bqk"}> : () -> ()
    %cst_24 = arith.constant dense<0.000000e+00> : vector<2x16x16xf32>
    %34 = tpu.matmul %29, %31, %cst_24 {dimension_numbers = #tpu.dot_dimension_numbers<[2], [2], [1], [1], [0, 0, 0, 1, 1, 1], [0], [0]>} : vector<2x16x64xbf16>, vector<2x16x64xbf16>, vector<2x16x16xf32> -> vector<2x16x16xf32>
    "tpu.trace_stop"() : () -> ()
    %cst_25 = arith.constant dense<0xFF800000> : vector<2x16xf32>
    %35 = vector.multi_reduction <maximumf>, %34, %cst_25 [2] : vector<2x16x16xf32> to vector<2x16xf32>
    %cst_26 = arith.constant 0xFF800000 : f32
    %36 = vector.broadcast %cst_26 : f32 to vector<2x16xf32>
    %37 = arith.maximumf %36, %35 : vector<2x16xf32>
    %38 = vector.shape_cast %37 : vector<2x16xf32> to vector<2x16x1xf32>
    %39 = vector.broadcast %38 : vector<2x16x1xf32> to vector<2x16x16xf32>
    %40 = arith.subf %34, %39 : vector<2x16x16xf32>
    %41 = math.exp %40 : vector<2x16x16xf32>
    %cst_27 = arith.constant dense<0.000000e+00> : vector<2x16xf32>
    %42 = vector.multi_reduction <add>, %41, %cst_27 [2] : vector<2x16x16xf32> to vector<2x16xf32>
    %43 = vector.shape_cast %42 : vector<2x16xf32> to vector<2x16x1xf32>
    %44 = vector.broadcast %43 : vector<2x16x1xf32> to vector<2x16x16xf32>
    %45 = arith.divf %41, %44 : vector<2x16x16xf32>
    %46 = arith.truncf %45 : vector<2x16x16xf32> to vector<2x16x16xbf16>
    "tpu.trace_start"() <{level = 10 : i32, message = "bqk,bke->bqe"}> : () -> ()
    %cst_28 = arith.constant dense<0.000000e+00> : vector<2x16x64xf32>
    %47 = tpu.matmul %46, %33, %cst_28 {dimension_numbers = #tpu.dot_dimension_numbers<[2], [1], [1], [2], [0, 0, 0, 1, 1, 2], [0], [0]>} : vector<2x16x16xbf16>, vector<2x16x64xbf16>, vector<2x16x64xf32> -> vector<2x16x64xf32>
    "tpu.trace_stop"() : () -> ()
    %48 = vector.shape_cast %47 : vector<2x16x64xf32> to vector<32x64xf32>
    %49 = arith.truncf %48 : vector<32x64xf32> to vector<32x64xbf16>
    %c0_29 = arith.constant 0 : index
    %c0_30 = arith.constant 0 : index
    %c0_31 = arith.constant 0 : index
    %50 = vector.load %arg8[%c0_29, %c0_30, %c0_31] : memref<2x64x128xbf16, #tpu.memory_space<vmem>>, vector<1x64x128xbf16>
    %51 = vector.shape_cast %50 : vector<1x64x128xbf16> to vector<64x128xbf16>
    %cst_32 = arith.constant dense<0.000000e+00> : vector<32x128xf32>
    %52 = tpu.matmul %49, %51, %cst_32 {dimension_numbers = #tpu.dot_dimension_numbers<[1], [0], [0], [1], [0, 0, 1, 1], [], []>} : vector<32x64xbf16>, vector<64x128xbf16>, vector<32x128xf32> -> vector<32x128xf32>
    %53 = arith.addf %4, %52 : vector<32x128xf32>
    %c1 = arith.constant 1 : index
    %c0_33 = arith.constant 0 : index
    %c0_34 = arith.constant 0 : index
    %54 = vector.load %arg2[%c1, %c0_33, %c0_34] : memref<2x128x64xbf16, #tpu.memory_space<vmem>>, vector<1x128x64xbf16>
    %55 = vector.shape_cast %54 : vector<1x128x64xbf16> to vector<128x64xbf16>
    %cst_35 = arith.constant dense<0.000000e+00> : vector<32x64xf32>
    %56 = tpu.matmul %3, %55, %cst_35 {dimension_numbers = #tpu.dot_dimension_numbers<[1], [0], [0], [1], [0, 0, 1, 1], [], []>} : vector<32x128xbf16>, vector<128x64xbf16>, vector<32x64xf32> -> vector<32x64xf32>
    %c1_36 = arith.constant 1 : index
    %c0_37 = arith.constant 0 : index
    %c0_38 = arith.constant 0 : index
    %57 = vector.load %arg5[%c1_36, %c0_37, %c0_38] : memref<2x1x64xf32, #tpu.memory_space<vmem>>, vector<1x1x64xf32>
    %58 = vector.shape_cast %57 : vector<1x1x64xf32> to vector<1x64xf32>
    %59 = vector.broadcast %58 : vector<1x64xf32> to vector<32x64xf32>
    %60 = arith.addf %56, %59 : vector<32x64xf32>
    %cst_39 = arith.constant 1.250000e-01 : f32
    %61 = vector.broadcast %cst_39 : f32 to vector<32x64xf32>
    %62 = arith.mulf %60, %61 : vector<32x64xf32>
    %c1_40 = arith.constant 1 : index
    %c0_41 = arith.constant 0 : index
    %c0_42 = arith.constant 0 : index
    %63 = vector.load %arg3[%c1_40, %c0_41, %c0_42] : memref<2x128x64xbf16, #tpu.memory_space<vmem>>, vector<1x128x64xbf16>
    %64 = vector.shape_cast %63 : vector<1x128x64xbf16> to vector<128x64xbf16>
    %cst_43 = arith.constant dense<0.000000e+00> : vector<32x64xf32>
    %65 = tpu.matmul %3, %64, %cst_43 {dimension_numbers = #tpu.dot_dimension_numbers<[1], [0], [0], [1], [0, 0, 1, 1], [], []>} : vector<32x128xbf16>, vector<128x64xbf16>, vector<32x64xf32> -> vector<32x64xf32>
    %c1_44 = arith.constant 1 : index
    %c0_45 = arith.constant 0 : index
    %c0_46 = arith.constant 0 : index
    %66 = vector.load %arg6[%c1_44, %c0_45, %c0_46] : memref<2x1x64xf32, #tpu.memory_space<vmem>>, vector<1x1x64xf32>
    %67 = vector.shape_cast %66 : vector<1x1x64xf32> to vector<1x64xf32>
    %68 = vector.broadcast %67 : vector<1x64xf32> to vector<32x64xf32>
    %69 = arith.addf %65, %68 : vector<32x64xf32>
    %c1_47 = arith.constant 1 : index
    %c0_48 = arith.constant 0 : index
    %c0_49 = arith.constant 0 : index
    %70 = vector.load %arg4[%c1_47, %c0_48, %c0_49] : memref<2x128x64xbf16, #tpu.memory_space<vmem>>, vector<1x128x64xbf16>
    %71 = vector.shape_cast %70 : vector<1x128x64xbf16> to vector<128x64xbf16>
    %cst_50 = arith.constant dense<0.000000e+00> : vector<32x64xf32>
    %72 = tpu.matmul %3, %71, %cst_50 {dimension_numbers = #tpu.dot_dimension_numbers<[1], [0], [0], [1], [0, 0, 1, 1], [], []>} : vector<32x128xbf16>, vector<128x64xbf16>, vector<32x64xf32> -> vector<32x64xf32>
    %c1_51 = arith.constant 1 : index
    %c0_52 = arith.constant 0 : index
    %c0_53 = arith.constant 0 : index
    %73 = vector.load %arg7[%c1_51, %c0_52, %c0_53] : memref<2x1x64xf32, #tpu.memory_space<vmem>>, vector<1x1x64xf32>
    %74 = vector.shape_cast %73 : vector<1x1x64xf32> to vector<1x64xf32>
    %75 = vector.broadcast %74 : vector<1x64xf32> to vector<32x64xf32>
    %76 = arith.addf %72, %75 : vector<32x64xf32>
    %77 = vector.shape_cast %62 : vector<32x64xf32> to vector<2x16x64xf32>
    %78 = arith.truncf %77 : vector<2x16x64xf32> to vector<2x16x64xbf16>
    %79 = vector.shape_cast %69 : vector<32x64xf32> to vector<2x16x64xf32>
    %80 = arith.truncf %79 : vector<2x16x64xf32> to vector<2x16x64xbf16>
    %81 = vector.shape_cast %76 : vector<32x64xf32> to vector<2x16x64xf32>
    %82 = arith.truncf %81 : vector<2x16x64xf32> to vector<2x16x64xbf16>
    "tpu.trace_start"() <{level = 10 : i32, message = "bqe,bke->bqk"}> : () -> ()
    %cst_54 = arith.constant dense<0.000000e+00> : vector<2x16x16xf32>
    %83 = tpu.matmul %78, %80, %cst_54 {dimension_numbers = #tpu.dot_dimension_numbers<[2], [2], [1], [1], [0, 0, 0, 1, 1, 1], [0], [0]>} : vector<2x16x64xbf16>, vector<2x16x64xbf16>, vector<2x16x16xf32> -> vector<2x16x16xf32>
    "tpu.trace_stop"() : () -> ()
    %cst_55 = arith.constant dense<0xFF800000> : vector<2x16xf32>
    %84 = vector.multi_reduction <maximumf>, %83, %cst_55 [2] : vector<2x16x16xf32> to vector<2x16xf32>
    %cst_56 = arith.constant 0xFF800000 : f32
    %85 = vector.broadcast %cst_56 : f32 to vector<2x16xf32>
    %86 = arith.maximumf %85, %84 : vector<2x16xf32>
    %87 = vector.shape_cast %86 : vector<2x16xf32> to vector<2x16x1xf32>
    %88 = vector.broadcast %87 : vector<2x16x1xf32> to vector<2x16x16xf32>
    %89 = arith.subf %83, %88 : vector<2x16x16xf32>
    %90 = math.exp %89 : vector<2x16x16xf32>
    %cst_57 = arith.constant dense<0.000000e+00> : vector<2x16xf32>
    %91 = vector.multi_reduction <add>, %90, %cst_57 [2] : vector<2x16x16xf32> to vector<2x16xf32>
    %92 = vector.shape_cast %91 : vector<2x16xf32> to vector<2x16x1xf32>
    %93 = vector.broadcast %92 : vector<2x16x1xf32> to vector<2x16x16xf32>
    %94 = arith.divf %90, %93 : vector<2x16x16xf32>
    %95 = arith.truncf %94 : vector<2x16x16xf32> to vector<2x16x16xbf16>
    "tpu.trace_start"() <{level = 10 : i32, message = "bqk,bke->bqe"}> : () -> ()
    %cst_58 = arith.constant dense<0.000000e+00> : vector<2x16x64xf32>
    %96 = tpu.matmul %95, %82, %cst_58 {dimension_numbers = #tpu.dot_dimension_numbers<[2], [1], [1], [2], [0, 0, 0, 1, 1, 2], [0], [0]>} : vector<2x16x16xbf16>, vector<2x16x64xbf16>, vector<2x16x64xf32> -> vector<2x16x64xf32>
    "tpu.trace_stop"() : () -> ()
    %97 = vector.shape_cast %96 : vector<2x16x64xf32> to vector<32x64xf32>
    %98 = arith.truncf %97 : vector<32x64xf32> to vector<32x64xbf16>
    %c1_59 = arith.constant 1 : index
    %c0_60 = arith.constant 0 : index
    %c0_61 = arith.constant 0 : index
    %99 = vector.load %arg8[%c1_59, %c0_60, %c0_61] : memref<2x64x128xbf16, #tpu.memory_space<vmem>>, vector<1x64x128xbf16>
    %100 = vector.shape_cast %99 : vector<1x64x128xbf16> to vector<64x128xbf16>
    %cst_62 = arith.constant dense<0.000000e+00> : vector<32x128xf32>
    %101 = tpu.matmul %98, %100, %cst_62 {dimension_numbers = #tpu.dot_dimension_numbers<[1], [0], [0], [1], [0, 0, 1, 1], [], []>} : vector<32x64xbf16>, vector<64x128xbf16>, vector<32x128xf32> -> vector<32x128xf32>
    %102 = arith.addf %53, %101 : vector<32x128xf32>
    %c0_63 = arith.constant 0 : index
    %c0_64 = arith.constant 0 : index
    %103 = vector.load %arg9[%c0_63, %c0_64] : memref<1x128xf32, #tpu.memory_space<vmem>>, vector<1x128xf32>
    %104 = vector.broadcast %103 : vector<1x128xf32> to vector<32x128xf32>
    %105 = arith.addf %102, %104 : vector<32x128xf32>
    %106 = arith.addf %2, %105 : vector<32x128xf32>
    %c0_65 = arith.constant 0 : index
    %c0_66 = arith.constant 0 : index
    %107 = vector.load %arg10[%c0_65, %c0_66] : memref<1x128xf32, #tpu.memory_space<vmem>>, vector<1x128xf32>
    %c0_67 = arith.constant 0 : index
    %c0_68 = arith.constant 0 : index
    %108 = vector.load %arg11[%c0_67, %c0_68] : memref<1x128xf32, #tpu.memory_space<vmem>>, vector<1x128xf32>
    %cst_69 = arith.constant dense<0.000000e+00> : vector<32xf32>
    %109 = vector.multi_reduction <add>, %106, %cst_69 [1] : vector<32x128xf32> to vector<32xf32>
    %110 = vector.shape_cast %109 : vector<32xf32> to vector<32x1xf32>
    %cst_70 = arith.constant 1.280000e+02 : f32
    %111 = vector.broadcast %cst_70 : f32 to vector<32x1xf32>
    %112 = arith.divf %110, %111 : vector<32x1xf32>
    %113 = vector.broadcast %112 : vector<32x1xf32> to vector<32x128xf32>
    %114 = arith.subf %106, %113 : vector<32x128xf32>
    %115 = arith.mulf %114, %114 : vector<32x128xf32>
    %cst_71 = arith.constant dense<0.000000e+00> : vector<32xf32>
    %116 = vector.multi_reduction <add>, %115, %cst_71 [1] : vector<32x128xf32> to vector<32xf32>
    %117 = vector.shape_cast %116 : vector<32xf32> to vector<32x1xf32>
    %cst_72 = arith.constant 1.280000e+02 : f32
    %118 = vector.broadcast %cst_72 : f32 to vector<32x1xf32>
    %119 = arith.divf %117, %118 : vector<32x1xf32>
    %120 = vector.broadcast %112 : vector<32x1xf32> to vector<32x128xf32>
    %121 = arith.subf %106, %120 : vector<32x128xf32>
    %cst_73 = arith.constant 9.99999974E-6 : f32
    %122 = vector.broadcast %cst_73 : f32 to vector<32x1xf32>
    %123 = arith.addf %119, %122 : vector<32x1xf32>
    %124 = math.rsqrt %123 : vector<32x1xf32>
    %125 = vector.broadcast %124 : vector<32x1xf32> to vector<32x128xf32>
    %126 = arith.mulf %121, %125 : vector<32x128xf32>
    %127 = vector.broadcast %107 : vector<1x128xf32> to vector<32x128xf32>
    %128 = arith.mulf %126, %127 : vector<32x128xf32>
    %129 = vector.broadcast %108 : vector<1x128xf32> to vector<32x128xf32>
    %130 = arith.addf %128, %129 : vector<32x128xf32>
    %131 = arith.truncf %130 : vector<32x128xf32> to vector<32x128xbf16>
    %c0_74 = arith.constant 0 : index
    %c0_75 = arith.constant 0 : index
    %132 = vector.load %arg12[%c0_74, %c0_75] : memref<128x1024xbf16, #tpu.memory_space<vmem>>, vector<128x1024xbf16>
    %cst_76 = arith.constant dense<0.000000e+00> : vector<32x1024xf32>
    %133 = tpu.matmul %131, %132, %cst_76 {dimension_numbers = #tpu.dot_dimension_numbers<[1], [0], [0], [1], [0, 0, 1, 1], [], []>} : vector<32x128xbf16>, vector<128x1024xbf16>, vector<32x1024xf32> -> vector<32x1024xf32>
    %c0_77 = arith.constant 0 : index
    %c0_78 = arith.constant 0 : index
    %134 = vector.load %arg13[%c0_77, %c0_78] : memref<1x1024xf32, #tpu.memory_space<vmem>>, vector<1x1024xf32>
    %135 = vector.broadcast %134 : vector<1x1024xf32> to vector<32x1024xf32>
    %136 = arith.addf %133, %135 : vector<32x1024xf32>
    %cst_79 = arith.constant 5.000000e-01 : f32
    %137 = vector.broadcast %cst_79 : f32 to vector<32x1024xf32>
    %138 = arith.mulf %137, %136 : vector<32x1024xf32>
    %cst_80 = arith.constant 0.707106769 : f32
    %139 = vector.broadcast %cst_80 : f32 to vector<32x1024xf32>
    %140 = arith.mulf %136, %139 : vector<32x1024xf32>
    %141 = math.absf %140 : vector<32x1024xf32>
    %cst_81 = arith.constant 0.327591091 : f32
    %142 = vector.broadcast %cst_81 : f32 to vector<32x1024xf32>
    %143 = arith.mulf %142, %141 : vector<32x1024xf32>
    %cst_82 = arith.constant 1.000000e+00 : f32
    %144 = vector.broadcast %cst_82 : f32 to vector<32x1024xf32>
    %145 = arith.addf %144, %143 : vector<32x1024xf32>
    %cst_83 = arith.constant 1.000000e+00 : f32
    %146 = vector.broadcast %cst_83 : f32 to vector<32x1024xf32>
    %147 = arith.divf %146, %145 : vector<32x1024xf32>
    %cst_84 = arith.constant 1.06140542 : f32
    %148 = vector.broadcast %cst_84 : f32 to vector<32x1024xf32>
    %149 = arith.mulf %148, %147 : vector<32x1024xf32>
    %cst_85 = arith.constant -1.45315206 : f32
    %150 = vector.broadcast %cst_85 : f32 to vector<32x1024xf32>
    %151 = arith.addf %149, %150 : vector<32x1024xf32>
    %152 = arith.mulf %151, %147 : vector<32x1024xf32>
    %cst_86 = arith.constant 1.42141378 : f32
    %153 = vector.broadcast %cst_86 : f32 to vector<32x1024xf32>
    %154 = arith.addf %152, %153 : vector<32x1024xf32>
    %155 = arith.mulf %154, %147 : vector<32x1024xf32>
    %cst_87 = arith.constant -0.284496725 : f32
    %156 = vector.broadcast %cst_87 : f32 to vector<32x1024xf32>
    %157 = arith.addf %155, %156 : vector<32x1024xf32>
    %158 = arith.mulf %157, %147 : vector<32x1024xf32>
    %cst_88 = arith.constant 0.254829586 : f32
    %159 = vector.broadcast %cst_88 : f32 to vector<32x1024xf32>
    %160 = arith.addf %158, %159 : vector<32x1024xf32>
    %161 = arith.mulf %160, %147 : vector<32x1024xf32>
    %cst_89 = arith.constant 0.000000e+00 : f32
    %162 = vector.broadcast %cst_89 : f32 to vector<32x1024xf32>
    %163 = arith.subf %162, %141 : vector<32x1024xf32>
    %164 = arith.mulf %163, %141 : vector<32x1024xf32>
    %165 = math.exp %164 : vector<32x1024xf32>
    %166 = arith.mulf %161, %165 : vector<32x1024xf32>
    %cst_90 = arith.constant 1.000000e+00 : f32
    %167 = vector.broadcast %cst_90 : f32 to vector<32x1024xf32>
    %168 = arith.subf %167, %166 : vector<32x1024xf32>
    %cst_91 = arith.constant 0.000000e+00 : f32
    %169 = vector.broadcast %cst_91 : f32 to vector<32x1024xf32>
    %170 = arith.cmpf olt, %140, %169 : vector<32x1024xf32>
    %cst_92 = arith.constant 0.000000e+00 : f32
    %171 = vector.broadcast %cst_92 : f32 to vector<32x1024xf32>
    %172 = arith.subf %171, %168 : vector<32x1024xf32>
    %173 = arith.select %170, %172, %168 : vector<32x1024xi1>, vector<32x1024xf32>
    %cst_93 = arith.constant 1.000000e+00 : f32
    %174 = vector.broadcast %cst_93 : f32 to vector<32x1024xf32>
    %175 = arith.addf %174, %173 : vector<32x1024xf32>
    %176 = arith.mulf %138, %175 : vector<32x1024xf32>
    %177 = arith.truncf %176 : vector<32x1024xf32> to vector<32x1024xbf16>
    %c0_94 = arith.constant 0 : index
    %c0_95 = arith.constant 0 : index
    %178 = vector.load %arg14[%c0_94, %c0_95] : memref<1024x128xbf16, #tpu.memory_space<vmem>>, vector<1024x128xbf16>
    %cst_96 = arith.constant dense<0.000000e+00> : vector<32x128xf32>
    %179 = tpu.matmul %177, %178, %cst_96 {dimension_numbers = #tpu.dot_dimension_numbers<[1], [0], [0], [1], [0, 0, 1, 1], [], []>} : vector<32x1024xbf16>, vector<1024x128xbf16>, vector<32x128xf32> -> vector<32x128xf32>
    %c0_97 = arith.constant 0 : index
    %c0_98 = arith.constant 0 : index
    %180 = vector.load %arg15[%c0_97, %c0_98] : memref<1x128xf32, #tpu.memory_space<vmem>>, vector<1x128xf32>
    %181 = vector.broadcast %180 : vector<1x128xf32> to vector<32x128xf32>
    %182 = arith.addf %179, %181 : vector<32x128xf32>
    %183 = arith.addf %130, %182 : vector<32x128xf32>
    %c0_99 = arith.constant 0 : index
    %c0_100 = arith.constant 0 : index
    %184 = vector.load %arg16[%c0_99, %c0_100] : memref<1x128xf32, #tpu.memory_space<vmem>>, vector<1x128xf32>
    %c0_101 = arith.constant 0 : index
    %c0_102 = arith.constant 0 : index
    %185 = vector.load %arg17[%c0_101, %c0_102] : memref<1x128xf32, #tpu.memory_space<vmem>>, vector<1x128xf32>
    %cst_103 = arith.constant dense<0.000000e+00> : vector<32xf32>
    %186 = vector.multi_reduction <add>, %183, %cst_103 [1] : vector<32x128xf32> to vector<32xf32>
    %187 = vector.shape_cast %186 : vector<32xf32> to vector<32x1xf32>
    %cst_104 = arith.constant 1.280000e+02 : f32
    %188 = vector.broadcast %cst_104 : f32 to vector<32x1xf32>
    %189 = arith.divf %187, %188 : vector<32x1xf32>
    %190 = vector.broadcast %189 : vector<32x1xf32> to vector<32x128xf32>
    %191 = arith.subf %183, %190 : vector<32x128xf32>
    %192 = arith.mulf %191, %191 : vector<32x128xf32>
    %cst_105 = arith.constant dense<0.000000e+00> : vector<32xf32>
    %193 = vector.multi_reduction <add>, %192, %cst_105 [1] : vector<32x128xf32> to vector<32xf32>
    %194 = vector.shape_cast %193 : vector<32xf32> to vector<32x1xf32>
    %cst_106 = arith.constant 1.280000e+02 : f32
    %195 = vector.broadcast %cst_106 : f32 to vector<32x1xf32>
    %196 = arith.divf %194, %195 : vector<32x1xf32>
    %197 = vector.broadcast %189 : vector<32x1xf32> to vector<32x128xf32>
    %198 = arith.subf %183, %197 : vector<32x128xf32>
    %cst_107 = arith.constant 9.99999974E-6 : f32
    %199 = vector.broadcast %cst_107 : f32 to vector<32x1xf32>
    %200 = arith.addf %196, %199 : vector<32x1xf32>
    %201 = math.rsqrt %200 : vector<32x1xf32>
    %202 = vector.broadcast %201 : vector<32x1xf32> to vector<32x128xf32>
    %203 = arith.mulf %198, %202 : vector<32x128xf32>
    %204 = vector.broadcast %184 : vector<1x128xf32> to vector<32x128xf32>
    %205 = arith.mulf %203, %204 : vector<32x128xf32>
    %206 = vector.broadcast %185 : vector<1x128xf32> to vector<32x128xf32>
    %207 = arith.addf %205, %206 : vector<32x128xf32>
    %208 = vector.shape_cast %207 : vector<32x128xf32> to vector<2x16x128xf32>
    %209 = arith.truncf %208 : vector<2x16x128xf32> to vector<2x16x128xbf16>
    %c0_108 = arith.constant 0 : index
    %c0_109 = arith.constant 0 : index
    %c0_110 = arith.constant 0 : index
    %210 = vector.load %arg18[%c0_108, %c0_109, %c0_110] : memref<2x16x128xbf16, #tpu.memory_space<vmem>>, vector<2x16x128xbf16>
    tpu.vector_store %arg18[%c0_108, %c0_109, %c0_110], %209 {strides = array<i32>} : memref<2x16x128xbf16, #tpu.memory_space<vmem>>, vector<2x16x128xbf16>,
    return
  }
  func.func @transform_0(%arg0: i32) -> (i32, i32, i32) {
    %c0_i32 = arith.constant 0 : i32
    %c0_i32_0 = arith.constant 0 : i32
    %c0_i32_1 = arith.constant 0 : i32
    return %arg0, %c0_i32, %c0_i32_0 : i32, i32, i32
  }
  func.func @transform_1(%arg0: i32) -> (i32, i32, i32) {
    %c0_i32 = arith.constant 0 : i32
    %c0_i32_0 = arith.constant 0 : i32
    %c0_i32_1 = arith.constant 0 : i32
    %c0_i32_2 = arith.constant 0 : i32
    return %c0_i32, %c0_i32_0, %c0_i32_1 : i32, i32, i32
  }
  func.func @transform_2(%arg0: i32) -> (i32, i32, i32) {
    %c0_i32 = arith.constant 0 : i32
    %c0_i32_0 = arith.constant 0 : i32
    %c0_i32_1 = arith.constant 0 : i32
    %c0_i32_2 = arith.constant 0 : i32
    return %c0_i32, %c0_i32_0, %c0_i32_1 : i32, i32, i32
  }
  func.func @transform_3(%arg0: i32) -> (i32, i32, i32) {
    %c0_i32 = arith.constant 0 : i32
    %c0_i32_0 = arith.constant 0 : i32
    %c0_i32_1 = arith.constant 0 : i32
    %c0_i32_2 = arith.constant 0 : i32
    return %c0_i32, %c0_i32_0, %c0_i32_1 : i32, i32, i32
  }
  func.func @transform_4(%arg0: i32) -> (i32, i32, i32) {
    %c0_i32 = arith.constant 0 : i32
    %c0_i32_0 = arith.constant 0 : i32
    %c0_i32_1 = arith.constant 0 : i32
    %c0_i32_2 = arith.constant 0 : i32
    return %c0_i32, %c0_i32_0, %c0_i32_1 : i32, i32, i32
  }
  func.func @transform_5(%arg0: i32) -> (i32, i32, i32) {
    %c0_i32 = arith.constant 0 : i32
    %c0_i32_0 = arith.constant 0 : i32
    %c0_i32_1 = arith.constant 0 : i32
    %c0_i32_2 = arith.constant 0 : i32
    return %c0_i32, %c0_i32_0, %c0_i32_1 : i32, i32, i32
  }
  func.func @transform_6(%arg0: i32) -> (i32, i32, i32) {
    %c0_i32 = arith.constant 0 : i32
    %c0_i32_0 = arith.constant 0 : i32
    %c0_i32_1 = arith.constant 0 : i32
    %c0_i32_2 = arith.constant 0 : i32
    return %c0_i32, %c0_i32_0, %c0_i32_1 : i32, i32, i32
  }
  func.func @transform_7(%arg0: i32) -> (i32, i32, i32) {
    %c0_i32 = arith.constant 0 : i32
    %c0_i32_0 = arith.constant 0 : i32
    %c0_i32_1 = arith.constant 0 : i32
    %c0_i32_2 = arith.constant 0 : i32
    return %c0_i32, %c0_i32_0, %c0_i32_1 : i32, i32, i32
  }
  func.func @transform_8(%arg0: i32) -> (i32, i32) {
    %c0_i32 = arith.constant 0 : i32
    %c0_i32_0 = arith.constant 0 : i32
    %c0_i32_1 = arith.constant 0 : i32
    return %c0_i32, %c0_i32_0 : i32, i32
  }
  func.func @transform_9(%arg0: i32) -> (i32, i32) {
    %c0_i32 = arith.constant 0 : i32
    %c0_i32_0 = arith.constant 0 : i32
    %c0_i32_1 = arith.constant 0 : i32
    return %c0_i32, %c0_i32_0 : i32, i32
  }
  func.func @transform_10(%arg0: i32) -> (i32, i32) {
    %c0_i32 = arith.constant 0 : i32
    %c0_i32_0 = arith.constant 0 : i32
    %c0_i32_1 = arith.constant 0 : i32
    return %c0_i32, %c0_i32_0 : i32, i32
  }
  func.func @transform_11(%arg0: i32) -> (i32, i32) {
    %c0_i32 = arith.constant 0 : i32
    %c0_i32_0 = arith.constant 0 : i32
    %c0_i32_1 = arith.constant 0 : i32
    return %c0_i32, %c0_i32_0 : i32, i32
  }
  func.func @transform_12(%arg0: i32) -> (i32, i32) {
    %c0_i32 = arith.constant 0 : i32
    %c0_i32_0 = arith.constant 0 : i32
    %c0_i32_1 = arith.constant 0 : i32
    return %c0_i32, %c0_i32_0 : i32, i32
  }
  func.func @transform_13(%arg0: i32) -> (i32, i32) {
    %c0_i32 = arith.constant 0 : i32
    %c0_i32_0 = arith.constant 0 : i32
    %c0_i32_1 = arith.constant 0 : i32
    return %c0_i32, %c0_i32_0 : i32, i32
  }
  func.func @transform_14(%arg0: i32) -> (i32, i32) {
    %c0_i32 = arith.constant 0 : i32
    %c0_i32_0 = arith.constant 0 : i32
    %c0_i32_1 = arith.constant 0 : i32
    return %c0_i32, %c0_i32_0 : i32, i32
  }
  func.func @transform_15(%arg0: i32) -> (i32, i32) {
    %c0_i32 = arith.constant 0 : i32
    %c0_i32_0 = arith.constant 0 : i32
    %c0_i32_1 = arith.constant 0 : i32
    return %c0_i32, %c0_i32_0 : i32, i32
  }
  func.func @transform_16(%arg0: i32) -> (i32, i32) {
    %c0_i32 = arith.constant 0 : i32
    %c0_i32_0 = arith.constant 0 : i32
    %c0_i32_1 = arith.constant 0 : i32
    return %c0_i32, %c0_i32_0 : i32, i32
  }
  func.func @transform_17(%arg0: i32) -> (i32, i32, i32) {
    %c0_i32 = arith.constant 0 : i32
    %c0_i32_0 = arith.constant 0 : i32
    %c0_i32_1 = arith.constant 0 : i32
    return %arg0, %c0_i32, %c0_i32_0 : i32, i32, i32
  }
}

</mosaic_0001>

<llo_original>
// kernel: bert_mlm_forward.9
$region0: #{bert_mlm_forward.9}
  #allocation0 [shape = 'u32[]', space=smem, size = 0x4, offset = 0x4, fixed_abs, tag = 'smem constant byte address 0x4 - core index']
  #allocation1 [shape = 'u32[144,128]{1,0:T(1,128)}', space=vmem, size = 0x12000, scoped, tag = 'internal scratch']
  %s0 = inlined_call_operand.hbm [shape: bf16[32,128], index: 0, kind: input, shape index: {}]
  %s1 = inlined_call_operand.hbm [shape: bf16[128,2048], index: 1, kind: input, shape index: {}]
  %s2 = inlined_call_operand.hbm [shape: f32[1,2048], index: 2, kind: input, shape index: {}]
  %s3 = inlined_call_operand.hbm [shape: bf16[32,2048], index: 3, kind: output, shape index: {}]
  %s4 = sld [smem:[#allocation0]]
  $region57: #{bert_mlm_forward.9} parent=0
    _
  %s6 = ssub.s32 1, %s4
  %s7 = scalar_select 0, %s6, %s4
  $region1: #{bert_mlm_forward.9} parent=0
    #allocation2 [shape = 'u8[8192]{0}', space=vmem, size = 0x2000, scoped, tag = 'input window, operand 0, single buffered']
    #allocation3 [shape = 's32[2]{0}', space=sflag, size = 0x8, scoped, tag = 'scoped memory for bert_mlm_forward.9']
    #allocation4 [shape = 's32[2]{0}', space=sflag, size = 0x8, scoped, tag = 'scoped memory for bert_mlm_forward.9']
    #allocation5 [shape = 'u8[524288]{0}', space=vmem, size = 0x80000, scoped, tag = 'input window, operand 1']
    #allocation6 [shape = 's32[2]{0}', space=sflag, size = 0x8, scoped, tag = 'scoped memory for bert_mlm_forward.9']
    #allocation7 [shape = 'u8[8192]{0}', space=vmem, size = 0x2000, scoped, tag = 'input window, operand 2']
    #allocation8 [shape = 'u8[131072]{0}', space=vmem, size = 0x20000, scoped, tag = 'output window, operand 0']
    %8 = vsyncpa [#allocation3], 0
    %9 = vsyncpa [#allocation6], 0
    %s10 = scalar_lea.sflag [#allocation6], 1
    %11 = vsyncpa %s10, 0
    %12 = vsyncpa [#allocation4], 0
    %s13 = scalar_lea.sflag [#allocation4], 1
    %14 = vsyncpa %s13, 0
    loop: start=0, step=1, limit=4
    $region2: #{bert_mlm_forward.9} parent=1 // loop_pre_header
      _
    $region3: #{bert_mlm_forward.9} parent=1 // loop_header
      %s16 = sphi 0, %s20
      %p17 = scmp.ge.s32.totalorder %s16, 4
      %s23 = sphi 0, %s35
      %s24 = sphi 0, %s31
      %s25 = sphi 0, %s23
      %s26 = sphi 0, %s24
      %s27 = sphi 0, %s25
      %s28 = sphi 0, %s26
      %s38 = sphi 0, %s40
      %s41 = sphi 0, %s38
      %s42 = sphi 0, %s41
      %s58 = sphi 0, %s42
      %s64 = sphi 0, %s66
      %s67 = sphi 0, %s64
      %s68 = sphi 0, %s67
      %s84 = sphi 0, %s68
      %s90 = sphi 0, %s92
      %s93 = sphi 0, %s90
      %s94 = sphi 0, %s93
      %s110 = sphi 0, %s94
      %s118 = sphi 0, %s120
      %s121 = sphi 0, %s118
      %s122 = sphi 0, %s121
      %s138 = sphi 0, %s122
    $region4: #{bert_mlm_forward.9} parent=1 // loop_header_branch
      %19 = sbr.rel (%p17) target = $region8
    $region5: #{bert_mlm_forward.9} parent=1 // loop_body
      %s21 = ssub.s32 %s16, 1
      %s22 = ssub.s32 %s16, 2
      %s29 = sadd.s32 1, %s24
      %p30 = scmp.ge.s32.totalorder %s29, 1
      %s31 = scalar_select %p30, 0, %s29
      %s32 = sadd.s32 1, %s23
      %s33 = scalar_select %p30, %s32, %s23
      %p34 = scmp.ge.s32.totalorder %s33, 2
      %s35 = scalar_select %p34, 0, %s33
      %s36 = ssub.s32 %s24, %s31
      %p37 = scmp.eq.s32.totalorder %s36, 0
      %s39 = sadd.s32 %s38, 1
      %s40 = scalar_select %p37, %s38, %s39
      %p43 = pneg %p37
      %p44 = scmp.eq.s32.totalorder %s16, 1
      %p45 = por %p43, %p44
      %p46 = scmp.ne.s32.totalorder %s38, %s41
      %p47 = scmp.eq.s32.totalorder %s16, 0
      %p48 = por %p46, %p47
      %p49 = scmp.ne.s32.totalorder %s38, %s41
      %p50 = scmp.eq.s32.totalorder %s21, 1
      %p51 = por %p49, %p50
      %p52 = scmp.ne.s32.totalorder %s41, %s42
      %p53 = scmp.eq.s32.totalorder %s21, 0
      %p54 = por %p52, %p53
      %p55 = scmp.ne.s32.totalorder %s41, %s42
      %p56 = scmp.eq.s32.totalorder %s22, 1
      %p57 = por %p55, %p56
      %p59 = scmp.ne.s32.totalorder %s42, %s58
      %p60 = scmp.eq.s32.totalorder %s22, 0
      %p61 = por %p59, %p60
      %s62 = ssub.s32 %s23, %s35
      %p63 = scmp.eq.s32.totalorder %s62, 0
      %s65 = sadd.s32 %s64, 1
      %s66 = scalar_select %p63, %s64, %s65
      %p69 = pneg %p63
      %p70 = scmp.eq.s32.totalorder %s16, 1
      %p71 = por %p69, %p70
      %p72 = scmp.ne.s32.totalorder %s64, %s67
      %p73 = scmp.eq.s32.totalorder %s16, 0
      %p74 = por %p72, %p73
      %p75 = scmp.ne.s32.totalorder %s64, %s67
      %p76 = scmp.eq.s32.totalorder %s21, 1
      %p77 = por %p75, %p76
      %p78 = scmp.ne.s32.totalorder %s67, %s68
      %p79 = scmp.eq.s32.totalorder %s21, 0
      %p80 = por %p78, %p79
      %p81 = scmp.ne.s32.totalorder %s67, %s68
      %p82 = scmp.eq.s32.totalorder %s22, 1
      %p83 = por %p81, %p82
      %p85 = scmp.ne.s32.totalorder %s68, %s84
      %p86 = scmp.eq.s32.totalorder %s22, 0
      %p87 = por %p85, %p86
      %s88 = ssub.s32 %s23, %s35
      %p89 = scmp.eq.s32.totalorder %s88, 0
      %s91 = sadd.s32 %s90, 1
      %s92 = scalar_select %p89, %s90, %s91
      %p95 = pneg %p89
      %p96 = scmp.eq.s32.totalorder %s16, 1
      %p97 = por %p95, %p96
      %p98 = scmp.ne.s32.totalorder %s90, %s93
      %p99 = scmp.eq.s32.totalorder %s16, 0
      %p100 = por %p98, %p99
      %p101 = scmp.ne.s32.totalorder %s90, %s93
      %p102 = scmp.eq.s32.totalorder %s21, 1
      %p103 = por %p101, %p102
      %p104 = scmp.ne.s32.totalorder %s93, %s94
      %p105 = scmp.eq.s32.totalorder %s21, 0
      %p106 = por %p104, %p105
      %p107 = scmp.ne.s32.totalorder %s93, %s94
      %p108 = scmp.eq.s32.totalorder %s22, 1
      %p109 = por %p107, %p108
      %p111 = scmp.ne.s32.totalorder %s94, %s110
      %p112 = scmp.eq.s32.totalorder %s22, 0
      %p113 = por %p111, %p112
      %s114 = ssub.s32 %s24, %s31
      %s115 = ssub.s32 %s23, %s35
      %s116 = sor.u32 %s114, %s115
      %p117 = scmp.eq.s32.totalorder %s116, 0
      %s119 = sadd.s32 %s118, 1
      %s120 = scalar_select %p117, %s118, %s119
      %p123 = pneg %p117
      %p124 = scmp.eq.s32.totalorder %s16, 1
      %p125 = por %p123, %p124
      %p126 = scmp.ne.s32.totalorder %s118, %s121
      %p127 = scmp.eq.s32.totalorder %s16, 0
      %p128 = por %p126, %p127
      %p129 = scmp.ne.s32.totalorder %s118, %s121
      %p130 = scmp.eq.s32.totalorder %s21, 1
      %p131 = por %p129, %p130
      %p132 = scmp.ne.s32.totalorder %s121, %s122
      %p133 = scmp.eq.s32.totalorder %s21, 0
      %p134 = por %p132, %p133
      %p135 = scmp.ne.s32.totalorder %s121, %s122
      %p136 = scmp.eq.s32.totalorder %s22, 1
      %p137 = por %p135, %p136
      %p139 = scmp.ne.s32.totalorder %s122, %s138
      %p140 = scmp.eq.s32.totalorder %s22, 0
      %p141 = por %p139, %p140
      %p142 = scmp.le.s32.totalorder 1, %s16
      %p143 = scmp.lt.s32.totalorder %s16, 3
      %p144 = pnand %p142, %p143
      %p145 = pneg %p144
      // Predicated region
      $region9: #{bert_mlm_forward.9} parent=5 // pred_check
        _
      $region10: #{bert_mlm_forward.9} parent=5 // pred_check_branch
        %147 = sbr.rel (%p144) target = $region12
      $region11: #{bert_mlm_forward.9} parent=5 // pred_region
        %s148 = ssub.s32 %s16, 1
        // Predicated region
        $region13: #{bert_mlm_forward.9} parent=11 // pred_check
          %p149 = pneg %p54
        $region14: #{bert_mlm_forward.9} parent=11 // pred_check_branch
          %151 = sbr.rel (%p149) target = $region16
        $region15: #{bert_mlm_forward.9} parent=11 // pred_region
          %s152 = smul.u32 4, %s26
          %s154 = ssub.s32 256, 256
          %155 = vsyncadd [#allocation3], %s154
          %s156 = smul.addr %s152, 64
          %s157 = scalar_lea.hbm %s0, %s156
          %s158 = sshll.u32 [#allocation2], 4
          %s159 = int_to_ptr.vmem [resolvable:$true] %s158
          %164 = dma.hbm_to_vmem [thread:$0]  %s157, 256, %s159, [#allocation3], 64, 64, 4
        $region16: #{bert_mlm_forward.9} parent=11 // pred_fallthru
          _
      $region12: #{bert_mlm_forward.9} parent=5 // pred_fallthru
        _
      %p165 = scmp.lt.s32.totalorder %s16, 2
      // Predicated region
      $region17: #{bert_mlm_forward.9} parent=5 // pred_check
        %p166 = pneg %p165
      $region18: #{bert_mlm_forward.9} parent=5 // pred_check_branch
        %168 = sbr.rel (%p166) target = $region20
      $region19: #{bert_mlm_forward.9} parent=5 // pred_region
        // Predicated region
        $region21: #{bert_mlm_forward.9} parent=19 // pred_check
          %p169 = pneg %p74
        $region22: #{bert_mlm_forward.9} parent=19 // pred_check_branch
          %171 = sbr.rel (%p169) target = $region24
        $region23: #{bert_mlm_forward.9} parent=19 // pred_region
          %s172 = sand.u32 %s16, 1
          %s173 = scalar_lea.sflag [#allocation6], %s172
          %s174 = sand.u32 %s64, 1
          %s175 = smul.addr %s174, 512
          %s176 = scalar_lea.vmem [#allocation5], %s175
          %s177 = smul.u32 8, %s23
          %s179 = ssub.s32 8192, 8192
          %180 = vsyncadd %s173, %s179
          %s181 = smul.addr %s177, 64
          %s182 = scalar_lea.hbm %s1, %s181
          %s183 = sshll.u32 %s176, 4
          %s184 = int_to_ptr.vmem [resolvable:$true] %s183
          %189 = dma.hbm_to_vmem [thread:$0]  %s182, 8192, %s184, %s173, 1024, 512, 32
        $region24: #{bert_mlm_forward.9} parent=19 // pred_fallthru
          _
        // Predicated region
        $region25: #{bert_mlm_forward.9} parent=19 // pred_check
          %p190 = pneg %p100
        $region26: #{bert_mlm_forward.9} parent=19 // pred_check_branch
          %192 = sbr.rel (%p190) target = $region28
        $region27: #{bert_mlm_forward.9} parent=19 // pred_region
          %s193 = sand.u32 %s16, 1
          %s194 = scalar_lea.sflag [#allocation6], %s193
          %s195 = sand.u32 %s90, 1
          %s196 = smul.addr %s195, 8
          %s197 = scalar_lea.vmem [#allocation7], %s196
          %s198 = smul.u32 8, %s23
          %s200 = ssub.s32 128, 128
          %201 = vsyncadd %s194, %s200
          %s202 = smul.addr %s198, 16
          %s203 = scalar_lea.hbm %s2, %s202
          %s205 = sshll.u32 %s197, 4
          %s206 = int_to_ptr.vmem [resolvable:$true] %s205
          %208 = dma.hbm_to_vmem [thread:$0]  %s203, 128, %s206, %s194
        $region28: #{bert_mlm_forward.9} parent=19 // pred_fallthru
          _
      $region20: #{bert_mlm_forward.9} parent=5 // pred_fallthru
        _
      %p209 = scmp.le.s32.totalorder 1, %s16
      %p210 = scmp.lt.s32.totalorder %s16, 3
      %p211 = pnand %p209, %p210
      %p212 = pneg %p211
      // Predicated region
      $region29: #{bert_mlm_forward.9} parent=5 // pred_check
        _
      $region30: #{bert_mlm_forward.9} parent=5 // pred_check_branch
        %214 = sbr.rel (%p211) target = $region32
      $region31: #{bert_mlm_forward.9} parent=5 // pred_region
        %s215 = ssub.s32 %s16, 1
        // Predicated region
        $region33: #{bert_mlm_forward.9} parent=31 // pred_check
          %p216 = pneg %p54
        $region34: #{bert_mlm_forward.9} parent=31 // pred_check_branch
          %218 = sbr.rel (%p216) target = $region36
        $region35: #{bert_mlm_forward.9} parent=31 // pred_region
          %219 = dma.done [#allocation3], 256
        $region36: #{bert_mlm_forward.9} parent=31 // pred_fallthru
          _
        %s220 = sand.u32 %s21, 1
        %s221 = scalar_lea.sflag [#allocation6], %s220
        %s222 = sand.u32 %s67, 1
        %s223 = smul.addr %s222, 512
        %s224 = scalar_lea.vmem [#allocation5], %s223
        // Predicated region
        $region37: #{bert_mlm_forward.9} parent=31 // pred_check
          %p225 = pneg %p80
        $region38: #{bert_mlm_forward.9} parent=31 // pred_check_branch
          %227 = sbr.rel (%p225) target = $region40
        $region39: #{bert_mlm_forward.9} parent=31 // pred_region
          %228 = dma.done %s221, 8192
        $region40: #{bert_mlm_forward.9} parent=31 // pred_fallthru
          _
        %s229 = sand.u32 %s21, 1
        %s230 = scalar_lea.sflag [#allocation6], %s229
        %s231 = sand.u32 %s93, 1
        %s232 = smul.addr %s231, 8
        %s233 = scalar_lea.vmem [#allocation7], %s232
        // Predicated region
        $region41: #{bert_mlm_forward.9} parent=31 // pred_check
          %p234 = pneg %p106
        $region42: #{bert_mlm_forward.9} parent=31 // pred_check_branch
          %236 = sbr.rel (%p234) target = $region44
        $region43: #{bert_mlm_forward.9} parent=31 // pred_region
          %237 = dma.done %s230, 128
        $region44: #{bert_mlm_forward.9} parent=31 // pred_fallthru
          _
        %p238 = pneg %p54
        %p239 = pneg %p51
        %s240 = sand.u32 %s21, 1
        %s241 = scalar_lea.sflag [#allocation6], %s240
        %s242 = sand.u32 %s67, 1
        %s243 = smul.addr %s242, 512
        %s244 = scalar_lea.vmem [#allocation5], %s243
        %p245 = pneg %p80
        %p246 = pneg %p77
        %s247 = sand.u32 %s21, 1
        %s248 = scalar_lea.sflag [#allocation6], %s247
        %s249 = sand.u32 %s93, 1
        %s250 = smul.addr %s249, 8
        %s251 = scalar_lea.vmem [#allocation7], %s250
        %p252 = pneg %p106
        %p253 = pneg %p103
        %p254 = pneg %p134
        %p255 = pneg %p131
        %s256 = sand.u32 %s121, 1
        %s257 = scalar_lea.sflag [#allocation4], %s256
        %s258 = sand.u32 %s121, 1
        %s259 = smul.addr %s258, 128
        %s260 = scalar_lea.vmem [#allocation8], %s259
        %s261 = smul.u32 4, %s26
        %s262 = smul.u32 8, %s25
        %s263 = smul.u32 8, %s25
        %s264 = smul.u32 4, %s26
        %s265 = smul.u32 8, %s25
        %v267 = vld [vmem:[#allocation2] sm:$0xf]
        %v268 = vld [vmem:[#allocation2 + $0x4] sm:$0xf]
        %v269 = vld [vmem:[#allocation2 + $0x8] sm:$0xf]
        %v270 = vld [vmem:[#allocation2 + $0xc] sm:$0xf]
        %v271 = vld [vmem:[%s224] sm:$0xff]
        %v272 = vld [vmem:[%s224 + $0x8] sm:$0xff]
        %v273 = vld [vmem:[%s224 + $0x10] sm:$0xff]
        %v274 = vld [vmem:[%s224 + $0x18] sm:$0xff]
        %v275 = vld [vmem:[%s224 + $0x20] sm:$0xff]
        %v276 = vld [vmem:[%s224 + $0x28] sm:$0xff]
        %v277 = vld [vmem:[%s224 + $0x30] sm:$0xff]
        %v278 = vld [vmem:[%s224 + $0x38] sm:$0xff]
        %v279 = vld [vmem:[%s224 + $0x40] sm:$0xff]
        %v280 = vld [vmem:[%s224 + $0x48] sm:$0xff]
        %v281 = vld [vmem:[%s224 + $0x50] sm:$0xff]
        %v282 = vld [vmem:[%s224 + $0x58] sm:$0xff]
        %v283 = vld [vmem:[%s224 + $0x60] sm:$0xff]
        %v284 = vld [vmem:[%s224 + $0x68] sm:$0xff]
        %v285 = vld [vmem:[%s224 + $0x70] sm:$0xff]
        %v286 = vld [vmem:[%s224 + $0x78] sm:$0xff]
        %v287 = vld [vmem:[%s224 + $0x80] sm:$0xff]
        %v288 = vld [vmem:[%s224 + $0x88] sm:$0xff]
        %v289 = vld [vmem:[%s224 + $0x90] sm:$0xff]
        %v290 = vld [vmem:[%s224 + $0x98] sm:$0xff]
        %v291 = vld [vmem:[%s224 + $0xa0] sm:$0xff]
        %v292 = vld [vmem:[%s224 + $0xa8] sm:$0xff]
        %v293 = vld [vmem:[%s224 + $0xb0] sm:$0xff]
        %v294 = vld [vmem:[%s224 + $0xb8] sm:$0xff]
        %v295 = vld [vmem:[%s224 + $0xc0] sm:$0xff]
        %v296 = vld [vmem:[%s224 + $0xc8] sm:$0xff]
        %v297 = vld [vmem:[%s224 + $0xd0] sm:$0xff]
        %v298 = vld [vmem:[%s224 + $0xd8] sm:$0xff]
        %v299 = vld [vmem:[%s224 + $0xe0] sm:$0xff]
        %v300 = vld [vmem:[%s224 + $0xe8] sm:$0xff]
        %v301 = vld [vmem:[%s224 + $0xf0] sm:$0xff]
        %v302 = vld [vmem:[%s224 + $0xf8] sm:$0xff]
        %v303 = vld [vmem:[%s224 + $0x100] sm:$0xff]
        %v304 = vld [vmem:[%s224 + $0x108] sm:$0xff]
        %v305 = vld [vmem:[%s224 + $0x110] sm:$0xff]
        %v306 = vld [vmem:[%s224 + $0x118] sm:$0xff]
        %v307 = vld [vmem:[%s224 + $0x120] sm:$0xff]
        %v308 = vld [vmem:[%s224 + $0x128] sm:$0xff]
        %v309 = vld [vmem:[%s224 + $0x130] sm:$0xff]
        %v310 = vld [vmem:[%s224 + $0x138] sm:$0xff]
        %v311 = vld [vmem:[%s224 + $0x140] sm:$0xff]
        %v312 = vld [vmem:[%s224 + $0x148] sm:$0xff]
        %v313 = vld [vmem:[%s224 + $0x150] sm:$0xff]
        %v314 = vld [vmem:[%s224 + $0x158] sm:$0xff]
        %v315 = vld [vmem:[%s224 + $0x160] sm:$0xff]
        %v316 = vld [vmem:[%s224 + $0x168] sm:$0xff]
        %v317 = vld [vmem:[%s224 + $0x170] sm:$0xff]
        %v318 = vld [vmem:[%s224 + $0x178] sm:$0xff]
        %v319 = vld [vmem:[%s224 + $0x180] sm:$0xff]
        %v320 = vld [vmem:[%s224 + $0x188] sm:$0xff]
        %v321 = vld [vmem:[%s224 + $0x190] sm:$0xff]
        %v322 = vld [vmem:[%s224 + $0x198] sm:$0xff]
        %v323 = vld [vmem:[%s224 + $0x1a0] sm:$0xff]
        %v324 = vld [vmem:[%s224 + $0x1a8] sm:$0xff]
        %v325 = vld [vmem:[%s224 + $0x1b0] sm:$0xff]
        %v326 = vld [vmem:[%s224 + $0x1b8] sm:$0xff]
        %v327 = vld [vmem:[%s224 + $0x1c0] sm:$0xff]
        %v328 = vld [vmem:[%s224 + $0x1c8] sm:$0xff]
        %v329 = vld [vmem:[%s224 + $0x1d0] sm:$0xff]
        %v330 = vld [vmem:[%s224 + $0x1d8] sm:$0xff]
        %v331 = vld [vmem:[%s224 + $0x1e0] sm:$0xff]
        %v332 = vld [vmem:[%s224 + $0x1e8] sm:$0xff]
        %v333 = vld [vmem:[%s224 + $0x1f0] sm:$0xff]
        %v334 = vld [vmem:[%s224 + $0x1f8] sm:$0xff]
        %v335 = vld [vmem:[%s233] sm:$0xff]
        %v337 = vlaneseq
        %v338 = vshrl.u32 %v337, 7
        %v339 = vsub.s32 0, %v338
        %v340 = vrot.slane %v335, %v339
        %v341 = vlaneseq
        %v342 = vshrl.u32 %v341, 7
        %v343 = vsub.s32 1, %v342
        %v344 = vrot.slane %v335, %v343
        %v345 = vlaneseq
        %v346 = vshrl.u32 %v345, 7
        %v347 = vsub.s32 2, %v346
        %v348 = vrot.slane %v335, %v347
        %v349 = vlaneseq
        %v350 = vshrl.u32 %v349, 7
        %v351 = vsub.s32 3, %v350
        %v352 = vrot.slane %v335, %v351
        %v353 = vlaneseq
        %v354 = vshrl.u32 %v353, 7
        %v355 = vsub.s32 4, %v354
        %v356 = vrot.slane %v335, %v355
        %v357 = vlaneseq
        %v358 = vshrl.u32 %v357, 7
        %v359 = vsub.s32 5, %v358
        %v360 = vrot.slane %v335, %v359
        %v361 = vlaneseq
        %v362 = vshrl.u32 %v361, 7
        %v363 = vsub.s32 6, %v362
        %v364 = vrot.slane %v335, %v363
        %v365 = vlaneseq
        %v366 = vshrl.u32 %v365, 7
        %v367 = vsub.s32 7, %v366
        %v368 = vrot.slane %v335, %v367
        %v381 = vunpack.c.l.b16 %v267
        %v382 = vunpack.c.l.b16 %v268
        %v383 = vunpack.c.l.b16 %v269
        %v384 = vunpack.c.l.b16 %v270
        %v385 = vpack.c.b16 %v382, %v381
        %v386 = vpack.c.b16 %v384, %v383
        %v453 = vunpack.c.l.b16 %v271
        %v454 = vunpack.c.h.b16 %v271
        %v455 = vunpack.c.l.b16 %v272
        %v456 = vunpack.c.h.b16 %v272
        %v457 = vunpack.c.l.b16 %v273
        %v458 = vunpack.c.h.b16 %v273
        %v459 = vunpack.c.l.b16 %v274
        %v460 = vunpack.c.h.b16 %v274
        %v461 = vunpack.c.l.b16 %v275
        %v462 = vunpack.c.h.b16 %v275
        %v463 = vunpack.c.l.b16 %v276
        %v464 = vunpack.c.h.b16 %v276
        %v465 = vunpack.c.l.b16 %v277
        %v466 = vunpack.c.h.b16 %v277
        %v467 = vunpack.c.l.b16 %v278
        %v468 = vunpack.c.h.b16 %v278
        %v469 = vunpack.c.l.b16 %v279
        %v470 = vunpack.c.h.b16 %v279
        %v471 = vunpack.c.l.b16 %v280
        %v472 = vunpack.c.h.b16 %v280
        %v473 = vunpack.c.l.b16 %v281
        %v474 = vunpack.c.h.b16 %v281
        %v475 = vunpack.c.l.b16 %v282
        %v476 = vunpack.c.h.b16 %v282
        %v477 = vunpack.c.l.b16 %v283
        %v478 = vunpack.c.h.b16 %v283
        %v479 = vunpack.c.l.b16 %v284
        %v480 = vunpack.c.h.b16 %v284
        %v481 = vunpack.c.l.b16 %v285
        %v482 = vunpack.c.h.b16 %v285
        %v483 = vunpack.c.l.b16 %v286
        %v484 = vunpack.c.h.b16 %v286
        %v485 = vunpack.c.l.b16 %v287
        %v486 = vunpack.c.h.b16 %v287
        %v487 = vunpack.c.l.b16 %v288
        %v488 = vunpack.c.h.b16 %v288
        %v489 = vunpack.c.l.b16 %v289
        %v490 = vunpack.c.h.b16 %v289
        %v491 = vunpack.c.l.b16 %v290
        %v492 = vunpack.c.h.b16 %v290
        %v493 = vunpack.c.l.b16 %v291
        %v494 = vunpack.c.h.b16 %v291
        %v495 = vunpack.c.l.b16 %v292
        %v496 = vunpack.c.h.b16 %v292
        %v497 = vunpack.c.l.b16 %v293
        %v498 = vunpack.c.h.b16 %v293
        %v499 = vunpack.c.l.b16 %v294
        %v500 = vunpack.c.h.b16 %v294
        %v501 = vunpack.c.l.b16 %v295
        %v502 = vunpack.c.h.b16 %v295
        %v503 = vunpack.c.l.b16 %v296
        %v504 = vunpack.c.h.b16 %v296
        %v505 = vunpack.c.l.b16 %v297
        %v506 = vunpack.c.h.b16 %v297
        %v507 = vunpack.c.l.b16 %v298
        %v508 = vunpack.c.h.b16 %v298
        %v509 = vunpack.c.l.b16 %v299
        %v510 = vunpack.c.h.b16 %v299
        %v511 = vunpack.c.l.b16 %v300
        %v512 = vunpack.c.h.b16 %v300
        %v513 = vunpack.c.l.b16 %v301
        %v514 = vunpack.c.h.b16 %v301
        %v515 = vunpack.c.l.b16 %v302
        %v516 = vunpack.c.h.b16 %v302
        %v517 = vunpack.c.l.b16 %v303
        %v518 = vunpack.c.h.b16 %v303
        %v519 = vunpack.c.l.b16 %v304
        %v520 = vunpack.c.h.b16 %v304
        %v521 = vunpack.c.l.b16 %v305
        %v522 = vunpack.c.h.b16 %v305
        %v523 = vunpack.c.l.b16 %v306
        %v524 = vunpack.c.h.b16 %v306
        %v525 = vunpack.c.l.b16 %v307
        %v526 = vunpack.c.h.b16 %v307
        %v527 = vunpack.c.l.b16 %v308
        %v528 = vunpack.c.h.b16 %v308
        %v529 = vunpack.c.l.b16 %v309
        %v530 = vunpack.c.h.b16 %v309
        %v531 = vunpack.c.l.b16 %v310
        %v532 = vunpack.c.h.b16 %v310
        %v533 = vunpack.c.l.b16 %v311
        %v534 = vunpack.c.h.b16 %v311
        %v535 = vunpack.c.l.b16 %v312
        %v536 = vunpack.c.h.b16 %v312
        %v537 = vunpack.c.l.b16 %v313
        %v538 = vunpack.c.h.b16 %v313
        %v539 = vunpack.c.l.b16 %v314
        %v540 = vunpack.c.h.b16 %v314
        %v541 = vunpack.c.l.b16 %v315
        %v542 = vunpack.c.h.b16 %v315
        %v543 = vunpack.c.l.b16 %v316
        %v544 = vunpack.c.h.b16 %v316
        %v545 = vunpack.c.l.b16 %v317
        %v546 = vunpack.c.h.b16 %v317
        %v547 = vunpack.c.l.b16 %v318
        %v548 = vunpack.c.h.b16 %v318
        %v549 = vunpack.c.l.b16 %v319
        %v550 = vunpack.c.h.b16 %v319
        %v551 = vunpack.c.l.b16 %v320
        %v552 = vunpack.c.h.b16 %v320
        %v553 = vunpack.c.l.b16 %v321
        %v554 = vunpack.c.h.b16 %v321
        %v555 = vunpack.c.l.b16 %v322
        %v556 = vunpack.c.h.b16 %v322
        %v557 = vunpack.c.l.b16 %v323
        %v558 = vunpack.c.h.b16 %v323
        %v559 = vunpack.c.l.b16 %v324
        %v560 = vunpack.c.h.b16 %v324
        %v561 = vunpack.c.l.b16 %v325
        %v562 = vunpack.c.h.b16 %v325
        %v563 = vunpack.c.l.b16 %v326
        %v564 = vunpack.c.h.b16 %v326
        %v565 = vunpack.c.l.b16 %v327
        %v566 = vunpack.c.h.b16 %v327
        %v567 = vunpack.c.l.b16 %v328
        %v568 = vunpack.c.h.b16 %v328
        %v569 = vunpack.c.l.b16 %v329
        %v570 = vunpack.c.h.b16 %v329
        %v571 = vunpack.c.l.b16 %v330
        %v572 = vunpack.c.h.b16 %v330
        %v573 = vunpack.c.l.b16 %v331
        %v574 = vunpack.c.h.b16 %v331
        %v575 = vunpack.c.l.b16 %v332
        %v576 = vunpack.c.h.b16 %v332
        %v577 = vunpack.c.l.b16 %v333
        %v578 = vunpack.c.h.b16 %v333
        %v579 = vunpack.c.l.b16 %v334
        %v580 = vunpack.c.h.b16 %v334
        %v581 = vpack.c.b16 %v461, %v453
        %v582 = vpack.c.b16 %v462, %v454
        %v583 = vpack.c.b16 %v463, %v455
        %v584 = vpack.c.b16 %v464, %v456
        %v585 = vpack.c.b16 %v465, %v457
        %v586 = vpack.c.b16 %v466, %v458
        %v587 = vpack.c.b16 %v467, %v459
        %v588 = vpack.c.b16 %v468, %v460
        %v589 = vpack.c.b16 %v477, %v469
        %v590 = vpack.c.b16 %v478, %v470
        %v591 = vpack.c.b16 %v479, %v471
        %v592 = vpack.c.b16 %v480, %v472
        %v593 = vpack.c.b16 %v481, %v473
        %v594 = vpack.c.b16 %v482, %v474
        %v595 = vpack.c.b16 %v483, %v475
        %v596 = vpack.c.b16 %v484, %v476
        %v597 = vpack.c.b16 %v493, %v485
        %v598 = vpack.c.b16 %v494, %v486
        %v599 = vpack.c.b16 %v495, %v487
        %v600 = vpack.c.b16 %v496, %v488
        %v601 = vpack.c.b16 %v497, %v489
        %v602 = vpack.c.b16 %v498, %v490
        %v603 = vpack.c.b16 %v499, %v491
        %v604 = vpack.c.b16 %v500, %v492
        %v605 = vpack.c.b16 %v509, %v501
        %v606 = vpack.c.b16 %v510, %v502
        %v607 = vpack.c.b16 %v511, %v503
        %v608 = vpack.c.b16 %v512, %v504
        %v609 = vpack.c.b16 %v513, %v505
        %v610 = vpack.c.b16 %v514, %v506
        %v611 = vpack.c.b16 %v515, %v507
        %v612 = vpack.c.b16 %v516, %v508
        %v613 = vpack.c.b16 %v525, %v517
        %v614 = vpack.c.b16 %v526, %v518
        %v615 = vpack.c.b16 %v527, %v519
        %v616 = vpack.c.b16 %v528, %v520
        %v617 = vpack.c.b16 %v529, %v521
        %v618 = vpack.c.b16 %v530, %v522
        %v619 = vpack.c.b16 %v531, %v523
        %v620 = vpack.c.b16 %v532, %v524
        %v621 = vpack.c.b16 %v541, %v533
        %v622 = vpack.c.b16 %v542, %v534
        %v623 = vpack.c.b16 %v543, %v535
        %v624 = vpack.c.b16 %v544, %v536
        %v625 = vpack.c.b16 %v545, %v537
        %v626 = vpack.c.b16 %v546, %v538
        %v627 = vpack.c.b16 %v547, %v539
        %v628 = vpack.c.b16 %v548, %v540
        %v629 = vpack.c.b16 %v557, %v549
        %v630 = vpack.c.b16 %v558, %v550
        %v631 = vpack.c.b16 %v559, %v551
        %v632 = vpack.c.b16 %v560, %v552
        %v633 = vpack.c.b16 %v561, %v553
        %v634 = vpack.c.b16 %v562, %v554
        %v635 = vpack.c.b16 %v563, %v555
        %v636 = vpack.c.b16 %v564, %v556
        %v637 = vpack.c.b16 %v573, %v565
        %v638 = vpack.c.b16 %v574, %v566
        %v639 = vpack.c.b16 %v575, %v567
        %v640 = vpack.c.b16 %v576, %v568
        %v641 = vpack.c.b16 %v577, %v569
        %v642 = vpack.c.b16 %v578, %v570
        %v643 = vpack.c.b16 %v579, %v571
        %v644 = vpack.c.b16 %v580, %v572
        %709 = vmatprep.subr.bf16.mxu0 %v582
        %710 = vmatpush1.bf16.msra.mxu0 %v581
        %711 = vmatprep.subr.bf16.mxu0 %v590
        %712 = vmatpush1.bf16.msra.mxu0 %v589
        %713 = vmatprep.subr.bf16.mxu0 %v598
        %714 = vmatpush1.bf16.msra.mxu0 %v597
        %715 = vmatprep.subr.bf16.mxu0 %v606
        %716 = vmatpush1.bf16.msra.mxu0 %v605
        %717 = vmatprep.subr.bf16.mxu0 %v614
        %718 = vmatpush1.bf16.msra.mxu0 %v613
        %719 = vmatprep.subr.bf16.mxu0 %v622
        %720 = vmatpush1.bf16.msra.mxu0 %v621
        %721 = vmatprep.subr.bf16.mxu0 %v630
        %722 = vmatpush1.bf16.msra.mxu0 %v629
        %723 = vmatprep.subr.bf16.mxu0 %v638
        %724 = vmatpush1.bf16.msra.mxu0 %v637
        %725 = vmatprep.subr.bf16.mxu0 0
        %726 = vmatpush1.bf16.msra.mxu0 0
        %727 = vmatprep.subr.bf16.mxu0 0
        %728 = vmatpush1.bf16.msra.mxu0 0
        %729 = vmatprep.subr.bf16.mxu0 0
        %730 = vmatpush1.bf16.msra.mxu0 0
        %731 = vmatprep.subr.bf16.mxu0 0
        %732 = vmatpush1.bf16.msra.mxu0 0
        %733 = vmatprep.subr.bf16.mxu0 0
        %734 = vmatpush1.bf16.msra.mxu0 0
        %735 = vmatprep.subr.bf16.mxu0 0
        %736 = vmatpush1.bf16.msra.mxu0 0
        %737 = vmatprep.subr.bf16.mxu0 0
        %738 = vmatpush1.bf16.msra.mxu0 0
        %739 = vmatprep.subr.bf16.mxu0 0
        %740 = vmatpush1.bf16.msra.mxu0 0
        %741 = vmatprep.mubr.bf16.mxu0 0
        %742 = vmatmul.mubr.bf16.gmra.mrb[0].mxu0 %v385
        %v743 = vpop.f32.mrb[0].mxu0
        %v744 = vadd.f32 %v340, %v743
        %v745 = vpop.f32.mrb[0].mxu0
        %v746 = vadd.f32 %v344, %v745
        %v747 = vpop.f32.mrb[0].mxu0
        %v748 = vadd.f32 %v340, %v747
        %v749 = vpop.f32.mrb[0].mxu0
        %v750 = vadd.f32 %v344, %v749
        %751 = vmatprep.mubr.bf16.mxu0 0
        %752 = vmatmul.mubr.bf16.gmra.mrb[0].mxu0 %v386
        %v753 = vpop.f32.mrb[0].mxu0
        %v754 = vadd.f32 %v340, %v753
        %v755 = vpop.f32.mrb[0].mxu0
        %v756 = vadd.f32 %v344, %v755
        %v757 = vpop.f32.mrb[0].mxu0
        %v758 = vadd.f32 %v340, %v757
        %v759 = vpop.f32.mrb[0].mxu0
        %v760 = vadd.f32 %v344, %v759
        %761 = vdwg.mxu0
        %762 = vmatprep.subr.bf16.mxu0 %v584
        %763 = vmatpush1.bf16.msra.mxu0 %v583
        %764 = vmatprep.subr.bf16.mxu0 %v592
        %765 = vmatpush1.bf16.msra.mxu0 %v591
        %766 = vmatprep.subr.bf16.mxu0 %v600
        %767 = vmatpush1.bf16.msra.mxu0 %v599
        %768 = vmatprep.subr.bf16.mxu0 %v608
        %769 = vmatpush1.bf16.msra.mxu0 %v607
        %770 = vmatprep.subr.bf16.mxu0 %v616
        %771 = vmatpush1.bf16.msra.mxu0 %v615
        %772 = vmatprep.subr.bf16.mxu0 %v624
        %773 = vmatpush1.bf16.msra.mxu0 %v623
        %774 = vmatprep.subr.bf16.mxu0 %v632
        %775 = vmatpush1.bf16.msra.mxu0 %v631
        %776 = vmatprep.subr.bf16.mxu0 %v640
        %777 = vmatpush1.bf16.msra.mxu0 %v639
        %778 = vmatprep.subr.bf16.mxu0 0
        %779 = vmatpush1.bf16.msra.mxu0 0
        %780 = vmatprep.subr.bf16.mxu0 0
        %781 = vmatpush1.bf16.msra.mxu0 0
        %782 = vmatprep.subr.bf16.mxu0 0
        %783 = vmatpush1.bf16.msra.mxu0 0
        %784 = vmatprep.subr.bf16.mxu0 0
        %785 = vmatpush1.bf16.msra.mxu0 0
        %786 = vmatprep.subr.bf16.mxu0 0
        %787 = vmatpush1.bf16.msra.mxu0 0
        %788 = vmatprep.subr.bf16.mxu0 0
        %789 = vmatpush1.bf16.msra.mxu0 0
        %790 = vmatprep.subr.bf16.mxu0 0
        %791 = vmatpush1.bf16.msra.mxu0 0
        %792 = vmatprep.subr.bf16.mxu0 0
        %793 = vmatpush1.bf16.msra.mxu0 0
        %794 = vmatprep.mubr.bf16.mxu0 0
        %795 = vmatmul.mubr.bf16.gmra.mrb[0].mxu0 %v385
        %v796 = vpop.f32.mrb[0].mxu0
        %v797 = vadd.f32 %v348, %v796
        %v798 = vpop.f32.mrb[0].mxu0
        %v799 = vadd.f32 %v352, %v798
        %v800 = vpop.f32.mrb[0].mxu0
        %v801 = vadd.f32 %v348, %v800
        %v802 = vpop.f32.mrb[0].mxu0
        %v803 = vadd.f32 %v352, %v802
        %804 = vmatprep.mubr.bf16.mxu0 0
        %805 = vmatmul.mubr.bf16.gmra.mrb[0].mxu0 %v386
        %v806 = vpop.f32.mrb[0].mxu0
        %v807 = vadd.f32 %v348, %v806
        %v808 = vpop.f32.mrb[0].mxu0
        %v809 = vadd.f32 %v352, %v808
        %v810 = vpop.f32.mrb[0].mxu0
        %v811 = vadd.f32 %v348, %v810
        %v812 = vpop.f32.mrb[0].mxu0
        %v813 = vadd.f32 %v352, %v812
        %814 = vdwg.mxu0
        %815 = vmatprep.subr.bf16.mxu0 %v586
        %816 = vmatpush1.bf16.msra.mxu0 %v585
        %817 = vmatprep.subr.bf16.mxu0 %v594
        %818 = vmatpush1.bf16.msra.mxu0 %v593
        %819 = vmatprep.subr.bf16.mxu0 %v602
        %820 = vmatpush1.bf16.msra.mxu0 %v601
        %821 = vmatprep.subr.bf16.mxu0 %v610
        %822 = vmatpush1.bf16.msra.mxu0 %v609
        %823 = vmatprep.subr.bf16.mxu0 %v618
        %824 = vmatpush1.bf16.msra.mxu0 %v617
        %825 = vmatprep.subr.bf16.mxu0 %v626
        %826 = vmatpush1.bf16.msra.mxu0 %v625
        %827 = vmatprep.subr.bf16.mxu0 %v634
        %828 = vmatpush1.bf16.msra.mxu0 %v633
        %829 = vmatprep.subr.bf16.mxu0 %v642
        %830 = vmatpush1.bf16.msra.mxu0 %v641
        %831 = vmatprep.subr.bf16.mxu0 0
        %832 = vmatpush1.bf16.msra.mxu0 0
        %833 = vmatprep.subr.bf16.mxu0 0
        %834 = vmatpush1.bf16.msra.mxu0 0
        %835 = vmatprep.subr.bf16.mxu0 0
        %836 = vmatpush1.bf16.msra.mxu0 0
        %837 = vmatprep.subr.bf16.mxu0 0
        %838 = vmatpush1.bf16.msra.mxu0 0
        %839 = vmatprep.subr.bf16.mxu0 0
        %840 = vmatpush1.bf16.msra.mxu0 0
        %841 = vmatprep.subr.bf16.mxu0 0
        %842 = vmatpush1.bf16.msra.mxu0 0
        %843 = vmatprep.subr.bf16.mxu0 0
        %844 = vmatpush1.bf16.msra.mxu0 0
        %845 = vmatprep.subr.bf16.mxu0 0
        %846 = vmatpush1.bf16.msra.mxu0 0
        %847 = vmatprep.mubr.bf16.mxu0 0
        %848 = vmatmul.mubr.bf16.gmra.mrb[0].mxu0 %v385
        %v849 = vpop.f32.mrb[0].mxu0
        %v850 = vadd.f32 %v356, %v849
        %v851 = vpop.f32.mrb[0].mxu0
        %v852 = vadd.f32 %v360, %v851
        %v853 = vpop.f32.mrb[0].mxu0
        %v854 = vadd.f32 %v356, %v853
        %v855 = vpop.f32.mrb[0].mxu0
        %v856 = vadd.f32 %v360, %v855
        %857 = vmatprep.mubr.bf16.mxu0 0
        %858 = vmatmul.mubr.bf16.gmra.mrb[0].mxu0 %v386
        %v859 = vpop.f32.mrb[0].mxu0
        %v860 = vadd.f32 %v356, %v859
        %v861 = vpop.f32.mrb[0].mxu0
        %v862 = vadd.f32 %v360, %v861
        %v863 = vpop.f32.mrb[0].mxu0
        %v864 = vadd.f32 %v356, %v863
        %v865 = vpop.f32.mrb[0].mxu0
        %v866 = vadd.f32 %v360, %v865
        %867 = vdwg.mxu0
        %868 = vmatprep.subr.bf16.mxu0 %v588
        %869 = vmatpush1.bf16.msra.mxu0 %v587
        %870 = vmatprep.subr.bf16.mxu0 %v596
        %871 = vmatpush1.bf16.msra.mxu0 %v595
        %872 = vmatprep.subr.bf16.mxu0 %v604
        %873 = vmatpush1.bf16.msra.mxu0 %v603
        %874 = vmatprep.subr.bf16.mxu0 %v612
        %875 = vmatpush1.bf16.msra.mxu0 %v611
        %876 = vmatprep.subr.bf16.mxu0 %v620
        %877 = vmatpush1.bf16.msra.mxu0 %v619
        %878 = vmatprep.subr.bf16.mxu0 %v628
        %879 = vmatpush1.bf16.msra.mxu0 %v627
        %880 = vmatprep.subr.bf16.mxu0 %v636
        %881 = vmatpush1.bf16.msra.mxu0 %v635
        %882 = vmatprep.subr.bf16.mxu0 %v644
        %883 = vmatpush1.bf16.msra.mxu0 %v643
        %884 = vmatprep.subr.bf16.mxu0 0
        %885 = vmatpush1.bf16.msra.mxu0 0
        %886 = vmatprep.subr.bf16.mxu0 0
        %887 = vmatpush1.bf16.msra.mxu0 0
        %888 = vmatprep.subr.bf16.mxu0 0
        %889 = vmatpush1.bf16.msra.mxu0 0
        %890 = vmatprep.subr.bf16.mxu0 0
        %891 = vmatpush1.bf16.msra.mxu0 0
        %892 = vmatprep.subr.bf16.mxu0 0
        %893 = vmatpush1.bf16.msra.mxu0 0
        %894 = vmatprep.subr.bf16.mxu0 0
        %895 = vmatpush1.bf16.msra.mxu0 0
        %896 = vmatprep.subr.bf16.mxu0 0
        %897 = vmatpush1.bf16.msra.mxu0 0
        %898 = vmatprep.subr.bf16.mxu0 0
        %899 = vmatpush1.bf16.msra.mxu0 0
        %900 = vmatprep.mubr.bf16.mxu0 0
        %901 = vmatmul.mubr.bf16.gmra.mrb[0].mxu0 %v385
        %v902 = vpop.f32.mrb[0].mxu0
        %v903 = vadd.f32 %v364, %v902
        %v904 = vpop.f32.mrb[0].mxu0
        %v905 = vadd.f32 %v368, %v904
        %v906 = vpop.f32.mrb[0].mxu0
        %v907 = vadd.f32 %v364, %v906
        %v908 = vpop.f32.mrb[0].mxu0
        %v909 = vadd.f32 %v368, %v908
        %910 = vmatprep.mubr.bf16.mxu0 0
        %911 = vmatmul.mubr.bf16.gmra.mrb[0].mxu0 %v386
        %v912 = vpop.f32.mrb[0].mxu0
        %v913 = vadd.f32 %v364, %v912
        %v914 = vpop.f32.mrb[0].mxu0
        %v915 = vadd.f32 %v368, %v914
        %v916 = vpop.f32.mrb[0].mxu0
        %v917 = vadd.f32 %v364, %v916
        %v918 = vpop.f32.mrb[0].mxu0
        %v919 = vadd.f32 %v368, %v918
        %920 = vdwg.mxu0
        %v921 = vpack.c.bf16 %v748, %v744
        %v922 = vpack.c.bf16 %v750, %v746
        %v923 = vpack.c.bf16 %v801, %v797
        %v924 = vpack.c.bf16 %v803, %v799
        %v925 = vpack.c.bf16 %v854, %v850
        %v926 = vpack.c.bf16 %v856, %v852
        %v927 = vpack.c.bf16 %v907, %v903
        %v928 = vpack.c.bf16 %v909, %v905
        %v929 = vpack.c.bf16 %v758, %v754
        %v930 = vpack.c.bf16 %v760, %v756
        %v931 = vpack.c.bf16 %v811, %v807
        %v932 = vpack.c.bf16 %v813, %v809
        %v933 = vpack.c.bf16 %v864, %v860
        %v934 = vpack.c.bf16 %v866, %v862
        %v935 = vpack.c.bf16 %v917, %v913
        %v936 = vpack.c.bf16 %v919, %v915
        %v953 = vunpack.c.l.b16 %v921
        %v954 = vunpack.c.l.b16 %v922
        %v955 = vunpack.c.l.b16 %v923
        %v956 = vunpack.c.l.b16 %v924
        %v957 = vunpack.c.l.b16 %v925
        %v958 = vunpack.c.l.b16 %v926
        %v959 = vunpack.c.l.b16 %v927
        %v960 = vunpack.c.l.b16 %v928
        %v961 = vunpack.c.h.b16 %v921
        %v962 = vunpack.c.h.b16 %v922
        %v963 = vunpack.c.h.b16 %v923
        %v964 = vunpack.c.h.b16 %v924
        %v965 = vunpack.c.h.b16 %v925
        %v966 = vunpack.c.h.b16 %v926
        %v967 = vunpack.c.h.b16 %v927
        %v968 = vunpack.c.h.b16 %v928
        %v969 = vunpack.c.l.b16 %v929
        %v970 = vunpack.c.l.b16 %v930
        %v971 = vunpack.c.l.b16 %v931
        %v972 = vunpack.c.l.b16 %v932
        %v973 = vunpack.c.l.b16 %v933
        %v974 = vunpack.c.l.b16 %v934
        %v975 = vunpack.c.l.b16 %v935
        %v976 = vunpack.c.l.b16 %v936
        %v977 = vunpack.c.h.b16 %v929
        %v978 = vunpack.c.h.b16 %v930
        %v979 = vunpack.c.h.b16 %v931
        %v980 = vunpack.c.h.b16 %v932
        %v981 = vunpack.c.h.b16 %v933
        %v982 = vunpack.c.h.b16 %v934
        %v983 = vunpack.c.h.b16 %v935
        %v984 = vunpack.c.h.b16 %v936
        %v985 = vpack.c.b16 %v954, %v953
        %v986 = vpack.c.b16 %v956, %v955
        %v987 = vpack.c.b16 %v958, %v957
        %v988 = vpack.c.b16 %v960, %v959
        %v989 = vpack.c.b16 %v962, %v961
        %v990 = vpack.c.b16 %v964, %v963
        %v991 = vpack.c.b16 %v966, %v965
        %v992 = vpack.c.b16 %v968, %v967
        %v993 = vpack.c.b16 %v970, %v969
        %v994 = vpack.c.b16 %v972, %v971
        %v995 = vpack.c.b16 %v974, %v973
        %v996 = vpack.c.b16 %v976, %v975
        %v997 = vpack.c.b16 %v978, %v977
        %v998 = vpack.c.b16 %v980, %v979
        %v999 = vpack.c.b16 %v982, %v981
        %v1000 = vpack.c.b16 %v984, %v983
        %1017 = vst [vmem:[%s260] sm:$0xff] %v985
        %1018 = vst [vmem:[%s260 + $0x8] sm:$0xff] %v986
        %1019 = vst [vmem:[%s260 + $0x10] sm:$0xff] %v987
        %1020 = vst [vmem:[%s260 + $0x18] sm:$0xff] %v988
        %1021 = vst [vmem:[%s260 + $0x20] sm:$0xff] %v989
        %1022 = vst [vmem:[%s260 + $0x28] sm:$0xff] %v990
        %1023 = vst [vmem:[%s260 + $0x30] sm:$0xff] %v991
        %1024 = vst [vmem:[%s260 + $0x38] sm:$0xff] %v992
        %1025 = vst [vmem:[%s260 + $0x40] sm:$0xff] %v993
        %1026 = vst [vmem:[%s260 + $0x48] sm:$0xff] %v994
        %1027 = vst [vmem:[%s260 + $0x50] sm:$0xff] %v995
        %1028 = vst [vmem:[%s260 + $0x58] sm:$0xff] %v996
        %1029 = vst [vmem:[%s260 + $0x60] sm:$0xff] %v997
        %1030 = vst [vmem:[%s260 + $0x68] sm:$0xff] %v998
        %1031 = vst [vmem:[%s260 + $0x70] sm:$0xff] %v999
        %1032 = vst [vmem:[%s260 + $0x78] sm:$0xff] %v1000
        %s1033 = sand.u32 %s121, 1
        %s1034 = scalar_lea.sflag [#allocation4], %s1033
        %s1035 = sand.u32 %s121, 1
        %s1036 = smul.addr %s1035, 128
        %s1037 = scalar_lea.vmem [#allocation8], %s1036
        // Predicated region
        $region45: #{bert_mlm_forward.9} parent=31 // pred_check
          %p1038 = pneg %p131
        $region46: #{bert_mlm_forward.9} parent=31 // pred_check_branch
          %1040 = sbr.rel (%p1038) target = $region48
        $region47: #{bert_mlm_forward.9} parent=31 // pred_region
          %s1041 = smul.u32 4, %s26
          %s1042 = smul.u32 8, %s25
          %s1044 = ssub.s32 2048, 2048
          %1045 = vsyncadd %s1034, %s1044
          %s1046 = smul.addr %s1041, 16
          %s1047 = sadd.s32 %s1042, %s1046
          %s1048 = smul.addr %s1047, 64
          %s1049 = scalar_lea.hbm %s3, %s1048
          %s1050 = sshll.u32 %s1037, 4
          %s1051 = int_to_ptr.vmem [resolvable:$true] %s1050
          %1056 = dma.vmem_to_hbm [thread:$0]  %s1051, 2048, %s1049, %s1034, 512, 1024, 32
        $region48: #{bert_mlm_forward.9} parent=31 // pred_fallthru
          _
      $region32: #{bert_mlm_forward.9} parent=5 // pred_fallthru
        _
      %p1057 = scmp.le.s32.totalorder 2, %s16
      // Predicated region
      $region49: #{bert_mlm_forward.9} parent=5 // pred_check
        %p1058 = pneg %p1057
      $region50: #{bert_mlm_forward.9} parent=5 // pred_check_branch
        %1060 = sbr.rel (%p1058) target = $region52
      $region51: #{bert_mlm_forward.9} parent=5 // pred_region
        %s1061 = ssub.s32 %s16, 2
        // Predicated region
        $region53: #{bert_mlm_forward.9} parent=51 // pred_check
          %p1062 = pneg %p137
        $region54: #{bert_mlm_forward.9} parent=51 // pred_check_branch
          %1064 = sbr.rel (%p1062) target = $region56
        $region55: #{bert_mlm_forward.9} parent=51 // pred_region
          %s1065 = sand.u32 %s122, 1
          %s1066 = scalar_lea.sflag [#allocation4], %s1065
          %s1067 = sand.u32 %s122, 1
          %s1068 = smul.addr %s1067, 128
          %s1069 = scalar_lea.vmem [#allocation8], %s1068
          %1070 = dma.done %s1066, 2048
        $region56: #{bert_mlm_forward.9} parent=51 // pred_fallthru
          _
      $region52: #{bert_mlm_forward.9} parent=5 // pred_fallthru
        _
    $region6: #{bert_mlm_forward.9} parent=1 // loop_footer
      %s20 = sadd.s32 1, %s16
    $region7: #{bert_mlm_forward.9} parent=1 // loop_footer_branch
      %15 = sbr.rel target = $region3
    $region8: #{bert_mlm_forward.9} parent=1 // loop_exit
      _
    %1071 = vsyncpa [#allocation3], 1
    %s1072 = scalar_lea.sflag [#allocation3], 1
    %1073 = vsyncpa %s1072, 1
    %1074 = vsyncpa [#allocation6], 1
    %s1075 = scalar_lea.sflag [#allocation6], 1
    %1076 = vsyncpa %s1075, 1
    %1077 = vsyncpa [#allocation4], 1
    %s1078 = scalar_lea.sflag [#allocation4], 1
    %1079 = vsyncpa %s1078, 1

// kernel: bert_mlm_forward.8
$region0: #{bert_mlm_forward.8}
  #allocation0 [shape = 'u32[]', space=smem, size = 0x4, offset = 0x4, fixed_abs, tag = 'smem constant byte address 0x4 - core index']
  #allocation1 [shape = 'u32[144,128]{1,0:T(1,128)}', space=vmem, size = 0x12000, scoped, tag = 'internal scratch']
  %s0 = inlined_call_operand.hbm [shape: bf16[32,128], index: 0, kind: input, shape index: {}]
  %s1 = inlined_call_operand.hbm [shape: bf16[128,128], index: 1, kind: input, shape index: {}]
  %s2 = inlined_call_operand.hbm [shape: f32[1,128], index: 2, kind: input, shape index: {}]
  %s3 = inlined_call_operand.hbm [shape: f32[1,128], index: 3, kind: input, shape index: {}]
  %s4 = inlined_call_operand.hbm [shape: f32[1,128], index: 4, kind: input, shape index: {}]
  %s5 = inlined_call_operand.hbm [shape: bf16[32,128], index: 5, kind: output, shape index: {}]
  %s6 = sld [smem:[#allocation0]]
  $region50: #{bert_mlm_forward.8} parent=0
    _
  %s8 = ssub.s32 1, %s6
  %s9 = scalar_select 0, %s8, %s6
  $region1: #{bert_mlm_forward.8} parent=0
    #allocation2 [shape = 'u8[8192]{0}', space=vmem, size = 0x2000, scoped, tag = 'input window, operand 0, single buffered']
    #allocation3 [shape = 's32[1]{0}', space=sflag, size = 0x4, scoped, tag = 'scoped memory for bert_mlm_forward.8']
    #allocation4 [shape = 's32[1]{0}', space=sflag, size = 0x4, scoped, tag = 'scoped memory for bert_mlm_forward.8']
    #allocation5 [shape = 'u8[32768]{0}', space=vmem, size = 0x8000, scoped, tag = 'input window, operand 1, single buffered']
    #allocation6 [shape = 's32[1]{0}', space=sflag, size = 0x4, scoped, tag = 'scoped memory for bert_mlm_forward.8']
    #allocation7 [shape = 'u8[512]{0}', space=vmem, size = 0x400, scoped, tag = 'input window, operand 2, single buffered']
    #allocation8 [shape = 'u8[512]{0}', space=vmem, size = 0x400, scoped, tag = 'input window, operand 3, single buffered']
    #allocation9 [shape = 's32[1]{0}', space=sflag, size = 0x4, scoped, tag = 'scoped memory for bert_mlm_forward.8']
    #allocation10 [shape = 'u8[512]{0}', space=vmem, size = 0x400, scoped, tag = 'input window, operand 4, single buffered']
    #allocation11 [shape = 'u8[8192]{0}', space=vmem, size = 0x2000, scoped, tag = 'output window, operand 0, single buffered']
    %10 = vsyncpa [#allocation3], 0
    %11 = vsyncpa [#allocation6], 0
    %12 = vsyncpa [#allocation9], 0
    %13 = vsyncpa [#allocation4], 0
    // Predicated region
    $region2: #{bert_mlm_forward.8} parent=1 // pred_check
      _
    $region3: #{bert_mlm_forward.8} parent=1 // pred_check_branch
      %15 = sbr.rel (0) target = $region5
    $region4: #{bert_mlm_forward.8} parent=1 // pred_region
      %s17 = ssub.s32 256, 256
      %18 = vsyncadd [#allocation3], %s17
      %s19 = sshll.u32 [#allocation2], 4
      %s20 = int_to_ptr.vmem [resolvable:$true] %s19
      %25 = dma.hbm_to_vmem [thread:$0]  %s0, 256, %s20, [#allocation3], 64, 64, 4
    $region5: #{bert_mlm_forward.8} parent=1 // pred_fallthru
      _
    // Predicated region
    $region6: #{bert_mlm_forward.8} parent=1 // pred_check
      _
    $region7: #{bert_mlm_forward.8} parent=1 // pred_check_branch
      %27 = sbr.rel (0) target = $region9
    $region8: #{bert_mlm_forward.8} parent=1 // pred_region
      %s29 = ssub.s32 1024, 1024
      %30 = vsyncadd [#allocation6], %s29
      %s31 = sshll.u32 [#allocation5], 4
      %s32 = int_to_ptr.vmem [resolvable:$true] %s31
      %37 = dma.hbm_to_vmem [thread:$0]  %s1, 1024, %s32, [#allocation6], 64, 64, 4
    $region9: #{bert_mlm_forward.8} parent=1 // pred_fallthru
      _
    // Predicated region
    $region10: #{bert_mlm_forward.8} parent=1 // pred_check
      _
    $region11: #{bert_mlm_forward.8} parent=1 // pred_check_branch
      %39 = sbr.rel (0) target = $region13
    $region12: #{bert_mlm_forward.8} parent=1 // pred_region
      %s41 = ssub.s32 16, 16
      %42 = vsyncadd [#allocation6], %s41
      %s44 = sshll.u32 [#allocation7], 4
      %s45 = int_to_ptr.vmem [resolvable:$true] %s44
      %47 = dma.hbm_to_vmem [thread:$0]  %s2, 16, %s45, [#allocation6]
    $region13: #{bert_mlm_forward.8} parent=1 // pred_fallthru
      _
    // Predicated region
    $region14: #{bert_mlm_forward.8} parent=1 // pred_check
      _
    $region15: #{bert_mlm_forward.8} parent=1 // pred_check_branch
      %49 = sbr.rel (0) target = $region17
    $region16: #{bert_mlm_forward.8} parent=1 // pred_region
      %s51 = ssub.s32 16, 16
      %52 = vsyncadd [#allocation9], %s51
      %s54 = sshll.u32 [#allocation8], 4
      %s55 = int_to_ptr.vmem [resolvable:$true] %s54
      %57 = dma.hbm_to_vmem [thread:$0]  %s3, 16, %s55, [#allocation9]
    $region17: #{bert_mlm_forward.8} parent=1 // pred_fallthru
      _
    // Predicated region
    $region18: #{bert_mlm_forward.8} parent=1 // pred_check
      _
    $region19: #{bert_mlm_forward.8} parent=1 // pred_check_branch
      %59 = sbr.rel (0) target = $region21
    $region20: #{bert_mlm_forward.8} parent=1 // pred_region
      %s61 = ssub.s32 16, 16
      %62 = vsyncadd [#allocation9], %s61
      %s64 = sshll.u32 [#allocation10], 4
      %s65 = int_to_ptr.vmem [resolvable:$true] %s64
      %67 = dma.hbm_to_vmem [thread:$0]  %s4, 16, %s65, [#allocation9]
    $region21: #{bert_mlm_forward.8} parent=1 // pred_fallthru
      _
    // Predicated region
    $region22: #{bert_mlm_forward.8} parent=1 // pred_check
      _
    $region23: #{bert_mlm_forward.8} parent=1 // pred_check_branch
      %69 = sbr.rel (0) target = $region25
    $region24: #{bert_mlm_forward.8} parent=1 // pred_region
      %70 = dma.done [#allocation3], 256
    $region25: #{bert_mlm_forward.8} parent=1 // pred_fallthru
      _
    // Predicated region
    $region26: #{bert_mlm_forward.8} parent=1 // pred_check
      _
    $region27: #{bert_mlm_forward.8} parent=1 // pred_check_branch
      %72 = sbr.rel (0) target = $region29
    $region28: #{bert_mlm_forward.8} parent=1 // pred_region
      %73 = dma.done [#allocation6], 1024
    $region29: #{bert_mlm_forward.8} parent=1 // pred_fallthru
      _
    // Predicated region
    $region30: #{bert_mlm_forward.8} parent=1 // pred_check
      _
    $region31: #{bert_mlm_forward.8} parent=1 // pred_check_branch
      %75 = sbr.rel (0) target = $region33
    $region32: #{bert_mlm_forward.8} parent=1 // pred_region
      %76 = dma.done [#allocation6], 16
    $region33: #{bert_mlm_forward.8} parent=1 // pred_fallthru
      _
    // Predicated region
    $region34: #{bert_mlm_forward.8} parent=1 // pred_check
      _
    $region35: #{bert_mlm_forward.8} parent=1 // pred_check_branch
      %78 = sbr.rel (0) target = $region37
    $region36: #{bert_mlm_forward.8} parent=1 // pred_region
      %79 = dma.done [#allocation9], 16
    $region37: #{bert_mlm_forward.8} parent=1 // pred_fallthru
      _
    // Predicated region
    $region38: #{bert_mlm_forward.8} parent=1 // pred_check
      _
    $region39: #{bert_mlm_forward.8} parent=1 // pred_check_branch
      %81 = sbr.rel (0) target = $region41
    $region40: #{bert_mlm_forward.8} parent=1 // pred_region
      %82 = dma.done [#allocation9], 16
    $region41: #{bert_mlm_forward.8} parent=1 // pred_fallthru
      _
    %v84 = vld [vmem:[#allocation2] sm:$0xf]
    %v85 = vld [vmem:[#allocation2 + $0x4] sm:$0xf]
    %v86 = vld [vmem:[#allocation2 + $0x8] sm:$0xf]
    %v87 = vld [vmem:[#allocation2 + $0xc] sm:$0xf]
    %v88 = vld [vmem:[#allocation5] sm:$0xf]
    %v89 = vld [vmem:[#allocation5 + $0x4] sm:$0xf]
    %v90 = vld [vmem:[#allocation5 + $0x8] sm:$0xf]
    %v91 = vld [vmem:[#allocation5 + $0xc] sm:$0xf]
    %v92 = vld [vmem:[#allocation5 + $0x10] sm:$0xf]
    %v93 = vld [vmem:[#allocation5 + $0x14] sm:$0xf]
    %v94 = vld [vmem:[#allocation5 + $0x18] sm:$0xf]
    %v95 = vld [vmem:[#allocation5 + $0x1c] sm:$0xf]
    %v96 = vld [vmem:[#allocation5 + $0x20] sm:$0xf]
    %v97 = vld [vmem:[#allocation5 + $0x24] sm:$0xf]
    %v98 = vld [vmem:[#allocation5 + $0x28] sm:$0xf]
    %v99 = vld [vmem:[#allocation5 + $0x2c] sm:$0xf]
    %v100 = vld [vmem:[#allocation5 + $0x30] sm:$0xf]
    %v101 = vld [vmem:[#allocation5 + $0x34] sm:$0xf]
    %v102 = vld [vmem:[#allocation5 + $0x38] sm:$0xf]
    %v103 = vld [vmem:[#allocation5 + $0x3c] sm:$0xf]
    %v104 = vld [vmem:[#allocation7] sm:$0x1]
    %v106 = vlaneseq
    %v107 = vshrl.u32 %v106, 7
    %v108 = vsub.s32 0, %v107
    %v109 = vrot.slane %v104, %v108
    %v115 = vunpack.c.l.b16 %v84
    %v116 = vunpack.c.l.b16 %v85
    %v117 = vunpack.c.l.b16 %v86
    %v118 = vunpack.c.l.b16 %v87
    %v119 = vpack.c.b16 %v116, %v115
    %v120 = vpack.c.b16 %v118, %v117
    %v139 = vunpack.c.l.b16 %v88
    %v140 = vunpack.c.l.b16 %v89
    %v141 = vunpack.c.l.b16 %v90
    %v142 = vunpack.c.l.b16 %v91
    %v143 = vunpack.c.l.b16 %v92
    %v144 = vunpack.c.l.b16 %v93
    %v145 = vunpack.c.l.b16 %v94
    %v146 = vunpack.c.l.b16 %v95
    %v147 = vunpack.c.l.b16 %v96
    %v148 = vunpack.c.l.b16 %v97
    %v149 = vunpack.c.l.b16 %v98
    %v150 = vunpack.c.l.b16 %v99
    %v151 = vunpack.c.l.b16 %v100
    %v152 = vunpack.c.l.b16 %v101
    %v153 = vunpack.c.l.b16 %v102
    %v154 = vunpack.c.l.b16 %v103
    %v155 = vpack.c.b16 %v140, %v139
    %v156 = vpack.c.b16 %v142, %v141
    %v157 = vpack.c.b16 %v144, %v143
    %v158 = vpack.c.b16 %v146, %v145
    %v159 = vpack.c.b16 %v148, %v147
    %v160 = vpack.c.b16 %v150, %v149
    %v161 = vpack.c.b16 %v152, %v151
    %v162 = vpack.c.b16 %v154, %v153
    %171 = vmatprep.subr.bf16.mxu0 0
    %172 = vmatpush1.bf16.msra.mxu0 %v155
    %173 = vmatprep.subr.bf16.mxu0 0
    %174 = vmatpush1.bf16.msra.mxu0 %v156
    %175 = vmatprep.subr.bf16.mxu0 0
    %176 = vmatpush1.bf16.msra.mxu0 %v157
    %177 = vmatprep.subr.bf16.mxu0 0
    %178 = vmatpush1.bf16.msra.mxu0 %v158
    %179 = vmatprep.subr.bf16.mxu0 0
    %180 = vmatpush1.bf16.msra.mxu0 %v159
    %181 = vmatprep.subr.bf16.mxu0 0
    %182 = vmatpush1.bf16.msra.mxu0 %v160
    %183 = vmatprep.subr.bf16.mxu0 0
    %184 = vmatpush1.bf16.msra.mxu0 %v161
    %185 = vmatprep.subr.bf16.mxu0 0
    %186 = vmatpush1.bf16.msra.mxu0 %v162
    %187 = vmatprep.subr.bf16.mxu0 0
    %188 = vmatpush1.bf16.msra.mxu0 0
    %189 = vmatprep.subr.bf16.mxu0 0
    %190 = vmatpush1.bf16.msra.mxu0 0
    %191 = vmatprep.subr.bf16.mxu0 0
    %192 = vmatpush1.bf16.msra.mxu0 0
    %193 = vmatprep.subr.bf16.mxu0 0
    %194 = vmatpush1.bf16.msra.mxu0 0
    %195 = vmatprep.subr.bf16.mxu0 0
    %196 = vmatpush1.bf16.msra.mxu0 0
    %197 = vmatprep.subr.bf16.mxu0 0
    %198 = vmatpush1.bf16.msra.mxu0 0
    %199 = vmatprep.subr.bf16.mxu0 0
    %200 = vmatpush1.bf16.msra.mxu0 0
    %201 = vmatprep.subr.bf16.mxu0 0
    %202 = vmatpush1.bf16.msra.mxu0 0
    %203 = vmatprep.mubr.bf16.mxu0 0
    %204 = vmatmul.mubr.bf16.gmra.mrb[0].mxu0 %v119
    %v205 = vpop.f32.mrb[0].mxu0
    %v206 = vadd.f32 %v109, %v205
    %v207 = vpop.f32.mrb[0].mxu0
    %v208 = vpop.f32.mrb[0].mxu0
    %v209 = vadd.f32 %v109, %v208
    %v210 = vpop.f32.mrb[0].mxu0
    %211 = vmatprep.mubr.bf16.mxu0 0
    %212 = vmatmul.mubr.bf16.gmra.mrb[0].mxu0 %v120
    %v213 = vpop.f32.mrb[0].mxu0
    %v214 = vadd.f32 %v109, %v213
    %v215 = vpop.f32.mrb[0].mxu0
    %v216 = vpop.f32.mrb[0].mxu0
    %v217 = vadd.f32 %v109, %v216
    %v218 = vpop.f32.mrb[0].mxu0
    %219 = vdwg.mxu0
    %v220 = vmul.f32 %v206, 0.5
    %v221 = vmul.f32 %v209, 0.5
    %v222 = vmul.f32 %v214, 0.5
    %v223 = vmul.f32 %v217, 0.5
    %v224 = vmul.f32 %v206, 0.70710677
    %v225 = vmul.f32 %v209, 0.70710677
    %v226 = vmul.f32 %v214, 0.70710677
    %v227 = vmul.f32 %v217, 0.70710677
    %v228 = vand.u32 2147483647, %v224
    %v229 = vand.u32 2147483647, %v225
    %v230 = vand.u32 2147483647, %v226
    %v231 = vand.u32 2147483647, %v227
    %v232 = vmul.f32 %v228, 0.3275911
    %v233 = vmul.f32 %v229, 0.3275911
    %v234 = vmul.f32 %v230, 0.3275911
    %v235 = vmul.f32 %v231, 0.3275911
    %v236 = vadd.f32 %v232, 1.0
    %v237 = vadd.f32 %v233, 1.0
    %v238 = vadd.f32 %v234, 1.0
    %v239 = vadd.f32 %v235, 1.0
    %v240 = vrcp.pop %v236
    %v241 = vmul.f32 1.0, %v240
    %v242 = vrcp.pop %v237
    %v243 = vmul.f32 1.0, %v242
    %v244 = vrcp.pop %v238
    %v245 = vmul.f32 1.0, %v244
    %v246 = vrcp.pop %v239
    %v247 = vmul.f32 1.0, %v246
    %v248 = vmul.f32 %v241, 1.0614054
    %v249 = vmul.f32 %v243, 1.0614054
    %v250 = vmul.f32 %v245, 1.0614054
    %v251 = vmul.f32 %v247, 1.0614054
    %v252 = vadd.f32 %v248, -1.4531521
    %v253 = vadd.f32 %v249, -1.4531521
    %v254 = vadd.f32 %v250, -1.4531521
    %v255 = vadd.f32 %v251, -1.4531521
    %v256 = vmul.f32 %v252, %v241
    %v257 = vmul.f32 %v253, %v243
    %v258 = vmul.f32 %v254, %v245
    %v259 = vmul.f32 %v255, %v247
    %v260 = vadd.f32 %v256, 1.4214138
    %v261 = vadd.f32 %v257, 1.4214138
    %v262 = vadd.f32 %v258, 1.4214138
    %v263 = vadd.f32 %v259, 1.4214138
    %v264 = vmul.f32 %v260, %v241
    %v265 = vmul.f32 %v261, %v243
    %v266 = vmul.f32 %v262, %v245
    %v267 = vmul.f32 %v263, %v247
    %v268 = vadd.f32 %v264, -0.28449672
    %v269 = vadd.f32 %v265, -0.28449672
    %v270 = vadd.f32 %v266, -0.28449672
    %v271 = vadd.f32 %v267, -0.28449672
    %v272 = vmul.f32 %v268, %v241
    %v273 = vmul.f32 %v269, %v243
    %v274 = vmul.f32 %v270, %v245
    %v275 = vmul.f32 %v271, %v247
    %v276 = vadd.f32 %v272, 0.2548296
    %v277 = vadd.f32 %v273, 0.2548296
    %v278 = vadd.f32 %v274, 0.2548296
    %v279 = vadd.f32 %v275, 0.2548296
    %v280 = vmul.f32 %v276, %v241
    %v281 = vmul.f32 %v277, %v243
    %v282 = vmul.f32 %v278, %v245
    %v283 = vmul.f32 %v279, %v247
    %v284 = vsub.f32 0.0, %v228
    %v285 = vsub.f32 0.0, %v229
    %v286 = vsub.f32 0.0, %v230
    %v287 = vsub.f32 0.0, %v231
    %v288 = vmul.f32 %v284, %v228
    %v289 = vmul.f32 %v285, %v229
    %v290 = vmul.f32 %v286, %v230
    %v291 = vmul.f32 %v287, %v231
    %v292 = vmul.f32 %v288, 1.442695
    %v293 = vpow.pop %v292
    %v294 = vmul.f32 %v289, 1.442695
    %v295 = vpow.pop %v294
    %v296 = vmul.f32 %v290, 1.442695
    %v297 = vpow.pop %v296
    %v298 = vmul.f32 %v291, 1.442695
    %v299 = vpow.pop %v298
    %v300 = vmul.f32 %v280, %v293
    %v301 = vmul.f32 %v281, %v295
    %v302 = vmul.f32 %v282, %v297
    %v303 = vmul.f32 %v283, %v299
    %v304 = vsub.f32 1.0, %v300
    %v305 = vsub.f32 1.0, %v301
    %v306 = vsub.f32 1.0, %v302
    %v307 = vsub.f32 1.0, %v303
    %vm308 = vcmp.lt.f32.partialorder %v224, 0.0
    %vm309 = vcmp.lt.f32.partialorder %v225, 0.0
    %vm310 = vcmp.lt.f32.partialorder %v226, 0.0
    %vm311 = vcmp.lt.f32.partialorder %v227, 0.0
    %v312 = vsub.f32 0.0, %v304
    %v313 = vsub.f32 0.0, %v305
    %v314 = vsub.f32 0.0, %v306
    %v315 = vsub.f32 0.0, %v307
    %v316 = vsel %vm308, %v312, %v304
    %v317 = vsel %vm309, %v313, %v305
    %v318 = vsel %vm310, %v314, %v306
    %v319 = vsel %vm311, %v315, %v307
    %v320 = vadd.f32 %v316, 1.0
    %v321 = vadd.f32 %v317, 1.0
    %v322 = vadd.f32 %v318, 1.0
    %v323 = vadd.f32 %v319, 1.0
    %v324 = vmul.f32 %v220, %v320
    %v325 = vmul.f32 %v221, %v321
    %v326 = vmul.f32 %v222, %v322
    %v327 = vmul.f32 %v223, %v323
    %v328 = vld [vmem:[#allocation8] sm:$0x1]
    %v329 = vld [vmem:[#allocation10] sm:$0x1]
    %330 = vadd.xlane.f32.xlu0 %v324
    %v331 = vpop.xlane.xlu0 %330
    %332 = vadd.xlane.f32.xlu0 %v325
    %v333 = vpop.xlane.xlu0 %332
    %334 = vadd.xlane.f32.xlu0 %v326
    %v335 = vpop.xlane.xlu0 %334
    %336 = vadd.xlane.f32.xlu0 %v327
    %v337 = vpop.xlane.xlu0 %336
    %v338 = vrcp.pop 128.0
    %v339 = vmul.f32 %v331, %v338
    %v340 = vmul.f32 %v333, %v338
    %v341 = vmul.f32 %v335, %v338
    %v342 = vmul.f32 %v337, %v338
    %v343 = vsub.f32 %v324, %v339
    %v344 = vsub.f32 %v325, %v340
    %v345 = vsub.f32 %v326, %v341
    %v346 = vsub.f32 %v327, %v342
    %v347 = vmul.f32 %v343, %v343
    %v348 = vmul.f32 %v344, %v344
    %v349 = vmul.f32 %v345, %v345
    %v350 = vmul.f32 %v346, %v346
    %351 = vadd.xlane.f32.xlu0 %v347
    %v352 = vpop.xlane.xlu0 %351
    %353 = vadd.xlane.f32.xlu0 %v348
    %v354 = vpop.xlane.xlu0 %353
    %355 = vadd.xlane.f32.xlu0 %v349
    %v356 = vpop.xlane.xlu0 %355
    %357 = vadd.xlane.f32.xlu0 %v350
    %v358 = vpop.xlane.xlu0 %357
    %v359 = vmul.f32 %v352, %v338
    %v360 = vmul.f32 %v354, %v338
    %v361 = vmul.f32 %v356, %v338
    %v362 = vmul.f32 %v358, %v338
    %v363 = vadd.f32 %v359, 1e-12
    %v364 = vadd.f32 %v360, 1e-12
    %v365 = vadd.f32 %v361, 1e-12
    %v366 = vadd.f32 %v362, 1e-12
    %v367 = vrsqrt.pop %v363
    %v368 = vrsqrt.pop %v364
    %v369 = vrsqrt.pop %v365
    %v370 = vrsqrt.pop %v366
    %v371 = vmul.f32 %v343, %v367
    %v372 = vmul.f32 %v344, %v368
    %v373 = vmul.f32 %v345, %v369
    %v374 = vmul.f32 %v346, %v370
    %v376 = vlaneseq
    %v377 = vshrl.u32 %v376, 7
    %v378 = vsub.s32 0, %v377
    %v379 = vrot.slane %v328, %v378
    %v381 = vmul.f32 %v371, %v379
    %v382 = vmul.f32 %v372, %v379
    %v383 = vmul.f32 %v373, %v379
    %v384 = vmul.f32 %v374, %v379
    %v386 = vlaneseq
    %v387 = vshrl.u32 %v386, 7
    %v388 = vsub.s32 0, %v387
    %v389 = vrot.slane %v329, %v388
    %v391 = vadd.f32 %v381, %v389
    %v392 = vadd.f32 %v382, %v389
    %v393 = vadd.f32 %v383, %v389
    %v394 = vadd.f32 %v384, %v389
    %v395 = vpack.c.bf16 %v392, %v391
    %v396 = vpack.c.bf16 %v394, %v393
    %v399 = vunpack.c.l.b16 %v395
    %v400 = vunpack.c.h.b16 %v395
    %v401 = vunpack.c.l.b16 %v396
    %v402 = vunpack.c.h.b16 %v396
    %v403 = vpack.c.b16 %v399, %v399
    %v404 = vpack.c.b16 %v400, %v400
    %v405 = vpack.c.b16 %v401, %v401
    %v406 = vpack.c.b16 %v402, %v402
    %411 = vst [vmem:[#allocation11] sm:$0xf] %v403
    %412 = vst [vmem:[#allocation11 + $0x4] sm:$0xf] %v404
    %413 = vst [vmem:[#allocation11 + $0x8] sm:$0xf] %v405
    %414 = vst [vmem:[#allocation11 + $0xc] sm:$0xf] %v406
    // Predicated region
    $region42: #{bert_mlm_forward.8} parent=1 // pred_check
      _
    $region43: #{bert_mlm_forward.8} parent=1 // pred_check_branch
      %416 = sbr.rel (0) target = $region45
    $region44: #{bert_mlm_forward.8} parent=1 // pred_region
      %s418 = ssub.s32 256, 256
      %419 = vsyncadd [#allocation4], %s418
      %s420 = sshll.u32 [#allocation11], 4
      %s421 = int_to_ptr.vmem [resolvable:$true] %s420
      %426 = dma.vmem_to_hbm [thread:$0]  %s421, 256, %s5, [#allocation4], 64, 64, 4
    $region45: #{bert_mlm_forward.8} parent=1 // pred_fallthru
      _
    // Predicated region
    $region46: #{bert_mlm_forward.8} parent=1 // pred_check
      _
    $region47: #{bert_mlm_forward.8} parent=1 // pred_check_branch
      %428 = sbr.rel (0) target = $region49
    $region48: #{bert_mlm_forward.8} parent=1 // pred_region
      %429 = dma.done [#allocation4], 256
    $region49: #{bert_mlm_forward.8} parent=1 // pred_fallthru
      _
    %430 = vsyncpa [#allocation3], 1
    %431 = vsyncpa [#allocation6], 1
    %432 = vsyncpa [#allocation9], 1
    %433 = vsyncpa [#allocation4], 1

// kernel: bert_mlm_forward.5
$region0: #{bert_mlm_forward.5}
  #allocation0 [shape = 'u32[]', space=smem, size = 0x4, offset = 0x4, fixed_abs, tag = 'smem constant byte address 0x4 - core index']
  #allocation1 [shape = 'u32[144,128]{1,0:T(1,128)}', space=vmem, size = 0x12000, scoped, tag = 'internal scratch']
  %s0 = inlined_call_operand.hbm [shape: s32[32,1], index: 0, kind: input, shape index: {}]
  %s1 = inlined_call_operand.hbm [shape: bf16[2048,128], index: 1, kind: input, shape index: {}]
  %s2 = inlined_call_operand.hbm [shape: f32[16,128], index: 2, kind: input, shape index: {}]
  %s3 = inlined_call_operand.hbm [shape: f32[1,128], index: 3, kind: input, shape index: {}]
  %s4 = inlined_call_operand.hbm [shape: f32[1,128], index: 4, kind: input, shape index: {}]
  %s5 = inlined_call_operand.hbm [shape: bf16[2,16,128], index: 5, kind: output, shape index: {}]
  %s6 = sld [smem:[#allocation0]]
  $region50: #{bert_mlm_forward.5} parent=0
    _
  %s8 = ssub.s32 1, %s6
  %s9 = scalar_select 0, %s8, %s6
  $region1: #{bert_mlm_forward.5} parent=0
    #allocation2 [shape = 'u8[16384]{0}', space=vmem, size = 0x4000, scoped, tag = 'input window, operand 0, single buffered']
    #allocation3 [shape = 's32[1]{0}', space=sflag, size = 0x4, scoped, tag = 'scoped memory for bert_mlm_forward.5']
    #allocation4 [shape = 's32[1]{0}', space=sflag, size = 0x4, scoped, tag = 'scoped memory for bert_mlm_forward.5']
    #allocation5 [shape = 'u8[524288]{0}', space=vmem, size = 0x80000, scoped, tag = 'input window, operand 1, single buffered']
    #allocation6 [shape = 's32[1]{0}', space=sflag, size = 0x4, scoped, tag = 'scoped memory for bert_mlm_forward.5']
    #allocation7 [shape = 'u8[8192]{0}', space=vmem, size = 0x2000, scoped, tag = 'input window, operand 2, single buffered']
    #allocation8 [shape = 'u8[512]{0}', space=vmem, size = 0x400, scoped, tag = 'input window, operand 3, single buffered']
    #allocation9 [shape = 's32[1]{0}', space=sflag, size = 0x4, scoped, tag = 'scoped memory for bert_mlm_forward.5']
    #allocation10 [shape = 'u8[512]{0}', space=vmem, size = 0x400, scoped, tag = 'input window, operand 4, single buffered']
    #allocation11 [shape = 'u8[8192]{0}', space=vmem, size = 0x2000, scoped, tag = 'output window, operand 0, single buffered']
    %10 = vsyncpa [#allocation3], 0
    %11 = vsyncpa [#allocation6], 0
    %12 = vsyncpa [#allocation9], 0
    %13 = vsyncpa [#allocation4], 0
    // Predicated region
    $region2: #{bert_mlm_forward.5} parent=1 // pred_check
      _
    $region3: #{bert_mlm_forward.5} parent=1 // pred_check_branch
      %15 = sbr.rel (0) target = $region5
    $region4: #{bert_mlm_forward.5} parent=1 // pred_region
      %s17 = ssub.s32 512, 512
      %18 = vsyncadd [#allocation3], %s17
      %s19 = sshll.u32 [#allocation2], 4
      %s20 = int_to_ptr.vmem [resolvable:$true] %s19
      %25 = dma.hbm_to_vmem [thread:$0]  %s0, 512, %s20, [#allocation3], 128, 128, 8
    $region5: #{bert_mlm_forward.5} parent=1 // pred_fallthru
      _
    // Predicated region
    $region6: #{bert_mlm_forward.5} parent=1 // pred_check
      _
    $region7: #{bert_mlm_forward.5} parent=1 // pred_check_branch
      %27 = sbr.rel (0) target = $region9
    $region8: #{bert_mlm_forward.5} parent=1 // pred_region
      %s29 = ssub.s32 16384, 16384
      %30 = vsyncadd [#allocation6], %s29
      %s31 = sshll.u32 [#allocation5], 4
      %s32 = int_to_ptr.vmem [resolvable:$true] %s31
      %37 = dma.hbm_to_vmem [thread:$0]  %s1, 16384, %s32, [#allocation6], 64, 64, 4
    $region9: #{bert_mlm_forward.5} parent=1 // pred_fallthru
      _
    // Predicated region
    $region10: #{bert_mlm_forward.5} parent=1 // pred_check
      _
    $region11: #{bert_mlm_forward.5} parent=1 // pred_check_branch
      %39 = sbr.rel (0) target = $region13
    $region12: #{bert_mlm_forward.5} parent=1 // pred_region
      %s41 = ssub.s32 256, 256
      %42 = vsyncadd [#allocation6], %s41
      %s43 = sshll.u32 [#allocation7], 4
      %s44 = int_to_ptr.vmem [resolvable:$true] %s43
      %49 = dma.hbm_to_vmem [thread:$0]  %s2, 256, %s44, [#allocation6], 128, 128, 8
    $region13: #{bert_mlm_forward.5} parent=1 // pred_fallthru
      _
    // Predicated region
    $region14: #{bert_mlm_forward.5} parent=1 // pred_check
      _
    $region15: #{bert_mlm_forward.5} parent=1 // pred_check_branch
      %51 = sbr.rel (0) target = $region17
    $region16: #{bert_mlm_forward.5} parent=1 // pred_region
      %s53 = ssub.s32 16, 16
      %54 = vsyncadd [#allocation9], %s53
      %s56 = sshll.u32 [#allocation8], 4
      %s57 = int_to_ptr.vmem [resolvable:$true] %s56
      %59 = dma.hbm_to_vmem [thread:$0]  %s3, 16, %s57, [#allocation9]
    $region17: #{bert_mlm_forward.5} parent=1 // pred_fallthru
      _
    // Predicated region
    $region18: #{bert_mlm_forward.5} parent=1 // pred_check
      _
    $region19: #{bert_mlm_forward.5} parent=1 // pred_check_branch
      %61 = sbr.rel (0) target = $region21
    $region20: #{bert_mlm_forward.5} parent=1 // pred_region
      %s63 = ssub.s32 16, 16
      %64 = vsyncadd [#allocation9], %s63
      %s66 = sshll.u32 [#allocation10], 4
      %s67 = int_to_ptr.vmem [resolvable:$true] %s66
      %69 = dma.hbm_to_vmem [thread:$0]  %s4, 16, %s67, [#allocation9]
    $region21: #{bert_mlm_forward.5} parent=1 // pred_fallthru
      _
    // Predicated region
    $region22: #{bert_mlm_forward.5} parent=1 // pred_check
      _
    $region23: #{bert_mlm_forward.5} parent=1 // pred_check_branch
      %71 = sbr.rel (0) target = $region25
    $region24: #{bert_mlm_forward.5} parent=1 // pred_region
      %72 = dma.done [#allocation3], 512
    $region25: #{bert_mlm_forward.5} parent=1 // pred_fallthru
      _
    // Predicated region
    $region26: #{bert_mlm_forward.5} parent=1 // pred_check
      _
    $region27: #{bert_mlm_forward.5} parent=1 // pred_check_branch
      %74 = sbr.rel (0) target = $region29
    $region28: #{bert_mlm_forward.5} parent=1 // pred_region
      %75 = dma.done [#allocation6], 16384
    $region29: #{bert_mlm_forward.5} parent=1 // pred_fallthru
      _
    // Predicated region
    $region30: #{bert_mlm_forward.5} parent=1 // pred_check
      _
    $region31: #{bert_mlm_forward.5} parent=1 // pred_check_branch
      %77 = sbr.rel (0) target = $region33
    $region32: #{bert_mlm_forward.5} parent=1 // pred_region
      %78 = dma.done [#allocation6], 256
    $region33: #{bert_mlm_forward.5} parent=1 // pred_fallthru
      _
    // Predicated region
    $region34: #{bert_mlm_forward.5} parent=1 // pred_check
      _
    $region35: #{bert_mlm_forward.5} parent=1 // pred_check_branch
      %80 = sbr.rel (0) target = $region37
    $region36: #{bert_mlm_forward.5} parent=1 // pred_region
      %81 = dma.done [#allocation9], 16
    $region37: #{bert_mlm_forward.5} parent=1 // pred_fallthru
      _
    // Predicated region
    $region38: #{bert_mlm_forward.5} parent=1 // pred_check
      _
    $region39: #{bert_mlm_forward.5} parent=1 // pred_check_branch
      %83 = sbr.rel (0) target = $region41
    $region40: #{bert_mlm_forward.5} parent=1 // pred_region
      %84 = dma.done [#allocation9], 16
    $region41: #{bert_mlm_forward.5} parent=1 // pred_fallthru
      _
    %v86 = vld [vmem:[#allocation2] sm:$0xff]
    %v87 = vld [vmem:[#allocation2 + $0x8] sm:$0xff]
    %v88 = vld [vmem:[#allocation2 + $0x10] sm:$0xff]
    %v89 = vld [vmem:[#allocation2 + $0x18] sm:$0xff]
    %v90 = vlaneseq
    %v91 = vand.u32 %v90, 127
    %v92 = vadd.s32 %v91, 128
    %v93 = vadd.s32 %v91, 256
    %v94 = vadd.s32 %v91, 384
    %v95 = vadd.s32 %v91, 512
    %v96 = vadd.s32 %v91, 640
    %v97 = vadd.s32 %v91, 768
    %v98 = vadd.s32 %v91, 896
    %v99 = vadd.s32 %v91, 1024
    %v100 = vadd.s32 %v91, 1152
    %v101 = vadd.s32 %v91, 1280
    %v102 = vadd.s32 %v91, 1408
    %v103 = vadd.s32 %v91, 1536
    %v104 = vadd.s32 %v91, 1664
    %v105 = vadd.s32 %v91, 1792
    %v106 = vadd.s32 %v91, 1920
    %107 = vset.pattern.permute.xlu0 0
    %108 = vperm.xlu0 %107, %v86
    %v109 = vpop.permute.xlu0 %108
    %110 = vset.pattern.permute.xlu0 0
    %111 = vperm.xlu0 %110, %v87
    %v112 = vpop.permute.xlu0 %111
    %113 = vset.pattern.permute.xlu0 0
    %114 = vperm.xlu0 %113, %v88
    %v115 = vpop.permute.xlu0 %114
    %116 = vset.pattern.permute.xlu0 0
    %117 = vperm.xlu0 %116, %v89
    %v118 = vpop.permute.xlu0 %117
    %vm119 = vcmp.eq.s32.totalorder %v91, %v109
    %vm120 = vcmp.eq.s32.totalorder %v92, %v109
    %vm121 = vcmp.eq.s32.totalorder %v93, %v109
    %vm122 = vcmp.eq.s32.totalorder %v94, %v109
    %vm123 = vcmp.eq.s32.totalorder %v95, %v109
    %vm124 = vcmp.eq.s32.totalorder %v96, %v109
    %vm125 = vcmp.eq.s32.totalorder %v97, %v109
    %vm126 = vcmp.eq.s32.totalorder %v98, %v109
    %vm127 = vcmp.eq.s32.totalorder %v99, %v109
    %vm128 = vcmp.eq.s32.totalorder %v100, %v109
    %vm129 = vcmp.eq.s32.totalorder %v101, %v109
    %vm130 = vcmp.eq.s32.totalorder %v102, %v109
    %vm131 = vcmp.eq.s32.totalorder %v103, %v109
    %vm132 = vcmp.eq.s32.totalorder %v104, %v109
    %vm133 = vcmp.eq.s32.totalorder %v105, %v109
    %vm134 = vcmp.eq.s32.totalorder %v106, %v109
    %vm135 = vcmp.eq.s32.totalorder %v91, %v112
    %vm136 = vcmp.eq.s32.totalorder %v92, %v112
    %vm137 = vcmp.eq.s32.totalorder %v93, %v112
    %vm138 = vcmp.eq.s32.totalorder %v94, %v112
    %vm139 = vcmp.eq.s32.totalorder %v95, %v112
    %vm140 = vcmp.eq.s32.totalorder %v96, %v112
    %vm141 = vcmp.eq.s32.totalorder %v97, %v112
    %vm142 = vcmp.eq.s32.totalorder %v98, %v112
    %vm143 = vcmp.eq.s32.totalorder %v99, %v112
    %vm144 = vcmp.eq.s32.totalorder %v100, %v112
    %vm145 = vcmp.eq.s32.totalorder %v101, %v112
    %vm146 = vcmp.eq.s32.totalorder %v102, %v112
    %vm147 = vcmp.eq.s32.totalorder %v103, %v112
    %vm148 = vcmp.eq.s32.totalorder %v104, %v112
    %vm149 = vcmp.eq.s32.totalorder %v105, %v112
    %vm150 = vcmp.eq.s32.totalorder %v106, %v112
    %vm151 = vcmp.eq.s32.totalorder %v91, %v115
    %vm152 = vcmp.eq.s32.totalorder %v92, %v115
    %vm153 = vcmp.eq.s32.totalorder %v93, %v115
    %vm154 = vcmp.eq.s32.totalorder %v94, %v115
    %vm155 = vcmp.eq.s32.totalorder %v95, %v115
    %vm156 = vcmp.eq.s32.totalorder %v96, %v115
    %vm157 = vcmp.eq.s32.totalorder %v97, %v115
    %vm158 = vcmp.eq.s32.totalorder %v98, %v115
    %vm159 = vcmp.eq.s32.totalorder %v99, %v115
    %vm160 = vcmp.eq.s32.totalorder %v100, %v115
    %vm161 = vcmp.eq.s32.totalorder %v101, %v115
    %vm162 = vcmp.eq.s32.totalorder %v102, %v115
    %vm163 = vcmp.eq.s32.totalorder %v103, %v115
    %vm164 = vcmp.eq.s32.totalorder %v104, %v115
    %vm165 = vcmp.eq.s32.totalorder %v105, %v115
    %vm166 = vcmp.eq.s32.totalorder %v106, %v115
    %vm167 = vcmp.eq.s32.totalorder %v91, %v118
    %vm168 = vcmp.eq.s32.totalorder %v92, %v118
    %vm169 = vcmp.eq.s32.totalorder %v93, %v118
    %vm170 = vcmp.eq.s32.totalorder %v94, %v118
    %vm171 = vcmp.eq.s32.totalorder %v95, %v118
    %vm172 = vcmp.eq.s32.totalorder %v96, %v118
    %vm173 = vcmp.eq.s32.totalorder %v97, %v118
    %vm174 = vcmp.eq.s32.totalorder %v98, %v118
    %vm175 = vcmp.eq.s32.totalorder %v99, %v118
    %vm176 = vcmp.eq.s32.totalorder %v100, %v118
    %vm177 = vcmp.eq.s32.totalorder %v101, %v118
    %vm178 = vcmp.eq.s32.totalorder %v102, %v118
    %vm179 = vcmp.eq.s32.totalorder %v103, %v118
    %vm180 = vcmp.eq.s32.totalorder %v104, %v118
    %vm181 = vcmp.eq.s32.totalorder %v105, %v118
    %vm182 = vcmp.eq.s32.totalorder %v106, %v118
    %v183 = vsel %vm119, 1, 0
    %v184 = vsel %vm120, 1, 0
    %v185 = vsel %vm121, 1, 0
    %v186 = vsel %vm122, 1, 0
    %v187 = vsel %vm123, 1, 0
    %v188 = vsel %vm124, 1, 0
    %v189 = vsel %vm125, 1, 0
    %v190 = vsel %vm126, 1, 0
    %v191 = vsel %vm127, 1, 0
    %v192 = vsel %vm128, 1, 0
    %v193 = vsel %vm129, 1, 0
    %v194 = vsel %vm130, 1, 0
    %v195 = vsel %vm131, 1, 0
    %v196 = vsel %vm132, 1, 0
    %v197 = vsel %vm133, 1, 0
    %v198 = vsel %vm134, 1, 0
    %v199 = vsel %vm135, 1, 0
    %v200 = vsel %vm136, 1, 0
    %v201 = vsel %vm137, 1, 0
    %v202 = vsel %vm138, 1, 0
    %v203 = vsel %vm139, 1, 0
    %v204 = vsel %vm140, 1, 0
    %v205 = vsel %vm141, 1, 0
    %v206 = vsel %vm142, 1, 0
    %v207 = vsel %vm143, 1, 0
    %v208 = vsel %vm144, 1, 0
    %v209 = vsel %vm145, 1, 0
    %v210 = vsel %vm146, 1, 0
    %v211 = vsel %vm147, 1, 0
    %v212 = vsel %vm148, 1, 0
    %v213 = vsel %vm149, 1, 0
    %v214 = vsel %vm150, 1, 0
    %v215 = vsel %vm151, 1, 0
    %v216 = vsel %vm152, 1, 0
    %v217 = vsel %vm153, 1, 0
    %v218 = vsel %vm154, 1, 0
    %v219 = vsel %vm155, 1, 0
    %v220 = vsel %vm156, 1, 0
    %v221 = vsel %vm157, 1, 0
    %v222 = vsel %vm158, 1, 0
    %v223 = vsel %vm159, 1, 0
    %v224 = vsel %vm160, 1, 0
    %v225 = vsel %vm161, 1, 0
    %v226 = vsel %vm162, 1, 0
    %v227 = vsel %vm163, 1, 0
    %v228 = vsel %vm164, 1, 0
    %v229 = vsel %vm165, 1, 0
    %v230 = vsel %vm166, 1, 0
    %v231 = vsel %vm167, 1, 0
    %v232 = vsel %vm168, 1, 0
    %v233 = vsel %vm169, 1, 0
    %v234 = vsel %vm170, 1, 0
    %v235 = vsel %vm171, 1, 0
    %v236 = vsel %vm172, 1, 0
    %v237 = vsel %vm173, 1, 0
    %v238 = vsel %vm174, 1, 0
    %v239 = vsel %vm175, 1, 0
    %v240 = vsel %vm176, 1, 0
    %v241 = vsel %vm177, 1, 0
    %v242 = vsel %vm178, 1, 0
    %v243 = vsel %vm179, 1, 0
    %v244 = vsel %vm180, 1, 0
    %v245 = vsel %vm181, 1, 0
    %v246 = vsel %vm182, 1, 0
    %v247 = vcvt.s32.f32 %v183
    %v248 = vcvt.s32.f32 %v184
    %v249 = vcvt.s32.f32 %v185
    %v250 = vcvt.s32.f32 %v186
    %v251 = vcvt.s32.f32 %v187
    %v252 = vcvt.s32.f32 %v188
    %v253 = vcvt.s32.f32 %v189
    %v254 = vcvt.s32.f32 %v190
    %v255 = vcvt.s32.f32 %v191
    %v256 = vcvt.s32.f32 %v192
    %v257 = vcvt.s32.f32 %v193
    %v258 = vcvt.s32.f32 %v194
    %v259 = vcvt.s32.f32 %v195
    %v260 = vcvt.s32.f32 %v196
    %v261 = vcvt.s32.f32 %v197
    %v262 = vcvt.s32.f32 %v198
    %v263 = vcvt.s32.f32 %v199
    %v264 = vcvt.s32.f32 %v200
    %v265 = vcvt.s32.f32 %v201
    %v266 = vcvt.s32.f32 %v202
    %v267 = vcvt.s32.f32 %v203
    %v268 = vcvt.s32.f32 %v204
    %v269 = vcvt.s32.f32 %v205
    %v270 = vcvt.s32.f32 %v206
    %v271 = vcvt.s32.f32 %v207
    %v272 = vcvt.s32.f32 %v208
    %v273 = vcvt.s32.f32 %v209
    %v274 = vcvt.s32.f32 %v210
    %v275 = vcvt.s32.f32 %v211
    %v276 = vcvt.s32.f32 %v212
    %v277 = vcvt.s32.f32 %v213
    %v278 = vcvt.s32.f32 %v214
    %v279 = vcvt.s32.f32 %v215
    %v280 = vcvt.s32.f32 %v216
    %v281 = vcvt.s32.f32 %v217
    %v282 = vcvt.s32.f32 %v218
    %v283 = vcvt.s32.f32 %v219
    %v284 = vcvt.s32.f32 %v220
    %v285 = vcvt.s32.f32 %v221
    %v286 = vcvt.s32.f32 %v222
    %v287 = vcvt.s32.f32 %v223
    %v288 = vcvt.s32.f32 %v224
    %v289 = vcvt.s32.f32 %v225
    %v290 = vcvt.s32.f32 %v226
    %v291 = vcvt.s32.f32 %v227
    %v292 = vcvt.s32.f32 %v228
    %v293 = vcvt.s32.f32 %v229
    %v294 = vcvt.s32.f32 %v230
    %v295 = vcvt.s32.f32 %v231
    %v296 = vcvt.s32.f32 %v232
    %v297 = vcvt.s32.f32 %v233
    %v298 = vcvt.s32.f32 %v234
    %v299 = vcvt.s32.f32 %v235
    %v300 = vcvt.s32.f32 %v236
    %v301 = vcvt.s32.f32 %v237
    %v302 = vcvt.s32.f32 %v238
    %v303 = vcvt.s32.f32 %v239
    %v304 = vcvt.s32.f32 %v240
    %v305 = vcvt.s32.f32 %v241
    %v306 = vcvt.s32.f32 %v242
    %v307 = vcvt.s32.f32 %v243
    %v308 = vcvt.s32.f32 %v244
    %v309 = vcvt.s32.f32 %v245
    %v310 = vcvt.s32.f32 %v246
    %v311 = vpack.c.bf16 %v263, %v247
    %v312 = vpack.c.bf16 %v264, %v248
    %v313 = vpack.c.bf16 %v265, %v249
    %v314 = vpack.c.bf16 %v266, %v250
    %v315 = vpack.c.bf16 %v267, %v251
    %v316 = vpack.c.bf16 %v268, %v252
    %v317 = vpack.c.bf16 %v269, %v253
    %v318 = vpack.c.bf16 %v270, %v254
    %v319 = vpack.c.bf16 %v271, %v255
    %v320 = vpack.c.bf16 %v272, %v256
    %v321 = vpack.c.bf16 %v273, %v257
    %v322 = vpack.c.bf16 %v274, %v258
    %v323 = vpack.c.bf16 %v275, %v259
    %v324 = vpack.c.bf16 %v276, %v260
    %v325 = vpack.c.bf16 %v277, %v261
    %v326 = vpack.c.bf16 %v278, %v262
    %v327 = vpack.c.bf16 %v295, %v279
    %v328 = vpack.c.bf16 %v296, %v280
    %v329 = vpack.c.bf16 %v297, %v281
    %v330 = vpack.c.bf16 %v298, %v282
    %v331 = vpack.c.bf16 %v299, %v283
    %v332 = vpack.c.bf16 %v300, %v284
    %v333 = vpack.c.bf16 %v301, %v285
    %v334 = vpack.c.bf16 %v302, %v286
    %v335 = vpack.c.bf16 %v303, %v287
    %v336 = vpack.c.bf16 %v304, %v288
    %v337 = vpack.c.bf16 %v305, %v289
    %v338 = vpack.c.bf16 %v306, %v290
    %v339 = vpack.c.bf16 %v307, %v291
    %v340 = vpack.c.bf16 %v308, %v292
    %v341 = vpack.c.bf16 %v309, %v293
    %v342 = vpack.c.bf16 %v310, %v294
    %v343 = vld [vmem:[#allocation5] sm:$0xf]
    %v344 = vld [vmem:[#allocation5 + $0x4] sm:$0xf]
    %v345 = vld [vmem:[#allocation5 + $0x8] sm:$0xf]
    %v346 = vld [vmem:[#allocation5 + $0xc] sm:$0xf]
    %v347 = vld [vmem:[#allocation5 + $0x10] sm:$0xf]
    %v348 = vld [vmem:[#allocation5 + $0x14] sm:$0xf]
    %v349 = vld [vmem:[#allocation5 + $0x18] sm:$0xf]
    %v350 = vld [vmem:[#allocation5 + $0x1c] sm:$0xf]
    %v351 = vld [vmem:[#allocation5 + $0x20] sm:$0xf]
    %v352 = vld [vmem:[#allocation5 + $0x24] sm:$0xf]
    %v353 = vld [vmem:[#allocation5 + $0x28] sm:$0xf]
    %v354 = vld [vmem:[#allocation5 + $0x2c] sm:$0xf]
    %v355 = vld [vmem:[#allocation5 + $0x30] sm:$0xf]
    %v356 = vld [vmem:[#allocation5 + $0x34] sm:$0xf]
    %v357 = vld [vmem:[#allocation5 + $0x38] sm:$0xf]
    %v358 = vld [vmem:[#allocation5 + $0x3c] sm:$0xf]
    %v359 = vld [vmem:[#allocation5 + $0x40] sm:$0xf]
    %v360 = vld [vmem:[#allocation5 + $0x44] sm:$0xf]
    %v361 = vld [vmem:[#allocation5 + $0x48] sm:$0xf]
    %v362 = vld [vmem:[#allocation5 + $0x4c] sm:$0xf]
    %v363 = vld [vmem:[#allocation5 + $0x50] sm:$0xf]
    %v364 = vld [vmem:[#allocation5 + $0x54] sm:$0xf]
    %v365 = vld [vmem:[#allocation5 + $0x58] sm:$0xf]
    %v366 = vld [vmem:[#allocation5 + $0x5c] sm:$0xf]
    %v367 = vld [vmem:[#allocation5 + $0x60] sm:$0xf]
    %v368 = vld [vmem:[#allocation5 + $0x64] sm:$0xf]
    %v369 = vld [vmem:[#allocation5 + $0x68] sm:$0xf]
    %v370 = vld [vmem:[#allocation5 + $0x6c] sm:$0xf]
    %v371 = vld [vmem:[#allocation5 + $0x70] sm:$0xf]
    %v372 = vld [vmem:[#allocation5 + $0x74] sm:$0xf]
    %v373 = vld [vmem:[#allocation5 + $0x78] sm:$0xf]
    %v374 = vld [vmem:[#allocation5 + $0x7c] sm:$0xf]
    %v375 = vld [vmem:[#allocation5 + $0x80] sm:$0xf]
    %v376 = vld [vmem:[#allocation5 + $0x84] sm:$0xf]
    %v377 = vld [vmem:[#allocation5 + $0x88] sm:$0xf]
    %v378 = vld [vmem:[#allocation5 + $0x8c] sm:$0xf]
    %v379 = vld [vmem:[#allocation5 + $0x90] sm:$0xf]
    %v380 = vld [vmem:[#allocation5 + $0x94] sm:$0xf]
    %v381 = vld [vmem:[#allocation5 + $0x98] sm:$0xf]
    %v382 = vld [vmem:[#allocation5 + $0x9c] sm:$0xf]
    %v383 = vld [vmem:[#allocation5 + $0xa0] sm:$0xf]
    %v384 = vld [vmem:[#allocation5 + $0xa4] sm:$0xf]
    %v385 = vld [vmem:[#allocation5 + $0xa8] sm:$0xf]
    %v386 = vld [vmem:[#allocation5 + $0xac] sm:$0xf]
    %v387 = vld [vmem:[#allocation5 + $0xb0] sm:$0xf]
    %v388 = vld [vmem:[#allocation5 + $0xb4] sm:$0xf]
    %v389 = vld [vmem:[#allocation5 + $0xb8] sm:$0xf]
    %v390 = vld [vmem:[#allocation5 + $0xbc] sm:$0xf]
    %v391 = vld [vmem:[#allocation5 + $0xc0] sm:$0xf]
    %v392 = vld [vmem:[#allocation5 + $0xc4] sm:$0xf]
    %v393 = vld [vmem:[#allocation5 + $0xc8] sm:$0xf]
    %v394 = vld [vmem:[#allocation5 + $0xcc] sm:$0xf]
    %v395 = vld [vmem:[#allocation5 + $0xd0] sm:$0xf]
    %v396 = vld [vmem:[#allocation5 + $0xd4] sm:$0xf]
    %v397 = vld [vmem:[#allocation5 + $0xd8] sm:$0xf]
    %v398 = vld [vmem:[#allocation5 + $0xdc] sm:$0xf]
    %v399 = vld [vmem:[#allocation5 + $0xe0] sm:$0xf]
    %v400 = vld [vmem:[#allocation5 + $0xe4] sm:$0xf]
    %v401 = vld [vmem:[#allocation5 + $0xe8] sm:$0xf]
    %v402 = vld [vmem:[#allocation5 + $0xec] sm:$0xf]
    %v403 = vld [vmem:[#allocation5 + $0xf0] sm:$0xf]
    %v404 = vld [vmem:[#allocation5 + $0xf4] sm:$0xf]
    %v405 = vld [vmem:[#allocation5 + $0xf8] sm:$0xf]
    %v406 = vld [vmem:[#allocation5 + $0xfc] sm:$0xf]
    %v407 = vld [vmem:[#allocation5 + $0x100] sm:$0xf]
    %v408 = vld [vmem:[#allocation5 + $0x104] sm:$0xf]
    %v409 = vld [vmem:[#allocation5 + $0x108] sm:$0xf]
    %v410 = vld [vmem:[#allocation5 + $0x10c] sm:$0xf]
    %v411 = vld [vmem:[#allocation5 + $0x110] sm:$0xf]
    %v412 = vld [vmem:[#allocation5 + $0x114] sm:$0xf]
    %v413 = vld [vmem:[#allocation5 + $0x118] sm:$0xf]
    %v414 = vld [vmem:[#allocation5 + $0x11c] sm:$0xf]
    %v415 = vld [vmem:[#allocation5 + $0x120] sm:$0xf]
    %v416 = vld [vmem:[#allocation5 + $0x124] sm:$0xf]
    %v417 = vld [vmem:[#allocation5 + $0x128] sm:$0xf]
    %v418 = vld [vmem:[#allocation5 + $0x12c] sm:$0xf]
    %v419 = vld [vmem:[#allocation5 + $0x130] sm:$0xf]
    %v420 = vld [vmem:[#allocation5 + $0x134] sm:$0xf]
    %v421 = vld [vmem:[#allocation5 + $0x138] sm:$0xf]
    %v422 = vld [vmem:[#allocation5 + $0x13c] sm:$0xf]
    %v423 = vld [vmem:[#allocation5 + $0x140] sm:$0xf]
    %v424 = vld [vmem:[#allocation5 + $0x144] sm:$0xf]
    %v425 = vld [vmem:[#allocation5 + $0x148] sm:$0xf]
    %v426 = vld [vmem:[#allocation5 + $0x14c] sm:$0xf]
    %v427 = vld [vmem:[#allocation5 + $0x150] sm:$0xf]
    %v428 = vld [vmem:[#allocation5 + $0x154] sm:$0xf]
    %v429 = vld [vmem:[#allocation5 + $0x158] sm:$0xf]
    %v430 = vld [vmem:[#allocation5 + $0x15c] sm:$0xf]
    %v431 = vld [vmem:[#allocation5 + $0x160] sm:$0xf]
    %v432 = vld [vmem:[#allocation5 + $0x164] sm:$0xf]
    %v433 = vld [vmem:[#allocation5 + $0x168] sm:$0xf]
    %v434 = vld [vmem:[#allocation5 + $0x16c] sm:$0xf]
    %v435 = vld [vmem:[#allocation5 + $0x170] sm:$0xf]
    %v436 = vld [vmem:[#allocation5 + $0x174] sm:$0xf]
    %v437 = vld [vmem:[#allocation5 + $0x178] sm:$0xf]
    %v438 = vld [vmem:[#allocation5 + $0x17c] sm:$0xf]
    %v439 = vld [vmem:[#allocation5 + $0x180] sm:$0xf]
    %v440 = vld [vmem:[#allocation5 + $0x184] sm:$0xf]
    %v441 = vld [vmem:[#allocation5 + $0x188] sm:$0xf]
    %v442 = vld [vmem:[#allocation5 + $0x18c] sm:$0xf]
    %v443 = vld [vmem:[#allocation5 + $0x190] sm:$0xf]
    %v444 = vld [vmem:[#allocation5 + $0x194] sm:$0xf]
    %v445 = vld [vmem:[#allocation5 + $0x198] sm:$0xf]
    %v446 = vld [vmem:[#allocation5 + $0x19c] sm:$0xf]
    %v447 = vld [vmem:[#allocation5 + $0x1a0] sm:$0xf]
    %v448 = vld [vmem:[#allocation5 + $0x1a4] sm:$0xf]
    %v449 = vld [vmem:[#allocation5 + $0x1a8] sm:$0xf]
    %v450 = vld [vmem:[#allocation5 + $0x1ac] sm:$0xf]
    %v451 = vld [vmem:[#allocation5 + $0x1b0] sm:$0xf]
    %v452 = vld [vmem:[#allocation5 + $0x1b4] sm:$0xf]
    %v453 = vld [vmem:[#allocation5 + $0x1b8] sm:$0xf]
    %v454 = vld [vmem:[#allocation5 + $0x1bc] sm:$0xf]
    %v455 = vld [vmem:[#allocation5 + $0x1c0] sm:$0xf]
    %v456 = vld [vmem:[#allocation5 + $0x1c4] sm:$0xf]
    %v457 = vld [vmem:[#allocation5 + $0x1c8] sm:$0xf]
    %v458 = vld [vmem:[#allocation5 + $0x1cc] sm:$0xf]
    %v459 = vld [vmem:[#allocation5 + $0x1d0] sm:$0xf]
    %v460 = vld [vmem:[#allocation5 + $0x1d4] sm:$0xf]
    %v461 = vld [vmem:[#allocation5 + $0x1d8] sm:$0xf]
    %v462 = vld [vmem:[#allocation5 + $0x1dc] sm:$0xf]
    %v463 = vld [vmem:[#allocation5 + $0x1e0] sm:$0xf]
    %v464 = vld [vmem:[#allocation5 + $0x1e4] sm:$0xf]
    %v465 = vld [vmem:[#allocation5 + $0x1e8] sm:$0xf]
    %v466 = vld [vmem:[#allocation5 + $0x1ec] sm:$0xf]
    %v467 = vld [vmem:[#allocation5 + $0x1f0] sm:$0xf]
    %v468 = vld [vmem:[#allocation5 + $0x1f4] sm:$0xf]
    %v469 = vld [vmem:[#allocation5 + $0x1f8] sm:$0xf]
    %v470 = vld [vmem:[#allocation5 + $0x1fc] sm:$0xf]
    %v471 = vld [vmem:[#allocation5 + $0x200] sm:$0xf]
    %v472 = vld [vmem:[#allocation5 + $0x204] sm:$0xf]
    %v473 = vld [vmem:[#allocation5 + $0x208] sm:$0xf]
    %v474 = vld [vmem:[#allocation5 + $0x20c] sm:$0xf]
    %v475 = vld [vmem:[#allocation5 + $0x210] sm:$0xf]
    %v476 = vld [vmem:[#allocation5 + $0x214] sm:$0xf]
    %v477 = vld [vmem:[#allocation5 + $0x218] sm:$0xf]
    %v478 = vld [vmem:[#allocation5 + $0x21c] sm:$0xf]
    %v479 = vld [vmem:[#allocation5 + $0x220] sm:$0xf]
    %v480 = vld [vmem:[#allocation5 + $0x224] sm:$0xf]
    %v481 = vld [vmem:[#allocation5 + $0x228] sm:$0xf]
    %v482 = vld [vmem:[#allocation5 + $0x22c] sm:$0xf]
    %v483 = vld [vmem:[#allocation5 + $0x230] sm:$0xf]
    %v484 = vld [vmem:[#allocation5 + $0x234] sm:$0xf]
    %v485 = vld [vmem:[#allocation5 + $0x238] sm:$0xf]
    %v486 = vld [vmem:[#allocation5 + $0x23c] sm:$0xf]
    %v487 = vld [vmem:[#allocation5 + $0x240] sm:$0xf]
    %v488 = vld [vmem:[#allocation5 + $0x244] sm:$0xf]
    %v489 = vld [vmem:[#allocation5 + $0x248] sm:$0xf]
    %v490 = vld [vmem:[#allocation5 + $0x24c] sm:$0xf]
    %v491 = vld [vmem:[#allocation5 + $0x250] sm:$0xf]
    %v492 = vld [vmem:[#allocation5 + $0x254] sm:$0xf]
    %v493 = vld [vmem:[#allocation5 + $0x258] sm:$0xf]
    %v494 = vld [vmem:[#allocation5 + $0x25c] sm:$0xf]
    %v495 = vld [vmem:[#allocation5 + $0x260] sm:$0xf]
    %v496 = vld [vmem:[#allocation5 + $0x264] sm:$0xf]
    %v497 = vld [vmem:[#allocation5 + $0x268] sm:$0xf]
    %v498 = vld [vmem:[#allocation5 + $0x26c] sm:$0xf]
    %v499 = vld [vmem:[#allocation5 + $0x270] sm:$0xf]
    %v500 = vld [vmem:[#allocation5 + $0x274] sm:$0xf]
    %v501 = vld [vmem:[#allocation5 + $0x278] sm:$0xf]
    %v502 = vld [vmem:[#allocation5 + $0x27c] sm:$0xf]
    %v503 = vld [vmem:[#allocation5 + $0x280] sm:$0xf]
    %v504 = vld [vmem:[#allocation5 + $0x284] sm:$0xf]
    %v505 = vld [vmem:[#allocation5 + $0x288] sm:$0xf]
    %v506 = vld [vmem:[#allocation5 + $0x28c] sm:$0xf]
    %v507 = vld [vmem:[#allocation5 + $0x290] sm:$0xf]
    %v508 = vld [vmem:[#allocation5 + $0x294] sm:$0xf]
    %v509 = vld [vmem:[#allocation5 + $0x298] sm:$0xf]
    %v510 = vld [vmem:[#allocation5 + $0x29c] sm:$0xf]
    %v511 = vld [vmem:[#allocation5 + $0x2a0] sm:$0xf]
    %v512 = vld [vmem:[#allocation5 + $0x2a4] sm:$0xf]
    %v513 = vld [vmem:[#allocation5 + $0x2a8] sm:$0xf]
    %v514 = vld [vmem:[#allocation5 + $0x2ac] sm:$0xf]
    %v515 = vld [vmem:[#allocation5 + $0x2b0] sm:$0xf]
    %v516 = vld [vmem:[#allocation5 + $0x2b4] sm:$0xf]
    %v517 = vld [vmem:[#allocation5 + $0x2b8] sm:$0xf]
    %v518 = vld [vmem:[#allocation5 + $0x2bc] sm:$0xf]
    %v519 = vld [vmem:[#allocation5 + $0x2c0] sm:$0xf]
    %v520 = vld [vmem:[#allocation5 + $0x2c4] sm:$0xf]
    %v521 = vld [vmem:[#allocation5 + $0x2c8] sm:$0xf]
    %v522 = vld [vmem:[#allocation5 + $0x2cc] sm:$0xf]
    %v523 = vld [vmem:[#allocation5 + $0x2d0] sm:$0xf]
    %v524 = vld [vmem:[#allocation5 + $0x2d4] sm:$0xf]
    %v525 = vld [vmem:[#allocation5 + $0x2d8] sm:$0xf]
    %v526 = vld [vmem:[#allocation5 + $0x2dc] sm:$0xf]
    %v527 = vld [vmem:[#allocation5 + $0x2e0] sm:$0xf]
    %v528 = vld [vmem:[#allocation5 + $0x2e4] sm:$0xf]
    %v529 = vld [vmem:[#allocation5 + $0x2e8] sm:$0xf]
    %v530 = vld [vmem:[#allocation5 + $0x2ec] sm:$0xf]
    %v531 = vld [vmem:[#allocation5 + $0x2f0] sm:$0xf]
    %v532 = vld [vmem:[#allocation5 + $0x2f4] sm:$0xf]
    %v533 = vld [vmem:[#allocation5 + $0x2f8] sm:$0xf]
    %v534 = vld [vmem:[#allocation5 + $0x2fc] sm:$0xf]
    %v535 = vld [vmem:[#allocation5 + $0x300] sm:$0xf]
    %v536 = vld [vmem:[#allocation5 + $0x304] sm:$0xf]
    %v537 = vld [vmem:[#allocation5 + $0x308] sm:$0xf]
    %v538 = vld [vmem:[#allocation5 + $0x30c] sm:$0xf]
    %v539 = vld [vmem:[#allocation5 + $0x310] sm:$0xf]
    %v540 = vld [vmem:[#allocation5 + $0x314] sm:$0xf]
    %v541 = vld [vmem:[#allocation5 + $0x318] sm:$0xf]
    %v542 = vld [vmem:[#allocation5 + $0x31c] sm:$0xf]
    %v543 = vld [vmem:[#allocation5 + $0x320] sm:$0xf]
    %v544 = vld [vmem:[#allocation5 + $0x324] sm:$0xf]
    %v545 = vld [vmem:[#allocation5 + $0x328] sm:$0xf]
    %v546 = vld [vmem:[#allocation5 + $0x32c] sm:$0xf]
    %v547 = vld [vmem:[#allocation5 + $0x330] sm:$0xf]
    %v548 = vld [vmem:[#allocation5 + $0x334] sm:$0xf]
    %v549 = vld [vmem:[#allocation5 + $0x338] sm:$0xf]
    %v550 = vld [vmem:[#allocation5 + $0x33c] sm:$0xf]
    %v551 = vld [vmem:[#allocation5 + $0x340] sm:$0xf]
    %v552 = vld [vmem:[#allocation5 + $0x344] sm:$0xf]
    %v553 = vld [vmem:[#allocation5 + $0x348] sm:$0xf]
    %v554 = vld [vmem:[#allocation5 + $0x34c] sm:$0xf]
    %v555 = vld [vmem:[#allocation5 + $0x350] sm:$0xf]
    %v556 = vld [vmem:[#allocation5 + $0x354] sm:$0xf]
    %v557 = vld [vmem:[#allocation5 + $0x358] sm:$0xf]
    %v558 = vld [vmem:[#allocation5 + $0x35c] sm:$0xf]
    %v559 = vld [vmem:[#allocation5 + $0x360] sm:$0xf]
    %v560 = vld [vmem:[#allocation5 + $0x364] sm:$0xf]
    %v561 = vld [vmem:[#allocation5 + $0x368] sm:$0xf]
    %v562 = vld [vmem:[#allocation5 + $0x36c] sm:$0xf]
    %v563 = vld [vmem:[#allocation5 + $0x370] sm:$0xf]
    %v564 = vld [vmem:[#allocation5 + $0x374] sm:$0xf]
    %v565 = vld [vmem:[#allocation5 + $0x378] sm:$0xf]
    %v566 = vld [vmem:[#allocation5 + $0x37c] sm:$0xf]
    %v567 = vld [vmem:[#allocation5 + $0x380] sm:$0xf]
    %v568 = vld [vmem:[#allocation5 + $0x384] sm:$0xf]
    %v569 = vld [vmem:[#allocation5 + $0x388] sm:$0xf]
    %v570 = vld [vmem:[#allocation5 + $0x38c] sm:$0xf]
    %v571 = vld [vmem:[#allocation5 + $0x390] sm:$0xf]
    %v572 = vld [vmem:[#allocation5 + $0x394] sm:$0xf]
    %v573 = vld [vmem:[#allocation5 + $0x398] sm:$0xf]
    %v574 = vld [vmem:[#allocation5 + $0x39c] sm:$0xf]
    %v575 = vld [vmem:[#allocation5 + $0x3a0] sm:$0xf]
    %v576 = vld [vmem:[#allocation5 + $0x3a4] sm:$0xf]
    %v577 = vld [vmem:[#allocation5 + $0x3a8] sm:$0xf]
    %v578 = vld [vmem:[#allocation5 + $0x3ac] sm:$0xf]
    %v579 = vld [vmem:[#allocation5 + $0x3b0] sm:$0xf]
    %v580 = vld [vmem:[#allocation5 + $0x3b4] sm:$0xf]
    %v581 = vld [vmem:[#allocation5 + $0x3b8] sm:$0xf]
    %v582 = vld [vmem:[#allocation5 + $0x3bc] sm:$0xf]
    %v583 = vld [vmem:[#allocation5 + $0x3c0] sm:$0xf]
    %v584 = vld [vmem:[#allocation5 + $0x3c4] sm:$0xf]
    %v585 = vld [vmem:[#allocation5 + $0x3c8] sm:$0xf]
    %v586 = vld [vmem:[#allocation5 + $0x3cc] sm:$0xf]
    %v587 = vld [vmem:[#allocation5 + $0x3d0] sm:$0xf]
    %v588 = vld [vmem:[#allocation5 + $0x3d4] sm:$0xf]
    %v589 = vld [vmem:[#allocation5 + $0x3d8] sm:$0xf]
    %v590 = vld [vmem:[#allocation5 + $0x3dc] sm:$0xf]
    %v591 = vld [vmem:[#allocation5 + $0x3e0] sm:$0xf]
    %v592 = vld [vmem:[#allocation5 + $0x3e4] sm:$0xf]
    %v593 = vld [vmem:[#allocation5 + $0x3e8] sm:$0xf]
    %v594 = vld [vmem:[#allocation5 + $0x3ec] sm:$0xf]
    %v595 = vld [vmem:[#allocation5 + $0x3f0] sm:$0xf]
    %v596 = vld [vmem:[#allocation5 + $0x3f4] sm:$0xf]
    %v597 = vld [vmem:[#allocation5 + $0x3f8] sm:$0xf]
    %v598 = vld [vmem:[#allocation5 + $0x3fc] sm:$0xf]
    %v855 = vunpack.c.l.b16 %v343
    %v856 = vunpack.c.l.b16 %v344
    %v857 = vunpack.c.l.b16 %v345
    %v858 = vunpack.c.l.b16 %v346
    %v859 = vunpack.c.l.b16 %v347
    %v860 = vunpack.c.l.b16 %v348
    %v861 = vunpack.c.l.b16 %v349
    %v862 = vunpack.c.l.b16 %v350
    %v863 = vunpack.c.l.b16 %v351
    %v864 = vunpack.c.l.b16 %v352
    %v865 = vunpack.c.l.b16 %v353
    %v866 = vunpack.c.l.b16 %v354
    %v867 = vunpack.c.l.b16 %v355
    %v868 = vunpack.c.l.b16 %v356
    %v869 = vunpack.c.l.b16 %v357
    %v870 = vunpack.c.l.b16 %v358
    %v871 = vunpack.c.l.b16 %v359
    %v872 = vunpack.c.l.b16 %v360
    %v873 = vunpack.c.l.b16 %v361
    %v874 = vunpack.c.l.b16 %v362
    %v875 = vunpack.c.l.b16 %v363
    %v876 = vunpack.c.l.b16 %v364
    %v877 = vunpack.c.l.b16 %v365
    %v878 = vunpack.c.l.b16 %v366
    %v879 = vunpack.c.l.b16 %v367
    %v880 = vunpack.c.l.b16 %v368
    %v881 = vunpack.c.l.b16 %v369
    %v882 = vunpack.c.l.b16 %v370
    %v883 = vunpack.c.l.b16 %v371
    %v884 = vunpack.c.l.b16 %v372
    %v885 = vunpack.c.l.b16 %v373
    %v886 = vunpack.c.l.b16 %v374
    %v887 = vunpack.c.l.b16 %v375
    %v888 = vunpack.c.l.b16 %v376
    %v889 = vunpack.c.l.b16 %v377
    %v890 = vunpack.c.l.b16 %v378
    %v891 = vunpack.c.l.b16 %v379
    %v892 = vunpack.c.l.b16 %v380
    %v893 = vunpack.c.l.b16 %v381
    %v894 = vunpack.c.l.b16 %v382
    %v895 = vunpack.c.l.b16 %v383
    %v896 = vunpack.c.l.b16 %v384
    %v897 = vunpack.c.l.b16 %v385
    %v898 = vunpack.c.l.b16 %v386
    %v899 = vunpack.c.l.b16 %v387
    %v900 = vunpack.c.l.b16 %v388
    %v901 = vunpack.c.l.b16 %v389
    %v902 = vunpack.c.l.b16 %v390
    %v903 = vunpack.c.l.b16 %v391
    %v904 = vunpack.c.l.b16 %v392
    %v905 = vunpack.c.l.b16 %v393
    %v906 = vunpack.c.l.b16 %v394
    %v907 = vunpack.c.l.b16 %v395
    %v908 = vunpack.c.l.b16 %v396
    %v909 = vunpack.c.l.b16 %v397
    %v910 = vunpack.c.l.b16 %v398
    %v911 = vunpack.c.l.b16 %v399
    %v912 = vunpack.c.l.b16 %v400
    %v913 = vunpack.c.l.b16 %v401
    %v914 = vunpack.c.l.b16 %v402
    %v915 = vunpack.c.l.b16 %v403
    %v916 = vunpack.c.l.b16 %v404
    %v917 = vunpack.c.l.b16 %v405
    %v918 = vunpack.c.l.b16 %v406
    %v919 = vunpack.c.l.b16 %v407
    %v920 = vunpack.c.l.b16 %v408
    %v921 = vunpack.c.l.b16 %v409
    %v922 = vunpack.c.l.b16 %v410
    %v923 = vunpack.c.l.b16 %v411
    %v924 = vunpack.c.l.b16 %v412
    %v925 = vunpack.c.l.b16 %v413
    %v926 = vunpack.c.l.b16 %v414
    %v927 = vunpack.c.l.b16 %v415
    %v928 = vunpack.c.l.b16 %v416
    %v929 = vunpack.c.l.b16 %v417
    %v930 = vunpack.c.l.b16 %v418
    %v931 = vunpack.c.l.b16 %v419
    %v932 = vunpack.c.l.b16 %v420
    %v933 = vunpack.c.l.b16 %v421
    %v934 = vunpack.c.l.b16 %v422
    %v935 = vunpack.c.l.b16 %v423
    %v936 = vunpack.c.l.b16 %v424
    %v937 = vunpack.c.l.b16 %v425
    %v938 = vunpack.c.l.b16 %v426
    %v939 = vunpack.c.l.b16 %v427
    %v940 = vunpack.c.l.b16 %v428
    %v941 = vunpack.c.l.b16 %v429
    %v942 = vunpack.c.l.b16 %v430
    %v943 = vunpack.c.l.b16 %v431
    %v944 = vunpack.c.l.b16 %v432
    %v945 = vunpack.c.l.b16 %v433
    %v946 = vunpack.c.l.b16 %v434
    %v947 = vunpack.c.l.b16 %v435
    %v948 = vunpack.c.l.b16 %v436
    %v949 = vunpack.c.l.b16 %v437
    %v950 = vunpack.c.l.b16 %v438
    %v951 = vunpack.c.l.b16 %v439
    %v952 = vunpack.c.l.b16 %v440
    %v953 = vunpack.c.l.b16 %v441
    %v954 = vunpack.c.l.b16 %v442
    %v955 = vunpack.c.l.b16 %v443
    %v956 = vunpack.c.l.b16 %v444
    %v957 = vunpack.c.l.b16 %v445
    %v958 = vunpack.c.l.b16 %v446
    %v959 = vunpack.c.l.b16 %v447
    %v960 = vunpack.c.l.b16 %v448
    %v961 = vunpack.c.l.b16 %v449
    %v962 = vunpack.c.l.b16 %v450
    %v963 = vunpack.c.l.b16 %v451
    %v964 = vunpack.c.l.b16 %v452
    %v965 = vunpack.c.l.b16 %v453
    %v966 = vunpack.c.l.b16 %v454
    %v967 = vunpack.c.l.b16 %v455
    %v968 = vunpack.c.l.b16 %v456
    %v969 = vunpack.c.l.b16 %v457
    %v970 = vunpack.c.l.b16 %v458
    %v971 = vunpack.c.l.b16 %v459
    %v972 = vunpack.c.l.b16 %v460
    %v973 = vunpack.c.l.b16 %v461
    %v974 = vunpack.c.l.b16 %v462
    %v975 = vunpack.c.l.b16 %v463
    %v976 = vunpack.c.l.b16 %v464
    %v977 = vunpack.c.l.b16 %v465
    %v978 = vunpack.c.l.b16 %v466
    %v979 = vunpack.c.l.b16 %v467
    %v980 = vunpack.c.l.b16 %v468
    %v981 = vunpack.c.l.b16 %v469
    %v982 = vunpack.c.l.b16 %v470
    %v983 = vunpack.c.l.b16 %v471
    %v984 = vunpack.c.l.b16 %v472
    %v985 = vunpack.c.l.b16 %v473
    %v986 = vunpack.c.l.b16 %v474
    %v987 = vunpack.c.l.b16 %v475
    %v988 = vunpack.c.l.b16 %v476
    %v989 = vunpack.c.l.b16 %v477
    %v990 = vunpack.c.l.b16 %v478
    %v991 = vunpack.c.l.b16 %v479
    %v992 = vunpack.c.l.b16 %v480
    %v993 = vunpack.c.l.b16 %v481
    %v994 = vunpack.c.l.b16 %v482
    %v995 = vunpack.c.l.b16 %v483
    %v996 = vunpack.c.l.b16 %v484
    %v997 = vunpack.c.l.b16 %v485
    %v998 = vunpack.c.l.b16 %v486
    %v999 = vunpack.c.l.b16 %v487
    %v1000 = vunpack.c.l.b16 %v488
    %v1001 = vunpack.c.l.b16 %v489
    %v1002 = vunpack.c.l.b16 %v490
    %v1003 = vunpack.c.l.b16 %v491
    %v1004 = vunpack.c.l.b16 %v492
    %v1005 = vunpack.c.l.b16 %v493
    %v1006 = vunpack.c.l.b16 %v494
    %v1007 = vunpack.c.l.b16 %v495
    %v1008 = vunpack.c.l.b16 %v496
    %v1009 = vunpack.c.l.b16 %v497
    %v1010 = vunpack.c.l.b16 %v498
    %v1011 = vunpack.c.l.b16 %v499
    %v1012 = vunpack.c.l.b16 %v500
    %v1013 = vunpack.c.l.b16 %v501
    %v1014 = vunpack.c.l.b16 %v502
    %v1015 = vunpack.c.l.b16 %v503
    %v1016 = vunpack.c.l.b16 %v504
    %v1017 = vunpack.c.l.b16 %v505
    %v1018 = vunpack.c.l.b16 %v506
    %v1019 = vunpack.c.l.b16 %v507
    %v1020 = vunpack.c.l.b16 %v508
    %v1021 = vunpack.c.l.b16 %v509
    %v1022 = vunpack.c.l.b16 %v510
    %v1023 = vunpack.c.l.b16 %v511
    %v1024 = vunpack.c.l.b16 %v512
    %v1025 = vunpack.c.l.b16 %v513
    %v1026 = vunpack.c.l.b16 %v514
    %v1027 = vunpack.c.l.b16 %v515
    %v1028 = vunpack.c.l.b16 %v516
    %v1029 = vunpack.c.l.b16 %v517
    %v1030 = vunpack.c.l.b16 %v518
    %v1031 = vunpack.c.l.b16 %v519
    %v1032 = vunpack.c.l.b16 %v520
    %v1033 = vunpack.c.l.b16 %v521
    %v1034 = vunpack.c.l.b16 %v522
    %v1035 = vunpack.c.l.b16 %v523
    %v1036 = vunpack.c.l.b16 %v524
    %v1037 = vunpack.c.l.b16 %v525
    %v1038 = vunpack.c.l.b16 %v526
    %v1039 = vunpack.c.l.b16 %v527
    %v1040 = vunpack.c.l.b16 %v528
    %v1041 = vunpack.c.l.b16 %v529
    %v1042 = vunpack.c.l.b16 %v530
    %v1043 = vunpack.c.l.b16 %v531
    %v1044 = vunpack.c.l.b16 %v532
    %v1045 = vunpack.c.l.b16 %v533
    %v1046 = vunpack.c.l.b16 %v534
    %v1047 = vunpack.c.l.b16 %v535
    %v1048 = vunpack.c.l.b16 %v536
    %v1049 = vunpack.c.l.b16 %v537
    %v1050 = vunpack.c.l.b16 %v538
    %v1051 = vunpack.c.l.b16 %v539
    %v1052 = vunpack.c.l.b16 %v540
    %v1053 = vunpack.c.l.b16 %v541
    %v1054 = vunpack.c.l.b16 %v542
    %v1055 = vunpack.c.l.b16 %v543
    %v1056 = vunpack.c.l.b16 %v544
    %v1057 = vunpack.c.l.b16 %v545
    %v1058 = vunpack.c.l.b16 %v546
    %v1059 = vunpack.c.l.b16 %v547
    %v1060 = vunpack.c.l.b16 %v548
    %v1061 = vunpack.c.l.b16 %v549
    %v1062 = vunpack.c.l.b16 %v550
    %v1063 = vunpack.c.l.b16 %v551
    %v1064 = vunpack.c.l.b16 %v552
    %v1065 = vunpack.c.l.b16 %v553
    %v1066 = vunpack.c.l.b16 %v554
    %v1067 = vunpack.c.l.b16 %v555
    %v1068 = vunpack.c.l.b16 %v556
    %v1069 = vunpack.c.l.b16 %v557
    %v1070 = vunpack.c.l.b16 %v558
    %v1071 = vunpack.c.l.b16 %v559
    %v1072 = vunpack.c.l.b16 %v560
    %v1073 = vunpack.c.l.b16 %v561
    %v1074 = vunpack.c.l.b16 %v562
    %v1075 = vunpack.c.l.b16 %v563
    %v1076 = vunpack.c.l.b16 %v564
    %v1077 = vunpack.c.l.b16 %v565
    %v1078 = vunpack.c.l.b16 %v566
    %v1079 = vunpack.c.l.b16 %v567
    %v1080 = vunpack.c.l.b16 %v568
    %v1081 = vunpack.c.l.b16 %v569
    %v1082 = vunpack.c.l.b16 %v570
    %v1083 = vunpack.c.l.b16 %v571
    %v1084 = vunpack.c.l.b16 %v572
    %v1085 = vunpack.c.l.b16 %v573
    %v1086 = vunpack.c.l.b16 %v574
    %v1087 = vunpack.c.l.b16 %v575
    %v1088 = vunpack.c.l.b16 %v576
    %v1089 = vunpack.c.l.b16 %v577
    %v1090 = vunpack.c.l.b16 %v578
    %v1091 = vunpack.c.l.b16 %v579
    %v1092 = vunpack.c.l.b16 %v580
    %v1093 = vunpack.c.l.b16 %v581
    %v1094 = vunpack.c.l.b16 %v582
    %v1095 = vunpack.c.l.b16 %v583
    %v1096 = vunpack.c.l.b16 %v584
    %v1097 = vunpack.c.l.b16 %v585
    %v1098 = vunpack.c.l.b16 %v586
    %v1099 = vunpack.c.l.b16 %v587
    %v1100 = vunpack.c.l.b16 %v588
    %v1101 = vunpack.c.l.b16 %v589
    %v1102 = vunpack.c.l.b16 %v590
    %v1103 = vunpack.c.l.b16 %v591
    %v1104 = vunpack.c.l.b16 %v592
    %v1105 = vunpack.c.l.b16 %v593
    %v1106 = vunpack.c.l.b16 %v594
    %v1107 = vunpack.c.l.b16 %v595
    %v1108 = vunpack.c.l.b16 %v596
    %v1109 = vunpack.c.l.b16 %v597
    %v1110 = vunpack.c.l.b16 %v598
    %v1111 = vpack.c.b16 %v856, %v855
    %v1112 = vpack.c.b16 %v858, %v857
    %v1113 = vpack.c.b16 %v860, %v859
    %v1114 = vpack.c.b16 %v862, %v861
    %v1115 = vpack.c.b16 %v864, %v863
    %v1116 = vpack.c.b16 %v866, %v865
    %v1117 = vpack.c.b16 %v868, %v867
    %v1118 = vpack.c.b16 %v870, %v869
    %v1119 = vpack.c.b16 %v872, %v871
    %v1120 = vpack.c.b16 %v874, %v873
    %v1121 = vpack.c.b16 %v876, %v875
    %v1122 = vpack.c.b16 %v878, %v877
    %v1123 = vpack.c.b16 %v880, %v879
    %v1124 = vpack.c.b16 %v882, %v881
    %v1125 = vpack.c.b16 %v884, %v883
    %v1126 = vpack.c.b16 %v886, %v885
    %v1127 = vpack.c.b16 %v888, %v887
    %v1128 = vpack.c.b16 %v890, %v889
    %v1129 = vpack.c.b16 %v892, %v891
    %v1130 = vpack.c.b16 %v894, %v893
    %v1131 = vpack.c.b16 %v896, %v895
    %v1132 = vpack.c.b16 %v898, %v897
    %v1133 = vpack.c.b16 %v900, %v899
    %v1134 = vpack.c.b16 %v902, %v901
    %v1135 = vpack.c.b16 %v904, %v903
    %v1136 = vpack.c.b16 %v906, %v905
    %v1137 = vpack.c.b16 %v908, %v907
    %v1138 = vpack.c.b16 %v910, %v909
    %v1139 = vpack.c.b16 %v912, %v911
    %v1140 = vpack.c.b16 %v914, %v913
    %v1141 = vpack.c.b16 %v916, %v915
    %v1142 = vpack.c.b16 %v918, %v917
    %v1143 = vpack.c.b16 %v920, %v919
    %v1144 = vpack.c.b16 %v922, %v921
    %v1145 = vpack.c.b16 %v924, %v923
    %v1146 = vpack.c.b16 %v926, %v925
    %v1147 = vpack.c.b16 %v928, %v927
    %v1148 = vpack.c.b16 %v930, %v929
    %v1149 = vpack.c.b16 %v932, %v931
    %v1150 = vpack.c.b16 %v934, %v933
    %v1151 = vpack.c.b16 %v936, %v935
    %v1152 = vpack.c.b16 %v938, %v937
    %v1153 = vpack.c.b16 %v940, %v939
    %v1154 = vpack.c.b16 %v942, %v941
    %v1155 = vpack.c.b16 %v944, %v943
    %v1156 = vpack.c.b16 %v946, %v945
    %v1157 = vpack.c.b16 %v948, %v947
    %v1158 = vpack.c.b16 %v950, %v949
    %v1159 = vpack.c.b16 %v952, %v951
    %v1160 = vpack.c.b16 %v954, %v953
    %v1161 = vpack.c.b16 %v956, %v955
    %v1162 = vpack.c.b16 %v958, %v957
    %v1163 = vpack.c.b16 %v960, %v959
    %v1164 = vpack.c.b16 %v962, %v961
    %v1165 = vpack.c.b16 %v964, %v963
    %v1166 = vpack.c.b16 %v966, %v965
    %v1167 = vpack.c.b16 %v968, %v967
    %v1168 = vpack.c.b16 %v970, %v969
    %v1169 = vpack.c.b16 %v972, %v971
    %v1170 = vpack.c.b16 %v974, %v973
    %v1171 = vpack.c.b16 %v976, %v975
    %v1172 = vpack.c.b16 %v978, %v977
    %v1173 = vpack.c.b16 %v980, %v979
    %v1174 = vpack.c.b16 %v982, %v981
    %v1175 = vpack.c.b16 %v984, %v983
    %v1176 = vpack.c.b16 %v986, %v985
    %v1177 = vpack.c.b16 %v988, %v987
    %v1178 = vpack.c.b16 %v990, %v989
    %v1179 = vpack.c.b16 %v992, %v991
    %v1180 = vpack.c.b16 %v994, %v993
    %v1181 = vpack.c.b16 %v996, %v995
    %v1182 = vpack.c.b16 %v998, %v997
    %v1183 = vpack.c.b16 %v1000, %v999
    %v1184 = vpack.c.b16 %v1002, %v1001
    %v1185 = vpack.c.b16 %v1004, %v1003
    %v1186 = vpack.c.b16 %v1006, %v1005
    %v1187 = vpack.c.b16 %v1008, %v1007
    %v1188 = vpack.c.b16 %v1010, %v1009
    %v1189 = vpack.c.b16 %v1012, %v1011
    %v1190 = vpack.c.b16 %v1014, %v1013
    %v1191 = vpack.c.b16 %v1016, %v1015
    %v1192 = vpack.c.b16 %v1018, %v1017
    %v1193 = vpack.c.b16 %v1020, %v1019
    %v1194 = vpack.c.b16 %v1022, %v1021
    %v1195 = vpack.c.b16 %v1024, %v1023
    %v1196 = vpack.c.b16 %v1026, %v1025
    %v1197 = vpack.c.b16 %v1028, %v1027
    %v1198 = vpack.c.b16 %v1030, %v1029
    %v1199 = vpack.c.b16 %v1032, %v1031
    %v1200 = vpack.c.b16 %v1034, %v1033
    %v1201 = vpack.c.b16 %v1036, %v1035
    %v1202 = vpack.c.b16 %v1038, %v1037
    %v1203 = vpack.c.b16 %v1040, %v1039
    %v1204 = vpack.c.b16 %v1042, %v1041
    %v1205 = vpack.c.b16 %v1044, %v1043
    %v1206 = vpack.c.b16 %v1046, %v1045
    %v1207 = vpack.c.b16 %v1048, %v1047
    %v1208 = vpack.c.b16 %v1050, %v1049
    %v1209 = vpack.c.b16 %v1052, %v1051
    %v1210 = vpack.c.b16 %v1054, %v1053
    %v1211 = vpack.c.b16 %v1056, %v1055
    %v1212 = vpack.c.b16 %v1058, %v1057
    %v1213 = vpack.c.b16 %v1060, %v1059
    %v1214 = vpack.c.b16 %v1062, %v1061
    %v1215 = vpack.c.b16 %v1064, %v1063
    %v1216 = vpack.c.b16 %v1066, %v1065
    %v1217 = vpack.c.b16 %v1068, %v1067
    %v1218 = vpack.c.b16 %v1070, %v1069
    %v1219 = vpack.c.b16 %v1072, %v1071
    %v1220 = vpack.c.b16 %v1074, %v1073
    %v1221 = vpack.c.b16 %v1076, %v1075
    %v1222 = vpack.c.b16 %v1078, %v1077
    %v1223 = vpack.c.b16 %v1080, %v1079
    %v1224 = vpack.c.b16 %v1082, %v1081
    %v1225 = vpack.c.b16 %v1084, %v1083
    %v1226 = vpack.c.b16 %v1086, %v1085
    %v1227 = vpack.c.b16 %v1088, %v1087
    %v1228 = vpack.c.b16 %v1090, %v1089
    %v1229 = vpack.c.b16 %v1092, %v1091
    %v1230 = vpack.c.b16 %v1094, %v1093
    %v1231 = vpack.c.b16 %v1096, %v1095
    %v1232 = vpack.c.b16 %v1098, %v1097
    %v1233 = vpack.c.b16 %v1100, %v1099
    %v1234 = vpack.c.b16 %v1102, %v1101
    %v1235 = vpack.c.b16 %v1104, %v1103
    %v1236 = vpack.c.b16 %v1106, %v1105
    %v1237 = vpack.c.b16 %v1108, %v1107
    %v1238 = vpack.c.b16 %v1110, %v1109
    %1367 = vmatprep.subr.bf16.mxu0 0
    %1368 = vmatpush1.bf16.msra.mxu0 %v1111
    %1369 = vmatprep.subr.bf16.mxu0 0
    %1370 = vmatpush1.bf16.msra.mxu0 %v1112
    %1371 = vmatprep.subr.bf16.mxu0 0
    %1372 = vmatpush1.bf16.msra.mxu0 %v1113
    %1373 = vmatprep.subr.bf16.mxu0 0
    %1374 = vmatpush1.bf16.msra.mxu0 %v1114
    %1375 = vmatprep.subr.bf16.mxu0 0
    %1376 = vmatpush1.bf16.msra.mxu0 %v1115
    %1377 = vmatprep.subr.bf16.mxu0 0
    %1378 = vmatpush1.bf16.msra.mxu0 %v1116
    %1379 = vmatprep.subr.bf16.mxu0 0
    %1380 = vmatpush1.bf16.msra.mxu0 %v1117
    %1381 = vmatprep.subr.bf16.mxu0 0
    %1382 = vmatpush1.bf16.msra.mxu0 %v1118
    %1383 = vmatprep.subr.bf16.mxu0 0
    %1384 = vmatpush1.bf16.msra.mxu0 %v1119
    %1385 = vmatprep.subr.bf16.mxu0 0
    %1386 = vmatpush1.bf16.msra.mxu0 %v1120
    %1387 = vmatprep.subr.bf16.mxu0 0
    %1388 = vmatpush1.bf16.msra.mxu0 %v1121
    %1389 = vmatprep.subr.bf16.mxu0 0
    %1390 = vmatpush1.bf16.msra.mxu0 %v1122
    %1391 = vmatprep.subr.bf16.mxu0 0
    %1392 = vmatpush1.bf16.msra.mxu0 %v1123
    %1393 = vmatprep.subr.bf16.mxu0 0
    %1394 = vmatpush1.bf16.msra.mxu0 %v1124
    %1395 = vmatprep.subr.bf16.mxu0 0
    %1396 = vmatpush1.bf16.msra.mxu0 %v1125
    %1397 = vmatprep.subr.bf16.mxu0 0
    %1398 = vmatpush1.bf16.msra.mxu0 %v1126
    %1399 = vmatprep.mubr.bf16.mxu0 %v312
    %1400 = vmatmul.mubr.bf16.gmra.mrb[0].mxu0 %v311
    %v1401 = vpop.f32.mrb[0].mxu0
    %v1402 = vadd.f32 0.0, %v1401
    %v1403 = vpop.f32.mrb[0].mxu0
    %v1404 = vpop.f32.mrb[0].mxu0
    %v1405 = vadd.f32 0.0, %v1404
    %v1406 = vpop.f32.mrb[0].mxu0
    %1407 = vmatprep.mubr.bf16.mxu0 %v328
    %1408 = vmatmul.mubr.bf16.gmra.mrb[0].mxu0 %v327
    %v1409 = vpop.f32.mrb[0].mxu0
    %v1410 = vadd.f32 0.0, %v1409
    %v1411 = vpop.f32.mrb[0].mxu0
    %v1412 = vpop.f32.mrb[0].mxu0
    %v1413 = vadd.f32 0.0, %v1412
    %v1414 = vpop.f32.mrb[0].mxu0
    %1415 = vdwg.mxu0
    %1416 = vmatprep.subr.bf16.mxu0 0
    %1417 = vmatpush1.bf16.msra.mxu0 %v1127
    %1418 = vmatprep.subr.bf16.mxu0 0
    %1419 = vmatpush1.bf16.msra.mxu0 %v1128
    %1420 = vmatprep.subr.bf16.mxu0 0
    %1421 = vmatpush1.bf16.msra.mxu0 %v1129
    %1422 = vmatprep.subr.bf16.mxu0 0
    %1423 = vmatpush1.bf16.msra.mxu0 %v1130
    %1424 = vmatprep.subr.bf16.mxu0 0
    %1425 = vmatpush1.bf16.msra.mxu0 %v1131
    %1426 = vmatprep.subr.bf16.mxu0 0
    %1427 = vmatpush1.bf16.msra.mxu0 %v1132
    %1428 = vmatprep.subr.bf16.mxu0 0
    %1429 = vmatpush1.bf16.msra.mxu0 %v1133
    %1430 = vmatprep.subr.bf16.mxu0 0
    %1431 = vmatpush1.bf16.msra.mxu0 %v1134
    %1432 = vmatprep.subr.bf16.mxu0 0
    %1433 = vmatpush1.bf16.msra.mxu0 %v1135
    %1434 = vmatprep.subr.bf16.mxu0 0
    %1435 = vmatpush1.bf16.msra.mxu0 %v1136
    %1436 = vmatprep.subr.bf16.mxu0 0
    %1437 = vmatpush1.bf16.msra.mxu0 %v1137
    %1438 = vmatprep.subr.bf16.mxu0 0
    %1439 = vmatpush1.bf16.msra.mxu0 %v1138
    %1440 = vmatprep.subr.bf16.mxu0 0
    %1441 = vmatpush1.bf16.msra.mxu0 %v1139
    %1442 = vmatprep.subr.bf16.mxu0 0
    %1443 = vmatpush1.bf16.msra.mxu0 %v1140
    %1444 = vmatprep.subr.bf16.mxu0 0
    %1445 = vmatpush1.bf16.msra.mxu0 %v1141
    %1446 = vmatprep.subr.bf16.mxu0 0
    %1447 = vmatpush1.bf16.msra.mxu0 %v1142
    %1448 = vmatprep.mubr.bf16.mxu0 %v314
    %1449 = vmatmul.mubr.bf16.gmra.mrb[0].mxu0 %v313
    %v1450 = vpop.f32.mrb[0].mxu0
    %v1451 = vadd.f32 %v1402, %v1450
    %v1452 = vpop.f32.mrb[0].mxu0
    %v1453 = vpop.f32.mrb[0].mxu0
    %v1454 = vadd.f32 %v1405, %v1453
    %v1455 = vpop.f32.mrb[0].mxu0
    %1456 = vmatprep.mubr.bf16.mxu0 %v330
    %1457 = vmatmul.mubr.bf16.gmra.mrb[0].mxu0 %v329
    %v1458 = vpop.f32.mrb[0].mxu0
    %v1459 = vadd.f32 %v1410, %v1458
    %v1460 = vpop.f32.mrb[0].mxu0
    %v1461 = vpop.f32.mrb[0].mxu0
    %v1462 = vadd.f32 %v1413, %v1461
    %v1463 = vpop.f32.mrb[0].mxu0
    %1464 = vdwg.mxu0
    %1465 = vmatprep.subr.bf16.mxu0 0
    %1466 = vmatpush1.bf16.msra.mxu0 %v1143
    %1467 = vmatprep.subr.bf16.mxu0 0
    %1468 = vmatpush1.bf16.msra.mxu0 %v1144
    %1469 = vmatprep.subr.bf16.mxu0 0
    %1470 = vmatpush1.bf16.msra.mxu0 %v1145
    %1471 = vmatprep.subr.bf16.mxu0 0
    %1472 = vmatpush1.bf16.msra.mxu0 %v1146
    %1473 = vmatprep.subr.bf16.mxu0 0
    %1474 = vmatpush1.bf16.msra.mxu0 %v1147
    %1475 = vmatprep.subr.bf16.mxu0 0
    %1476 = vmatpush1.bf16.msra.mxu0 %v1148
    %1477 = vmatprep.subr.bf16.mxu0 0
    %1478 = vmatpush1.bf16.msra.mxu0 %v1149
    %1479 = vmatprep.subr.bf16.mxu0 0
    %1480 = vmatpush1.bf16.msra.mxu0 %v1150
    %1481 = vmatprep.subr.bf16.mxu0 0
    %1482 = vmatpush1.bf16.msra.mxu0 %v1151
    %1483 = vmatprep.subr.bf16.mxu0 0
    %1484 = vmatpush1.bf16.msra.mxu0 %v1152
    %1485 = vmatprep.subr.bf16.mxu0 0
    %1486 = vmatpush1.bf16.msra.mxu0 %v1153
    %1487 = vmatprep.subr.bf16.mxu0 0
    %1488 = vmatpush1.bf16.msra.mxu0 %v1154
    %1489 = vmatprep.subr.bf16.mxu0 0
    %1490 = vmatpush1.bf16.msra.mxu0 %v1155
    %1491 = vmatprep.subr.bf16.mxu0 0
    %1492 = vmatpush1.bf16.msra.mxu0 %v1156
    %1493 = vmatprep.subr.bf16.mxu0 0
    %1494 = vmatpush1.bf16.msra.mxu0 %v1157
    %1495 = vmatprep.subr.bf16.mxu0 0
    %1496 = vmatpush1.bf16.msra.mxu0 %v1158
    %1497 = vmatprep.mubr.bf16.mxu0 %v316
    %1498 = vmatmul.mubr.bf16.gmra.mrb[0].mxu0 %v315
    %v1499 = vpop.f32.mrb[0].mxu0
    %v1500 = vadd.f32 %v1451, %v1499
    %v1501 = vpop.f32.mrb[0].mxu0
    %v1502 = vpop.f32.mrb[0].mxu0
    %v1503 = vadd.f32 %v1454, %v1502
    %v1504 = vpop.f32.mrb[0].mxu0
    %1505 = vmatprep.mubr.bf16.mxu0 %v332
    %1506 = vmatmul.mubr.bf16.gmra.mrb[0].mxu0 %v331
    %v1507 = vpop.f32.mrb[0].mxu0
    %v1508 = vadd.f32 %v1459, %v1507
    %v1509 = vpop.f32.mrb[0].mxu0
    %v1510 = vpop.f32.mrb[0].mxu0
    %v1511 = vadd.f32 %v1462, %v1510
    %v1512 = vpop.f32.mrb[0].mxu0
    %1513 = vdwg.mxu0
    %1514 = vmatprep.subr.bf16.mxu0 0
    %1515 = vmatpush1.bf16.msra.mxu0 %v1159
    %1516 = vmatprep.subr.bf16.mxu0 0
    %1517 = vmatpush1.bf16.msra.mxu0 %v1160
    %1518 = vmatprep.subr.bf16.mxu0 0
    %1519 = vmatpush1.bf16.msra.mxu0 %v1161
    %1520 = vmatprep.subr.bf16.mxu0 0
    %1521 = vmatpush1.bf16.msra.mxu0 %v1162
    %1522 = vmatprep.subr.bf16.mxu0 0
    %1523 = vmatpush1.bf16.msra.mxu0 %v1163
    %1524 = vmatprep.subr.bf16.mxu0 0
    %1525 = vmatpush1.bf16.msra.mxu0 %v1164
    %1526 = vmatprep.subr.bf16.mxu0 0
    %1527 = vmatpush1.bf16.msra.mxu0 %v1165
    %1528 = vmatprep.subr.bf16.mxu0 0
    %1529 = vmatpush1.bf16.msra.mxu0 %v1166
    %1530 = vmatprep.subr.bf16.mxu0 0
    %1531 = vmatpush1.bf16.msra.mxu0 %v1167
    %1532 = vmatprep.subr.bf16.mxu0 0
    %1533 = vmatpush1.bf16.msra.mxu0 %v1168
    %1534 = vmatprep.subr.bf16.mxu0 0
    %1535 = vmatpush1.bf16.msra.mxu0 %v1169
    %1536 = vmatprep.subr.bf16.mxu0 0
    %1537 = vmatpush1.bf16.msra.mxu0 %v1170
    %1538 = vmatprep.subr.bf16.mxu0 0
    %1539 = vmatpush1.bf16.msra.mxu0 %v1171
    %1540 = vmatprep.subr.bf16.mxu0 0
    %1541 = vmatpush1.bf16.msra.mxu0 %v1172
    %1542 = vmatprep.subr.bf16.mxu0 0
    %1543 = vmatpush1.bf16.msra.mxu0 %v1173
    %1544 = vmatprep.subr.bf16.mxu0 0
    %1545 = vmatpush1.bf16.msra.mxu0 %v1174
    %1546 = vmatprep.mubr.bf16.mxu0 %v318
    %1547 = vmatmul.mubr.bf16.gmra.mrb[0].mxu0 %v317
    %v1548 = vpop.f32.mrb[0].mxu0
    %v1549 = vadd.f32 %v1500, %v1548
    %v1550 = vpop.f32.mrb[0].mxu0
    %v1551 = vpop.f32.mrb[0].mxu0
    %v1552 = vadd.f32 %v1503, %v1551
    %v1553 = vpop.f32.mrb[0].mxu0
    %1554 = vmatprep.mubr.bf16.mxu0 %v334
    %1555 = vmatmul.mubr.bf16.gmra.mrb[0].mxu0 %v333
    %v1556 = vpop.f32.mrb[0].mxu0
    %v1557 = vadd.f32 %v1508, %v1556
    %v1558 = vpop.f32.mrb[0].mxu0
    %v1559 = vpop.f32.mrb[0].mxu0
    %v1560 = vadd.f32 %v1511, %v1559
    %v1561 = vpop.f32.mrb[0].mxu0
    %1562 = vdwg.mxu0
    %1563 = vmatprep.subr.bf16.mxu0 0
    %1564 = vmatpush1.bf16.msra.mxu0 %v1175
    %1565 = vmatprep.subr.bf16.mxu0 0
    %1566 = vmatpush1.bf16.msra.mxu0 %v1176
    %1567 = vmatprep.subr.bf16.mxu0 0
    %1568 = vmatpush1.bf16.msra.mxu0 %v1177
    %1569 = vmatprep.subr.bf16.mxu0 0
    %1570 = vmatpush1.bf16.msra.mxu0 %v1178
    %1571 = vmatprep.subr.bf16.mxu0 0
    %1572 = vmatpush1.bf16.msra.mxu0 %v1179
    %1573 = vmatprep.subr.bf16.mxu0 0
    %1574 = vmatpush1.bf16.msra.mxu0 %v1180
    %1575 = vmatprep.subr.bf16.mxu0 0
    %1576 = vmatpush1.bf16.msra.mxu0 %v1181
    %1577 = vmatprep.subr.bf16.mxu0 0
    %1578 = vmatpush1.bf16.msra.mxu0 %v1182
    %1579 = vmatprep.subr.bf16.mxu0 0
    %1580 = vmatpush1.bf16.msra.mxu0 %v1183
    %1581 = vmatprep.subr.bf16.mxu0 0
    %1582 = vmatpush1.bf16.msra.mxu0 %v1184
    %1583 = vmatprep.subr.bf16.mxu0 0
    %1584 = vmatpush1.bf16.msra.mxu0 %v1185
    %1585 = vmatprep.subr.bf16.mxu0 0
    %1586 = vmatpush1.bf16.msra.mxu0 %v1186
    %1587 = vmatprep.subr.bf16.mxu0 0
    %1588 = vmatpush1.bf16.msra.mxu0 %v1187
    %1589 = vmatprep.subr.bf16.mxu0 0
    %1590 = vmatpush1.bf16.msra.mxu0 %v1188
    %1591 = vmatprep.subr.bf16.mxu0 0
    %1592 = vmatpush1.bf16.msra.mxu0 %v1189
    %1593 = vmatprep.subr.bf16.mxu0 0
    %1594 = vmatpush1.bf16.msra.mxu0 %v1190
    %1595 = vmatprep.mubr.bf16.mxu0 %v320
    %1596 = vmatmul.mubr.bf16.gmra.mrb[0].mxu0 %v319
    %v1597 = vpop.f32.mrb[0].mxu0
    %v1598 = vadd.f32 %v1549, %v1597
    %v1599 = vpop.f32.mrb[0].mxu0
    %v1600 = vpop.f32.mrb[0].mxu0
    %v1601 = vadd.f32 %v1552, %v1600
    %v1602 = vpop.f32.mrb[0].mxu0
    %1603 = vmatprep.mubr.bf16.mxu0 %v336
    %1604 = vmatmul.mubr.bf16.gmra.mrb[0].mxu0 %v335
    %v1605 = vpop.f32.mrb[0].mxu0
    %v1606 = vadd.f32 %v1557, %v1605
    %v1607 = vpop.f32.mrb[0].mxu0
    %v1608 = vpop.f32.mrb[0].mxu0
    %v1609 = vadd.f32 %v1560, %v1608
    %v1610 = vpop.f32.mrb[0].mxu0
    %1611 = vdwg.mxu0
    %1612 = vmatprep.subr.bf16.mxu0 0
    %1613 = vmatpush1.bf16.msra.mxu0 %v1191
    %1614 = vmatprep.subr.bf16.mxu0 0
    %1615 = vmatpush1.bf16.msra.mxu0 %v1192
    %1616 = vmatprep.subr.bf16.mxu0 0
    %1617 = vmatpush1.bf16.msra.mxu0 %v1193
    %1618 = vmatprep.subr.bf16.mxu0 0
    %1619 = vmatpush1.bf16.msra.mxu0 %v1194
    %1620 = vmatprep.subr.bf16.mxu0 0
    %1621 = vmatpush1.bf16.msra.mxu0 %v1195
    %1622 = vmatprep.subr.bf16.mxu0 0
    %1623 = vmatpush1.bf16.msra.mxu0 %v1196
    %1624 = vmatprep.subr.bf16.mxu0 0
    %1625 = vmatpush1.bf16.msra.mxu0 %v1197
    %1626 = vmatprep.subr.bf16.mxu0 0
    %1627 = vmatpush1.bf16.msra.mxu0 %v1198
    %1628 = vmatprep.subr.bf16.mxu0 0
    %1629 = vmatpush1.bf16.msra.mxu0 %v1199
    %1630 = vmatprep.subr.bf16.mxu0 0
    %1631 = vmatpush1.bf16.msra.mxu0 %v1200
    %1632 = vmatprep.subr.bf16.mxu0 0
    %1633 = vmatpush1.bf16.msra.mxu0 %v1201
    %1634 = vmatprep.subr.bf16.mxu0 0
    %1635 = vmatpush1.bf16.msra.mxu0 %v1202
    %1636 = vmatprep.subr.bf16.mxu0 0
    %1637 = vmatpush1.bf16.msra.mxu0 %v1203
    %1638 = vmatprep.subr.bf16.mxu0 0
    %1639 = vmatpush1.bf16.msra.mxu0 %v1204
    %1640 = vmatprep.subr.bf16.mxu0 0
    %1641 = vmatpush1.bf16.msra.mxu0 %v1205
    %1642 = vmatprep.subr.bf16.mxu0 0
    %1643 = vmatpush1.bf16.msra.mxu0 %v1206
    %1644 = vmatprep.mubr.bf16.mxu0 %v322
    %1645 = vmatmul.mubr.bf16.gmra.mrb[0].mxu0 %v321
    %v1646 = vpop.f32.mrb[0].mxu0
    %v1647 = vadd.f32 %v1598, %v1646
    %v1648 = vpop.f32.mrb[0].mxu0
    %v1649 = vpop.f32.mrb[0].mxu0
    %v1650 = vadd.f32 %v1601, %v1649
    %v1651 = vpop.f32.mrb[0].mxu0
    %1652 = vmatprep.mubr.bf16.mxu0 %v338
    %1653 = vmatmul.mubr.bf16.gmra.mrb[0].mxu0 %v337
    %v1654 = vpop.f32.mrb[0].mxu0
    %v1655 = vadd.f32 %v1606, %v1654
    %v1656 = vpop.f32.mrb[0].mxu0
    %v1657 = vpop.f32.mrb[0].mxu0
    %v1658 = vadd.f32 %v1609, %v1657
    %v1659 = vpop.f32.mrb[0].mxu0
    %1660 = vdwg.mxu0
    %1661 = vmatprep.subr.bf16.mxu0 0
    %1662 = vmatpush1.bf16.msra.mxu0 %v1207
    %1663 = vmatprep.subr.bf16.mxu0 0
    %1664 = vmatpush1.bf16.msra.mxu0 %v1208
    %1665 = vmatprep.subr.bf16.mxu0 0
    %1666 = vmatpush1.bf16.msra.mxu0 %v1209
    %1667 = vmatprep.subr.bf16.mxu0 0
    %1668 = vmatpush1.bf16.msra.mxu0 %v1210
    %1669 = vmatprep.subr.bf16.mxu0 0
    %1670 = vmatpush1.bf16.msra.mxu0 %v1211
    %1671 = vmatprep.subr.bf16.mxu0 0
    %1672 = vmatpush1.bf16.msra.mxu0 %v1212
    %1673 = vmatprep.subr.bf16.mxu0 0
    %1674 = vmatpush1.bf16.msra.mxu0 %v1213
    %1675 = vmatprep.subr.bf16.mxu0 0
    %1676 = vmatpush1.bf16.msra.mxu0 %v1214
    %1677 = vmatprep.subr.bf16.mxu0 0
    %1678 = vmatpush1.bf16.msra.mxu0 %v1215
    %1679 = vmatprep.subr.bf16.mxu0 0
    %1680 = vmatpush1.bf16.msra.mxu0 %v1216
    %1681 = vmatprep.subr.bf16.mxu0 0
    %1682 = vmatpush1.bf16.msra.mxu0 %v1217
    %1683 = vmatprep.subr.bf16.mxu0 0
    %1684 = vmatpush1.bf16.msra.mxu0 %v1218
    %1685 = vmatprep.subr.bf16.mxu0 0
    %1686 = vmatpush1.bf16.msra.mxu0 %v1219
    %1687 = vmatprep.subr.bf16.mxu0 0
    %1688 = vmatpush1.bf16.msra.mxu0 %v1220
    %1689 = vmatprep.subr.bf16.mxu0 0
    %1690 = vmatpush1.bf16.msra.mxu0 %v1221
    %1691 = vmatprep.subr.bf16.mxu0 0
    %1692 = vmatpush1.bf16.msra.mxu0 %v1222
    %1693 = vmatprep.mubr.bf16.mxu0 %v324
    %1694 = vmatmul.mubr.bf16.gmra.mrb[0].mxu0 %v323
    %v1695 = vpop.f32.mrb[0].mxu0
    %v1696 = vadd.f32 %v1647, %v1695
    %v1697 = vpop.f32.mrb[0].mxu0
    %v1698 = vpop.f32.mrb[0].mxu0
    %v1699 = vadd.f32 %v1650, %v1698
    %v1700 = vpop.f32.mrb[0].mxu0
    %1701 = vmatprep.mubr.bf16.mxu0 %v340
    %1702 = vmatmul.mubr.bf16.gmra.mrb[0].mxu0 %v339
    %v1703 = vpop.f32.mrb[0].mxu0
    %v1704 = vadd.f32 %v1655, %v1703
    %v1705 = vpop.f32.mrb[0].mxu0
    %v1706 = vpop.f32.mrb[0].mxu0
    %v1707 = vadd.f32 %v1658, %v1706
    %v1708 = vpop.f32.mrb[0].mxu0
    %1709 = vdwg.mxu0
    %1710 = vmatprep.subr.bf16.mxu0 0
    %1711 = vmatpush1.bf16.msra.mxu0 %v1223
    %1712 = vmatprep.subr.bf16.mxu0 0
    %1713 = vmatpush1.bf16.msra.mxu0 %v1224
    %1714 = vmatprep.subr.bf16.mxu0 0
    %1715 = vmatpush1.bf16.msra.mxu0 %v1225
    %1716 = vmatprep.subr.bf16.mxu0 0
    %1717 = vmatpush1.bf16.msra.mxu0 %v1226
    %1718 = vmatprep.subr.bf16.mxu0 0
    %1719 = vmatpush1.bf16.msra.mxu0 %v1227
    %1720 = vmatprep.subr.bf16.mxu0 0
    %1721 = vmatpush1.bf16.msra.mxu0 %v1228
    %1722 = vmatprep.subr.bf16.mxu0 0
    %1723 = vmatpush1.bf16.msra.mxu0 %v1229
    %1724 = vmatprep.subr.bf16.mxu0 0
    %1725 = vmatpush1.bf16.msra.mxu0 %v1230
    %1726 = vmatprep.subr.bf16.mxu0 0
    %1727 = vmatpush1.bf16.msra.mxu0 %v1231
    %1728 = vmatprep.subr.bf16.mxu0 0
    %1729 = vmatpush1.bf16.msra.mxu0 %v1232
    %1730 = vmatprep.subr.bf16.mxu0 0
    %1731 = vmatpush1.bf16.msra.mxu0 %v1233
    %1732 = vmatprep.subr.bf16.mxu0 0
    %1733 = vmatpush1.bf16.msra.mxu0 %v1234
    %1734 = vmatprep.subr.bf16.mxu0 0
    %1735 = vmatpush1.bf16.msra.mxu0 %v1235
    %1736 = vmatprep.subr.bf16.mxu0 0
    %1737 = vmatpush1.bf16.msra.mxu0 %v1236
    %1738 = vmatprep.subr.bf16.mxu0 0
    %1739 = vmatpush1.bf16.msra.mxu0 %v1237
    %1740 = vmatprep.subr.bf16.mxu0 0
    %1741 = vmatpush1.bf16.msra.mxu0 %v1238
    %1742 = vmatprep.mubr.bf16.mxu0 %v326
    %1743 = vmatmul.mubr.bf16.gmra.mrb[0].mxu0 %v325
    %v1744 = vpop.f32.mrb[0].mxu0
    %v1745 = vadd.f32 %v1696, %v1744
    %v1746 = vpop.f32.mrb[0].mxu0
    %v1747 = vpop.f32.mrb[0].mxu0
    %v1748 = vadd.f32 %v1699, %v1747
    %v1749 = vpop.f32.mrb[0].mxu0
    %1750 = vmatprep.mubr.bf16.mxu0 %v342
    %1751 = vmatmul.mubr.bf16.gmra.mrb[0].mxu0 %v341
    %v1752 = vpop.f32.mrb[0].mxu0
    %v1753 = vadd.f32 %v1704, %v1752
    %v1754 = vpop.f32.mrb[0].mxu0
    %v1755 = vpop.f32.mrb[0].mxu0
    %v1756 = vadd.f32 %v1707, %v1755
    %v1757 = vpop.f32.mrb[0].mxu0
    %1758 = vdwg.mxu0
    %v1759 = vld [vmem:[#allocation7] sm:$0xff]
    %v1760 = vld [vmem:[#allocation7 + $0x8] sm:$0xff]
    %v1761 = vadd.f32 %v1745, %v1759
    %v1762 = vadd.f32 %v1748, %v1760
    %v1763 = vadd.f32 %v1753, %v1759
    %v1764 = vadd.f32 %v1756, %v1760
    %v1765 = vld [vmem:[#allocation8] sm:$0x1]
    %v1766 = vld [vmem:[#allocation10] sm:$0x1]
    %1767 = vadd.xlane.f32.xlu0 %v1761
    %v1768 = vpop.xlane.xlu0 %1767
    %1769 = vadd.xlane.f32.xlu0 %v1762
    %v1770 = vpop.xlane.xlu0 %1769
    %1771 = vadd.xlane.f32.xlu0 %v1763
    %v1772 = vpop.xlane.xlu0 %1771
    %1773 = vadd.xlane.f32.xlu0 %v1764
    %v1774 = vpop.xlane.xlu0 %1773
    %v1775 = vrcp.pop 128.0
    %v1776 = vmul.f32 %v1768, %v1775
    %v1777 = vmul.f32 %v1770, %v1775
    %v1778 = vmul.f32 %v1772, %v1775
    %v1779 = vmul.f32 %v1774, %v1775
    %v1780 = vsub.f32 %v1761, %v1776
    %v1781 = vsub.f32 %v1762, %v1777
    %v1782 = vsub.f32 %v1763, %v1778
    %v1783 = vsub.f32 %v1764, %v1779
    %v1784 = vmul.f32 %v1780, %v1780
    %v1785 = vmul.f32 %v1781, %v1781
    %v1786 = vmul.f32 %v1782, %v1782
    %v1787 = vmul.f32 %v1783, %v1783
    %1788 = vadd.xlane.f32.xlu0 %v1784
    %v1789 = vpop.xlane.xlu0 %1788
    %1790 = vadd.xlane.f32.xlu0 %v1785
    %v1791 = vpop.xlane.xlu0 %1790
    %1792 = vadd.xlane.f32.xlu0 %v1786
    %v1793 = vpop.xlane.xlu0 %1792
    %1794 = vadd.xlane.f32.xlu0 %v1787
    %v1795 = vpop.xlane.xlu0 %1794
    %v1796 = vmul.f32 %v1789, %v1775
    %v1797 = vmul.f32 %v1791, %v1775
    %v1798 = vmul.f32 %v1793, %v1775
    %v1799 = vmul.f32 %v1795, %v1775
    %v1800 = vadd.f32 %v1796, 1e-12
    %v1801 = vadd.f32 %v1797, 1e-12
    %v1802 = vadd.f32 %v1798, 1e-12
    %v1803 = vadd.f32 %v1799, 1e-12
    %v1804 = vrsqrt.pop %v1800
    %v1805 = vrsqrt.pop %v1801
    %v1806 = vrsqrt.pop %v1802
    %v1807 = vrsqrt.pop %v1803
    %v1808 = vmul.f32 %v1780, %v1804
    %v1809 = vmul.f32 %v1781, %v1805
    %v1810 = vmul.f32 %v1782, %v1806
    %v1811 = vmul.f32 %v1783, %v1807
    %v1813 = vlaneseq
    %v1814 = vshrl.u32 %v1813, 7
    %v1815 = vsub.s32 0, %v1814
    %v1816 = vrot.slane %v1765, %v1815
    %v1818 = vmul.f32 %v1808, %v1816
    %v1819 = vmul.f32 %v1809, %v1816
    %v1820 = vmul.f32 %v1810, %v1816
    %v1821 = vmul.f32 %v1811, %v1816
    %v1823 = vlaneseq
    %v1824 = vshrl.u32 %v1823, 7
    %v1825 = vsub.s32 0, %v1824
    %v1826 = vrot.slane %v1766, %v1825
    %v1828 = vadd.f32 %v1818, %v1826
    %v1829 = vadd.f32 %v1819, %v1826
    %v1830 = vadd.f32 %v1820, %v1826
    %v1831 = vadd.f32 %v1821, %v1826
    %v1832 = vpack.c.bf16 %v1829, %v1828
    %v1833 = vpack.c.bf16 %v1831, %v1830
    %v1836 = vunpack.c.l.b16 %v1832
    %v1837 = vunpack.c.h.b16 %v1832
    %v1838 = vunpack.c.l.b16 %v1833
    %v1839 = vunpack.c.h.b16 %v1833
    %v1840 = vpack.c.b16 %v1836, %v1836
    %v1841 = vpack.c.b16 %v1837, %v1837
    %v1842 = vpack.c.b16 %v1838, %v1838
    %v1843 = vpack.c.b16 %v1839, %v1839
    %1848 = vst [vmem:[#allocation11] sm:$0xf] %v1840
    %1849 = vst [vmem:[#allocation11 + $0x4] sm:$0xf] %v1841
    %1850 = vst [vmem:[#allocation11 + $0x8] sm:$0xf] %v1842
    %1851 = vst [vmem:[#allocation11 + $0xc] sm:$0xf] %v1843
    // Predicated region
    $region42: #{bert_mlm_forward.5} parent=1 // pred_check
      _
    $region43: #{bert_mlm_forward.5} parent=1 // pred_check_branch
      %1853 = sbr.rel (0) target = $region45
    $region44: #{bert_mlm_forward.5} parent=1 // pred_region
      %s1855 = ssub.s32 256, 256
      %1856 = vsyncadd [#allocation4], %s1855
      %s1857 = sshll.u32 [#allocation11], 4
      %s1858 = int_to_ptr.vmem [resolvable:$true] %s1857
      %1863 = dma.vmem_to_hbm [thread:$0]  %s1858, 256, %s5, [#allocation4], 64, 64, 4
    $region45: #{bert_mlm_forward.5} parent=1 // pred_fallthru
      _
    // Predicated region
    $region46: #{bert_mlm_forward.5} parent=1 // pred_check
      _
    $region47: #{bert_mlm_forward.5} parent=1 // pred_check_branch
      %1865 = sbr.rel (0) target = $region49
    $region48: #{bert_mlm_forward.5} parent=1 // pred_region
      %1866 = dma.done [#allocation4], 256
    $region49: #{bert_mlm_forward.5} parent=1 // pred_fallthru
      _
    %1867 = vsyncpa [#allocation3], 1
    %1868 = vsyncpa [#allocation6], 1
    %1869 = vsyncpa [#allocation9], 1
    %1870 = vsyncpa [#allocation4], 1

// kernel: bert_mlm_forward.6
$region0: #{bert_mlm_forward.6}
  #allocation0 [shape = 'u32[]', space=smem, size = 0x4, offset = 0x4, fixed_abs, tag = 'smem constant byte address 0x4 - core index']
  #allocation1 [shape = 'u32[144,128]{1,0:T(1,128)}', space=vmem, size = 0x12000, scoped, tag = 'internal scratch']
  %s0 = inlined_call_operand.hbm [shape: bf16[2,16,128], index: 0, kind: input, shape index: {}]
  %s1 = inlined_call_operand.hbm [shape: bf16[2,128,64], index: 1, kind: input, shape index: {}]
  %s2 = inlined_call_operand.hbm [shape: bf16[2,128,64], index: 2, kind: input, shape index: {}]
  %s3 = inlined_call_operand.hbm [shape: bf16[2,128,64], index: 3, kind: input, shape index: {}]
  %s4 = inlined_call_operand.hbm [shape: f32[2,1,64], index: 4, kind: input, shape index: {}]
  %s5 = inlined_call_operand.hbm [shape: f32[2,1,64], index: 5, kind: input, shape index: {}]
  %s6 = inlined_call_operand.hbm [shape: f32[2,1,64], index: 6, kind: input, shape index: {}]
  %s7 = inlined_call_operand.hbm [shape: bf16[2,64,128], index: 7, kind: input, shape index: {}]
  %s8 = inlined_call_operand.hbm [shape: f32[1,128], index: 8, kind: input, shape index: {}]
  %s9 = inlined_call_operand.hbm [shape: f32[1,128], index: 9, kind: input, shape index: {}]
  %s10 = inlined_call_operand.hbm [shape: f32[1,128], index: 10, kind: input, shape index: {}]
  %s11 = inlined_call_operand.hbm [shape: bf16[128,1024], index: 11, kind: input, shape index: {}]
  %s12 = inlined_call_operand.hbm [shape: f32[1,1024], index: 12, kind: input, shape index: {}]
  %s13 = inlined_call_operand.hbm [shape: bf16[1024,128], index: 13, kind: input, shape index: {}]
  %s14 = inlined_call_operand.hbm [shape: f32[1,128], index: 14, kind: input, shape index: {}]
  %s15 = inlined_call_operand.hbm [shape: f32[1,128], index: 15, kind: input, shape index: {}]
  %s16 = inlined_call_operand.hbm [shape: f32[1,128], index: 16, kind: input, shape index: {}]
  %s17 = inlined_call_operand.hbm [shape: bf16[2,16,128], index: 17, kind: output, shape index: {}]
  %s18 = sld [smem:[#allocation0]]
  $region146: #{bert_mlm_forward.6} parent=0
    _
  %s20 = ssub.s32 1, %s18
  %s21 = scalar_select 0, %s20, %s18
  $region1: #{bert_mlm_forward.6} parent=0
    #allocation2 [shape = 'u8[8192]{0}', space=vmem, size = 0x2000, scoped, tag = 'input window, operand 0, single buffered']
    #allocation3 [shape = 's32[1]{0}', space=sflag, size = 0x4, scoped, tag = 'scoped memory for bert_mlm_forward.6']
    #allocation4 [shape = 's32[1]{0}', space=sflag, size = 0x4, scoped, tag = 'scoped memory for bert_mlm_forward.6']
    #allocation5 [shape = 'u8[65536]{0}', space=vmem, size = 0x10000, scoped, tag = 'input window, operand 1, single buffered']
    #allocation6 [shape = 's32[1]{0}', space=sflag, size = 0x4, scoped, tag = 'scoped memory for bert_mlm_forward.6']
    #allocation7 [shape = 'u8[65536]{0}', space=vmem, size = 0x10000, scoped, tag = 'input window, operand 2, single buffered']
    #allocation8 [shape = 'u8[65536]{0}', space=vmem, size = 0x10000, scoped, tag = 'input window, operand 3, single buffered']
    #allocation9 [shape = 's32[1]{0}', space=sflag, size = 0x4, scoped, tag = 'scoped memory for bert_mlm_forward.6']
    #allocation10 [shape = 'u8[1024]{0}', space=vmem, size = 0x400, scoped, tag = 'input window, operand 4, single buffered']
    #allocation11 [shape = 'u8[1024]{0}', space=vmem, size = 0x400, scoped, tag = 'input window, operand 5, single buffered']
    #allocation12 [shape = 's32[1]{0}', space=sflag, size = 0x4, scoped, tag = 'scoped memory for bert_mlm_forward.6']
    #allocation13 [shape = 'u8[1024]{0}', space=vmem, size = 0x400, scoped, tag = 'input window, operand 6, single buffered']
    #allocation14 [shape = 'u8[32768]{0}', space=vmem, size = 0x8000, scoped, tag = 'input window, operand 7, single buffered']
    #allocation15 [shape = 's32[1]{0}', space=sflag, size = 0x4, scoped, tag = 'scoped memory for bert_mlm_forward.6']
    #allocation16 [shape = 'u8[512]{0}', space=vmem, size = 0x400, scoped, tag = 'input window, operand 8, single buffered']
    #allocation17 [shape = 'u8[512]{0}', space=vmem, size = 0x400, scoped, tag = 'input window, operand 9, single buffered']
    #allocation18 [shape = 's32[1]{0}', space=sflag, size = 0x4, scoped, tag = 'scoped memory for bert_mlm_forward.6']
    #allocation19 [shape = 'u8[512]{0}', space=vmem, size = 0x400, scoped, tag = 'input window, operand 10, single buffered']
    #allocation20 [shape = 'u8[262144]{0}', space=vmem, size = 0x40000, scoped, tag = 'input window, operand 11, single buffered']
    #allocation21 [shape = 's32[1]{0}', space=sflag, size = 0x4, scoped, tag = 'scoped memory for bert_mlm_forward.6']
    #allocation22 [shape = 'u8[4096]{0}', space=vmem, size = 0x1000, scoped, tag = 'input window, operand 12, single buffered']
    #allocation23 [shape = 'u8[262144]{0}', space=vmem, size = 0x40000, scoped, tag = 'input window, operand 13, single buffered']
    #allocation24 [shape = 's32[1]{0}', space=sflag, size = 0x4, scoped, tag = 'scoped memory for bert_mlm_forward.6']
    #allocation25 [shape = 'u8[512]{0}', space=vmem, size = 0x400, scoped, tag = 'input window, operand 14, single buffered']
    #allocation26 [shape = 'u8[512]{0}', space=vmem, size = 0x400, scoped, tag = 'input window, operand 15, single buffered']
    #allocation27 [shape = 's32[1]{0}', space=sflag, size = 0x4, scoped, tag = 'scoped memory for bert_mlm_forward.6']
    #allocation28 [shape = 'u8[512]{0}', space=vmem, size = 0x400, scoped, tag = 'input window, operand 16, single buffered']
    #allocation29 [shape = 'u8[8192]{0}', space=vmem, size = 0x2000, scoped, tag = 'output window, operand 0, single buffered']
    %22 = vsyncpa [#allocation3], 0
    %23 = vsyncpa [#allocation6], 0
    %24 = vsyncpa [#allocation9], 0
    %25 = vsyncpa [#allocation12], 0
    %26 = vsyncpa [#allocation15], 0
    %27 = vsyncpa [#allocation18], 0
    %28 = vsyncpa [#allocation21], 0
    %29 = vsyncpa [#allocation24], 0
    %30 = vsyncpa [#allocation27], 0
    %31 = vsyncpa [#allocation4], 0
    // Predicated region
    $region2: #{bert_mlm_forward.6} parent=1 // pred_check
      _
    $region3: #{bert_mlm_forward.6} parent=1 // pred_check_branch
      %33 = sbr.rel (0) target = $region5
    $region4: #{bert_mlm_forward.6} parent=1 // pred_region
      %s35 = ssub.s32 256, 256
      %36 = vsyncadd [#allocation3], %s35
      %s37 = sshll.u32 [#allocation2], 4
      %s38 = int_to_ptr.vmem [resolvable:$true] %s37
      %43 = dma.hbm_to_vmem [thread:$0]  %s0, 256, %s38, [#allocation3], 64, 64, 4
    $region5: #{bert_mlm_forward.6} parent=1 // pred_fallthru
      _
    // Predicated region
    $region6: #{bert_mlm_forward.6} parent=1 // pred_check
      _
    $region7: #{bert_mlm_forward.6} parent=1 // pred_check_branch
      %45 = sbr.rel (0) target = $region9
    $region8: #{bert_mlm_forward.6} parent=1 // pred_region
      %s47 = ssub.s32 2048, 2048
      %48 = vsyncadd [#allocation6], %s47
      %s49 = sshll.u32 [#allocation5], 4
      %s50 = int_to_ptr.vmem [resolvable:$true] %s49
      %55 = dma.hbm_to_vmem [thread:$0]  %s1, 2048, %s50, [#allocation6], 64, 64, 4
    $region9: #{bert_mlm_forward.6} parent=1 // pred_fallthru
      _
    // Predicated region
    $region10: #{bert_mlm_forward.6} parent=1 // pred_check
      _
    $region11: #{bert_mlm_forward.6} parent=1 // pred_check_branch
      %57 = sbr.rel (0) target = $region13
    $region12: #{bert_mlm_forward.6} parent=1 // pred_region
      %s59 = ssub.s32 2048, 2048
      %60 = vsyncadd [#allocation6], %s59
      %s61 = sshll.u32 [#allocation7], 4
      %s62 = int_to_ptr.vmem [resolvable:$true] %s61
      %67 = dma.hbm_to_vmem [thread:$0]  %s2, 2048, %s62, [#allocation6], 64, 64, 4
    $region13: #{bert_mlm_forward.6} parent=1 // pred_fallthru
      _
    // Predicated region
    $region14: #{bert_mlm_forward.6} parent=1 // pred_check
      _
    $region15: #{bert_mlm_forward.6} parent=1 // pred_check_branch
      %69 = sbr.rel (0) target = $region17
    $region16: #{bert_mlm_forward.6} parent=1 // pred_region
      %s71 = ssub.s32 2048, 2048
      %72 = vsyncadd [#allocation9], %s71
      %s73 = sshll.u32 [#allocation8], 4
      %s74 = int_to_ptr.vmem [resolvable:$true] %s73
      %79 = dma.hbm_to_vmem [thread:$0]  %s3, 2048, %s74, [#allocation9], 64, 64, 4
    $region17: #{bert_mlm_forward.6} parent=1 // pred_fallthru
      _
    // Predicated region
    $region18: #{bert_mlm_forward.6} parent=1 // pred_check
      _
    $region19: #{bert_mlm_forward.6} parent=1 // pred_check_branch
      %81 = sbr.rel (0) target = $region21
    $region20: #{bert_mlm_forward.6} parent=1 // pred_region
      %s83 = ssub.s32 32, 32
      %84 = vsyncadd [#allocation9], %s83
      %s85 = sshll.u32 [#allocation10], 4
      %s86 = int_to_ptr.vmem [resolvable:$true] %s85
      %91 = dma.hbm_to_vmem [thread:$0]  %s4, 32, %s86, [#allocation9], 16, 16, 1
    $region21: #{bert_mlm_forward.6} parent=1 // pred_fallthru
      _
    // Predicated region
    $region22: #{bert_mlm_forward.6} parent=1 // pred_check
      _
    $region23: #{bert_mlm_forward.6} parent=1 // pred_check_branch
      %93 = sbr.rel (0) target = $region25
    $region24: #{bert_mlm_forward.6} parent=1 // pred_region
      %s95 = ssub.s32 32, 32
      %96 = vsyncadd [#allocation12], %s95
      %s97 = sshll.u32 [#allocation11], 4
      %s98 = int_to_ptr.vmem [resolvable:$true] %s97
      %103 = dma.hbm_to_vmem [thread:$0]  %s5, 32, %s98, [#allocation12], 16, 16, 1
    $region25: #{bert_mlm_forward.6} parent=1 // pred_fallthru
      _
    // Predicated region
    $region26: #{bert_mlm_forward.6} parent=1 // pred_check
      _
    $region27: #{bert_mlm_forward.6} parent=1 // pred_check_branch
      %105 = sbr.rel (0) target = $region29
    $region28: #{bert_mlm_forward.6} parent=1 // pred_region
      %s107 = ssub.s32 32, 32
      %108 = vsyncadd [#allocation12], %s107
      %s109 = sshll.u32 [#allocation13], 4
      %s110 = int_to_ptr.vmem [resolvable:$true] %s109
      %115 = dma.hbm_to_vmem [thread:$0]  %s6, 32, %s110, [#allocation12], 16, 16, 1
    $region29: #{bert_mlm_forward.6} parent=1 // pred_fallthru
      _
    // Predicated region
    $region30: #{bert_mlm_forward.6} parent=1 // pred_check
      _
    $region31: #{bert_mlm_forward.6} parent=1 // pred_check_branch
      %117 = sbr.rel (0) target = $region33
    $region32: #{bert_mlm_forward.6} parent=1 // pred_region
      %s119 = ssub.s32 1024, 1024
      %120 = vsyncadd [#allocation15], %s119
      %s121 = sshll.u32 [#allocation14], 4
      %s122 = int_to_ptr.vmem [resolvable:$true] %s121
      %127 = dma.hbm_to_vmem [thread:$0]  %s7, 1024, %s122, [#allocation15], 64, 64, 4
    $region33: #{bert_mlm_forward.6} parent=1 // pred_fallthru
      _
    // Predicated region
    $region34: #{bert_mlm_forward.6} parent=1 // pred_check
      _
    $region35: #{bert_mlm_forward.6} parent=1 // pred_check_branch
      %129 = sbr.rel (0) target = $region37
    $region36: #{bert_mlm_forward.6} parent=1 // pred_region
      %s131 = ssub.s32 16, 16
      %132 = vsyncadd [#allocation15], %s131
      %s134 = sshll.u32 [#allocation16], 4
      %s135 = int_to_ptr.vmem [resolvable:$true] %s134
      %137 = dma.hbm_to_vmem [thread:$0]  %s8, 16, %s135, [#allocation15]
    $region37: #{bert_mlm_forward.6} parent=1 // pred_fallthru
      _
    // Predicated region
    $region38: #{bert_mlm_forward.6} parent=1 // pred_check
      _
    $region39: #{bert_mlm_forward.6} parent=1 // pred_check_branch
      %139 = sbr.rel (0) target = $region41
    $region40: #{bert_mlm_forward.6} parent=1 // pred_region
      %s141 = ssub.s32 16, 16
      %142 = vsyncadd [#allocation18], %s141
      %s144 = sshll.u32 [#allocation17], 4
      %s145 = int_to_ptr.vmem [resolvable:$true] %s144
      %147 = dma.hbm_to_vmem [thread:$0]  %s9, 16, %s145, [#allocation18]
    $region41: #{bert_mlm_forward.6} parent=1 // pred_fallthru
      _
    // Predicated region
    $region42: #{bert_mlm_forward.6} parent=1 // pred_check
      _
    $region43: #{bert_mlm_forward.6} parent=1 // pred_check_branch
      %149 = sbr.rel (0) target = $region45
    $region44: #{bert_mlm_forward.6} parent=1 // pred_region
      %s151 = ssub.s32 16, 16
      %152 = vsyncadd [#allocation18], %s151
      %s154 = sshll.u32 [#allocation19], 4
      %s155 = int_to_ptr.vmem [resolvable:$true] %s154
      %157 = dma.hbm_to_vmem [thread:$0]  %s10, 16, %s155, [#allocation18]
    $region45: #{bert_mlm_forward.6} parent=1 // pred_fallthru
      _
    // Predicated region
    $region46: #{bert_mlm_forward.6} parent=1 // pred_check
      _
    $region47: #{bert_mlm_forward.6} parent=1 // pred_check_branch
      %159 = sbr.rel (0) target = $region49
    $region48: #{bert_mlm_forward.6} parent=1 // pred_region
      %s161 = ssub.s32 8192, 8192
      %162 = vsyncadd [#allocation21], %s161
      %s163 = sshll.u32 [#allocation20], 4
      %s164 = int_to_ptr.vmem [resolvable:$true] %s163
      %169 = dma.hbm_to_vmem [thread:$0]  %s11, 8192, %s164, [#allocation21], 512, 512, 32
    $region49: #{bert_mlm_forward.6} parent=1 // pred_fallthru
      _
    // Predicated region
    $region50: #{bert_mlm_forward.6} parent=1 // pred_check
      _
    $region51: #{bert_mlm_forward.6} parent=1 // pred_check_branch
      %171 = sbr.rel (0) target = $region53
    $region52: #{bert_mlm_forward.6} parent=1 // pred_region
      %s173 = ssub.s32 128, 128
      %174 = vsyncadd [#allocation21], %s173
      %s176 = sshll.u32 [#allocation22], 4
      %s177 = int_to_ptr.vmem [resolvable:$true] %s176
      %179 = dma.hbm_to_vmem [thread:$0]  %s12, 128, %s177, [#allocation21]
    $region53: #{bert_mlm_forward.6} parent=1 // pred_fallthru
      _
    // Predicated region
    $region54: #{bert_mlm_forward.6} parent=1 // pred_check
      _
    $region55: #{bert_mlm_forward.6} parent=1 // pred_check_branch
      %181 = sbr.rel (0) target = $region57
    $region56: #{bert_mlm_forward.6} parent=1 // pred_region
      %s183 = ssub.s32 8192, 8192
      %184 = vsyncadd [#allocation24], %s183
      %s185 = sshll.u32 [#allocation23], 4
      %s186 = int_to_ptr.vmem [resolvable:$true] %s185
      %191 = dma.hbm_to_vmem [thread:$0]  %s13, 8192, %s186, [#allocation24], 64, 64, 4
    $region57: #{bert_mlm_forward.6} parent=1 // pred_fallthru
      _
    // Predicated region
    $region58: #{bert_mlm_forward.6} parent=1 // pred_check
      _
    $region59: #{bert_mlm_forward.6} parent=1 // pred_check_branch
      %193 = sbr.rel (0) target = $region61
    $region60: #{bert_mlm_forward.6} parent=1 // pred_region
      %s195 = ssub.s32 16, 16
      %196 = vsyncadd [#allocation24], %s195
      %s198 = sshll.u32 [#allocation25], 4
      %s199 = int_to_ptr.vmem [resolvable:$true] %s198
      %201 = dma.hbm_to_vmem [thread:$0]  %s14, 16, %s199, [#allocation24]
    $region61: #{bert_mlm_forward.6} parent=1 // pred_fallthru
      _
    // Predicated region
    $region62: #{bert_mlm_forward.6} parent=1 // pred_check
      _
    $region63: #{bert_mlm_forward.6} parent=1 // pred_check_branch
      %203 = sbr.rel (0) target = $region65
    $region64: #{bert_mlm_forward.6} parent=1 // pred_region
      %s205 = ssub.s32 16, 16
      %206 = vsyncadd [#allocation27], %s205
      %s208 = sshll.u32 [#allocation26], 4
      %s209 = int_to_ptr.vmem [resolvable:$true] %s208
      %211 = dma.hbm_to_vmem [thread:$0]  %s15, 16, %s209, [#allocation27]
    $region65: #{bert_mlm_forward.6} parent=1 // pred_fallthru
      _
    // Predicated region
    $region66: #{bert_mlm_forward.6} parent=1 // pred_check
      _
    $region67: #{bert_mlm_forward.6} parent=1 // pred_check_branch
      %213 = sbr.rel (0) target = $region69
    $region68: #{bert_mlm_forward.6} parent=1 // pred_region
      %s215 = ssub.s32 16, 16
      %216 = vsyncadd [#allocation27], %s215
      %s218 = sshll.u32 [#allocation28], 4
      %s219 = int_to_ptr.vmem [resolvable:$true] %s218
      %221 = dma.hbm_to_vmem [thread:$0]  %s16, 16, %s219, [#allocation27]
    $region69: #{bert_mlm_forward.6} parent=1 // pred_fallthru
      _
    // Predicated region
    $region70: #{bert_mlm_forward.6} parent=1 // pred_check
      _
    $region71: #{bert_mlm_forward.6} parent=1 // pred_check_branch
      %223 = sbr.rel (0) target = $region73
    $region72: #{bert_mlm_forward.6} parent=1 // pred_region
      %224 = dma.done [#allocation3], 256
    $region73: #{bert_mlm_forward.6} parent=1 // pred_fallthru
      _
    // Predicated region
    $region74: #{bert_mlm_forward.6} parent=1 // pred_check
      _
    $region75: #{bert_mlm_forward.6} parent=1 // pred_check_branch
      %226 = sbr.rel (0) target = $region77
    $region76: #{bert_mlm_forward.6} parent=1 // pred_region
      %227 = dma.done [#allocation6], 2048
    $region77: #{bert_mlm_forward.6} parent=1 // pred_fallthru
      _
    // Predicated region
    $region78: #{bert_mlm_forward.6} parent=1 // pred_check
      _
    $region79: #{bert_mlm_forward.6} parent=1 // pred_check_branch
      %229 = sbr.rel (0) target = $region81
    $region80: #{bert_mlm_forward.6} parent=1 // pred_region
      %230 = dma.done [#allocation6], 2048
    $region81: #{bert_mlm_forward.6} parent=1 // pred_fallthru
      _
    // Predicated region
    $region82: #{bert_mlm_forward.6} parent=1 // pred_check
      _
    $region83: #{bert_mlm_forward.6} parent=1 // pred_check_branch
      %232 = sbr.rel (0) target = $region85
    $region84: #{bert_mlm_forward.6} parent=1 // pred_region
      %233 = dma.done [#allocation9], 2048
    $region85: #{bert_mlm_forward.6} parent=1 // pred_fallthru
      _
    // Predicated region
    $region86: #{bert_mlm_forward.6} parent=1 // pred_check
      _
    $region87: #{bert_mlm_forward.6} parent=1 // pred_check_branch
      %235 = sbr.rel (0) target = $region89
    $region88: #{bert_mlm_forward.6} parent=1 // pred_region
      %236 = dma.done [#allocation9], 32
    $region89: #{bert_mlm_forward.6} parent=1 // pred_fallthru
      _
    // Predicated region
    $region90: #{bert_mlm_forward.6} parent=1 // pred_check
      _
    $region91: #{bert_mlm_forward.6} parent=1 // pred_check_branch
      %238 = sbr.rel (0) target = $region93
    $region92: #{bert_mlm_forward.6} parent=1 // pred_region
      %239 = dma.done [#allocation12], 32
    $region93: #{bert_mlm_forward.6} parent=1 // pred_fallthru
      _
    // Predicated region
    $region94: #{bert_mlm_forward.6} parent=1 // pred_check
      _
    $region95: #{bert_mlm_forward.6} parent=1 // pred_check_branch
      %241 = sbr.rel (0) target = $region97
    $region96: #{bert_mlm_forward.6} parent=1 // pred_region
      %242 = dma.done [#allocation12], 32
    $region97: #{bert_mlm_forward.6} parent=1 // pred_fallthru
      _
    // Predicated region
    $region98: #{bert_mlm_forward.6} parent=1 // pred_check
      _
    $region99: #{bert_mlm_forward.6} parent=1 // pred_check_branch
      %244 = sbr.rel (0) target = $region101
    $region100: #{bert_mlm_forward.6} parent=1 // pred_region
      %245 = dma.done [#allocation15], 1024
    $region101: #{bert_mlm_forward.6} parent=1 // pred_fallthru
      _
    // Predicated region
    $region102: #{bert_mlm_forward.6} parent=1 // pred_check
      _
    $region103: #{bert_mlm_forward.6} parent=1 // pred_check_branch
      %247 = sbr.rel (0) target = $region105
    $region104: #{bert_mlm_forward.6} parent=1 // pred_region
      %248 = dma.done [#allocation15], 16
    $region105: #{bert_mlm_forward.6} parent=1 // pred_fallthru
      _
    // Predicated region
    $region106: #{bert_mlm_forward.6} parent=1 // pred_check
      _
    $region107: #{bert_mlm_forward.6} parent=1 // pred_check_branch
      %250 = sbr.rel (0) target = $region109
    $region108: #{bert_mlm_forward.6} parent=1 // pred_region
      %251 = dma.done [#allocation18], 16
    $region109: #{bert_mlm_forward.6} parent=1 // pred_fallthru
      _
    // Predicated region
    $region110: #{bert_mlm_forward.6} parent=1 // pred_check
      _
    $region111: #{bert_mlm_forward.6} parent=1 // pred_check_branch
      %253 = sbr.rel (0) target = $region113
    $region112: #{bert_mlm_forward.6} parent=1 // pred_region
      %254 = dma.done [#allocation18], 16
    $region113: #{bert_mlm_forward.6} parent=1 // pred_fallthru
      _
    // Predicated region
    $region114: #{bert_mlm_forward.6} parent=1 // pred_check
      _
    $region115: #{bert_mlm_forward.6} parent=1 // pred_check_branch
      %256 = sbr.rel (0) target = $region117
    $region116: #{bert_mlm_forward.6} parent=1 // pred_region
      %257 = dma.done [#allocation21], 8192
    $region117: #{bert_mlm_forward.6} parent=1 // pred_fallthru
      _
    // Predicated region
    $region118: #{bert_mlm_forward.6} parent=1 // pred_check
      _
    $region119: #{bert_mlm_forward.6} parent=1 // pred_check_branch
      %259 = sbr.rel (0) target = $region121
    $region120: #{bert_mlm_forward.6} parent=1 // pred_region
      %260 = dma.done [#allocation21], 128
    $region121: #{bert_mlm_forward.6} parent=1 // pred_fallthru
      _
    // Predicated region
    $region122: #{bert_mlm_forward.6} parent=1 // pred_check
      _
    $region123: #{bert_mlm_forward.6} parent=1 // pred_check_branch
      %262 = sbr.rel (0) target = $region125
    $region124: #{bert_mlm_forward.6} parent=1 // pred_region
      %263 = dma.done [#allocation24], 8192
    $region125: #{bert_mlm_forward.6} parent=1 // pred_fallthru
      _
    // Predicated region
    $region126: #{bert_mlm_forward.6} parent=1 // pred_check
      _
    $region127: #{bert_mlm_forward.6} parent=1 // pred_check_branch
      %265 = sbr.rel (0) target = $region129
    $region128: #{bert_mlm_forward.6} parent=1 // pred_region
      %266 = dma.done [#allocation24], 16
    $region129: #{bert_mlm_forward.6} parent=1 // pred_fallthru
      _
    // Predicated region
    $region130: #{bert_mlm_forward.6} parent=1 // pred_check
      _
    $region131: #{bert_mlm_forward.6} parent=1 // pred_check_branch
      %268 = sbr.rel (0) target = $region133
    $region132: #{bert_mlm_forward.6} parent=1 // pred_region
      %269 = dma.done [#allocation27], 16
    $region133: #{bert_mlm_forward.6} parent=1 // pred_fallthru
      _
    // Predicated region
    $region134: #{bert_mlm_forward.6} parent=1 // pred_check
      _
    $region135: #{bert_mlm_forward.6} parent=1 // pred_check_branch
      %271 = sbr.rel (0) target = $region137
    $region136: #{bert_mlm_forward.6} parent=1 // pred_region
      %272 = dma.done [#allocation27], 16
    $region137: #{bert_mlm_forward.6} parent=1 // pred_fallthru
      _
    %v274 = vld [vmem:[#allocation2] sm:$0xf]
    %v275 = vld [vmem:[#allocation2 + $0x4] sm:$0xf]
    %v276 = vld [vmem:[#allocation2 + $0x8] sm:$0xf]
    %v277 = vld [vmem:[#allocation2 + $0xc] sm:$0xf]
    %v278 = vunpack.c.l.bf16 %v274
    %v279 = vunpack.c.l.bf16 %v275
    %v280 = vunpack.c.l.bf16 %v276
    %v281 = vunpack.c.l.bf16 %v277
    %v282 = vpack.c.bf16 %v279, %v278
    %v283 = vpack.c.bf16 %v281, %v280
    %v284 = vld [vmem:[#allocation5] sm:$0xf]
    %v285 = vld [vmem:[#allocation5 + $0x4] sm:$0xf]
    %v286 = vld [vmem:[#allocation5 + $0x8] sm:$0xf]
    %v287 = vld [vmem:[#allocation5 + $0xc] sm:$0xf]
    %v288 = vld [vmem:[#allocation5 + $0x10] sm:$0xf]
    %v289 = vld [vmem:[#allocation5 + $0x14] sm:$0xf]
    %v290 = vld [vmem:[#allocation5 + $0x18] sm:$0xf]
    %v291 = vld [vmem:[#allocation5 + $0x1c] sm:$0xf]
    %v292 = vld [vmem:[#allocation5 + $0x20] sm:$0xf]
    %v293 = vld [vmem:[#allocation5 + $0x24] sm:$0xf]
    %v294 = vld [vmem:[#allocation5 + $0x28] sm:$0xf]
    %v295 = vld [vmem:[#allocation5 + $0x2c] sm:$0xf]
    %v296 = vld [vmem:[#allocation5 + $0x30] sm:$0xf]
    %v297 = vld [vmem:[#allocation5 + $0x34] sm:$0xf]
    %v298 = vld [vmem:[#allocation5 + $0x38] sm:$0xf]
    %v299 = vld [vmem:[#allocation5 + $0x3c] sm:$0xf]
    %v300 = vld [vmem:[#allocation10] sm:$0x1]
    %v302 = vlaneseq
    %v303 = vshrl.u32 %v302, 7
    %v304 = vsub.s32 0, %v303
    %v305 = vrot.slane %v300, %v304
    %v323 = vunpack.c.l.b16 %v284
    %v324 = vunpack.c.l.b16 %v285
    %v325 = vunpack.c.l.b16 %v286
    %v326 = vunpack.c.l.b16 %v287
    %v327 = vunpack.c.l.b16 %v288
    %v328 = vunpack.c.l.b16 %v289
    %v329 = vunpack.c.l.b16 %v290
    %v330 = vunpack.c.l.b16 %v291
    %v331 = vunpack.c.l.b16 %v292
    %v332 = vunpack.c.l.b16 %v293
    %v333 = vunpack.c.l.b16 %v294
    %v334 = vunpack.c.l.b16 %v295
    %v335 = vunpack.c.l.b16 %v296
    %v336 = vunpack.c.l.b16 %v297
    %v337 = vunpack.c.l.b16 %v298
    %v338 = vunpack.c.l.b16 %v299
    %v339 = vpack.c.b16 %v324, %v323
    %v340 = vpack.c.b16 %v326, %v325
    %v341 = vpack.c.b16 %v328, %v327
    %v342 = vpack.c.b16 %v330, %v329
    %v343 = vpack.c.b16 %v332, %v331
    %v344 = vpack.c.b16 %v334, %v333
    %v345 = vpack.c.b16 %v336, %v335
    %v346 = vpack.c.b16 %v338, %v337
    %355 = vmatprep.subr.bf16.mxu0 0
    %356 = vmatpush1.bf16.msra.mxu0 %v339
    %357 = vmatprep.subr.bf16.mxu0 0
    %358 = vmatpush1.bf16.msra.mxu0 %v340
    %359 = vmatprep.subr.bf16.mxu0 0
    %360 = vmatpush1.bf16.msra.mxu0 %v341
    %361 = vmatprep.subr.bf16.mxu0 0
    %362 = vmatpush1.bf16.msra.mxu0 %v342
    %363 = vmatprep.subr.bf16.mxu0 0
    %364 = vmatpush1.bf16.msra.mxu0 %v343
    %365 = vmatprep.subr.bf16.mxu0 0
    %366 = vmatpush1.bf16.msra.mxu0 %v344
    %367 = vmatprep.subr.bf16.mxu0 0
    %368 = vmatpush1.bf16.msra.mxu0 %v345
    %369 = vmatprep.subr.bf16.mxu0 0
    %370 = vmatpush1.bf16.msra.mxu0 %v346
    %371 = vmatprep.subr.bf16.mxu0 0
    %372 = vmatpush1.bf16.msra.mxu0 0
    %373 = vmatprep.subr.bf16.mxu0 0
    %374 = vmatpush1.bf16.msra.mxu0 0
    %375 = vmatprep.subr.bf16.mxu0 0
    %376 = vmatpush1.bf16.msra.mxu0 0
    %377 = vmatprep.subr.bf16.mxu0 0
    %378 = vmatpush1.bf16.msra.mxu0 0
    %379 = vmatprep.subr.bf16.mxu0 0
    %380 = vmatpush1.bf16.msra.mxu0 0
    %381 = vmatprep.subr.bf16.mxu0 0
    %382 = vmatpush1.bf16.msra.mxu0 0
    %383 = vmatprep.subr.bf16.mxu0 0
    %384 = vmatpush1.bf16.msra.mxu0 0
    %385 = vmatprep.subr.bf16.mxu0 0
    %386 = vmatpush1.bf16.msra.mxu0 0
    %387 = vmatprep.mubr.bf16.mxu0 0
    %388 = vmatmul.mubr.bf16.gmra.mrb[0].mxu0 %v282
    %v389 = vpop.f32.mrb[0].mxu0
    %v390 = vadd.f32 %v305, %v389
    %v391 = vpop.f32.mrb[0].mxu0
    %v392 = vpop.f32.mrb[0].mxu0
    %v393 = vadd.f32 %v305, %v392
    %v394 = vpop.f32.mrb[0].mxu0
    %395 = vmatprep.mubr.bf16.mxu0 0
    %396 = vmatmul.mubr.bf16.gmra.mrb[0].mxu0 %v283
    %v397 = vpop.f32.mrb[0].mxu0
    %v398 = vadd.f32 %v305, %v397
    %v399 = vpop.f32.mrb[0].mxu0
    %v400 = vpop.f32.mrb[0].mxu0
    %v401 = vadd.f32 %v305, %v400
    %v402 = vpop.f32.mrb[0].mxu0
    %403 = vdwg.mxu0
    %v404 = vmul.f32 %v390, 0.125
    %v405 = vmul.f32 %v393, 0.125
    %v406 = vmul.f32 %v398, 0.125
    %v407 = vmul.f32 %v401, 0.125
    %v408 = vld [vmem:[#allocation7] sm:$0xf]
    %v409 = vld [vmem:[#allocation7 + $0x4] sm:$0xf]
    %v410 = vld [vmem:[#allocation7 + $0x8] sm:$0xf]
    %v411 = vld [vmem:[#allocation7 + $0xc] sm:$0xf]
    %v412 = vld [vmem:[#allocation7 + $0x10] sm:$0xf]
    %v413 = vld [vmem:[#allocation7 + $0x14] sm:$0xf]
    %v414 = vld [vmem:[#allocation7 + $0x18] sm:$0xf]
    %v415 = vld [vmem:[#allocation7 + $0x1c] sm:$0xf]
    %v416 = vld [vmem:[#allocation7 + $0x20] sm:$0xf]
    %v417 = vld [vmem:[#allocation7 + $0x24] sm:$0xf]
    %v418 = vld [vmem:[#allocation7 + $0x28] sm:$0xf]
    %v419 = vld [vmem:[#allocation7 + $0x2c] sm:$0xf]
    %v420 = vld [vmem:[#allocation7 + $0x30] sm:$0xf]
    %v421 = vld [vmem:[#allocation7 + $0x34] sm:$0xf]
    %v422 = vld [vmem:[#allocation7 + $0x38] sm:$0xf]
    %v423 = vld [vmem:[#allocation7 + $0x3c] sm:$0xf]
    %v424 = vld [vmem:[#allocation11] sm:$0x1]
    %v426 = vlaneseq
    %v427 = vshrl.u32 %v426, 7
    %v428 = vsub.s32 0, %v427
    %v429 = vrot.slane %v424, %v428
    %v447 = vunpack.c.l.b16 %v408
    %v448 = vunpack.c.l.b16 %v409
    %v449 = vunpack.c.l.b16 %v410
    %v450 = vunpack.c.l.b16 %v411
    %v451 = vunpack.c.l.b16 %v412
    %v452 = vunpack.c.l.b16 %v413
    %v453 = vunpack.c.l.b16 %v414
    %v454 = vunpack.c.l.b16 %v415
    %v455 = vunpack.c.l.b16 %v416
    %v456 = vunpack.c.l.b16 %v417
    %v457 = vunpack.c.l.b16 %v418
    %v458 = vunpack.c.l.b16 %v419
    %v459 = vunpack.c.l.b16 %v420
    %v460 = vunpack.c.l.b16 %v421
    %v461 = vunpack.c.l.b16 %v422
    %v462 = vunpack.c.l.b16 %v423
    %v463 = vpack.c.b16 %v448, %v447
    %v464 = vpack.c.b16 %v450, %v449
    %v465 = vpack.c.b16 %v452, %v451
    %v466 = vpack.c.b16 %v454, %v453
    %v467 = vpack.c.b16 %v456, %v455
    %v468 = vpack.c.b16 %v458, %v457
    %v469 = vpack.c.b16 %v460, %v459
    %v470 = vpack.c.b16 %v462, %v461
    %479 = vmatprep.subr.bf16.mxu0 0
    %480 = vmatpush1.bf16.msra.mxu0 %v463
    %481 = vmatprep.subr.bf16.mxu0 0
    %482 = vmatpush1.bf16.msra.mxu0 %v464
    %483 = vmatprep.subr.bf16.mxu0 0
    %484 = vmatpush1.bf16.msra.mxu0 %v465
    %485 = vmatprep.subr.bf16.mxu0 0
    %486 = vmatpush1.bf16.msra.mxu0 %v466
    %487 = vmatprep.subr.bf16.mxu0 0
    %488 = vmatpush1.bf16.msra.mxu0 %v467
    %489 = vmatprep.subr.bf16.mxu0 0
    %490 = vmatpush1.bf16.msra.mxu0 %v468
    %491 = vmatprep.subr.bf16.mxu0 0
    %492 = vmatpush1.bf16.msra.mxu0 %v469
    %493 = vmatprep.subr.bf16.mxu0 0
    %494 = vmatpush1.bf16.msra.mxu0 %v470
    %495 = vmatprep.subr.bf16.mxu0 0
    %496 = vmatpush1.bf16.msra.mxu0 0
    %497 = vmatprep.subr.bf16.mxu0 0
    %498 = vmatpush1.bf16.msra.mxu0 0
    %499 = vmatprep.subr.bf16.mxu0 0
    %500 = vmatpush1.bf16.msra.mxu0 0
    %501 = vmatprep.subr.bf16.mxu0 0
    %502 = vmatpush1.bf16.msra.mxu0 0
    %503 = vmatprep.subr.bf16.mxu0 0
    %504 = vmatpush1.bf16.msra.mxu0 0
    %505 = vmatprep.subr.bf16.mxu0 0
    %506 = vmatpush1.bf16.msra.mxu0 0
    %507 = vmatprep.subr.bf16.mxu0 0
    %508 = vmatpush1.bf16.msra.mxu0 0
    %509 = vmatprep.subr.bf16.mxu0 0
    %510 = vmatpush1.bf16.msra.mxu0 0
    %511 = vmatprep.mubr.bf16.mxu0 0
    %512 = vmatmul.mubr.bf16.gmra.mrb[0].mxu0 %v282
    %v513 = vpop.f32.mrb[0].mxu0
    %v514 = vadd.f32 %v429, %v513
    %v515 = vpop.f32.mrb[0].mxu0
    %v516 = vpop.f32.mrb[0].mxu0
    %v517 = vadd.f32 %v429, %v516
    %v518 = vpop.f32.mrb[0].mxu0
    %519 = vmatprep.mubr.bf16.mxu0 0
    %520 = vmatmul.mubr.bf16.gmra.mrb[0].mxu0 %v283
    %v521 = vpop.f32.mrb[0].mxu0
    %v522 = vadd.f32 %v429, %v521
    %v523 = vpop.f32.mrb[0].mxu0
    %v524 = vpop.f32.mrb[0].mxu0
    %v525 = vadd.f32 %v429, %v524
    %v526 = vpop.f32.mrb[0].mxu0
    %527 = vdwg.mxu0
    %v528 = vld [vmem:[#allocation8] sm:$0xf]
    %v529 = vld [vmem:[#allocation8 + $0x4] sm:$0xf]
    %v530 = vld [vmem:[#allocation8 + $0x8] sm:$0xf]
    %v531 = vld [vmem:[#allocation8 + $0xc] sm:$0xf]
    %v532 = vld [vmem:[#allocation8 + $0x10] sm:$0xf]
    %v533 = vld [vmem:[#allocation8 + $0x14] sm:$0xf]
    %v534 = vld [vmem:[#allocation8 + $0x18] sm:$0xf]
    %v535 = vld [vmem:[#allocation8 + $0x1c] sm:$0xf]
    %v536 = vld [vmem:[#allocation8 + $0x20] sm:$0xf]
    %v537 = vld [vmem:[#allocation8 + $0x24] sm:$0xf]
    %v538 = vld [vmem:[#allocation8 + $0x28] sm:$0xf]
    %v539 = vld [vmem:[#allocation8 + $0x2c] sm:$0xf]
    %v540 = vld [vmem:[#allocation8 + $0x30] sm:$0xf]
    %v541 = vld [vmem:[#allocation8 + $0x34] sm:$0xf]
    %v542 = vld [vmem:[#allocation8 + $0x38] sm:$0xf]
    %v543 = vld [vmem:[#allocation8 + $0x3c] sm:$0xf]
    %v544 = vld [vmem:[#allocation13] sm:$0x1]
    %v546 = vlaneseq
    %v547 = vshrl.u32 %v546, 7
    %v548 = vsub.s32 0, %v547
    %v549 = vrot.slane %v544, %v548
    %v567 = vunpack.c.l.b16 %v528
    %v568 = vunpack.c.l.b16 %v529
    %v569 = vunpack.c.l.b16 %v530
    %v570 = vunpack.c.l.b16 %v531
    %v571 = vunpack.c.l.b16 %v532
    %v572 = vunpack.c.l.b16 %v533
    %v573 = vunpack.c.l.b16 %v534
    %v574 = vunpack.c.l.b16 %v535
    %v575 = vunpack.c.l.b16 %v536
    %v576 = vunpack.c.l.b16 %v537
    %v577 = vunpack.c.l.b16 %v538
    %v578 = vunpack.c.l.b16 %v539
    %v579 = vunpack.c.l.b16 %v540
    %v580 = vunpack.c.l.b16 %v541
    %v581 = vunpack.c.l.b16 %v542
    %v582 = vunpack.c.l.b16 %v543
    %v583 = vpack.c.b16 %v568, %v567
    %v584 = vpack.c.b16 %v570, %v569
    %v585 = vpack.c.b16 %v572, %v571
    %v586 = vpack.c.b16 %v574, %v573
    %v587 = vpack.c.b16 %v576, %v575
    %v588 = vpack.c.b16 %v578, %v577
    %v589 = vpack.c.b16 %v580, %v579
    %v590 = vpack.c.b16 %v582, %v581
    %599 = vmatprep.subr.bf16.mxu0 0
    %600 = vmatpush1.bf16.msra.mxu0 %v583
    %601 = vmatprep.subr.bf16.mxu0 0
    %602 = vmatpush1.bf16.msra.mxu0 %v584
    %603 = vmatprep.subr.bf16.mxu0 0
    %604 = vmatpush1.bf16.msra.mxu0 %v585
    %605 = vmatprep.subr.bf16.mxu0 0
    %606 = vmatpush1.bf16.msra.mxu0 %v586
    %607 = vmatprep.subr.bf16.mxu0 0
    %608 = vmatpush1.bf16.msra.mxu0 %v587
    %609 = vmatprep.subr.bf16.mxu0 0
    %610 = vmatpush1.bf16.msra.mxu0 %v588
    %611 = vmatprep.subr.bf16.mxu0 0
    %612 = vmatpush1.bf16.msra.mxu0 %v589
    %613 = vmatprep.subr.bf16.mxu0 0
    %614 = vmatpush1.bf16.msra.mxu0 %v590
    %615 = vmatprep.subr.bf16.mxu0 0
    %616 = vmatpush1.bf16.msra.mxu0 0
    %617 = vmatprep.subr.bf16.mxu0 0
    %618 = vmatpush1.bf16.msra.mxu0 0
    %619 = vmatprep.subr.bf16.mxu0 0
    %620 = vmatpush1.bf16.msra.mxu0 0
    %621 = vmatprep.subr.bf16.mxu0 0
    %622 = vmatpush1.bf16.msra.mxu0 0
    %623 = vmatprep.subr.bf16.mxu0 0
    %624 = vmatpush1.bf16.msra.mxu0 0
    %625 = vmatprep.subr.bf16.mxu0 0
    %626 = vmatpush1.bf16.msra.mxu0 0
    %627 = vmatprep.subr.bf16.mxu0 0
    %628 = vmatpush1.bf16.msra.mxu0 0
    %629 = vmatprep.subr.bf16.mxu0 0
    %630 = vmatpush1.bf16.msra.mxu0 0
    %631 = vmatprep.mubr.bf16.mxu0 0
    %632 = vmatmul.mubr.bf16.gmra.mrb[0].mxu0 %v282
    %v633 = vpop.f32.mrb[0].mxu0
    %v634 = vadd.f32 %v549, %v633
    %v635 = vpop.f32.mrb[0].mxu0
    %v636 = vpop.f32.mrb[0].mxu0
    %v637 = vadd.f32 %v549, %v636
    %v638 = vpop.f32.mrb[0].mxu0
    %639 = vmatprep.mubr.bf16.mxu0 0
    %640 = vmatmul.mubr.bf16.gmra.mrb[0].mxu0 %v283
    %v641 = vpop.f32.mrb[0].mxu0
    %v642 = vadd.f32 %v549, %v641
    %v643 = vpop.f32.mrb[0].mxu0
    %v644 = vpop.f32.mrb[0].mxu0
    %v645 = vadd.f32 %v549, %v644
    %v646 = vpop.f32.mrb[0].mxu0
    %647 = vdwg.mxu0
    %v648 = vpack.c.bf16 %v405, %v404
    %v649 = vpack.c.bf16 %v407, %v406
    %v650 = vpack.c.bf16 %v517, %v514
    %v651 = vpack.c.bf16 %v525, %v522
    %v652 = vpack.c.bf16 %v637, %v634
    %v653 = vpack.c.bf16 %v645, %v642
    %vm654 = vcmask 523264
    %v656 = vsel %vm654, %v648, 0
    %v659 = vsel %vm654, %v650, 0
    %661 = vmatprep.subr.bf16.mxu0 0
    %662 = vmatpush1.bf16.xpose.msra.mxu0 %v659
    %663 = vmatprep.subr.bf16.mxu0 0
    %664 = vmatpush1.bf16.xpose.msra.mxu0 0
    %665 = vmatprep.subr.bf16.mxu0 0
    %666 = vmatpush1.bf16.xpose.msra.mxu0 0
    %667 = vmatprep.subr.bf16.mxu0 0
    %668 = vmatpush1.bf16.xpose.msra.mxu0 0
    %669 = vmatprep.subr.bf16.mxu0 0
    %670 = vmatpush1.bf16.xpose.msra.mxu0 0
    %671 = vmatprep.subr.bf16.mxu0 0
    %672 = vmatpush1.bf16.xpose.msra.mxu0 0
    %673 = vmatprep.subr.bf16.mxu0 0
    %674 = vmatpush1.bf16.xpose.msra.mxu0 0
    %675 = vmatprep.subr.bf16.mxu0 0
    %676 = vmatpush1.bf16.xpose.msra.mxu0 0
    %677 = vmatprep.subr.bf16.mxu0 0
    %678 = vmatpush1.bf16.xpose.msra.mxu0 0
    %679 = vmatprep.subr.bf16.mxu0 0
    %680 = vmatpush1.bf16.xpose.msra.mxu0 0
    %681 = vmatprep.subr.bf16.mxu0 0
    %682 = vmatpush1.bf16.xpose.msra.mxu0 0
    %683 = vmatprep.subr.bf16.mxu0 0
    %684 = vmatpush1.bf16.xpose.msra.mxu0 0
    %685 = vmatprep.subr.bf16.mxu0 0
    %686 = vmatpush1.bf16.xpose.msra.mxu0 0
    %687 = vmatprep.subr.bf16.mxu0 0
    %688 = vmatpush1.bf16.xpose.msra.mxu0 0
    %689 = vmatprep.subr.bf16.mxu0 0
    %690 = vmatpush1.bf16.xpose.msra.mxu0 0
    %691 = vmatprep.subr.bf16.mxu0 0
    %692 = vmatpush1.bf16.xpose.msra.mxu0 0
    %693 = vmatprep.mubr.bf16.mxu0 0
    %694 = vmatmul.mubr.bf16.gmra.mrb[0].mxu0 %v656
    %v695 = vpop.f32.mrb[0].mxu0
    %v696 = vadd.f32 0.0, %v695
    %v697 = vpop.f32.mrb[0].mxu0
    %v698 = vpop.f32.mrb[0].mxu0
    %v699 = vadd.f32 0.0, %v698
    %v700 = vpop.f32.mrb[0].mxu0
    %701 = vdwg.mxu0
    %v703 = vsel %vm654, %v649, 0
    %v706 = vsel %vm654, %v651, 0
    %708 = vmatprep.subr.bf16.mxu0 0
    %709 = vmatpush1.bf16.xpose.msra.mxu0 %v706
    %710 = vmatprep.subr.bf16.mxu0 0
    %711 = vmatpush1.bf16.xpose.msra.mxu0 0
    %712 = vmatprep.subr.bf16.mxu0 0
    %713 = vmatpush1.bf16.xpose.msra.mxu0 0
    %714 = vmatprep.subr.bf16.mxu0 0
    %715 = vmatpush1.bf16.xpose.msra.mxu0 0
    %716 = vmatprep.subr.bf16.mxu0 0
    %717 = vmatpush1.bf16.xpose.msra.mxu0 0
    %718 = vmatprep.subr.bf16.mxu0 0
    %719 = vmatpush1.bf16.xpose.msra.mxu0 0
    %720 = vmatprep.subr.bf16.mxu0 0
    %721 = vmatpush1.bf16.xpose.msra.mxu0 0
    %722 = vmatprep.subr.bf16.mxu0 0
    %723 = vmatpush1.bf16.xpose.msra.mxu0 0
    %724 = vmatprep.subr.bf16.mxu0 0
    %725 = vmatpush1.bf16.xpose.msra.mxu0 0
    %726 = vmatprep.subr.bf16.mxu0 0
    %727 = vmatpush1.bf16.xpose.msra.mxu0 0
    %728 = vmatprep.subr.bf16.mxu0 0
    %729 = vmatpush1.bf16.xpose.msra.mxu0 0
    %730 = vmatprep.subr.bf16.mxu0 0
    %731 = vmatpush1.bf16.xpose.msra.mxu0 0
    %732 = vmatprep.subr.bf16.mxu0 0
    %733 = vmatpush1.bf16.xpose.msra.mxu0 0
    %734 = vmatprep.subr.bf16.mxu0 0
    %735 = vmatpush1.bf16.xpose.msra.mxu0 0
    %736 = vmatprep.subr.bf16.mxu0 0
    %737 = vmatpush1.bf16.xpose.msra.mxu0 0
    %738 = vmatprep.subr.bf16.mxu0 0
    %739 = vmatpush1.bf16.xpose.msra.mxu0 0
    %740 = vmatprep.mubr.bf16.mxu0 0
    %741 = vmatmul.mubr.bf16.gmra.mrb[0].mxu0 %v703
    %v742 = vpop.f32.mrb[0].mxu0
    %v743 = vadd.f32 0.0, %v742
    %v744 = vpop.f32.mrb[0].mxu0
    %v745 = vpop.f32.mrb[0].mxu0
    %v746 = vadd.f32 0.0, %v745
    %v747 = vpop.f32.mrb[0].mxu0
    %748 = vdwg.mxu0
    %vm749 = vcmask 130048
    %v750 = vsel %vm749, %v696, -inf
    %751 = vmax.xlane.f32.xlu0 %v750
    %v752 = vpop.xlane.xlu0 %751
    %v753 = vsel %vm749, %v699, -inf
    %754 = vmax.xlane.f32.xlu0 %v753
    %v755 = vpop.xlane.xlu0 %754
    %v756 = vsel %vm749, %v743, -inf
    %757 = vmax.xlane.f32.xlu0 %v756
    %v758 = vpop.xlane.xlu0 %757
    %v759 = vsel %vm749, %v746, -inf
    %760 = vmax.xlane.f32.xlu0 %v759
    %v761 = vpop.xlane.xlu0 %760
    %v762 = vsub.f32 %v696, %v752
    %v763 = vsub.f32 %v699, %v755
    %v764 = vsub.f32 %v743, %v758
    %v765 = vsub.f32 %v746, %v761
    %v766 = vmul.f32 %v762, 1.442695
    %v767 = vpow.pop %v766
    %v768 = vmul.f32 %v763, 1.442695
    %v769 = vpow.pop %v768
    %v770 = vmul.f32 %v764, 1.442695
    %v771 = vpow.pop %v770
    %v772 = vmul.f32 %v765, 1.442695
    %v773 = vpow.pop %v772
    %v774 = vsel %vm749, %v767, 0.0
    %775 = vadd.xlane.f32.xlu0 %v774
    %v776 = vpop.xlane.xlu0 %775
    %v777 = vsel %vm749, %v769, 0.0
    %778 = vadd.xlane.f32.xlu0 %v777
    %v779 = vpop.xlane.xlu0 %778
    %v780 = vsel %vm749, %v771, 0.0
    %781 = vadd.xlane.f32.xlu0 %v780
    %v782 = vpop.xlane.xlu0 %781
    %v783 = vsel %vm749, %v773, 0.0
    %784 = vadd.xlane.f32.xlu0 %v783
    %v785 = vpop.xlane.xlu0 %784
    %v786 = vrcp.pop %v776
    %v787 = vmul.f32 %v767, %v786
    %v788 = vrcp.pop %v779
    %v789 = vmul.f32 %v769, %v788
    %v790 = vrcp.pop %v782
    %v791 = vmul.f32 %v771, %v790
    %v792 = vrcp.pop %v785
    %v793 = vmul.f32 %v773, %v792
    %v794 = vpack.c.bf16 %v789, %v787
    %v795 = vpack.c.bf16 %v793, %v791
    %v797 = vsel %vm749, %v794, 0
    %799 = vmatprep.subr.bf16.mxu0 0
    %800 = vmatpush1.bf16.msra.mxu0 %v652
    %801 = vmatprep.subr.bf16.mxu0 0
    %802 = vmatpush1.bf16.msra.mxu0 0
    %803 = vmatprep.subr.bf16.mxu0 0
    %804 = vmatpush1.bf16.msra.mxu0 0
    %805 = vmatprep.subr.bf16.mxu0 0
    %806 = vmatpush1.bf16.msra.mxu0 0
    %807 = vmatprep.subr.bf16.mxu0 0
    %808 = vmatpush1.bf16.msra.mxu0 0
    %809 = vmatprep.subr.bf16.mxu0 0
    %810 = vmatpush1.bf16.msra.mxu0 0
    %811 = vmatprep.subr.bf16.mxu0 0
    %812 = vmatpush1.bf16.msra.mxu0 0
    %813 = vmatprep.subr.bf16.mxu0 0
    %814 = vmatpush1.bf16.msra.mxu0 0
    %815 = vmatprep.subr.bf16.mxu0 0
    %816 = vmatpush1.bf16.msra.mxu0 0
    %817 = vmatprep.subr.bf16.mxu0 0
    %818 = vmatpush1.bf16.msra.mxu0 0
    %819 = vmatprep.subr.bf16.mxu0 0
    %820 = vmatpush1.bf16.msra.mxu0 0
    %821 = vmatprep.subr.bf16.mxu0 0
    %822 = vmatpush1.bf16.msra.mxu0 0
    %823 = vmatprep.subr.bf16.mxu0 0
    %824 = vmatpush1.bf16.msra.mxu0 0
    %825 = vmatprep.subr.bf16.mxu0 0
    %826 = vmatpush1.bf16.msra.mxu0 0
    %827 = vmatprep.subr.bf16.mxu0 0
    %828 = vmatpush1.bf16.msra.mxu0 0
    %829 = vmatprep.subr.bf16.mxu0 0
    %830 = vmatpush1.bf16.msra.mxu0 0
    %831 = vmatprep.mubr.bf16.mxu0 0
    %832 = vmatmul.mubr.bf16.gmra.mrb[0].mxu0 %v797
    %v833 = vpop.f32.mrb[0].mxu0
    %v834 = vadd.f32 0.0, %v833
    %v835 = vpop.f32.mrb[0].mxu0
    %v836 = vpop.f32.mrb[0].mxu0
    %v837 = vadd.f32 0.0, %v836
    %v838 = vpop.f32.mrb[0].mxu0
    %839 = vdwg.mxu0
    %v841 = vsel %vm749, %v795, 0
    %843 = vmatprep.subr.bf16.mxu0 0
    %844 = vmatpush1.bf16.msra.mxu0 %v653
    %845 = vmatprep.subr.bf16.mxu0 0
    %846 = vmatpush1.bf16.msra.mxu0 0
    %847 = vmatprep.subr.bf16.mxu0 0
    %848 = vmatpush1.bf16.msra.mxu0 0
    %849 = vmatprep.subr.bf16.mxu0 0
    %850 = vmatpush1.bf16.msra.mxu0 0
    %851 = vmatprep.subr.bf16.mxu0 0
    %852 = vmatpush1.bf16.msra.mxu0 0
    %853 = vmatprep.subr.bf16.mxu0 0
    %854 = vmatpush1.bf16.msra.mxu0 0
    %855 = vmatprep.subr.bf16.mxu0 0
    %856 = vmatpush1.bf16.msra.mxu0 0
    %857 = vmatprep.subr.bf16.mxu0 0
    %858 = vmatpush1.bf16.msra.mxu0 0
    %859 = vmatprep.subr.bf16.mxu0 0
    %860 = vmatpush1.bf16.msra.mxu0 0
    %861 = vmatprep.subr.bf16.mxu0 0
    %862 = vmatpush1.bf16.msra.mxu0 0
    %863 = vmatprep.subr.bf16.mxu0 0
    %864 = vmatpush1.bf16.msra.mxu0 0
    %865 = vmatprep.subr.bf16.mxu0 0
    %866 = vmatpush1.bf16.msra.mxu0 0
    %867 = vmatprep.subr.bf16.mxu0 0
    %868 = vmatpush1.bf16.msra.mxu0 0
    %869 = vmatprep.subr.bf16.mxu0 0
    %870 = vmatpush1.bf16.msra.mxu0 0
    %871 = vmatprep.subr.bf16.mxu0 0
    %872 = vmatpush1.bf16.msra.mxu0 0
    %873 = vmatprep.subr.bf16.mxu0 0
    %874 = vmatpush1.bf16.msra.mxu0 0
    %875 = vmatprep.mubr.bf16.mxu0 0
    %876 = vmatmul.mubr.bf16.gmra.mrb[0].mxu0 %v841
    %v877 = vpop.f32.mrb[0].mxu0
    %v878 = vadd.f32 0.0, %v877
    %v879 = vpop.f32.mrb[0].mxu0
    %v880 = vpop.f32.mrb[0].mxu0
    %v881 = vadd.f32 0.0, %v880
    %v882 = vpop.f32.mrb[0].mxu0
    %883 = vdwg.mxu0
    %v884 = vpack.c.bf16 %v837, %v834
    %v885 = vpack.c.bf16 %v881, %v878
    %v886 = vld [vmem:[#allocation14] sm:$0xf]
    %v887 = vld [vmem:[#allocation14 + $0x4] sm:$0xf]
    %v888 = vld [vmem:[#allocation14 + $0x8] sm:$0xf]
    %v889 = vld [vmem:[#allocation14 + $0xc] sm:$0xf]
    %v890 = vld [vmem:[#allocation14 + $0x10] sm:$0xf]
    %v891 = vld [vmem:[#allocation14 + $0x14] sm:$0xf]
    %v892 = vld [vmem:[#allocation14 + $0x18] sm:$0xf]
    %v893 = vld [vmem:[#allocation14 + $0x1c] sm:$0xf]
    %s894 = scalar_lea.vmem [#allocation5], 64
    %v895 = vld [vmem:[%s894] sm:$0xf]
    %v896 = vld [vmem:[%s894 + $0x4] sm:$0xf]
    %v897 = vld [vmem:[%s894 + $0x8] sm:$0xf]
    %v898 = vld [vmem:[%s894 + $0xc] sm:$0xf]
    %v899 = vld [vmem:[%s894 + $0x10] sm:$0xf]
    %v900 = vld [vmem:[%s894 + $0x14] sm:$0xf]
    %v901 = vld [vmem:[%s894 + $0x18] sm:$0xf]
    %v902 = vld [vmem:[%s894 + $0x1c] sm:$0xf]
    %v903 = vld [vmem:[%s894 + $0x20] sm:$0xf]
    %v904 = vld [vmem:[%s894 + $0x24] sm:$0xf]
    %v905 = vld [vmem:[%s894 + $0x28] sm:$0xf]
    %v906 = vld [vmem:[%s894 + $0x2c] sm:$0xf]
    %v907 = vld [vmem:[%s894 + $0x30] sm:$0xf]
    %v908 = vld [vmem:[%s894 + $0x34] sm:$0xf]
    %v909 = vld [vmem:[%s894 + $0x38] sm:$0xf]
    %v910 = vld [vmem:[%s894 + $0x3c] sm:$0xf]
    %s911 = scalar_lea.vmem [#allocation10], 1
    %v912 = vld [vmem:[%s911] sm:$0x1]
    %v914 = vlaneseq
    %v915 = vshrl.u32 %v914, 7
    %v916 = vsub.s32 0, %v915
    %v917 = vrot.slane %v912, %v916
    %v935 = vunpack.c.l.b16 %v895
    %v936 = vunpack.c.l.b16 %v896
    %v937 = vunpack.c.l.b16 %v897
    %v938 = vunpack.c.l.b16 %v898
    %v939 = vunpack.c.l.b16 %v899
    %v940 = vunpack.c.l.b16 %v900
    %v941 = vunpack.c.l.b16 %v901
    %v942 = vunpack.c.l.b16 %v902
    %v943 = vunpack.c.l.b16 %v903
    %v944 = vunpack.c.l.b16 %v904
    %v945 = vunpack.c.l.b16 %v905
    %v946 = vunpack.c.l.b16 %v906
    %v947 = vunpack.c.l.b16 %v907
    %v948 = vunpack.c.l.b16 %v908
    %v949 = vunpack.c.l.b16 %v909
    %v950 = vunpack.c.l.b16 %v910
    %v951 = vpack.c.b16 %v936, %v935
    %v952 = vpack.c.b16 %v938, %v937
    %v953 = vpack.c.b16 %v940, %v939
    %v954 = vpack.c.b16 %v942, %v941
    %v955 = vpack.c.b16 %v944, %v943
    %v956 = vpack.c.b16 %v946, %v945
    %v957 = vpack.c.b16 %v948, %v947
    %v958 = vpack.c.b16 %v950, %v949
    %967 = vmatprep.subr.bf16.mxu0 0
    %968 = vmatpush1.bf16.msra.mxu0 %v951
    %969 = vmatprep.subr.bf16.mxu0 0
    %970 = vmatpush1.bf16.msra.mxu0 %v952
    %971 = vmatprep.subr.bf16.mxu0 0
    %972 = vmatpush1.bf16.msra.mxu0 %v953
    %973 = vmatprep.subr.bf16.mxu0 0
    %974 = vmatpush1.bf16.msra.mxu0 %v954
    %975 = vmatprep.subr.bf16.mxu0 0
    %976 = vmatpush1.bf16.msra.mxu0 %v955
    %977 = vmatprep.subr.bf16.mxu0 0
    %978 = vmatpush1.bf16.msra.mxu0 %v956
    %979 = vmatprep.subr.bf16.mxu0 0
    %980 = vmatpush1.bf16.msra.mxu0 %v957
    %981 = vmatprep.subr.bf16.mxu0 0
    %982 = vmatpush1.bf16.msra.mxu0 %v958
    %983 = vmatprep.subr.bf16.mxu0 0
    %984 = vmatpush1.bf16.msra.mxu0 0
    %985 = vmatprep.subr.bf16.mxu0 0
    %986 = vmatpush1.bf16.msra.mxu0 0
    %987 = vmatprep.subr.bf16.mxu0 0
    %988 = vmatpush1.bf16.msra.mxu0 0
    %989 = vmatprep.subr.bf16.mxu0 0
    %990 = vmatpush1.bf16.msra.mxu0 0
    %991 = vmatprep.subr.bf16.mxu0 0
    %992 = vmatpush1.bf16.msra.mxu0 0
    %993 = vmatprep.subr.bf16.mxu0 0
    %994 = vmatpush1.bf16.msra.mxu0 0
    %995 = vmatprep.subr.bf16.mxu0 0
    %996 = vmatpush1.bf16.msra.mxu0 0
    %997 = vmatprep.subr.bf16.mxu0 0
    %998 = vmatpush1.bf16.msra.mxu0 0
    %999 = vmatprep.mubr.bf16.mxu0 0
    %1000 = vmatmul.mubr.bf16.gmra.mrb[0].mxu0 %v282
    %v1001 = vpop.f32.mrb[0].mxu0
    %v1002 = vadd.f32 %v917, %v1001
    %v1003 = vpop.f32.mrb[0].mxu0
    %v1004 = vpop.f32.mrb[0].mxu0
    %v1005 = vadd.f32 %v917, %v1004
    %v1006 = vpop.f32.mrb[0].mxu0
    %1007 = vmatprep.mubr.bf16.mxu0 0
    %1008 = vmatmul.mubr.bf16.gmra.mrb[0].mxu0 %v283
    %v1009 = vpop.f32.mrb[0].mxu0
    %v1010 = vadd.f32 %v917, %v1009
    %v1011 = vpop.f32.mrb[0].mxu0
    %v1012 = vpop.f32.mrb[0].mxu0
    %v1013 = vadd.f32 %v917, %v1012
    %v1014 = vpop.f32.mrb[0].mxu0
    %1015 = vdwg.mxu0
    %v1016 = vmul.f32 %v1002, 0.125
    %v1017 = vmul.f32 %v1005, 0.125
    %v1018 = vmul.f32 %v1010, 0.125
    %v1019 = vmul.f32 %v1013, 0.125
    %s1020 = scalar_lea.vmem [#allocation7], 64
    %v1021 = vld [vmem:[%s1020] sm:$0xf]
    %v1022 = vld [vmem:[%s1020 + $0x4] sm:$0xf]
    %v1023 = vld [vmem:[%s1020 + $0x8] sm:$0xf]
    %v1024 = vld [vmem:[%s1020 + $0xc] sm:$0xf]
    %v1025 = vld [vmem:[%s1020 + $0x10] sm:$0xf]
    %v1026 = vld [vmem:[%s1020 + $0x14] sm:$0xf]
    %v1027 = vld [vmem:[%s1020 + $0x18] sm:$0xf]
    %v1028 = vld [vmem:[%s1020 + $0x1c] sm:$0xf]
    %v1029 = vld [vmem:[%s1020 + $0x20] sm:$0xf]
    %v1030 = vld [vmem:[%s1020 + $0x24] sm:$0xf]
    %v1031 = vld [vmem:[%s1020 + $0x28] sm:$0xf]
    %v1032 = vld [vmem:[%s1020 + $0x2c] sm:$0xf]
    %v1033 = vld [vmem:[%s1020 + $0x30] sm:$0xf]
    %v1034 = vld [vmem:[%s1020 + $0x34] sm:$0xf]
    %v1035 = vld [vmem:[%s1020 + $0x38] sm:$0xf]
    %v1036 = vld [vmem:[%s1020 + $0x3c] sm:$0xf]
    %s1037 = scalar_lea.vmem [#allocation11], 1
    %v1038 = vld [vmem:[%s1037] sm:$0x1]
    %v1040 = vlaneseq
    %v1041 = vshrl.u32 %v1040, 7
    %v1042 = vsub.s32 0, %v1041
    %v1043 = vrot.slane %v1038, %v1042
    %v1061 = vunpack.c.l.b16 %v1021
    %v1062 = vunpack.c.l.b16 %v1022
    %v1063 = vunpack.c.l.b16 %v1023
    %v1064 = vunpack.c.l.b16 %v1024
    %v1065 = vunpack.c.l.b16 %v1025
    %v1066 = vunpack.c.l.b16 %v1026
    %v1067 = vunpack.c.l.b16 %v1027
    %v1068 = vunpack.c.l.b16 %v1028
    %v1069 = vunpack.c.l.b16 %v1029
    %v1070 = vunpack.c.l.b16 %v1030
    %v1071 = vunpack.c.l.b16 %v1031
    %v1072 = vunpack.c.l.b16 %v1032
    %v1073 = vunpack.c.l.b16 %v1033
    %v1074 = vunpack.c.l.b16 %v1034
    %v1075 = vunpack.c.l.b16 %v1035
    %v1076 = vunpack.c.l.b16 %v1036
    %v1077 = vpack.c.b16 %v1062, %v1061
    %v1078 = vpack.c.b16 %v1064, %v1063
    %v1079 = vpack.c.b16 %v1066, %v1065
    %v1080 = vpack.c.b16 %v1068, %v1067
    %v1081 = vpack.c.b16 %v1070, %v1069
    %v1082 = vpack.c.b16 %v1072, %v1071
    %v1083 = vpack.c.b16 %v1074, %v1073
    %v1084 = vpack.c.b16 %v1076, %v1075
    %1093 = vmatprep.subr.bf16.mxu0 0
    %1094 = vmatpush1.bf16.msra.mxu0 %v1077
    %1095 = vmatprep.subr.bf16.mxu0 0
    %1096 = vmatpush1.bf16.msra.mxu0 %v1078
    %1097 = vmatprep.subr.bf16.mxu0 0
    %1098 = vmatpush1.bf16.msra.mxu0 %v1079
    %1099 = vmatprep.subr.bf16.mxu0 0
    %1100 = vmatpush1.bf16.msra.mxu0 %v1080
    %1101 = vmatprep.subr.bf16.mxu0 0
    %1102 = vmatpush1.bf16.msra.mxu0 %v1081
    %1103 = vmatprep.subr.bf16.mxu0 0
    %1104 = vmatpush1.bf16.msra.mxu0 %v1082
    %1105 = vmatprep.subr.bf16.mxu0 0
    %1106 = vmatpush1.bf16.msra.mxu0 %v1083
    %1107 = vmatprep.subr.bf16.mxu0 0
    %1108 = vmatpush1.bf16.msra.mxu0 %v1084
    %1109 = vmatprep.subr.bf16.mxu0 0
    %1110 = vmatpush1.bf16.msra.mxu0 0
    %1111 = vmatprep.subr.bf16.mxu0 0
    %1112 = vmatpush1.bf16.msra.mxu0 0
    %1113 = vmatprep.subr.bf16.mxu0 0
    %1114 = vmatpush1.bf16.msra.mxu0 0
    %1115 = vmatprep.subr.bf16.mxu0 0
    %1116 = vmatpush1.bf16.msra.mxu0 0
    %1117 = vmatprep.subr.bf16.mxu0 0
    %1118 = vmatpush1.bf16.msra.mxu0 0
    %1119 = vmatprep.subr.bf16.mxu0 0
    %1120 = vmatpush1.bf16.msra.mxu0 0
    %1121 = vmatprep.subr.bf16.mxu0 0
    %1122 = vmatpush1.bf16.msra.mxu0 0
    %1123 = vmatprep.subr.bf16.mxu0 0
    %1124 = vmatpush1.bf16.msra.mxu0 0
    %1125 = vmatprep.mubr.bf16.mxu0 0
    %1126 = vmatmul.mubr.bf16.gmra.mrb[0].mxu0 %v282
    %v1127 = vpop.f32.mrb[0].mxu0
    %v1128 = vadd.f32 %v1043, %v1127
    %v1129 = vpop.f32.mrb[0].mxu0
    %v1130 = vpop.f32.mrb[0].mxu0
    %v1131 = vadd.f32 %v1043, %v1130
    %v1132 = vpop.f32.mrb[0].mxu0
    %1133 = vmatprep.mubr.bf16.mxu0 0
    %1134 = vmatmul.mubr.bf16.gmra.mrb[0].mxu0 %v283
    %v1135 = vpop.f32.mrb[0].mxu0
    %v1136 = vadd.f32 %v1043, %v1135
    %v1137 = vpop.f32.mrb[0].mxu0
    %v1138 = vpop.f32.mrb[0].mxu0
    %v1139 = vadd.f32 %v1043, %v1138
    %v1140 = vpop.f32.mrb[0].mxu0
    %1141 = vdwg.mxu0
    %s1142 = scalar_lea.vmem [#allocation8], 64
    %v1143 = vld [vmem:[%s1142] sm:$0xf]
    %v1144 = vld [vmem:[%s1142 + $0x4] sm:$0xf]
    %v1145 = vld [vmem:[%s1142 + $0x8] sm:$0xf]
    %v1146 = vld [vmem:[%s1142 + $0xc] sm:$0xf]
    %v1147 = vld [vmem:[%s1142 + $0x10] sm:$0xf]
    %v1148 = vld [vmem:[%s1142 + $0x14] sm:$0xf]
    %v1149 = vld [vmem:[%s1142 + $0x18] sm:$0xf]
    %v1150 = vld [vmem:[%s1142 + $0x1c] sm:$0xf]
    %v1151 = vld [vmem:[%s1142 + $0x20] sm:$0xf]
    %v1152 = vld [vmem:[%s1142 + $0x24] sm:$0xf]
    %v1153 = vld [vmem:[%s1142 + $0x28] sm:$0xf]
    %v1154 = vld [vmem:[%s1142 + $0x2c] sm:$0xf]
    %v1155 = vld [vmem:[%s1142 + $0x30] sm:$0xf]
    %v1156 = vld [vmem:[%s1142 + $0x34] sm:$0xf]
    %v1157 = vld [vmem:[%s1142 + $0x38] sm:$0xf]
    %v1158 = vld [vmem:[%s1142 + $0x3c] sm:$0xf]
    %s1159 = scalar_lea.vmem [#allocation13], 1
    %v1160 = vld [vmem:[%s1159] sm:$0x1]
    %v1162 = vlaneseq
    %v1163 = vshrl.u32 %v1162, 7
    %v1164 = vsub.s32 0, %v1163
    %v1165 = vrot.slane %v1160, %v1164
    %v1183 = vunpack.c.l.b16 %v1143
    %v1184 = vunpack.c.l.b16 %v1144
    %v1185 = vunpack.c.l.b16 %v1145
    %v1186 = vunpack.c.l.b16 %v1146
    %v1187 = vunpack.c.l.b16 %v1147
    %v1188 = vunpack.c.l.b16 %v1148
    %v1189 = vunpack.c.l.b16 %v1149
    %v1190 = vunpack.c.l.b16 %v1150
    %v1191 = vunpack.c.l.b16 %v1151
    %v1192 = vunpack.c.l.b16 %v1152
    %v1193 = vunpack.c.l.b16 %v1153
    %v1194 = vunpack.c.l.b16 %v1154
    %v1195 = vunpack.c.l.b16 %v1155
    %v1196 = vunpack.c.l.b16 %v1156
    %v1197 = vunpack.c.l.b16 %v1157
    %v1198 = vunpack.c.l.b16 %v1158
    %v1199 = vpack.c.b16 %v1184, %v1183
    %v1200 = vpack.c.b16 %v1186, %v1185
    %v1201 = vpack.c.b16 %v1188, %v1187
    %v1202 = vpack.c.b16 %v1190, %v1189
    %v1203 = vpack.c.b16 %v1192, %v1191
    %v1204 = vpack.c.b16 %v1194, %v1193
    %v1205 = vpack.c.b16 %v1196, %v1195
    %v1206 = vpack.c.b16 %v1198, %v1197
    %1215 = vmatprep.subr.bf16.mxu0 0
    %1216 = vmatpush1.bf16.msra.mxu0 %v1199
    %1217 = vmatprep.subr.bf16.mxu0 0
    %1218 = vmatpush1.bf16.msra.mxu0 %v1200
    %1219 = vmatprep.subr.bf16.mxu0 0
    %1220 = vmatpush1.bf16.msra.mxu0 %v1201
    %1221 = vmatprep.subr.bf16.mxu0 0
    %1222 = vmatpush1.bf16.msra.mxu0 %v1202
    %1223 = vmatprep.subr.bf16.mxu0 0
    %1224 = vmatpush1.bf16.msra.mxu0 %v1203
    %1225 = vmatprep.subr.bf16.mxu0 0
    %1226 = vmatpush1.bf16.msra.mxu0 %v1204
    %1227 = vmatprep.subr.bf16.mxu0 0
    %1228 = vmatpush1.bf16.msra.mxu0 %v1205
    %1229 = vmatprep.subr.bf16.mxu0 0
    %1230 = vmatpush1.bf16.msra.mxu0 %v1206
    %1231 = vmatprep.subr.bf16.mxu0 0
    %1232 = vmatpush1.bf16.msra.mxu0 0
    %1233 = vmatprep.subr.bf16.mxu0 0
    %1234 = vmatpush1.bf16.msra.mxu0 0
    %1235 = vmatprep.subr.bf16.mxu0 0
    %1236 = vmatpush1.bf16.msra.mxu0 0
    %1237 = vmatprep.subr.bf16.mxu0 0
    %1238 = vmatpush1.bf16.msra.mxu0 0
    %1239 = vmatprep.subr.bf16.mxu0 0
    %1240 = vmatpush1.bf16.msra.mxu0 0
    %1241 = vmatprep.subr.bf16.mxu0 0
    %1242 = vmatpush1.bf16.msra.mxu0 0
    %1243 = vmatprep.subr.bf16.mxu0 0
    %1244 = vmatpush1.bf16.msra.mxu0 0
    %1245 = vmatprep.subr.bf16.mxu0 0
    %1246 = vmatpush1.bf16.msra.mxu0 0
    %1247 = vmatprep.mubr.bf16.mxu0 0
    %1248 = vmatmul.mubr.bf16.gmra.mrb[0].mxu0 %v282
    %v1249 = vpop.f32.mrb[0].mxu0
    %v1250 = vadd.f32 %v1165, %v1249
    %v1251 = vpop.f32.mrb[0].mxu0
    %v1252 = vpop.f32.mrb[0].mxu0
    %v1253 = vadd.f32 %v1165, %v1252
    %v1254 = vpop.f32.mrb[0].mxu0
    %1255 = vmatprep.mubr.bf16.mxu0 0
    %1256 = vmatmul.mubr.bf16.gmra.mrb[0].mxu0 %v283
    %v1257 = vpop.f32.mrb[0].mxu0
    %v1258 = vadd.f32 %v1165, %v1257
    %v1259 = vpop.f32.mrb[0].mxu0
    %v1260 = vpop.f32.mrb[0].mxu0
    %v1261 = vadd.f32 %v1165, %v1260
    %v1262 = vpop.f32.mrb[0].mxu0
    %1263 = vdwg.mxu0
    %v1264 = vpack.c.bf16 %v1017, %v1016
    %v1265 = vpack.c.bf16 %v1019, %v1018
    %v1266 = vpack.c.bf16 %v1131, %v1128
    %v1267 = vpack.c.bf16 %v1139, %v1136
    %v1268 = vpack.c.bf16 %v1253, %v1250
    %v1269 = vpack.c.bf16 %v1261, %v1258
    %v1271 = vsel %vm654, %v1264, 0
    %v1274 = vsel %vm654, %v1266, 0
    %1276 = vmatprep.subr.bf16.mxu0 0
    %1277 = vmatpush1.bf16.xpose.msra.mxu0 %v1274
    %1278 = vmatprep.subr.bf16.mxu0 0
    %1279 = vmatpush1.bf16.xpose.msra.mxu0 0
    %1280 = vmatprep.subr.bf16.mxu0 0
    %1281 = vmatpush1.bf16.xpose.msra.mxu0 0
    %1282 = vmatprep.subr.bf16.mxu0 0
    %1283 = vmatpush1.bf16.xpose.msra.mxu0 0
    %1284 = vmatprep.subr.bf16.mxu0 0
    %1285 = vmatpush1.bf16.xpose.msra.mxu0 0
    %1286 = vmatprep.subr.bf16.mxu0 0
    %1287 = vmatpush1.bf16.xpose.msra.mxu0 0
    %1288 = vmatprep.subr.bf16.mxu0 0
    %1289 = vmatpush1.bf16.xpose.msra.mxu0 0
    %1290 = vmatprep.subr.bf16.mxu0 0
    %1291 = vmatpush1.bf16.xpose.msra.mxu0 0
    %1292 = vmatprep.subr.bf16.mxu0 0
    %1293 = vmatpush1.bf16.xpose.msra.mxu0 0
    %1294 = vmatprep.subr.bf16.mxu0 0
    %1295 = vmatpush1.bf16.xpose.msra.mxu0 0
    %1296 = vmatprep.subr.bf16.mxu0 0
    %1297 = vmatpush1.bf16.xpose.msra.mxu0 0
    %1298 = vmatprep.subr.bf16.mxu0 0
    %1299 = vmatpush1.bf16.xpose.msra.mxu0 0
    %1300 = vmatprep.subr.bf16.mxu0 0
    %1301 = vmatpush1.bf16.xpose.msra.mxu0 0
    %1302 = vmatprep.subr.bf16.mxu0 0
    %1303 = vmatpush1.bf16.xpose.msra.mxu0 0
    %1304 = vmatprep.subr.bf16.mxu0 0
    %1305 = vmatpush1.bf16.xpose.msra.mxu0 0
    %1306 = vmatprep.subr.bf16.mxu0 0
    %1307 = vmatpush1.bf16.xpose.msra.mxu0 0
    %1308 = vmatprep.mubr.bf16.mxu0 0
    %1309 = vmatmul.mubr.bf16.gmra.mrb[0].mxu0 %v1271
    %v1310 = vpop.f32.mrb[0].mxu0
    %v1311 = vadd.f32 0.0, %v1310
    %v1312 = vpop.f32.mrb[0].mxu0
    %v1313 = vpop.f32.mrb[0].mxu0
    %v1314 = vadd.f32 0.0, %v1313
    %v1315 = vpop.f32.mrb[0].mxu0
    %1316 = vdwg.mxu0
    %v1318 = vsel %vm654, %v1265, 0
    %v1321 = vsel %vm654, %v1267, 0
    %1323 = vmatprep.subr.bf16.mxu0 0
    %1324 = vmatpush1.bf16.xpose.msra.mxu0 %v1321
    %1325 = vmatprep.subr.bf16.mxu0 0
    %1326 = vmatpush1.bf16.xpose.msra.mxu0 0
    %1327 = vmatprep.subr.bf16.mxu0 0
    %1328 = vmatpush1.bf16.xpose.msra.mxu0 0
    %1329 = vmatprep.subr.bf16.mxu0 0
    %1330 = vmatpush1.bf16.xpose.msra.mxu0 0
    %1331 = vmatprep.subr.bf16.mxu0 0
    %1332 = vmatpush1.bf16.xpose.msra.mxu0 0
    %1333 = vmatprep.subr.bf16.mxu0 0
    %1334 = vmatpush1.bf16.xpose.msra.mxu0 0
    %1335 = vmatprep.subr.bf16.mxu0 0
    %1336 = vmatpush1.bf16.xpose.msra.mxu0 0
    %1337 = vmatprep.subr.bf16.mxu0 0
    %1338 = vmatpush1.bf16.xpose.msra.mxu0 0
    %1339 = vmatprep.subr.bf16.mxu0 0
    %1340 = vmatpush1.bf16.xpose.msra.mxu0 0
    %1341 = vmatprep.subr.bf16.mxu0 0
    %1342 = vmatpush1.bf16.xpose.msra.mxu0 0
    %1343 = vmatprep.subr.bf16.mxu0 0
    %1344 = vmatpush1.bf16.xpose.msra.mxu0 0
    %1345 = vmatprep.subr.bf16.mxu0 0
    %1346 = vmatpush1.bf16.xpose.msra.mxu0 0
    %1347 = vmatprep.subr.bf16.mxu0 0
    %1348 = vmatpush1.bf16.xpose.msra.mxu0 0
    %1349 = vmatprep.subr.bf16.mxu0 0
    %1350 = vmatpush1.bf16.xpose.msra.mxu0 0
    %1351 = vmatprep.subr.bf16.mxu0 0
    %1352 = vmatpush1.bf16.xpose.msra.mxu0 0
    %1353 = vmatprep.subr.bf16.mxu0 0
    %1354 = vmatpush1.bf16.xpose.msra.mxu0 0
    %1355 = vmatprep.mubr.bf16.mxu0 0
    %1356 = vmatmul.mubr.bf16.gmra.mrb[0].mxu0 %v1318
    %v1357 = vpop.f32.mrb[0].mxu0
    %v1358 = vadd.f32 0.0, %v1357
    %v1359 = vpop.f32.mrb[0].mxu0
    %v1360 = vpop.f32.mrb[0].mxu0
    %v1361 = vadd.f32 0.0, %v1360
    %v1362 = vpop.f32.mrb[0].mxu0
    %1363 = vdwg.mxu0
    %v1364 = vsel %vm749, %v1311, -inf
    %1365 = vmax.xlane.f32.xlu0 %v1364
    %v1366 = vpop.xlane.xlu0 %1365
    %v1367 = vsel %vm749, %v1314, -inf
    %1368 = vmax.xlane.f32.xlu0 %v1367
    %v1369 = vpop.xlane.xlu0 %1368
    %v1370 = vsel %vm749, %v1358, -inf
    %1371 = vmax.xlane.f32.xlu0 %v1370
    %v1372 = vpop.xlane.xlu0 %1371
    %v1373 = vsel %vm749, %v1361, -inf
    %1374 = vmax.xlane.f32.xlu0 %v1373
    %v1375 = vpop.xlane.xlu0 %1374
    %v1376 = vsub.f32 %v1311, %v1366
    %v1377 = vsub.f32 %v1314, %v1369
    %v1378 = vsub.f32 %v1358, %v1372
    %v1379 = vsub.f32 %v1361, %v1375
    %v1380 = vmul.f32 %v1376, 1.442695
    %v1381 = vpow.pop %v1380
    %v1382 = vmul.f32 %v1377, 1.442695
    %v1383 = vpow.pop %v1382
    %v1384 = vmul.f32 %v1378, 1.442695
    %v1385 = vpow.pop %v1384
    %v1386 = vmul.f32 %v1379, 1.442695
    %v1387 = vpow.pop %v1386
    %v1388 = vsel %vm749, %v1381, 0.0
    %1389 = vadd.xlane.f32.xlu0 %v1388
    %v1390 = vpop.xlane.xlu0 %1389
    %v1391 = vsel %vm749, %v1383, 0.0
    %1392 = vadd.xlane.f32.xlu0 %v1391
    %v1393 = vpop.xlane.xlu0 %1392
    %v1394 = vsel %vm749, %v1385, 0.0
    %1395 = vadd.xlane.f32.xlu0 %v1394
    %v1396 = vpop.xlane.xlu0 %1395
    %v1397 = vsel %vm749, %v1387, 0.0
    %1398 = vadd.xlane.f32.xlu0 %v1397
    %v1399 = vpop.xlane.xlu0 %1398
    %v1400 = vrcp.pop %v1390
    %v1401 = vmul.f32 %v1381, %v1400
    %v1402 = vrcp.pop %v1393
    %v1403 = vmul.f32 %v1383, %v1402
    %v1404 = vrcp.pop %v1396
    %v1405 = vmul.f32 %v1385, %v1404
    %v1406 = vrcp.pop %v1399
    %v1407 = vmul.f32 %v1387, %v1406
    %v1408 = vpack.c.bf16 %v1403, %v1401
    %v1409 = vpack.c.bf16 %v1407, %v1405
    %v1411 = vsel %vm749, %v1408, 0
    %1413 = vmatprep.subr.bf16.mxu0 0
    %1414 = vmatpush1.bf16.msra.mxu0 %v1268
    %1415 = vmatprep.subr.bf16.mxu0 0
    %1416 = vmatpush1.bf16.msra.mxu0 0
    %1417 = vmatprep.subr.bf16.mxu0 0
    %1418 = vmatpush1.bf16.msra.mxu0 0
    %1419 = vmatprep.subr.bf16.mxu0 0
    %1420 = vmatpush1.bf16.msra.mxu0 0
    %1421 = vmatprep.subr.bf16.mxu0 0
    %1422 = vmatpush1.bf16.msra.mxu0 0
    %1423 = vmatprep.subr.bf16.mxu0 0
    %1424 = vmatpush1.bf16.msra.mxu0 0
    %1425 = vmatprep.subr.bf16.mxu0 0
    %1426 = vmatpush1.bf16.msra.mxu0 0
    %1427 = vmatprep.subr.bf16.mxu0 0
    %1428 = vmatpush1.bf16.msra.mxu0 0
    %1429 = vmatprep.subr.bf16.mxu0 0
    %1430 = vmatpush1.bf16.msra.mxu0 0
    %1431 = vmatprep.subr.bf16.mxu0 0
    %1432 = vmatpush1.bf16.msra.mxu0 0
    %1433 = vmatprep.subr.bf16.mxu0 0
    %1434 = vmatpush1.bf16.msra.mxu0 0
    %1435 = vmatprep.subr.bf16.mxu0 0
    %1436 = vmatpush1.bf16.msra.mxu0 0
    %1437 = vmatprep.subr.bf16.mxu0 0
    %1438 = vmatpush1.bf16.msra.mxu0 0
    %1439 = vmatprep.subr.bf16.mxu0 0
    %1440 = vmatpush1.bf16.msra.mxu0 0
    %1441 = vmatprep.subr.bf16.mxu0 0
    %1442 = vmatpush1.bf16.msra.mxu0 0
    %1443 = vmatprep.subr.bf16.mxu0 0
    %1444 = vmatpush1.bf16.msra.mxu0 0
    %1445 = vmatprep.mubr.bf16.mxu0 0
    %1446 = vmatmul.mubr.bf16.gmra.mrb[0].mxu0 %v1411
    %v1447 = vpop.f32.mrb[0].mxu0
    %v1448 = vadd.f32 0.0, %v1447
    %v1449 = vpop.f32.mrb[0].mxu0
    %v1450 = vpop.f32.mrb[0].mxu0
    %v1451 = vadd.f32 0.0, %v1450
    %v1452 = vpop.f32.mrb[0].mxu0
    %1453 = vdwg.mxu0
    %v1455 = vsel %vm749, %v1409, 0
    %1457 = vmatprep.subr.bf16.mxu0 0
    %1458 = vmatpush1.bf16.msra.mxu0 %v1269
    %1459 = vmatprep.subr.bf16.mxu0 0
    %1460 = vmatpush1.bf16.msra.mxu0 0
    %1461 = vmatprep.subr.bf16.mxu0 0
    %1462 = vmatpush1.bf16.msra.mxu0 0
    %1463 = vmatprep.subr.bf16.mxu0 0
    %1464 = vmatpush1.bf16.msra.mxu0 0
    %1465 = vmatprep.subr.bf16.mxu0 0
    %1466 = vmatpush1.bf16.msra.mxu0 0
    %1467 = vmatprep.subr.bf16.mxu0 0
    %1468 = vmatpush1.bf16.msra.mxu0 0
    %1469 = vmatprep.subr.bf16.mxu0 0
    %1470 = vmatpush1.bf16.msra.mxu0 0
    %1471 = vmatprep.subr.bf16.mxu0 0
    %1472 = vmatpush1.bf16.msra.mxu0 0
    %1473 = vmatprep.subr.bf16.mxu0 0
    %1474 = vmatpush1.bf16.msra.mxu0 0
    %1475 = vmatprep.subr.bf16.mxu0 0
    %1476 = vmatpush1.bf16.msra.mxu0 0
    %1477 = vmatprep.subr.bf16.mxu0 0
    %1478 = vmatpush1.bf16.msra.mxu0 0
    %1479 = vmatprep.subr.bf16.mxu0 0
    %1480 = vmatpush1.bf16.msra.mxu0 0
    %1481 = vmatprep.subr.bf16.mxu0 0
    %1482 = vmatpush1.bf16.msra.mxu0 0
    %1483 = vmatprep.subr.bf16.mxu0 0
    %1484 = vmatpush1.bf16.msra.mxu0 0
    %1485 = vmatprep.subr.bf16.mxu0 0
    %1486 = vmatpush1.bf16.msra.mxu0 0
    %1487 = vmatprep.subr.bf16.mxu0 0
    %1488 = vmatpush1.bf16.msra.mxu0 0
    %1489 = vmatprep.mubr.bf16.mxu0 0
    %1490 = vmatmul.mubr.bf16.gmra.mrb[0].mxu0 %v1455
    %v1491 = vpop.f32.mrb[0].mxu0
    %v1492 = vadd.f32 0.0, %v1491
    %v1493 = vpop.f32.mrb[0].mxu0
    %v1494 = vpop.f32.mrb[0].mxu0
    %v1495 = vadd.f32 0.0, %v1494
    %v1496 = vpop.f32.mrb[0].mxu0
    %1497 = vdwg.mxu0
    %v1498 = vpack.c.bf16 %v1451, %v1448
    %v1499 = vpack.c.bf16 %v1495, %v1492
    %s1500 = scalar_lea.vmem [#allocation14], 32
    %v1501 = vld [vmem:[%s1500] sm:$0xf]
    %v1502 = vld [vmem:[%s1500 + $0x4] sm:$0xf]
    %v1503 = vld [vmem:[%s1500 + $0x8] sm:$0xf]
    %v1504 = vld [vmem:[%s1500 + $0xc] sm:$0xf]
    %v1505 = vld [vmem:[%s1500 + $0x10] sm:$0xf]
    %v1506 = vld [vmem:[%s1500 + $0x14] sm:$0xf]
    %v1507 = vld [vmem:[%s1500 + $0x18] sm:$0xf]
    %v1508 = vld [vmem:[%s1500 + $0x1c] sm:$0xf]
    %v1517 = vunpack.c.l.b16 %v1501
    %v1518 = vunpack.c.l.b16 %v1502
    %v1519 = vunpack.c.l.b16 %v1503
    %v1520 = vunpack.c.l.b16 %v1504
    %v1521 = vunpack.c.l.b16 %v1505
    %v1522 = vunpack.c.l.b16 %v1506
    %v1523 = vunpack.c.l.b16 %v1507
    %v1524 = vunpack.c.l.b16 %v1508
    %v1525 = vpack.c.b16 %v1518, %v1517
    %v1526 = vpack.c.b16 %v1520, %v1519
    %v1527 = vpack.c.b16 %v1522, %v1521
    %v1528 = vpack.c.b16 %v1524, %v1523
    %v1534 = vsel %vm654, %v1498, 0
    %v1537 = vsel %vm654, %v1499, 0
    %1539 = vmatprep.subr.bf16.mxu0 0
    %1540 = vmatpush1.bf16.msra.mxu0 %v1525
    %1541 = vmatprep.subr.bf16.mxu0 0
    %1542 = vmatpush1.bf16.msra.mxu0 %v1526
    %1543 = vmatprep.subr.bf16.mxu0 0
    %1544 = vmatpush1.bf16.msra.mxu0 %v1527
    %1545 = vmatprep.subr.bf16.mxu0 0
    %1546 = vmatpush1.bf16.msra.mxu0 %v1528
    %1547 = vmatprep.subr.bf16.mxu0 0
    %1548 = vmatpush1.bf16.msra.mxu0 0
    %1549 = vmatprep.subr.bf16.mxu0 0
    %1550 = vmatpush1.bf16.msra.mxu0 0
    %1551 = vmatprep.subr.bf16.mxu0 0
    %1552 = vmatpush1.bf16.msra.mxu0 0
    %1553 = vmatprep.subr.bf16.mxu0 0
    %1554 = vmatpush1.bf16.msra.mxu0 0
    %1555 = vmatprep.subr.bf16.mxu0 0
    %1556 = vmatpush1.bf16.msra.mxu0 0
    %1557 = vmatprep.subr.bf16.mxu0 0
    %1558 = vmatpush1.bf16.msra.mxu0 0
    %1559 = vmatprep.subr.bf16.mxu0 0
    %1560 = vmatpush1.bf16.msra.mxu0 0
    %1561 = vmatprep.subr.bf16.mxu0 0
    %1562 = vmatpush1.bf16.msra.mxu0 0
    %1563 = vmatprep.subr.bf16.mxu0 0
    %1564 = vmatpush1.bf16.msra.mxu0 0
    %1565 = vmatprep.subr.bf16.mxu0 0
    %1566 = vmatpush1.bf16.msra.mxu0 0
    %1567 = vmatprep.subr.bf16.mxu0 0
    %1568 = vmatpush1.bf16.msra.mxu0 0
    %1569 = vmatprep.subr.bf16.mxu0 0
    %1570 = vmatpush1.bf16.msra.mxu0 0
    %1571 = vmatprep.mubr.bf16.mxu0 0
    %1572 = vmatmul.mubr.bf16.gmra.mrb[0].mxu0 %v1534
    %v1573 = vpop.f32.mrb[0].mxu0
    %v1574 = vadd.f32 0.0, %v1573
    %v1575 = vpop.f32.mrb[0].mxu0
    %v1576 = vpop.f32.mrb[0].mxu0
    %v1577 = vadd.f32 0.0, %v1576
    %v1578 = vpop.f32.mrb[0].mxu0
    %1579 = vmatprep.mubr.bf16.mxu0 0
    %1580 = vmatmul.mubr.bf16.gmra.mrb[0].mxu0 %v1537
    %v1581 = vpop.f32.mrb[0].mxu0
    %v1582 = vadd.f32 0.0, %v1581
    %v1583 = vpop.f32.mrb[0].mxu0
    %v1584 = vpop.f32.mrb[0].mxu0
    %v1585 = vadd.f32 0.0, %v1584
    %v1586 = vpop.f32.mrb[0].mxu0
    %1587 = vdwg.mxu0
    %v1596 = vunpack.c.l.b16 %v886
    %v1597 = vunpack.c.l.b16 %v887
    %v1598 = vunpack.c.l.b16 %v888
    %v1599 = vunpack.c.l.b16 %v889
    %v1600 = vunpack.c.l.b16 %v890
    %v1601 = vunpack.c.l.b16 %v891
    %v1602 = vunpack.c.l.b16 %v892
    %v1603 = vunpack.c.l.b16 %v893
    %v1604 = vpack.c.b16 %v1597, %v1596
    %v1605 = vpack.c.b16 %v1599, %v1598
    %v1606 = vpack.c.b16 %v1601, %v1600
    %v1607 = vpack.c.b16 %v1603, %v1602
    %v1613 = vsel %vm654, %v884, 0
    %v1616 = vsel %vm654, %v885, 0
    %1618 = vmatprep.subr.bf16.mxu0 0
    %1619 = vmatpush1.bf16.msra.mxu0 %v1604
    %1620 = vmatprep.subr.bf16.mxu0 0
    %1621 = vmatpush1.bf16.msra.mxu0 %v1605
    %1622 = vmatprep.subr.bf16.mxu0 0
    %1623 = vmatpush1.bf16.msra.mxu0 %v1606
    %1624 = vmatprep.subr.bf16.mxu0 0
    %1625 = vmatpush1.bf16.msra.mxu0 %v1607
    %1626 = vmatprep.subr.bf16.mxu0 0
    %1627 = vmatpush1.bf16.msra.mxu0 0
    %1628 = vmatprep.subr.bf16.mxu0 0
    %1629 = vmatpush1.bf16.msra.mxu0 0
    %1630 = vmatprep.subr.bf16.mxu0 0
    %1631 = vmatpush1.bf16.msra.mxu0 0
    %1632 = vmatprep.subr.bf16.mxu0 0
    %1633 = vmatpush1.bf16.msra.mxu0 0
    %1634 = vmatprep.subr.bf16.mxu0 0
    %1635 = vmatpush1.bf16.msra.mxu0 0
    %1636 = vmatprep.subr.bf16.mxu0 0
    %1637 = vmatpush1.bf16.msra.mxu0 0
    %1638 = vmatprep.subr.bf16.mxu0 0
    %1639 = vmatpush1.bf16.msra.mxu0 0
    %1640 = vmatprep.subr.bf16.mxu0 0
    %1641 = vmatpush1.bf16.msra.mxu0 0
    %1642 = vmatprep.subr.bf16.mxu0 0
    %1643 = vmatpush1.bf16.msra.mxu0 0
    %1644 = vmatprep.subr.bf16.mxu0 0
    %1645 = vmatpush1.bf16.msra.mxu0 0
    %1646 = vmatprep.subr.bf16.mxu0 0
    %1647 = vmatpush1.bf16.msra.mxu0 0
    %1648 = vmatprep.subr.bf16.mxu0 0
    %1649 = vmatpush1.bf16.msra.mxu0 0
    %1650 = vmatprep.mubr.bf16.mxu0 0
    %1651 = vmatmul.mubr.bf16.gmra.mrb[0].mxu0 %v1613
    %v1652 = vpop.f32.mrb[0].mxu0
    %v1653 = vadd.f32 %v1574, %v1652
    %v1654 = vpop.f32.mrb[0].mxu0
    %v1655 = vpop.f32.mrb[0].mxu0
    %v1656 = vadd.f32 %v1577, %v1655
    %v1657 = vpop.f32.mrb[0].mxu0
    %1658 = vmatprep.mubr.bf16.mxu0 0
    %1659 = vmatmul.mubr.bf16.gmra.mrb[0].mxu0 %v1616
    %v1660 = vpop.f32.mrb[0].mxu0
    %v1661 = vadd.f32 %v1582, %v1660
    %v1662 = vpop.f32.mrb[0].mxu0
    %v1663 = vpop.f32.mrb[0].mxu0
    %v1664 = vadd.f32 %v1585, %v1663
    %v1665 = vpop.f32.mrb[0].mxu0
    %1666 = vdwg.mxu0
    %v1667 = vld [vmem:[#allocation16] sm:$0x1]
    %v1669 = vlaneseq
    %v1670 = vshrl.u32 %v1669, 7
    %v1671 = vsub.s32 0, %v1670
    %v1672 = vrot.slane %v1667, %v1671
    %v1674 = vadd.f32 %v1653, %v1672
    %v1675 = vadd.f32 %v1656, %v1672
    %v1676 = vadd.f32 %v1661, %v1672
    %v1677 = vadd.f32 %v1664, %v1672
    %v1678 = vadd.f32 %v278, %v1674
    %v1679 = vadd.f32 %v279, %v1675
    %v1680 = vadd.f32 %v280, %v1676
    %v1681 = vadd.f32 %v281, %v1677
    %v1682 = vld [vmem:[#allocation17] sm:$0x1]
    %v1683 = vld [vmem:[#allocation19] sm:$0x1]
    %1684 = vadd.xlane.f32.xlu0 %v1678
    %v1685 = vpop.xlane.xlu0 %1684
    %1686 = vadd.xlane.f32.xlu0 %v1679
    %v1687 = vpop.xlane.xlu0 %1686
    %1688 = vadd.xlane.f32.xlu0 %v1680
    %v1689 = vpop.xlane.xlu0 %1688
    %1690 = vadd.xlane.f32.xlu0 %v1681
    %v1691 = vpop.xlane.xlu0 %1690
    %v1692 = vrcp.pop 128.0
    %v1693 = vmul.f32 %v1685, %v1692
    %v1694 = vmul.f32 %v1687, %v1692
    %v1695 = vmul.f32 %v1689, %v1692
    %v1696 = vmul.f32 %v1691, %v1692
    %v1697 = vsub.f32 %v1678, %v1693
    %v1698 = vsub.f32 %v1679, %v1694
    %v1699 = vsub.f32 %v1680, %v1695
    %v1700 = vsub.f32 %v1681, %v1696
    %v1701 = vmul.f32 %v1697, %v1697
    %v1702 = vmul.f32 %v1698, %v1698
    %v1703 = vmul.f32 %v1699, %v1699
    %v1704 = vmul.f32 %v1700, %v1700
    %1705 = vadd.xlane.f32.xlu0 %v1701
    %v1706 = vpop.xlane.xlu0 %1705
    %1707 = vadd.xlane.f32.xlu0 %v1702
    %v1708 = vpop.xlane.xlu0 %1707
    %1709 = vadd.xlane.f32.xlu0 %v1703
    %v1710 = vpop.xlane.xlu0 %1709
    %1711 = vadd.xlane.f32.xlu0 %v1704
    %v1712 = vpop.xlane.xlu0 %1711
    %v1713 = vmul.f32 %v1706, %v1692
    %v1714 = vmul.f32 %v1708, %v1692
    %v1715 = vmul.f32 %v1710, %v1692
    %v1716 = vmul.f32 %v1712, %v1692
    %v1717 = vadd.f32 %v1713, 1e-05
    %v1718 = vadd.f32 %v1714, 1e-05
    %v1719 = vadd.f32 %v1715, 1e-05
    %v1720 = vadd.f32 %v1716, 1e-05
    %v1721 = vrsqrt.pop %v1717
    %v1722 = vrsqrt.pop %v1718
    %v1723 = vrsqrt.pop %v1719
    %v1724 = vrsqrt.pop %v1720
    %v1725 = vmul.f32 %v1697, %v1721
    %v1726 = vmul.f32 %v1698, %v1722
    %v1727 = vmul.f32 %v1699, %v1723
    %v1728 = vmul.f32 %v1700, %v1724
    %v1730 = vlaneseq
    %v1731 = vshrl.u32 %v1730, 7
    %v1732 = vsub.s32 0, %v1731
    %v1733 = vrot.slane %v1682, %v1732
    %v1735 = vmul.f32 %v1725, %v1733
    %v1736 = vmul.f32 %v1726, %v1733
    %v1737 = vmul.f32 %v1727, %v1733
    %v1738 = vmul.f32 %v1728, %v1733
    %v1740 = vlaneseq
    %v1741 = vshrl.u32 %v1740, 7
    %v1742 = vsub.s32 0, %v1741
    %v1743 = vrot.slane %v1683, %v1742
    %v1745 = vadd.f32 %v1735, %v1743
    %v1746 = vadd.f32 %v1736, %v1743
    %v1747 = vadd.f32 %v1737, %v1743
    %v1748 = vadd.f32 %v1738, %v1743
    %v1749 = vpack.c.bf16 %v1746, %v1745
    %v1750 = vpack.c.bf16 %v1748, %v1747
    %v1751 = vld [vmem:[#allocation20] sm:$0xff]
    %v1752 = vld [vmem:[#allocation20 + $0x8] sm:$0xff]
    %v1753 = vld [vmem:[#allocation20 + $0x10] sm:$0xff]
    %v1754 = vld [vmem:[#allocation20 + $0x18] sm:$0xff]
    %v1755 = vld [vmem:[#allocation20 + $0x20] sm:$0xff]
    %v1756 = vld [vmem:[#allocation20 + $0x28] sm:$0xff]
    %v1757 = vld [vmem:[#allocation20 + $0x30] sm:$0xff]
    %v1758 = vld [vmem:[#allocation20 + $0x38] sm:$0xff]
    %v1759 = vld [vmem:[#allocation20 + $0x40] sm:$0xff]
    %v1760 = vld [vmem:[#allocation20 + $0x48] sm:$0xff]
    %v1761 = vld [vmem:[#allocation20 + $0x50] sm:$0xff]
    %v1762 = vld [vmem:[#allocation20 + $0x58] sm:$0xff]
    %v1763 = vld [vmem:[#allocation20 + $0x60] sm:$0xff]
    %v1764 = vld [vmem:[#allocation20 + $0x68] sm:$0xff]
    %v1765 = vld [vmem:[#allocation20 + $0x70] sm:$0xff]
    %v1766 = vld [vmem:[#allocation20 + $0x78] sm:$0xff]
    %v1767 = vld [vmem:[#allocation20 + $0x80] sm:$0xff]
    %v1768 = vld [vmem:[#allocation20 + $0x88] sm:$0xff]
    %v1769 = vld [vmem:[#allocation20 + $0x90] sm:$0xff]
    %v1770 = vld [vmem:[#allocation20 + $0x98] sm:$0xff]
    %v1771 = vld [vmem:[#allocation20 + $0xa0] sm:$0xff]
    %v1772 = vld [vmem:[#allocation20 + $0xa8] sm:$0xff]
    %v1773 = vld [vmem:[#allocation20 + $0xb0] sm:$0xff]
    %v1774 = vld [vmem:[#allocation20 + $0xb8] sm:$0xff]
    %v1775 = vld [vmem:[#allocation20 + $0xc0] sm:$0xff]
    %v1776 = vld [vmem:[#allocation20 + $0xc8] sm:$0xff]
    %v1777 = vld [vmem:[#allocation20 + $0xd0] sm:$0xff]
    %v1778 = vld [vmem:[#allocation20 + $0xd8] sm:$0xff]
    %v1779 = vld [vmem:[#allocation20 + $0xe0] sm:$0xff]
    %v1780 = vld [vmem:[#allocation20 + $0xe8] sm:$0xff]
    %v1781 = vld [vmem:[#allocation20 + $0xf0] sm:$0xff]
    %v1782 = vld [vmem:[#allocation20 + $0xf8] sm:$0xff]
    %v1783 = vld [vmem:[#allocation20 + $0x100] sm:$0xff]
    %v1784 = vld [vmem:[#allocation20 + $0x108] sm:$0xff]
    %v1785 = vld [vmem:[#allocation20 + $0x110] sm:$0xff]
    %v1786 = vld [vmem:[#allocation20 + $0x118] sm:$0xff]
    %v1787 = vld [vmem:[#allocation20 + $0x120] sm:$0xff]
    %v1788 = vld [vmem:[#allocation20 + $0x128] sm:$0xff]
    %v1789 = vld [vmem:[#allocation20 + $0x130] sm:$0xff]
    %v1790 = vld [vmem:[#allocation20 + $0x138] sm:$0xff]
    %v1791 = vld [vmem:[#allocation20 + $0x140] sm:$0xff]
    %v1792 = vld [vmem:[#allocation20 + $0x148] sm:$0xff]
    %v1793 = vld [vmem:[#allocation20 + $0x150] sm:$0xff]
    %v1794 = vld [vmem:[#allocation20 + $0x158] sm:$0xff]
    %v1795 = vld [vmem:[#allocation20 + $0x160] sm:$0xff]
    %v1796 = vld [vmem:[#allocation20 + $0x168] sm:$0xff]
    %v1797 = vld [vmem:[#allocation20 + $0x170] sm:$0xff]
    %v1798 = vld [vmem:[#allocation20 + $0x178] sm:$0xff]
    %v1799 = vld [vmem:[#allocation20 + $0x180] sm:$0xff]
    %v1800 = vld [vmem:[#allocation20 + $0x188] sm:$0xff]
    %v1801 = vld [vmem:[#allocation20 + $0x190] sm:$0xff]
    %v1802 = vld [vmem:[#allocation20 + $0x198] sm:$0xff]
    %v1803 = vld [vmem:[#allocation20 + $0x1a0] sm:$0xff]
    %v1804 = vld [vmem:[#allocation20 + $0x1a8] sm:$0xff]
    %v1805 = vld [vmem:[#allocation20 + $0x1b0] sm:$0xff]
    %v1806 = vld [vmem:[#allocation20 + $0x1b8] sm:$0xff]
    %v1807 = vld [vmem:[#allocation20 + $0x1c0] sm:$0xff]
    %v1808 = vld [vmem:[#allocation20 + $0x1c8] sm:$0xff]
    %v1809 = vld [vmem:[#allocation20 + $0x1d0] sm:$0xff]
    %v1810 = vld [vmem:[#allocation20 + $0x1d8] sm:$0xff]
    %v1811 = vld [vmem:[#allocation20 + $0x1e0] sm:$0xff]
    %v1812 = vld [vmem:[#allocation20 + $0x1e8] sm:$0xff]
    %v1813 = vld [vmem:[#allocation20 + $0x1f0] sm:$0xff]
    %v1814 = vld [vmem:[#allocation20 + $0x1f8] sm:$0xff]
    %v1815 = vld [vmem:[#allocation22] sm:$0xff]
    %v1817 = vlaneseq
    %v1818 = vshrl.u32 %v1817, 7
    %v1819 = vsub.s32 0, %v1818
    %v1820 = vrot.slane %v1815, %v1819
    %v1821 = vlaneseq
    %v1822 = vshrl.u32 %v1821, 7
    %v1823 = vsub.s32 1, %v1822
    %v1824 = vrot.slane %v1815, %v1823
    %v1825 = vlaneseq
    %v1826 = vshrl.u32 %v1825, 7
    %v1827 = vsub.s32 2, %v1826
    %v1828 = vrot.slane %v1815, %v1827
    %v1829 = vlaneseq
    %v1830 = vshrl.u32 %v1829, 7
    %v1831 = vsub.s32 3, %v1830
    %v1832 = vrot.slane %v1815, %v1831
    %v1833 = vlaneseq
    %v1834 = vshrl.u32 %v1833, 7
    %v1835 = vsub.s32 4, %v1834
    %v1836 = vrot.slane %v1815, %v1835
    %v1837 = vlaneseq
    %v1838 = vshrl.u32 %v1837, 7
    %v1839 = vsub.s32 5, %v1838
    %v1840 = vrot.slane %v1815, %v1839
    %v1841 = vlaneseq
    %v1842 = vshrl.u32 %v1841, 7
    %v1843 = vsub.s32 6, %v1842
    %v1844 = vrot.slane %v1815, %v1843
    %v1845 = vlaneseq
    %v1846 = vshrl.u32 %v1845, 7
    %v1847 = vsub.s32 7, %v1846
    %v1848 = vrot.slane %v1815, %v1847
    %v1921 = vunpack.c.l.b16 %v1751
    %v1922 = vunpack.c.h.b16 %v1751
    %v1923 = vunpack.c.l.b16 %v1752
    %v1924 = vunpack.c.h.b16 %v1752
    %v1925 = vunpack.c.l.b16 %v1753
    %v1926 = vunpack.c.h.b16 %v1753
    %v1927 = vunpack.c.l.b16 %v1754
    %v1928 = vunpack.c.h.b16 %v1754
    %v1929 = vunpack.c.l.b16 %v1755
    %v1930 = vunpack.c.h.b16 %v1755
    %v1931 = vunpack.c.l.b16 %v1756
    %v1932 = vunpack.c.h.b16 %v1756
    %v1933 = vunpack.c.l.b16 %v1757
    %v1934 = vunpack.c.h.b16 %v1757
    %v1935 = vunpack.c.l.b16 %v1758
    %v1936 = vunpack.c.h.b16 %v1758
    %v1937 = vunpack.c.l.b16 %v1759
    %v1938 = vunpack.c.h.b16 %v1759
    %v1939 = vunpack.c.l.b16 %v1760
    %v1940 = vunpack.c.h.b16 %v1760
    %v1941 = vunpack.c.l.b16 %v1761
    %v1942 = vunpack.c.h.b16 %v1761
    %v1943 = vunpack.c.l.b16 %v1762
    %v1944 = vunpack.c.h.b16 %v1762
    %v1945 = vunpack.c.l.b16 %v1763
    %v1946 = vunpack.c.h.b16 %v1763
    %v1947 = vunpack.c.l.b16 %v1764
    %v1948 = vunpack.c.h.b16 %v1764
    %v1949 = vunpack.c.l.b16 %v1765
    %v1950 = vunpack.c.h.b16 %v1765
    %v1951 = vunpack.c.l.b16 %v1766
    %v1952 = vunpack.c.h.b16 %v1766
    %v1953 = vunpack.c.l.b16 %v1767
    %v1954 = vunpack.c.h.b16 %v1767
    %v1955 = vunpack.c.l.b16 %v1768
    %v1956 = vunpack.c.h.b16 %v1768
    %v1957 = vunpack.c.l.b16 %v1769
    %v1958 = vunpack.c.h.b16 %v1769
    %v1959 = vunpack.c.l.b16 %v1770
    %v1960 = vunpack.c.h.b16 %v1770
    %v1961 = vunpack.c.l.b16 %v1771
    %v1962 = vunpack.c.h.b16 %v1771
    %v1963 = vunpack.c.l.b16 %v1772
    %v1964 = vunpack.c.h.b16 %v1772
    %v1965 = vunpack.c.l.b16 %v1773
    %v1966 = vunpack.c.h.b16 %v1773
    %v1967 = vunpack.c.l.b16 %v1774
    %v1968 = vunpack.c.h.b16 %v1774
    %v1969 = vunpack.c.l.b16 %v1775
    %v1970 = vunpack.c.h.b16 %v1775
    %v1971 = vunpack.c.l.b16 %v1776
    %v1972 = vunpack.c.h.b16 %v1776
    %v1973 = vunpack.c.l.b16 %v1777
    %v1974 = vunpack.c.h.b16 %v1777
    %v1975 = vunpack.c.l.b16 %v1778
    %v1976 = vunpack.c.h.b16 %v1778
    %v1977 = vunpack.c.l.b16 %v1779
    %v1978 = vunpack.c.h.b16 %v1779
    %v1979 = vunpack.c.l.b16 %v1780
    %v1980 = vunpack.c.h.b16 %v1780
    %v1981 = vunpack.c.l.b16 %v1781
    %v1982 = vunpack.c.h.b16 %v1781
    %v1983 = vunpack.c.l.b16 %v1782
    %v1984 = vunpack.c.h.b16 %v1782
    %v1985 = vunpack.c.l.b16 %v1783
    %v1986 = vunpack.c.h.b16 %v1783
    %v1987 = vunpack.c.l.b16 %v1784
    %v1988 = vunpack.c.h.b16 %v1784
    %v1989 = vunpack.c.l.b16 %v1785
    %v1990 = vunpack.c.h.b16 %v1785
    %v1991 = vunpack.c.l.b16 %v1786
    %v1992 = vunpack.c.h.b16 %v1786
    %v1993 = vunpack.c.l.b16 %v1787
    %v1994 = vunpack.c.h.b16 %v1787
    %v1995 = vunpack.c.l.b16 %v1788
    %v1996 = vunpack.c.h.b16 %v1788
    %v1997 = vunpack.c.l.b16 %v1789
    %v1998 = vunpack.c.h.b16 %v1789
    %v1999 = vunpack.c.l.b16 %v1790
    %v2000 = vunpack.c.h.b16 %v1790
    %v2001 = vunpack.c.l.b16 %v1791
    %v2002 = vunpack.c.h.b16 %v1791
    %v2003 = vunpack.c.l.b16 %v1792
    %v2004 = vunpack.c.h.b16 %v1792
    %v2005 = vunpack.c.l.b16 %v1793
    %v2006 = vunpack.c.h.b16 %v1793
    %v2007 = vunpack.c.l.b16 %v1794
    %v2008 = vunpack.c.h.b16 %v1794
    %v2009 = vunpack.c.l.b16 %v1795
    %v2010 = vunpack.c.h.b16 %v1795
    %v2011 = vunpack.c.l.b16 %v1796
    %v2012 = vunpack.c.h.b16 %v1796
    %v2013 = vunpack.c.l.b16 %v1797
    %v2014 = vunpack.c.h.b16 %v1797
    %v2015 = vunpack.c.l.b16 %v1798
    %v2016 = vunpack.c.h.b16 %v1798
    %v2017 = vunpack.c.l.b16 %v1799
    %v2018 = vunpack.c.h.b16 %v1799
    %v2019 = vunpack.c.l.b16 %v1800
    %v2020 = vunpack.c.h.b16 %v1800
    %v2021 = vunpack.c.l.b16 %v1801
    %v2022 = vunpack.c.h.b16 %v1801
    %v2023 = vunpack.c.l.b16 %v1802
    %v2024 = vunpack.c.h.b16 %v1802
    %v2025 = vunpack.c.l.b16 %v1803
    %v2026 = vunpack.c.h.b16 %v1803
    %v2027 = vunpack.c.l.b16 %v1804
    %v2028 = vunpack.c.h.b16 %v1804
    %v2029 = vunpack.c.l.b16 %v1805
    %v2030 = vunpack.c.h.b16 %v1805
    %v2031 = vunpack.c.l.b16 %v1806
    %v2032 = vunpack.c.h.b16 %v1806
    %v2033 = vunpack.c.l.b16 %v1807
    %v2034 = vunpack.c.h.b16 %v1807
    %v2035 = vunpack.c.l.b16 %v1808
    %v2036 = vunpack.c.h.b16 %v1808
    %v2037 = vunpack.c.l.b16 %v1809
    %v2038 = vunpack.c.h.b16 %v1809
    %v2039 = vunpack.c.l.b16 %v1810
    %v2040 = vunpack.c.h.b16 %v1810
    %v2041 = vunpack.c.l.b16 %v1811
    %v2042 = vunpack.c.h.b16 %v1811
    %v2043 = vunpack.c.l.b16 %v1812
    %v2044 = vunpack.c.h.b16 %v1812
    %v2045 = vunpack.c.l.b16 %v1813
    %v2046 = vunpack.c.h.b16 %v1813
    %v2047 = vunpack.c.l.b16 %v1814
    %v2048 = vunpack.c.h.b16 %v1814
    %v2049 = vpack.c.b16 %v1929, %v1921
    %v2050 = vpack.c.b16 %v1930, %v1922
    %v2051 = vpack.c.b16 %v1931, %v1923
    %v2052 = vpack.c.b16 %v1932, %v1924
    %v2053 = vpack.c.b16 %v1933, %v1925
    %v2054 = vpack.c.b16 %v1934, %v1926
    %v2055 = vpack.c.b16 %v1935, %v1927
    %v2056 = vpack.c.b16 %v1936, %v1928
    %v2057 = vpack.c.b16 %v1945, %v1937
    %v2058 = vpack.c.b16 %v1946, %v1938
    %v2059 = vpack.c.b16 %v1947, %v1939
    %v2060 = vpack.c.b16 %v1948, %v1940
    %v2061 = vpack.c.b16 %v1949, %v1941
    %v2062 = vpack.c.b16 %v1950, %v1942
    %v2063 = vpack.c.b16 %v1951, %v1943
    %v2064 = vpack.c.b16 %v1952, %v1944
    %v2065 = vpack.c.b16 %v1961, %v1953
    %v2066 = vpack.c.b16 %v1962, %v1954
    %v2067 = vpack.c.b16 %v1963, %v1955
    %v2068 = vpack.c.b16 %v1964, %v1956
    %v2069 = vpack.c.b16 %v1965, %v1957
    %v2070 = vpack.c.b16 %v1966, %v1958
    %v2071 = vpack.c.b16 %v1967, %v1959
    %v2072 = vpack.c.b16 %v1968, %v1960
    %v2073 = vpack.c.b16 %v1977, %v1969
    %v2074 = vpack.c.b16 %v1978, %v1970
    %v2075 = vpack.c.b16 %v1979, %v1971
    %v2076 = vpack.c.b16 %v1980, %v1972
    %v2077 = vpack.c.b16 %v1981, %v1973
    %v2078 = vpack.c.b16 %v1982, %v1974
    %v2079 = vpack.c.b16 %v1983, %v1975
    %v2080 = vpack.c.b16 %v1984, %v1976
    %v2081 = vpack.c.b16 %v1993, %v1985
    %v2082 = vpack.c.b16 %v1994, %v1986
    %v2083 = vpack.c.b16 %v1995, %v1987
    %v2084 = vpack.c.b16 %v1996, %v1988
    %v2085 = vpack.c.b16 %v1997, %v1989
    %v2086 = vpack.c.b16 %v1998, %v1990
    %v2087 = vpack.c.b16 %v1999, %v1991
    %v2088 = vpack.c.b16 %v2000, %v1992
    %v2089 = vpack.c.b16 %v2009, %v2001
    %v2090 = vpack.c.b16 %v2010, %v2002
    %v2091 = vpack.c.b16 %v2011, %v2003
    %v2092 = vpack.c.b16 %v2012, %v2004
    %v2093 = vpack.c.b16 %v2013, %v2005
    %v2094 = vpack.c.b16 %v2014, %v2006
    %v2095 = vpack.c.b16 %v2015, %v2007
    %v2096 = vpack.c.b16 %v2016, %v2008
    %v2097 = vpack.c.b16 %v2025, %v2017
    %v2098 = vpack.c.b16 %v2026, %v2018
    %v2099 = vpack.c.b16 %v2027, %v2019
    %v2100 = vpack.c.b16 %v2028, %v2020
    %v2101 = vpack.c.b16 %v2029, %v2021
    %v2102 = vpack.c.b16 %v2030, %v2022
    %v2103 = vpack.c.b16 %v2031, %v2023
    %v2104 = vpack.c.b16 %v2032, %v2024
    %v2105 = vpack.c.b16 %v2041, %v2033
    %v2106 = vpack.c.b16 %v2042, %v2034
    %v2107 = vpack.c.b16 %v2043, %v2035
    %v2108 = vpack.c.b16 %v2044, %v2036
    %v2109 = vpack.c.b16 %v2045, %v2037
    %v2110 = vpack.c.b16 %v2046, %v2038
    %v2111 = vpack.c.b16 %v2047, %v2039
    %v2112 = vpack.c.b16 %v2048, %v2040
    %2177 = vmatprep.subr.bf16.mxu0 %v2050
    %2178 = vmatpush1.bf16.msra.mxu0 %v2049
    %2179 = vmatprep.subr.bf16.mxu0 %v2058
    %2180 = vmatpush1.bf16.msra.mxu0 %v2057
    %2181 = vmatprep.subr.bf16.mxu0 %v2066
    %2182 = vmatpush1.bf16.msra.mxu0 %v2065
    %2183 = vmatprep.subr.bf16.mxu0 %v2074
    %2184 = vmatpush1.bf16.msra.mxu0 %v2073
    %2185 = vmatprep.subr.bf16.mxu0 %v2082
    %2186 = vmatpush1.bf16.msra.mxu0 %v2081
    %2187 = vmatprep.subr.bf16.mxu0 %v2090
    %2188 = vmatpush1.bf16.msra.mxu0 %v2089
    %2189 = vmatprep.subr.bf16.mxu0 %v2098
    %2190 = vmatpush1.bf16.msra.mxu0 %v2097
    %2191 = vmatprep.subr.bf16.mxu0 %v2106
    %2192 = vmatpush1.bf16.msra.mxu0 %v2105
    %2193 = vmatprep.subr.bf16.mxu0 0
    %2194 = vmatpush1.bf16.msra.mxu0 0
    %2195 = vmatprep.subr.bf16.mxu0 0
    %2196 = vmatpush1.bf16.msra.mxu0 0
    %2197 = vmatprep.subr.bf16.mxu0 0
    %2198 = vmatpush1.bf16.msra.mxu0 0
    %2199 = vmatprep.subr.bf16.mxu0 0
    %2200 = vmatpush1.bf16.msra.mxu0 0
    %2201 = vmatprep.subr.bf16.mxu0 0
    %2202 = vmatpush1.bf16.msra.mxu0 0
    %2203 = vmatprep.subr.bf16.mxu0 0
    %2204 = vmatpush1.bf16.msra.mxu0 0
    %2205 = vmatprep.subr.bf16.mxu0 0
    %2206 = vmatpush1.bf16.msra.mxu0 0
    %2207 = vmatprep.subr.bf16.mxu0 0
    %2208 = vmatpush1.bf16.msra.mxu0 0
    %2209 = vmatprep.mubr.bf16.mxu0 0
    %2210 = vmatmul.mubr.bf16.gmra.mrb[0].mxu0 %v1749
    %v2211 = vpop.f32.mrb[0].mxu0
    %v2212 = vadd.f32 %v1820, %v2211
    %v2213 = vpop.f32.mrb[0].mxu0
    %v2214 = vadd.f32 %v1824, %v2213
    %v2215 = vpop.f32.mrb[0].mxu0
    %v2216 = vadd.f32 %v1820, %v2215
    %v2217 = vpop.f32.mrb[0].mxu0
    %v2218 = vadd.f32 %v1824, %v2217
    %2219 = vmatprep.mubr.bf16.mxu0 0
    %2220 = vmatmul.mubr.bf16.gmra.mrb[0].mxu0 %v1750
    %v2221 = vpop.f32.mrb[0].mxu0
    %v2222 = vadd.f32 %v1820, %v2221
    %v2223 = vpop.f32.mrb[0].mxu0
    %v2224 = vadd.f32 %v1824, %v2223
    %v2225 = vpop.f32.mrb[0].mxu0
    %v2226 = vadd.f32 %v1820, %v2225
    %v2227 = vpop.f32.mrb[0].mxu0
    %v2228 = vadd.f32 %v1824, %v2227
    %2229 = vdwg.mxu0
    %2230 = vmatprep.subr.bf16.mxu0 %v2052
    %2231 = vmatpush1.bf16.msra.mxu0 %v2051
    %2232 = vmatprep.subr.bf16.mxu0 %v2060
    %2233 = vmatpush1.bf16.msra.mxu0 %v2059
    %2234 = vmatprep.subr.bf16.mxu0 %v2068
    %2235 = vmatpush1.bf16.msra.mxu0 %v2067
    %2236 = vmatprep.subr.bf16.mxu0 %v2076
    %2237 = vmatpush1.bf16.msra.mxu0 %v2075
    %2238 = vmatprep.subr.bf16.mxu0 %v2084
    %2239 = vmatpush1.bf16.msra.mxu0 %v2083
    %2240 = vmatprep.subr.bf16.mxu0 %v2092
    %2241 = vmatpush1.bf16.msra.mxu0 %v2091
    %2242 = vmatprep.subr.bf16.mxu0 %v2100
    %2243 = vmatpush1.bf16.msra.mxu0 %v2099
    %2244 = vmatprep.subr.bf16.mxu0 %v2108
    %2245 = vmatpush1.bf16.msra.mxu0 %v2107
    %2246 = vmatprep.subr.bf16.mxu0 0
    %2247 = vmatpush1.bf16.msra.mxu0 0
    %2248 = vmatprep.subr.bf16.mxu0 0
    %2249 = vmatpush1.bf16.msra.mxu0 0
    %2250 = vmatprep.subr.bf16.mxu0 0
    %2251 = vmatpush1.bf16.msra.mxu0 0
    %2252 = vmatprep.subr.bf16.mxu0 0
    %2253 = vmatpush1.bf16.msra.mxu0 0
    %2254 = vmatprep.subr.bf16.mxu0 0
    %2255 = vmatpush1.bf16.msra.mxu0 0
    %2256 = vmatprep.subr.bf16.mxu0 0
    %2257 = vmatpush1.bf16.msra.mxu0 0
    %2258 = vmatprep.subr.bf16.mxu0 0
    %2259 = vmatpush1.bf16.msra.mxu0 0
    %2260 = vmatprep.subr.bf16.mxu0 0
    %2261 = vmatpush1.bf16.msra.mxu0 0
    %2262 = vmatprep.mubr.bf16.mxu0 0
    %2263 = vmatmul.mubr.bf16.gmra.mrb[0].mxu0 %v1749
    %v2264 = vpop.f32.mrb[0].mxu0
    %v2265 = vadd.f32 %v1828, %v2264
    %v2266 = vpop.f32.mrb[0].mxu0
    %v2267 = vadd.f32 %v1832, %v2266
    %v2268 = vpop.f32.mrb[0].mxu0
    %v2269 = vadd.f32 %v1828, %v2268
    %v2270 = vpop.f32.mrb[0].mxu0
    %v2271 = vadd.f32 %v1832, %v2270
    %2272 = vmatprep.mubr.bf16.mxu0 0
    %2273 = vmatmul.mubr.bf16.gmra.mrb[0].mxu0 %v1750
    %v2274 = vpop.f32.mrb[0].mxu0
    %v2275 = vadd.f32 %v1828, %v2274
    %v2276 = vpop.f32.mrb[0].mxu0
    %v2277 = vadd.f32 %v1832, %v2276
    %v2278 = vpop.f32.mrb[0].mxu0
    %v2279 = vadd.f32 %v1828, %v2278
    %v2280 = vpop.f32.mrb[0].mxu0
    %v2281 = vadd.f32 %v1832, %v2280
    %2282 = vdwg.mxu0
    %2283 = vmatprep.subr.bf16.mxu0 %v2054
    %2284 = vmatpush1.bf16.msra.mxu0 %v2053
    %2285 = vmatprep.subr.bf16.mxu0 %v2062
    %2286 = vmatpush1.bf16.msra.mxu0 %v2061
    %2287 = vmatprep.subr.bf16.mxu0 %v2070
    %2288 = vmatpush1.bf16.msra.mxu0 %v2069
    %2289 = vmatprep.subr.bf16.mxu0 %v2078
    %2290 = vmatpush1.bf16.msra.mxu0 %v2077
    %2291 = vmatprep.subr.bf16.mxu0 %v2086
    %2292 = vmatpush1.bf16.msra.mxu0 %v2085
    %2293 = vmatprep.subr.bf16.mxu0 %v2094
    %2294 = vmatpush1.bf16.msra.mxu0 %v2093
    %2295 = vmatprep.subr.bf16.mxu0 %v2102
    %2296 = vmatpush1.bf16.msra.mxu0 %v2101
    %2297 = vmatprep.subr.bf16.mxu0 %v2110
    %2298 = vmatpush1.bf16.msra.mxu0 %v2109
    %2299 = vmatprep.subr.bf16.mxu0 0
    %2300 = vmatpush1.bf16.msra.mxu0 0
    %2301 = vmatprep.subr.bf16.mxu0 0
    %2302 = vmatpush1.bf16.msra.mxu0 0
    %2303 = vmatprep.subr.bf16.mxu0 0
    %2304 = vmatpush1.bf16.msra.mxu0 0
    %2305 = vmatprep.subr.bf16.mxu0 0
    %2306 = vmatpush1.bf16.msra.mxu0 0
    %2307 = vmatprep.subr.bf16.mxu0 0
    %2308 = vmatpush1.bf16.msra.mxu0 0
    %2309 = vmatprep.subr.bf16.mxu0 0
    %2310 = vmatpush1.bf16.msra.mxu0 0
    %2311 = vmatprep.subr.bf16.mxu0 0
    %2312 = vmatpush1.bf16.msra.mxu0 0
    %2313 = vmatprep.subr.bf16.mxu0 0
    %2314 = vmatpush1.bf16.msra.mxu0 0
    %2315 = vmatprep.mubr.bf16.mxu0 0
    %2316 = vmatmul.mubr.bf16.gmra.mrb[0].mxu0 %v1749
    %v2317 = vpop.f32.mrb[0].mxu0
    %v2318 = vadd.f32 %v1836, %v2317
    %v2319 = vpop.f32.mrb[0].mxu0
    %v2320 = vadd.f32 %v1840, %v2319
    %v2321 = vpop.f32.mrb[0].mxu0
    %v2322 = vadd.f32 %v1836, %v2321
    %v2323 = vpop.f32.mrb[0].mxu0
    %v2324 = vadd.f32 %v1840, %v2323
    %2325 = vmatprep.mubr.bf16.mxu0 0
    %2326 = vmatmul.mubr.bf16.gmra.mrb[0].mxu0 %v1750
    %v2327 = vpop.f32.mrb[0].mxu0
    %v2328 = vadd.f32 %v1836, %v2327
    %v2329 = vpop.f32.mrb[0].mxu0
    %v2330 = vadd.f32 %v1840, %v2329
    %v2331 = vpop.f32.mrb[0].mxu0
    %v2332 = vadd.f32 %v1836, %v2331
    %v2333 = vpop.f32.mrb[0].mxu0
    %v2334 = vadd.f32 %v1840, %v2333
    %2335 = vdwg.mxu0
    %2336 = vmatprep.subr.bf16.mxu0 %v2056
    %2337 = vmatpush1.bf16.msra.mxu0 %v2055
    %2338 = vmatprep.subr.bf16.mxu0 %v2064
    %2339 = vmatpush1.bf16.msra.mxu0 %v2063
    %2340 = vmatprep.subr.bf16.mxu0 %v2072
    %2341 = vmatpush1.bf16.msra.mxu0 %v2071
    %2342 = vmatprep.subr.bf16.mxu0 %v2080
    %2343 = vmatpush1.bf16.msra.mxu0 %v2079
    %2344 = vmatprep.subr.bf16.mxu0 %v2088
    %2345 = vmatpush1.bf16.msra.mxu0 %v2087
    %2346 = vmatprep.subr.bf16.mxu0 %v2096
    %2347 = vmatpush1.bf16.msra.mxu0 %v2095
    %2348 = vmatprep.subr.bf16.mxu0 %v2104
    %2349 = vmatpush1.bf16.msra.mxu0 %v2103
    %2350 = vmatprep.subr.bf16.mxu0 %v2112
    %2351 = vmatpush1.bf16.msra.mxu0 %v2111
    %2352 = vmatprep.subr.bf16.mxu0 0
    %2353 = vmatpush1.bf16.msra.mxu0 0
    %2354 = vmatprep.subr.bf16.mxu0 0
    %2355 = vmatpush1.bf16.msra.mxu0 0
    %2356 = vmatprep.subr.bf16.mxu0 0
    %2357 = vmatpush1.bf16.msra.mxu0 0
    %2358 = vmatprep.subr.bf16.mxu0 0
    %2359 = vmatpush1.bf16.msra.mxu0 0
    %2360 = vmatprep.subr.bf16.mxu0 0
    %2361 = vmatpush1.bf16.msra.mxu0 0
    %2362 = vmatprep.subr.bf16.mxu0 0
    %2363 = vmatpush1.bf16.msra.mxu0 0
    %2364 = vmatprep.subr.bf16.mxu0 0
    %2365 = vmatpush1.bf16.msra.mxu0 0
    %2366 = vmatprep.subr.bf16.mxu0 0
    %2367 = vmatpush1.bf16.msra.mxu0 0
    %2368 = vmatprep.mubr.bf16.mxu0 0
    %2369 = vmatmul.mubr.bf16.gmra.mrb[0].mxu0 %v1749
    %v2370 = vpop.f32.mrb[0].mxu0
    %v2371 = vadd.f32 %v1844, %v2370
    %v2372 = vpop.f32.mrb[0].mxu0
    %v2373 = vadd.f32 %v1848, %v2372
    %v2374 = vpop.f32.mrb[0].mxu0
    %v2375 = vadd.f32 %v1844, %v2374
    %v2376 = vpop.f32.mrb[0].mxu0
    %v2377 = vadd.f32 %v1848, %v2376
    %2378 = vmatprep.mubr.bf16.mxu0 0
    %2379 = vmatmul.mubr.bf16.gmra.mrb[0].mxu0 %v1750
    %v2380 = vpop.f32.mrb[0].mxu0
    %v2381 = vadd.f32 %v1844, %v2380
    %v2382 = vpop.f32.mrb[0].mxu0
    %v2383 = vadd.f32 %v1848, %v2382
    %v2384 = vpop.f32.mrb[0].mxu0
    %v2385 = vadd.f32 %v1844, %v2384
    %v2386 = vpop.f32.mrb[0].mxu0
    %v2387 = vadd.f32 %v1848, %v2386
    %2388 = vdwg.mxu0
    %v2389 = vmul.f32 %v2212, 0.5
    %v2390 = vmul.f32 %v2214, 0.5
    %v2391 = vmul.f32 %v2265, 0.5
    %v2392 = vmul.f32 %v2267, 0.5
    %v2393 = vmul.f32 %v2318, 0.5
    %v2394 = vmul.f32 %v2320, 0.5
    %v2395 = vmul.f32 %v2371, 0.5
    %v2396 = vmul.f32 %v2373, 0.5
    %v2397 = vmul.f32 %v2216, 0.5
    %v2398 = vmul.f32 %v2218, 0.5
    %v2399 = vmul.f32 %v2269, 0.5
    %v2400 = vmul.f32 %v2271, 0.5
    %v2401 = vmul.f32 %v2322, 0.5
    %v2402 = vmul.f32 %v2324, 0.5
    %v2403 = vmul.f32 %v2375, 0.5
    %v2404 = vmul.f32 %v2377, 0.5
    %v2405 = vmul.f32 %v2222, 0.5
    %v2406 = vmul.f32 %v2224, 0.5
    %v2407 = vmul.f32 %v2275, 0.5
    %v2408 = vmul.f32 %v2277, 0.5
    %v2409 = vmul.f32 %v2328, 0.5
    %v2410 = vmul.f32 %v2330, 0.5
    %v2411 = vmul.f32 %v2381, 0.5
    %v2412 = vmul.f32 %v2383, 0.5
    %v2413 = vmul.f32 %v2226, 0.5
    %v2414 = vmul.f32 %v2228, 0.5
    %v2415 = vmul.f32 %v2279, 0.5
    %v2416 = vmul.f32 %v2281, 0.5
    %v2417 = vmul.f32 %v2332, 0.5
    %v2418 = vmul.f32 %v2334, 0.5
    %v2419 = vmul.f32 %v2385, 0.5
    %v2420 = vmul.f32 %v2387, 0.5
    %v2421 = vmul.f32 %v2212, 0.70710677
    %v2422 = vmul.f32 %v2214, 0.70710677
    %v2423 = vmul.f32 %v2265, 0.70710677
    %v2424 = vmul.f32 %v2267, 0.70710677
    %v2425 = vmul.f32 %v2318, 0.70710677
    %v2426 = vmul.f32 %v2320, 0.70710677
    %v2427 = vmul.f32 %v2371, 0.70710677
    %v2428 = vmul.f32 %v2373, 0.70710677
    %v2429 = vmul.f32 %v2216, 0.70710677
    %v2430 = vmul.f32 %v2218, 0.70710677
    %v2431 = vmul.f32 %v2269, 0.70710677
    %v2432 = vmul.f32 %v2271, 0.70710677
    %v2433 = vmul.f32 %v2322, 0.70710677
    %v2434 = vmul.f32 %v2324, 0.70710677
    %v2435 = vmul.f32 %v2375, 0.70710677
    %v2436 = vmul.f32 %v2377, 0.70710677
    %v2437 = vmul.f32 %v2222, 0.70710677
    %v2438 = vmul.f32 %v2224, 0.70710677
    %v2439 = vmul.f32 %v2275, 0.70710677
    %v2440 = vmul.f32 %v2277, 0.70710677
    %v2441 = vmul.f32 %v2328, 0.70710677
    %v2442 = vmul.f32 %v2330, 0.70710677
    %v2443 = vmul.f32 %v2381, 0.70710677
    %v2444 = vmul.f32 %v2383, 0.70710677
    %v2445 = vmul.f32 %v2226, 0.70710677
    %v2446 = vmul.f32 %v2228, 0.70710677
    %v2447 = vmul.f32 %v2279, 0.70710677
    %v2448 = vmul.f32 %v2281, 0.70710677
    %v2449 = vmul.f32 %v2332, 0.70710677
    %v2450 = vmul.f32 %v2334, 0.70710677
    %v2451 = vmul.f32 %v2385, 0.70710677
    %v2452 = vmul.f32 %v2387, 0.70710677
    %v2453 = vand.u32 2147483647, %v2421
    %v2454 = vand.u32 2147483647, %v2422
    %v2455 = vand.u32 2147483647, %v2423
    %v2456 = vand.u32 2147483647, %v2424
    %v2457 = vand.u32 2147483647, %v2425
    %v2458 = vand.u32 2147483647, %v2426
    %v2459 = vand.u32 2147483647, %v2427
    %v2460 = vand.u32 2147483647, %v2428
    %v2461 = vand.u32 2147483647, %v2429
    %v2462 = vand.u32 2147483647, %v2430
    %v2463 = vand.u32 2147483647, %v2431
    %v2464 = vand.u32 2147483647, %v2432
    %v2465 = vand.u32 2147483647, %v2433
    %v2466 = vand.u32 2147483647, %v2434
    %v2467 = vand.u32 2147483647, %v2435
    %v2468 = vand.u32 2147483647, %v2436
    %v2469 = vand.u32 2147483647, %v2437
    %v2470 = vand.u32 2147483647, %v2438
    %v2471 = vand.u32 2147483647, %v2439
    %v2472 = vand.u32 2147483647, %v2440
    %v2473 = vand.u32 2147483647, %v2441
    %v2474 = vand.u32 2147483647, %v2442
    %v2475 = vand.u32 2147483647, %v2443
    %v2476 = vand.u32 2147483647, %v2444
    %v2477 = vand.u32 2147483647, %v2445
    %v2478 = vand.u32 2147483647, %v2446
    %v2479 = vand.u32 2147483647, %v2447
    %v2480 = vand.u32 2147483647, %v2448
    %v2481 = vand.u32 2147483647, %v2449
    %v2482 = vand.u32 2147483647, %v2450
    %v2483 = vand.u32 2147483647, %v2451
    %v2484 = vand.u32 2147483647, %v2452
    %v2485 = vmul.f32 %v2453, 0.3275911
    %v2486 = vmul.f32 %v2454, 0.3275911
    %v2487 = vmul.f32 %v2455, 0.3275911
    %v2488 = vmul.f32 %v2456, 0.3275911
    %v2489 = vmul.f32 %v2457, 0.3275911
    %v2490 = vmul.f32 %v2458, 0.3275911
    %v2491 = vmul.f32 %v2459, 0.3275911
    %v2492 = vmul.f32 %v2460, 0.3275911
    %v2493 = vmul.f32 %v2461, 0.3275911
    %v2494 = vmul.f32 %v2462, 0.3275911
    %v2495 = vmul.f32 %v2463, 0.3275911
    %v2496 = vmul.f32 %v2464, 0.3275911
    %v2497 = vmul.f32 %v2465, 0.3275911
    %v2498 = vmul.f32 %v2466, 0.3275911
    %v2499 = vmul.f32 %v2467, 0.3275911
    %v2500 = vmul.f32 %v2468, 0.3275911
    %v2501 = vmul.f32 %v2469, 0.3275911
    %v2502 = vmul.f32 %v2470, 0.3275911
    %v2503 = vmul.f32 %v2471, 0.3275911
    %v2504 = vmul.f32 %v2472, 0.3275911
    %v2505 = vmul.f32 %v2473, 0.3275911
    %v2506 = vmul.f32 %v2474, 0.3275911
    %v2507 = vmul.f32 %v2475, 0.3275911
    %v2508 = vmul.f32 %v2476, 0.3275911
    %v2509 = vmul.f32 %v2477, 0.3275911
    %v2510 = vmul.f32 %v2478, 0.3275911
    %v2511 = vmul.f32 %v2479, 0.3275911
    %v2512 = vmul.f32 %v2480, 0.3275911
    %v2513 = vmul.f32 %v2481, 0.3275911
    %v2514 = vmul.f32 %v2482, 0.3275911
    %v2515 = vmul.f32 %v2483, 0.3275911
    %v2516 = vmul.f32 %v2484, 0.3275911
    %v2517 = vadd.f32 %v2485, 1.0
    %v2518 = vadd.f32 %v2486, 1.0
    %v2519 = vadd.f32 %v2487, 1.0
    %v2520 = vadd.f32 %v2488, 1.0
    %v2521 = vadd.f32 %v2489, 1.0
    %v2522 = vadd.f32 %v2490, 1.0
    %v2523 = vadd.f32 %v2491, 1.0
    %v2524 = vadd.f32 %v2492, 1.0
    %v2525 = vadd.f32 %v2493, 1.0
    %v2526 = vadd.f32 %v2494, 1.0
    %v2527 = vadd.f32 %v2495, 1.0
    %v2528 = vadd.f32 %v2496, 1.0
    %v2529 = vadd.f32 %v2497, 1.0
    %v2530 = vadd.f32 %v2498, 1.0
    %v2531 = vadd.f32 %v2499, 1.0
    %v2532 = vadd.f32 %v2500, 1.0
    %v2533 = vadd.f32 %v2501, 1.0
    %v2534 = vadd.f32 %v2502, 1.0
    %v2535 = vadd.f32 %v2503, 1.0
    %v2536 = vadd.f32 %v2504, 1.0
    %v2537 = vadd.f32 %v2505, 1.0
    %v2538 = vadd.f32 %v2506, 1.0
    %v2539 = vadd.f32 %v2507, 1.0
    %v2540 = vadd.f32 %v2508, 1.0
    %v2541 = vadd.f32 %v2509, 1.0
    %v2542 = vadd.f32 %v2510, 1.0
    %v2543 = vadd.f32 %v2511, 1.0
    %v2544 = vadd.f32 %v2512, 1.0
    %v2545 = vadd.f32 %v2513, 1.0
    %v2546 = vadd.f32 %v2514, 1.0
    %v2547 = vadd.f32 %v2515, 1.0
    %v2548 = vadd.f32 %v2516, 1.0
    %v2549 = vrcp.pop %v2517
    %v2550 = vmul.f32 1.0, %v2549
    %v2551 = vrcp.pop %v2518
    %v2552 = vmul.f32 1.0, %v2551
    %v2553 = vrcp.pop %v2519
    %v2554 = vmul.f32 1.0, %v2553
    %v2555 = vrcp.pop %v2520
    %v2556 = vmul.f32 1.0, %v2555
    %v2557 = vrcp.pop %v2521
    %v2558 = vmul.f32 1.0, %v2557
    %v2559 = vrcp.pop %v2522
    %v2560 = vmul.f32 1.0, %v2559
    %v2561 = vrcp.pop %v2523
    %v2562 = vmul.f32 1.0, %v2561
    %v2563 = vrcp.pop %v2524
    %v2564 = vmul.f32 1.0, %v2563
    %v2565 = vrcp.pop %v2525
    %v2566 = vmul.f32 1.0, %v2565
    %v2567 = vrcp.pop %v2526
    %v2568 = vmul.f32 1.0, %v2567
    %v2569 = vrcp.pop %v2527
    %v2570 = vmul.f32 1.0, %v2569
    %v2571 = vrcp.pop %v2528
    %v2572 = vmul.f32 1.0, %v2571
    %v2573 = vrcp.pop %v2529
    %v2574 = vmul.f32 1.0, %v2573
    %v2575 = vrcp.pop %v2530
    %v2576 = vmul.f32 1.0, %v2575
    %v2577 = vrcp.pop %v2531
    %v2578 = vmul.f32 1.0, %v2577
    %v2579 = vrcp.pop %v2532
    %v2580 = vmul.f32 1.0, %v2579
    %v2581 = vrcp.pop %v2533
    %v2582 = vmul.f32 1.0, %v2581
    %v2583 = vrcp.pop %v2534
    %v2584 = vmul.f32 1.0, %v2583
    %v2585 = vrcp.pop %v2535
    %v2586 = vmul.f32 1.0, %v2585
    %v2587 = vrcp.pop %v2536
    %v2588 = vmul.f32 1.0, %v2587
    %v2589 = vrcp.pop %v2537
    %v2590 = vmul.f32 1.0, %v2589
    %v2591 = vrcp.pop %v2538
    %v2592 = vmul.f32 1.0, %v2591
    %v2593 = vrcp.pop %v2539
    %v2594 = vmul.f32 1.0, %v2593
    %v2595 = vrcp.pop %v2540
    %v2596 = vmul.f32 1.0, %v2595
    %v2597 = vrcp.pop %v2541
    %v2598 = vmul.f32 1.0, %v2597
    %v2599 = vrcp.pop %v2542
    %v2600 = vmul.f32 1.0, %v2599
    %v2601 = vrcp.pop %v2543
    %v2602 = vmul.f32 1.0, %v2601
    %v2603 = vrcp.pop %v2544
    %v2604 = vmul.f32 1.0, %v2603
    %v2605 = vrcp.pop %v2545
    %v2606 = vmul.f32 1.0, %v2605
    %v2607 = vrcp.pop %v2546
    %v2608 = vmul.f32 1.0, %v2607
    %v2609 = vrcp.pop %v2547
    %v2610 = vmul.f32 1.0, %v2609
    %v2611 = vrcp.pop %v2548
    %v2612 = vmul.f32 1.0, %v2611
    %v2613 = vmul.f32 %v2550, 1.0614054
    %v2614 = vmul.f32 %v2552, 1.0614054
    %v2615 = vmul.f32 %v2554, 1.0614054
    %v2616 = vmul.f32 %v2556, 1.0614054
    %v2617 = vmul.f32 %v2558, 1.0614054
    %v2618 = vmul.f32 %v2560, 1.0614054
    %v2619 = vmul.f32 %v2562, 1.0614054
    %v2620 = vmul.f32 %v2564, 1.0614054
    %v2621 = vmul.f32 %v2566, 1.0614054
    %v2622 = vmul.f32 %v2568, 1.0614054
    %v2623 = vmul.f32 %v2570, 1.0614054
    %v2624 = vmul.f32 %v2572, 1.0614054
    %v2625 = vmul.f32 %v2574, 1.0614054
    %v2626 = vmul.f32 %v2576, 1.0614054
    %v2627 = vmul.f32 %v2578, 1.0614054
    %v2628 = vmul.f32 %v2580, 1.0614054
    %v2629 = vmul.f32 %v2582, 1.0614054
    %v2630 = vmul.f32 %v2584, 1.0614054
    %v2631 = vmul.f32 %v2586, 1.0614054
    %v2632 = vmul.f32 %v2588, 1.0614054
    %v2633 = vmul.f32 %v2590, 1.0614054
    %v2634 = vmul.f32 %v2592, 1.0614054
    %v2635 = vmul.f32 %v2594, 1.0614054
    %v2636 = vmul.f32 %v2596, 1.0614054
    %v2637 = vmul.f32 %v2598, 1.0614054
    %v2638 = vmul.f32 %v2600, 1.0614054
    %v2639 = vmul.f32 %v2602, 1.0614054
    %v2640 = vmul.f32 %v2604, 1.0614054
    %v2641 = vmul.f32 %v2606, 1.0614054
    %v2642 = vmul.f32 %v2608, 1.0614054
    %v2643 = vmul.f32 %v2610, 1.0614054
    %v2644 = vmul.f32 %v2612, 1.0614054
    %v2645 = vadd.f32 %v2613, -1.4531521
    %v2646 = vadd.f32 %v2614, -1.4531521
    %v2647 = vadd.f32 %v2615, -1.4531521
    %v2648 = vadd.f32 %v2616, -1.4531521
    %v2649 = vadd.f32 %v2617, -1.4531521
    %v2650 = vadd.f32 %v2618, -1.4531521
    %v2651 = vadd.f32 %v2619, -1.4531521
    %v2652 = vadd.f32 %v2620, -1.4531521
    %v2653 = vadd.f32 %v2621, -1.4531521
    %v2654 = vadd.f32 %v2622, -1.4531521
    %v2655 = vadd.f32 %v2623, -1.4531521
    %v2656 = vadd.f32 %v2624, -1.4531521
    %v2657 = vadd.f32 %v2625, -1.4531521
    %v2658 = vadd.f32 %v2626, -1.4531521
    %v2659 = vadd.f32 %v2627, -1.4531521
    %v2660 = vadd.f32 %v2628, -1.4531521
    %v2661 = vadd.f32 %v2629, -1.4531521
    %v2662 = vadd.f32 %v2630, -1.4531521
    %v2663 = vadd.f32 %v2631, -1.4531521
    %v2664 = vadd.f32 %v2632, -1.4531521
    %v2665 = vadd.f32 %v2633, -1.4531521
    %v2666 = vadd.f32 %v2634, -1.4531521
    %v2667 = vadd.f32 %v2635, -1.4531521
    %v2668 = vadd.f32 %v2636, -1.4531521
    %v2669 = vadd.f32 %v2637, -1.4531521
    %v2670 = vadd.f32 %v2638, -1.4531521
    %v2671 = vadd.f32 %v2639, -1.4531521
    %v2672 = vadd.f32 %v2640, -1.4531521
    %v2673 = vadd.f32 %v2641, -1.4531521
    %v2674 = vadd.f32 %v2642, -1.4531521
    %v2675 = vadd.f32 %v2643, -1.4531521
    %v2676 = vadd.f32 %v2644, -1.4531521
    %v2677 = vmul.f32 %v2645, %v2550
    %v2678 = vmul.f32 %v2646, %v2552
    %v2679 = vmul.f32 %v2647, %v2554
    %v2680 = vmul.f32 %v2648, %v2556
    %v2681 = vmul.f32 %v2649, %v2558
    %v2682 = vmul.f32 %v2650, %v2560
    %v2683 = vmul.f32 %v2651, %v2562
    %v2684 = vmul.f32 %v2652, %v2564
    %v2685 = vmul.f32 %v2653, %v2566
    %v2686 = vmul.f32 %v2654, %v2568
    %v2687 = vmul.f32 %v2655, %v2570
    %v2688 = vmul.f32 %v2656, %v2572
    %v2689 = vmul.f32 %v2657, %v2574
    %v2690 = vmul.f32 %v2658, %v2576
    %v2691 = vmul.f32 %v2659, %v2578
    %v2692 = vmul.f32 %v2660, %v2580
    %v2693 = vmul.f32 %v2661, %v2582
    %v2694 = vmul.f32 %v2662, %v2584
    %v2695 = vmul.f32 %v2663, %v2586
    %v2696 = vmul.f32 %v2664, %v2588
    %v2697 = vmul.f32 %v2665, %v2590
    %v2698 = vmul.f32 %v2666, %v2592
    %v2699 = vmul.f32 %v2667, %v2594
    %v2700 = vmul.f32 %v2668, %v2596
    %v2701 = vmul.f32 %v2669, %v2598
    %v2702 = vmul.f32 %v2670, %v2600
    %v2703 = vmul.f32 %v2671, %v2602
    %v2704 = vmul.f32 %v2672, %v2604
    %v2705 = vmul.f32 %v2673, %v2606
    %v2706 = vmul.f32 %v2674, %v2608
    %v2707 = vmul.f32 %v2675, %v2610
    %v2708 = vmul.f32 %v2676, %v2612
    %v2709 = vadd.f32 %v2677, 1.4214138
    %v2710 = vadd.f32 %v2678, 1.4214138
    %v2711 = vadd.f32 %v2679, 1.4214138
    %v2712 = vadd.f32 %v2680, 1.4214138
    %v2713 = vadd.f32 %v2681, 1.4214138
    %v2714 = vadd.f32 %v2682, 1.4214138
    %v2715 = vadd.f32 %v2683, 1.4214138
    %v2716 = vadd.f32 %v2684, 1.4214138
    %v2717 = vadd.f32 %v2685, 1.4214138
    %v2718 = vadd.f32 %v2686, 1.4214138
    %v2719 = vadd.f32 %v2687, 1.4214138
    %v2720 = vadd.f32 %v2688, 1.4214138
    %v2721 = vadd.f32 %v2689, 1.4214138
    %v2722 = vadd.f32 %v2690, 1.4214138
    %v2723 = vadd.f32 %v2691, 1.4214138
    %v2724 = vadd.f32 %v2692, 1.4214138
    %v2725 = vadd.f32 %v2693, 1.4214138
    %v2726 = vadd.f32 %v2694, 1.4214138
    %v2727 = vadd.f32 %v2695, 1.4214138
    %v2728 = vadd.f32 %v2696, 1.4214138
    %v2729 = vadd.f32 %v2697, 1.4214138
    %v2730 = vadd.f32 %v2698, 1.4214138
    %v2731 = vadd.f32 %v2699, 1.4214138
    %v2732 = vadd.f32 %v2700, 1.4214138
    %v2733 = vadd.f32 %v2701, 1.4214138
    %v2734 = vadd.f32 %v2702, 1.4214138
    %v2735 = vadd.f32 %v2703, 1.4214138
    %v2736 = vadd.f32 %v2704, 1.4214138
    %v2737 = vadd.f32 %v2705, 1.4214138
    %v2738 = vadd.f32 %v2706, 1.4214138
    %v2739 = vadd.f32 %v2707, 1.4214138
    %v2740 = vadd.f32 %v2708, 1.4214138
    %v2741 = vmul.f32 %v2709, %v2550
    %v2742 = vmul.f32 %v2710, %v2552
    %v2743 = vmul.f32 %v2711, %v2554
    %v2744 = vmul.f32 %v2712, %v2556
    %v2745 = vmul.f32 %v2713, %v2558
    %v2746 = vmul.f32 %v2714, %v2560
    %v2747 = vmul.f32 %v2715, %v2562
    %v2748 = vmul.f32 %v2716, %v2564
    %v2749 = vmul.f32 %v2717, %v2566
    %v2750 = vmul.f32 %v2718, %v2568
    %v2751 = vmul.f32 %v2719, %v2570
    %v2752 = vmul.f32 %v2720, %v2572
    %v2753 = vmul.f32 %v2721, %v2574
    %v2754 = vmul.f32 %v2722, %v2576
    %v2755 = vmul.f32 %v2723, %v2578
    %v2756 = vmul.f32 %v2724, %v2580
    %v2757 = vmul.f32 %v2725, %v2582
    %v2758 = vmul.f32 %v2726, %v2584
    %v2759 = vmul.f32 %v2727, %v2586
    %v2760 = vmul.f32 %v2728, %v2588
    %v2761 = vmul.f32 %v2729, %v2590
    %v2762 = vmul.f32 %v2730, %v2592
    %v2763 = vmul.f32 %v2731, %v2594
    %v2764 = vmul.f32 %v2732, %v2596
    %v2765 = vmul.f32 %v2733, %v2598
    %v2766 = vmul.f32 %v2734, %v2600
    %v2767 = vmul.f32 %v2735, %v2602
    %v2768 = vmul.f32 %v2736, %v2604
    %v2769 = vmul.f32 %v2737, %v2606
    %v2770 = vmul.f32 %v2738, %v2608
    %v2771 = vmul.f32 %v2739, %v2610
    %v2772 = vmul.f32 %v2740, %v2612
    %v2773 = vadd.f32 %v2741, -0.28449672
    %v2774 = vadd.f32 %v2742, -0.28449672
    %v2775 = vadd.f32 %v2743, -0.28449672
    %v2776 = vadd.f32 %v2744, -0.28449672
    %v2777 = vadd.f32 %v2745, -0.28449672
    %v2778 = vadd.f32 %v2746, -0.28449672
    %v2779 = vadd.f32 %v2747, -0.28449672
    %v2780 = vadd.f32 %v2748, -0.28449672
    %v2781 = vadd.f32 %v2749, -0.28449672
    %v2782 = vadd.f32 %v2750, -0.28449672
    %v2783 = vadd.f32 %v2751, -0.28449672
    %v2784 = vadd.f32 %v2752, -0.28449672
    %v2785 = vadd.f32 %v2753, -0.28449672
    %v2786 = vadd.f32 %v2754, -0.28449672
    %v2787 = vadd.f32 %v2755, -0.28449672
    %v2788 = vadd.f32 %v2756, -0.28449672
    %v2789 = vadd.f32 %v2757, -0.28449672
    %v2790 = vadd.f32 %v2758, -0.28449672
    %v2791 = vadd.f32 %v2759, -0.28449672
    %v2792 = vadd.f32 %v2760, -0.28449672
    %v2793 = vadd.f32 %v2761, -0.28449672
    %v2794 = vadd.f32 %v2762, -0.28449672
    %v2795 = vadd.f32 %v2763, -0.28449672
    %v2796 = vadd.f32 %v2764, -0.28449672
    %v2797 = vadd.f32 %v2765, -0.28449672
    %v2798 = vadd.f32 %v2766, -0.28449672
    %v2799 = vadd.f32 %v2767, -0.28449672
    %v2800 = vadd.f32 %v2768, -0.28449672
    %v2801 = vadd.f32 %v2769, -0.28449672
    %v2802 = vadd.f32 %v2770, -0.28449672
    %v2803 = vadd.f32 %v2771, -0.28449672
    %v2804 = vadd.f32 %v2772, -0.28449672
    %v2805 = vmul.f32 %v2773, %v2550
    %v2806 = vmul.f32 %v2774, %v2552
    %v2807 = vmul.f32 %v2775, %v2554
    %v2808 = vmul.f32 %v2776, %v2556
    %v2809 = vmul.f32 %v2777, %v2558
    %v2810 = vmul.f32 %v2778, %v2560
    %v2811 = vmul.f32 %v2779, %v2562
    %v2812 = vmul.f32 %v2780, %v2564
    %v2813 = vmul.f32 %v2781, %v2566
    %v2814 = vmul.f32 %v2782, %v2568
    %v2815 = vmul.f32 %v2783, %v2570
    %v2816 = vmul.f32 %v2784, %v2572
    %v2817 = vmul.f32 %v2785, %v2574
    %v2818 = vmul.f32 %v2786, %v2576
    %v2819 = vmul.f32 %v2787, %v2578
    %v2820 = vmul.f32 %v2788, %v2580
    %v2821 = vmul.f32 %v2789, %v2582
    %v2822 = vmul.f32 %v2790, %v2584
    %v2823 = vmul.f32 %v2791, %v2586
    %v2824 = vmul.f32 %v2792, %v2588
    %v2825 = vmul.f32 %v2793, %v2590
    %v2826 = vmul.f32 %v2794, %v2592
    %v2827 = vmul.f32 %v2795, %v2594
    %v2828 = vmul.f32 %v2796, %v2596
    %v2829 = vmul.f32 %v2797, %v2598
    %v2830 = vmul.f32 %v2798, %v2600
    %v2831 = vmul.f32 %v2799, %v2602
    %v2832 = vmul.f32 %v2800, %v2604
    %v2833 = vmul.f32 %v2801, %v2606
    %v2834 = vmul.f32 %v2802, %v2608
    %v2835 = vmul.f32 %v2803, %v2610
    %v2836 = vmul.f32 %v2804, %v2612
    %v2837 = vadd.f32 %v2805, 0.2548296
    %v2838 = vadd.f32 %v2806, 0.2548296
    %v2839 = vadd.f32 %v2807, 0.2548296
    %v2840 = vadd.f32 %v2808, 0.2548296
    %v2841 = vadd.f32 %v2809, 0.2548296
    %v2842 = vadd.f32 %v2810, 0.2548296
    %v2843 = vadd.f32 %v2811, 0.2548296
    %v2844 = vadd.f32 %v2812, 0.2548296
    %v2845 = vadd.f32 %v2813, 0.2548296
    %v2846 = vadd.f32 %v2814, 0.2548296
    %v2847 = vadd.f32 %v2815, 0.2548296
    %v2848 = vadd.f32 %v2816, 0.2548296
    %v2849 = vadd.f32 %v2817, 0.2548296
    %v2850 = vadd.f32 %v2818, 0.2548296
    %v2851 = vadd.f32 %v2819, 0.2548296
    %v2852 = vadd.f32 %v2820, 0.2548296
    %v2853 = vadd.f32 %v2821, 0.2548296
    %v2854 = vadd.f32 %v2822, 0.2548296
    %v2855 = vadd.f32 %v2823, 0.2548296
    %v2856 = vadd.f32 %v2824, 0.2548296
    %v2857 = vadd.f32 %v2825, 0.2548296
    %v2858 = vadd.f32 %v2826, 0.2548296
    %v2859 = vadd.f32 %v2827, 0.2548296
    %v2860 = vadd.f32 %v2828, 0.2548296
    %v2861 = vadd.f32 %v2829, 0.2548296
    %v2862 = vadd.f32 %v2830, 0.2548296
    %v2863 = vadd.f32 %v2831, 0.2548296
    %v2864 = vadd.f32 %v2832, 0.2548296
    %v2865 = vadd.f32 %v2833, 0.2548296
    %v2866 = vadd.f32 %v2834, 0.2548296
    %v2867 = vadd.f32 %v2835, 0.2548296
    %v2868 = vadd.f32 %v2836, 0.2548296
    %v2869 = vmul.f32 %v2837, %v2550
    %v2870 = vmul.f32 %v2838, %v2552
    %v2871 = vmul.f32 %v2839, %v2554
    %v2872 = vmul.f32 %v2840, %v2556
    %v2873 = vmul.f32 %v2841, %v2558
    %v2874 = vmul.f32 %v2842, %v2560
    %v2875 = vmul.f32 %v2843, %v2562
    %v2876 = vmul.f32 %v2844, %v2564
    %v2877 = vmul.f32 %v2845, %v2566
    %v2878 = vmul.f32 %v2846, %v2568
    %v2879 = vmul.f32 %v2847, %v2570
    %v2880 = vmul.f32 %v2848, %v2572
    %v2881 = vmul.f32 %v2849, %v2574
    %v2882 = vmul.f32 %v2850, %v2576
    %v2883 = vmul.f32 %v2851, %v2578
    %v2884 = vmul.f32 %v2852, %v2580
    %v2885 = vmul.f32 %v2853, %v2582
    %v2886 = vmul.f32 %v2854, %v2584
    %v2887 = vmul.f32 %v2855, %v2586
    %v2888 = vmul.f32 %v2856, %v2588
    %v2889 = vmul.f32 %v2857, %v2590
    %v2890 = vmul.f32 %v2858, %v2592
    %v2891 = vmul.f32 %v2859, %v2594
    %v2892 = vmul.f32 %v2860, %v2596
    %v2893 = vmul.f32 %v2861, %v2598
    %v2894 = vmul.f32 %v2862, %v2600
    %v2895 = vmul.f32 %v2863, %v2602
    %v2896 = vmul.f32 %v2864, %v2604
    %v2897 = vmul.f32 %v2865, %v2606
    %v2898 = vmul.f32 %v2866, %v2608
    %v2899 = vmul.f32 %v2867, %v2610
    %v2900 = vmul.f32 %v2868, %v2612
    %v2901 = vsub.f32 0.0, %v2453
    %v2902 = vsub.f32 0.0, %v2454
    %v2903 = vsub.f32 0.0, %v2455
    %v2904 = vsub.f32 0.0, %v2456
    %v2905 = vsub.f32 0.0, %v2457
    %v2906 = vsub.f32 0.0, %v2458
    %v2907 = vsub.f32 0.0, %v2459
    %v2908 = vsub.f32 0.0, %v2460
    %v2909 = vsub.f32 0.0, %v2461
    %v2910 = vsub.f32 0.0, %v2462
    %v2911 = vsub.f32 0.0, %v2463
    %v2912 = vsub.f32 0.0, %v2464
    %v2913 = vsub.f32 0.0, %v2465
    %v2914 = vsub.f32 0.0, %v2466
    %v2915 = vsub.f32 0.0, %v2467
    %v2916 = vsub.f32 0.0, %v2468
    %v2917 = vsub.f32 0.0, %v2469
    %v2918 = vsub.f32 0.0, %v2470
    %v2919 = vsub.f32 0.0, %v2471
    %v2920 = vsub.f32 0.0, %v2472
    %v2921 = vsub.f32 0.0, %v2473
    %v2922 = vsub.f32 0.0, %v2474
    %v2923 = vsub.f32 0.0, %v2475
    %v2924 = vsub.f32 0.0, %v2476
    %v2925 = vsub.f32 0.0, %v2477
    %v2926 = vsub.f32 0.0, %v2478
    %v2927 = vsub.f32 0.0, %v2479
    %v2928 = vsub.f32 0.0, %v2480
    %v2929 = vsub.f32 0.0, %v2481
    %v2930 = vsub.f32 0.0, %v2482
    %v2931 = vsub.f32 0.0, %v2483
    %v2932 = vsub.f32 0.0, %v2484
    %v2933 = vmul.f32 %v2901, %v2453
    %v2934 = vmul.f32 %v2902, %v2454
    %v2935 = vmul.f32 %v2903, %v2455
    %v2936 = vmul.f32 %v2904, %v2456
    %v2937 = vmul.f32 %v2905, %v2457
    %v2938 = vmul.f32 %v2906, %v2458
    %v2939 = vmul.f32 %v2907, %v2459
    %v2940 = vmul.f32 %v2908, %v2460
    %v2941 = vmul.f32 %v2909, %v2461
    %v2942 = vmul.f32 %v2910, %v2462
    %v2943 = vmul.f32 %v2911, %v2463
    %v2944 = vmul.f32 %v2912, %v2464
    %v2945 = vmul.f32 %v2913, %v2465
    %v2946 = vmul.f32 %v2914, %v2466
    %v2947 = vmul.f32 %v2915, %v2467
    %v2948 = vmul.f32 %v2916, %v2468
    %v2949 = vmul.f32 %v2917, %v2469
    %v2950 = vmul.f32 %v2918, %v2470
    %v2951 = vmul.f32 %v2919, %v2471
    %v2952 = vmul.f32 %v2920, %v2472
    %v2953 = vmul.f32 %v2921, %v2473
    %v2954 = vmul.f32 %v2922, %v2474
    %v2955 = vmul.f32 %v2923, %v2475
    %v2956 = vmul.f32 %v2924, %v2476
    %v2957 = vmul.f32 %v2925, %v2477
    %v2958 = vmul.f32 %v2926, %v2478
    %v2959 = vmul.f32 %v2927, %v2479
    %v2960 = vmul.f32 %v2928, %v2480
    %v2961 = vmul.f32 %v2929, %v2481
    %v2962 = vmul.f32 %v2930, %v2482
    %v2963 = vmul.f32 %v2931, %v2483
    %v2964 = vmul.f32 %v2932, %v2484
    %v2965 = vmul.f32 %v2933, 1.442695
    %v2966 = vpow.pop %v2965
    %v2967 = vmul.f32 %v2934, 1.442695
    %v2968 = vpow.pop %v2967
    %v2969 = vmul.f32 %v2935, 1.442695
    %v2970 = vpow.pop %v2969
    %v2971 = vmul.f32 %v2936, 1.442695
    %v2972 = vpow.pop %v2971
    %v2973 = vmul.f32 %v2937, 1.442695
    %v2974 = vpow.pop %v2973
    %v2975 = vmul.f32 %v2938, 1.442695
    %v2976 = vpow.pop %v2975
    %v2977 = vmul.f32 %v2939, 1.442695
    %v2978 = vpow.pop %v2977
    %v2979 = vmul.f32 %v2940, 1.442695
    %v2980 = vpow.pop %v2979
    %v2981 = vmul.f32 %v2941, 1.442695
    %v2982 = vpow.pop %v2981
    %v2983 = vmul.f32 %v2942, 1.442695
    %v2984 = vpow.pop %v2983
    %v2985 = vmul.f32 %v2943, 1.442695
    %v2986 = vpow.pop %v2985
    %v2987 = vmul.f32 %v2944, 1.442695
    %v2988 = vpow.pop %v2987
    %v2989 = vmul.f32 %v2945, 1.442695
    %v2990 = vpow.pop %v2989
    %v2991 = vmul.f32 %v2946, 1.442695
    %v2992 = vpow.pop %v2991
    %v2993 = vmul.f32 %v2947, 1.442695
    %v2994 = vpow.pop %v2993
    %v2995 = vmul.f32 %v2948, 1.442695
    %v2996 = vpow.pop %v2995
    %v2997 = vmul.f32 %v2949, 1.442695
    %v2998 = vpow.pop %v2997
    %v2999 = vmul.f32 %v2950, 1.442695
    %v3000 = vpow.pop %v2999
    %v3001 = vmul.f32 %v2951, 1.442695
    %v3002 = vpow.pop %v3001
    %v3003 = vmul.f32 %v2952, 1.442695
    %v3004 = vpow.pop %v3003
    %v3005 = vmul.f32 %v2953, 1.442695
    %v3006 = vpow.pop %v3005
    %v3007 = vmul.f32 %v2954, 1.442695
    %v3008 = vpow.pop %v3007
    %v3009 = vmul.f32 %v2955, 1.442695
    %v3010 = vpow.pop %v3009
    %v3011 = vmul.f32 %v2956, 1.442695
    %v3012 = vpow.pop %v3011
    %v3013 = vmul.f32 %v2957, 1.442695
    %v3014 = vpow.pop %v3013
    %v3015 = vmul.f32 %v2958, 1.442695
    %v3016 = vpow.pop %v3015
    %v3017 = vmul.f32 %v2959, 1.442695
    %v3018 = vpow.pop %v3017
    %v3019 = vmul.f32 %v2960, 1.442695
    %v3020 = vpow.pop %v3019
    %v3021 = vmul.f32 %v2961, 1.442695
    %v3022 = vpow.pop %v3021
    %v3023 = vmul.f32 %v2962, 1.442695
    %v3024 = vpow.pop %v3023
    %v3025 = vmul.f32 %v2963, 1.442695
    %v3026 = vpow.pop %v3025
    %v3027 = vmul.f32 %v2964, 1.442695
    %v3028 = vpow.pop %v3027
    %v3029 = vmul.f32 %v2869, %v2966
    %v3030 = vmul.f32 %v2870, %v2968
    %v3031 = vmul.f32 %v2871, %v2970
    %v3032 = vmul.f32 %v2872, %v2972
    %v3033 = vmul.f32 %v2873, %v2974
    %v3034 = vmul.f32 %v2874, %v2976
    %v3035 = vmul.f32 %v2875, %v2978
    %v3036 = vmul.f32 %v2876, %v2980
    %v3037 = vmul.f32 %v2877, %v2982
    %v3038 = vmul.f32 %v2878, %v2984
    %v3039 = vmul.f32 %v2879, %v2986
    %v3040 = vmul.f32 %v2880, %v2988
    %v3041 = vmul.f32 %v2881, %v2990
    %v3042 = vmul.f32 %v2882, %v2992
    %v3043 = vmul.f32 %v2883, %v2994
    %v3044 = vmul.f32 %v2884, %v2996
    %v3045 = vmul.f32 %v2885, %v2998
    %v3046 = vmul.f32 %v2886, %v3000
    %v3047 = vmul.f32 %v2887, %v3002
    %v3048 = vmul.f32 %v2888, %v3004
    %v3049 = vmul.f32 %v2889, %v3006
    %v3050 = vmul.f32 %v2890, %v3008
    %v3051 = vmul.f32 %v2891, %v3010
    %v3052 = vmul.f32 %v2892, %v3012
    %v3053 = vmul.f32 %v2893, %v3014
    %v3054 = vmul.f32 %v2894, %v3016
    %v3055 = vmul.f32 %v2895, %v3018
    %v3056 = vmul.f32 %v2896, %v3020
    %v3057 = vmul.f32 %v2897, %v3022
    %v3058 = vmul.f32 %v2898, %v3024
    %v3059 = vmul.f32 %v2899, %v3026
    %v3060 = vmul.f32 %v2900, %v3028
    %v3061 = vsub.f32 1.0, %v3029
    %v3062 = vsub.f32 1.0, %v3030
    %v3063 = vsub.f32 1.0, %v3031
    %v3064 = vsub.f32 1.0, %v3032
    %v3065 = vsub.f32 1.0, %v3033
    %v3066 = vsub.f32 1.0, %v3034
    %v3067 = vsub.f32 1.0, %v3035
    %v3068 = vsub.f32 1.0, %v3036
    %v3069 = vsub.f32 1.0, %v3037
    %v3070 = vsub.f32 1.0, %v3038
    %v3071 = vsub.f32 1.0, %v3039
    %v3072 = vsub.f32 1.0, %v3040
    %v3073 = vsub.f32 1.0, %v3041
    %v3074 = vsub.f32 1.0, %v3042
    %v3075 = vsub.f32 1.0, %v3043
    %v3076 = vsub.f32 1.0, %v3044
    %v3077 = vsub.f32 1.0, %v3045
    %v3078 = vsub.f32 1.0, %v3046
    %v3079 = vsub.f32 1.0, %v3047
    %v3080 = vsub.f32 1.0, %v3048
    %v3081 = vsub.f32 1.0, %v3049
    %v3082 = vsub.f32 1.0, %v3050
    %v3083 = vsub.f32 1.0, %v3051
    %v3084 = vsub.f32 1.0, %v3052
    %v3085 = vsub.f32 1.0, %v3053
    %v3086 = vsub.f32 1.0, %v3054
    %v3087 = vsub.f32 1.0, %v3055
    %v3088 = vsub.f32 1.0, %v3056
    %v3089 = vsub.f32 1.0, %v3057
    %v3090 = vsub.f32 1.0, %v3058
    %v3091 = vsub.f32 1.0, %v3059
    %v3092 = vsub.f32 1.0, %v3060
    %vm3093 = vcmp.lt.f32.partialorder %v2421, 0.0
    %vm3094 = vcmp.lt.f32.partialorder %v2422, 0.0
    %vm3095 = vcmp.lt.f32.partialorder %v2423, 0.0
    %vm3096 = vcmp.lt.f32.partialorder %v2424, 0.0
    %vm3097 = vcmp.lt.f32.partialorder %v2425, 0.0
    %vm3098 = vcmp.lt.f32.partialorder %v2426, 0.0
    %vm3099 = vcmp.lt.f32.partialorder %v2427, 0.0
    %vm3100 = vcmp.lt.f32.partialorder %v2428, 0.0
    %vm3101 = vcmp.lt.f32.partialorder %v2429, 0.0
    %vm3102 = vcmp.lt.f32.partialorder %v2430, 0.0
    %vm3103 = vcmp.lt.f32.partialorder %v2431, 0.0
    %vm3104 = vcmp.lt.f32.partialorder %v2432, 0.0
    %vm3105 = vcmp.lt.f32.partialorder %v2433, 0.0
    %vm3106 = vcmp.lt.f32.partialorder %v2434, 0.0
    %vm3107 = vcmp.lt.f32.partialorder %v2435, 0.0
    %vm3108 = vcmp.lt.f32.partialorder %v2436, 0.0
    %vm3109 = vcmp.lt.f32.partialorder %v2437, 0.0
    %vm3110 = vcmp.lt.f32.partialorder %v2438, 0.0
    %vm3111 = vcmp.lt.f32.partialorder %v2439, 0.0
    %vm3112 = vcmp.lt.f32.partialorder %v2440, 0.0
    %vm3113 = vcmp.lt.f32.partialorder %v2441, 0.0
    %vm3114 = vcmp.lt.f32.partialorder %v2442, 0.0
    %vm3115 = vcmp.lt.f32.partialorder %v2443, 0.0
    %vm3116 = vcmp.lt.f32.partialorder %v2444, 0.0
    %vm3117 = vcmp.lt.f32.partialorder %v2445, 0.0
    %vm3118 = vcmp.lt.f32.partialorder %v2446, 0.0
    %vm3119 = vcmp.lt.f32.partialorder %v2447, 0.0
    %vm3120 = vcmp.lt.f32.partialorder %v2448, 0.0
    %vm3121 = vcmp.lt.f32.partialorder %v2449, 0.0
    %vm3122 = vcmp.lt.f32.partialorder %v2450, 0.0
    %vm3123 = vcmp.lt.f32.partialorder %v2451, 0.0
    %vm3124 = vcmp.lt.f32.partialorder %v2452, 0.0
    %v3125 = vsub.f32 0.0, %v3061
    %v3126 = vsub.f32 0.0, %v3062
    %v3127 = vsub.f32 0.0, %v3063
    %v3128 = vsub.f32 0.0, %v3064
    %v3129 = vsub.f32 0.0, %v3065
    %v3130 = vsub.f32 0.0, %v3066
    %v3131 = vsub.f32 0.0, %v3067
    %v3132 = vsub.f32 0.0, %v3068
    %v3133 = vsub.f32 0.0, %v3069
    %v3134 = vsub.f32 0.0, %v3070
    %v3135 = vsub.f32 0.0, %v3071
    %v3136 = vsub.f32 0.0, %v3072
    %v3137 = vsub.f32 0.0, %v3073
    %v3138 = vsub.f32 0.0, %v3074
    %v3139 = vsub.f32 0.0, %v3075
    %v3140 = vsub.f32 0.0, %v3076
    %v3141 = vsub.f32 0.0, %v3077
    %v3142 = vsub.f32 0.0, %v3078
    %v3143 = vsub.f32 0.0, %v3079
    %v3144 = vsub.f32 0.0, %v3080
    %v3145 = vsub.f32 0.0, %v3081
    %v3146 = vsub.f32 0.0, %v3082
    %v3147 = vsub.f32 0.0, %v3083
    %v3148 = vsub.f32 0.0, %v3084
    %v3149 = vsub.f32 0.0, %v3085
    %v3150 = vsub.f32 0.0, %v3086
    %v3151 = vsub.f32 0.0, %v3087
    %v3152 = vsub.f32 0.0, %v3088
    %v3153 = vsub.f32 0.0, %v3089
    %v3154 = vsub.f32 0.0, %v3090
    %v3155 = vsub.f32 0.0, %v3091
    %v3156 = vsub.f32 0.0, %v3092
    %v3157 = vsel %vm3093, %v3125, %v3061
    %v3158 = vsel %vm3094, %v3126, %v3062
    %v3159 = vsel %vm3095, %v3127, %v3063
    %v3160 = vsel %vm3096, %v3128, %v3064
    %v3161 = vsel %vm3097, %v3129, %v3065
    %v3162 = vsel %vm3098, %v3130, %v3066
    %v3163 = vsel %vm3099, %v3131, %v3067
    %v3164 = vsel %vm3100, %v3132, %v3068
    %v3165 = vsel %vm3101, %v3133, %v3069
    %v3166 = vsel %vm3102, %v3134, %v3070
    %v3167 = vsel %vm3103, %v3135, %v3071
    %v3168 = vsel %vm3104, %v3136, %v3072
    %v3169 = vsel %vm3105, %v3137, %v3073
    %v3170 = vsel %vm3106, %v3138, %v3074
    %v3171 = vsel %vm3107, %v3139, %v3075
    %v3172 = vsel %vm3108, %v3140, %v3076
    %v3173 = vsel %vm3109, %v3141, %v3077
    %v3174 = vsel %vm3110, %v3142, %v3078
    %v3175 = vsel %vm3111, %v3143, %v3079
    %v3176 = vsel %vm3112, %v3144, %v3080
    %v3177 = vsel %vm3113, %v3145, %v3081
    %v3178 = vsel %vm3114, %v3146, %v3082
    %v3179 = vsel %vm3115, %v3147, %v3083
    %v3180 = vsel %vm3116, %v3148, %v3084
    %v3181 = vsel %vm3117, %v3149, %v3085
    %v3182 = vsel %vm3118, %v3150, %v3086
    %v3183 = vsel %vm3119, %v3151, %v3087
    %v3184 = vsel %vm3120, %v3152, %v3088
    %v3185 = vsel %vm3121, %v3153, %v3089
    %v3186 = vsel %vm3122, %v3154, %v3090
    %v3187 = vsel %vm3123, %v3155, %v3091
    %v3188 = vsel %vm3124, %v3156, %v3092
    %v3189 = vadd.f32 %v3157, 1.0
    %v3190 = vadd.f32 %v3158, 1.0
    %v3191 = vadd.f32 %v3159, 1.0
    %v3192 = vadd.f32 %v3160, 1.0
    %v3193 = vadd.f32 %v3161, 1.0
    %v3194 = vadd.f32 %v3162, 1.0
    %v3195 = vadd.f32 %v3163, 1.0
    %v3196 = vadd.f32 %v3164, 1.0
    %v3197 = vadd.f32 %v3165, 1.0
    %v3198 = vadd.f32 %v3166, 1.0
    %v3199 = vadd.f32 %v3167, 1.0
    %v3200 = vadd.f32 %v3168, 1.0
    %v3201 = vadd.f32 %v3169, 1.0
    %v3202 = vadd.f32 %v3170, 1.0
    %v3203 = vadd.f32 %v3171, 1.0
    %v3204 = vadd.f32 %v3172, 1.0
    %v3205 = vadd.f32 %v3173, 1.0
    %v3206 = vadd.f32 %v3174, 1.0
    %v3207 = vadd.f32 %v3175, 1.0
    %v3208 = vadd.f32 %v3176, 1.0
    %v3209 = vadd.f32 %v3177, 1.0
    %v3210 = vadd.f32 %v3178, 1.0
    %v3211 = vadd.f32 %v3179, 1.0
    %v3212 = vadd.f32 %v3180, 1.0
    %v3213 = vadd.f32 %v3181, 1.0
    %v3214 = vadd.f32 %v3182, 1.0
    %v3215 = vadd.f32 %v3183, 1.0
    %v3216 = vadd.f32 %v3184, 1.0
    %v3217 = vadd.f32 %v3185, 1.0
    %v3218 = vadd.f32 %v3186, 1.0
    %v3219 = vadd.f32 %v3187, 1.0
    %v3220 = vadd.f32 %v3188, 1.0
    %v3221 = vmul.f32 %v2389, %v3189
    %v3222 = vmul.f32 %v2390, %v3190
    %v3223 = vmul.f32 %v2391, %v3191
    %v3224 = vmul.f32 %v2392, %v3192
    %v3225 = vmul.f32 %v2393, %v3193
    %v3226 = vmul.f32 %v2394, %v3194
    %v3227 = vmul.f32 %v2395, %v3195
    %v3228 = vmul.f32 %v2396, %v3196
    %v3229 = vmul.f32 %v2397, %v3197
    %v3230 = vmul.f32 %v2398, %v3198
    %v3231 = vmul.f32 %v2399, %v3199
    %v3232 = vmul.f32 %v2400, %v3200
    %v3233 = vmul.f32 %v2401, %v3201
    %v3234 = vmul.f32 %v2402, %v3202
    %v3235 = vmul.f32 %v2403, %v3203
    %v3236 = vmul.f32 %v2404, %v3204
    %v3237 = vmul.f32 %v2405, %v3205
    %v3238 = vmul.f32 %v2406, %v3206
    %v3239 = vmul.f32 %v2407, %v3207
    %v3240 = vmul.f32 %v2408, %v3208
    %v3241 = vmul.f32 %v2409, %v3209
    %v3242 = vmul.f32 %v2410, %v3210
    %v3243 = vmul.f32 %v2411, %v3211
    %v3244 = vmul.f32 %v2412, %v3212
    %v3245 = vmul.f32 %v2413, %v3213
    %v3246 = vmul.f32 %v2414, %v3214
    %v3247 = vmul.f32 %v2415, %v3215
    %v3248 = vmul.f32 %v2416, %v3216
    %v3249 = vmul.f32 %v2417, %v3217
    %v3250 = vmul.f32 %v2418, %v3218
    %v3251 = vmul.f32 %v2419, %v3219
    %v3252 = vmul.f32 %v2420, %v3220
    %v3253 = vpack.c.bf16 %v3229, %v3221
    %v3254 = vpack.c.bf16 %v3230, %v3222
    %v3255 = vpack.c.bf16 %v3231, %v3223
    %v3256 = vpack.c.bf16 %v3232, %v3224
    %v3257 = vpack.c.bf16 %v3233, %v3225
    %v3258 = vpack.c.bf16 %v3234, %v3226
    %v3259 = vpack.c.bf16 %v3235, %v3227
    %v3260 = vpack.c.bf16 %v3236, %v3228
    %v3261 = vpack.c.bf16 %v3245, %v3237
    %v3262 = vpack.c.bf16 %v3246, %v3238
    %v3263 = vpack.c.bf16 %v3247, %v3239
    %v3264 = vpack.c.bf16 %v3248, %v3240
    %v3265 = vpack.c.bf16 %v3249, %v3241
    %v3266 = vpack.c.bf16 %v3250, %v3242
    %v3267 = vpack.c.bf16 %v3251, %v3243
    %v3268 = vpack.c.bf16 %v3252, %v3244
    %v3269 = vld [vmem:[#allocation23] sm:$0xf]
    %v3270 = vld [vmem:[#allocation23 + $0x4] sm:$0xf]
    %v3271 = vld [vmem:[#allocation23 + $0x8] sm:$0xf]
    %v3272 = vld [vmem:[#allocation23 + $0xc] sm:$0xf]
    %v3273 = vld [vmem:[#allocation23 + $0x10] sm:$0xf]
    %v3274 = vld [vmem:[#allocation23 + $0x14] sm:$0xf]
    %v3275 = vld [vmem:[#allocation23 + $0x18] sm:$0xf]
    %v3276 = vld [vmem:[#allocation23 + $0x1c] sm:$0xf]
    %v3277 = vld [vmem:[#allocation23 + $0x20] sm:$0xf]
    %v3278 = vld [vmem:[#allocation23 + $0x24] sm:$0xf]
    %v3279 = vld [vmem:[#allocation23 + $0x28] sm:$0xf]
    %v3280 = vld [vmem:[#allocation23 + $0x2c] sm:$0xf]
    %v3281 = vld [vmem:[#allocation23 + $0x30] sm:$0xf]
    %v3282 = vld [vmem:[#allocation23 + $0x34] sm:$0xf]
    %v3283 = vld [vmem:[#allocation23 + $0x38] sm:$0xf]
    %v3284 = vld [vmem:[#allocation23 + $0x3c] sm:$0xf]
    %v3285 = vld [vmem:[#allocation23 + $0x40] sm:$0xf]
    %v3286 = vld [vmem:[#allocation23 + $0x44] sm:$0xf]
    %v3287 = vld [vmem:[#allocation23 + $0x48] sm:$0xf]
    %v3288 = vld [vmem:[#allocation23 + $0x4c] sm:$0xf]
    %v3289 = vld [vmem:[#allocation23 + $0x50] sm:$0xf]
    %v3290 = vld [vmem:[#allocation23 + $0x54] sm:$0xf]
    %v3291 = vld [vmem:[#allocation23 + $0x58] sm:$0xf]
    %v3292 = vld [vmem:[#allocation23 + $0x5c] sm:$0xf]
    %v3293 = vld [vmem:[#allocation23 + $0x60] sm:$0xf]
    %v3294 = vld [vmem:[#allocation23 + $0x64] sm:$0xf]
    %v3295 = vld [vmem:[#allocation23 + $0x68] sm:$0xf]
    %v3296 = vld [vmem:[#allocation23 + $0x6c] sm:$0xf]
    %v3297 = vld [vmem:[#allocation23 + $0x70] sm:$0xf]
    %v3298 = vld [vmem:[#allocation23 + $0x74] sm:$0xf]
    %v3299 = vld [vmem:[#allocation23 + $0x78] sm:$0xf]
    %v3300 = vld [vmem:[#allocation23 + $0x7c] sm:$0xf]
    %v3301 = vld [vmem:[#allocation23 + $0x80] sm:$0xf]
    %v3302 = vld [vmem:[#allocation23 + $0x84] sm:$0xf]
    %v3303 = vld [vmem:[#allocation23 + $0x88] sm:$0xf]
    %v3304 = vld [vmem:[#allocation23 + $0x8c] sm:$0xf]
    %v3305 = vld [vmem:[#allocation23 + $0x90] sm:$0xf]
    %v3306 = vld [vmem:[#allocation23 + $0x94] sm:$0xf]
    %v3307 = vld [vmem:[#allocation23 + $0x98] sm:$0xf]
    %v3308 = vld [vmem:[#allocation23 + $0x9c] sm:$0xf]
    %v3309 = vld [vmem:[#allocation23 + $0xa0] sm:$0xf]
    %v3310 = vld [vmem:[#allocation23 + $0xa4] sm:$0xf]
    %v3311 = vld [vmem:[#allocation23 + $0xa8] sm:$0xf]
    %v3312 = vld [vmem:[#allocation23 + $0xac] sm:$0xf]
    %v3313 = vld [vmem:[#allocation23 + $0xb0] sm:$0xf]
    %v3314 = vld [vmem:[#allocation23 + $0xb4] sm:$0xf]
    %v3315 = vld [vmem:[#allocation23 + $0xb8] sm:$0xf]
    %v3316 = vld [vmem:[#allocation23 + $0xbc] sm:$0xf]
    %v3317 = vld [vmem:[#allocation23 + $0xc0] sm:$0xf]
    %v3318 = vld [vmem:[#allocation23 + $0xc4] sm:$0xf]
    %v3319 = vld [vmem:[#allocation23 + $0xc8] sm:$0xf]
    %v3320 = vld [vmem:[#allocation23 + $0xcc] sm:$0xf]
    %v3321 = vld [vmem:[#allocation23 + $0xd0] sm:$0xf]
    %v3322 = vld [vmem:[#allocation23 + $0xd4] sm:$0xf]
    %v3323 = vld [vmem:[#allocation23 + $0xd8] sm:$0xf]
    %v3324 = vld [vmem:[#allocation23 + $0xdc] sm:$0xf]
    %v3325 = vld [vmem:[#allocation23 + $0xe0] sm:$0xf]
    %v3326 = vld [vmem:[#allocation23 + $0xe4] sm:$0xf]
    %v3327 = vld [vmem:[#allocation23 + $0xe8] sm:$0xf]
    %v3328 = vld [vmem:[#allocation23 + $0xec] sm:$0xf]
    %v3329 = vld [vmem:[#allocation23 + $0xf0] sm:$0xf]
    %v3330 = vld [vmem:[#allocation23 + $0xf4] sm:$0xf]
    %v3331 = vld [vmem:[#allocation23 + $0xf8] sm:$0xf]
    %v3332 = vld [vmem:[#allocation23 + $0xfc] sm:$0xf]
    %v3333 = vld [vmem:[#allocation23 + $0x100] sm:$0xf]
    %v3334 = vld [vmem:[#allocation23 + $0x104] sm:$0xf]
    %v3335 = vld [vmem:[#allocation23 + $0x108] sm:$0xf]
    %v3336 = vld [vmem:[#allocation23 + $0x10c] sm:$0xf]
    %v3337 = vld [vmem:[#allocation23 + $0x110] sm:$0xf]
    %v3338 = vld [vmem:[#allocation23 + $0x114] sm:$0xf]
    %v3339 = vld [vmem:[#allocation23 + $0x118] sm:$0xf]
    %v3340 = vld [vmem:[#allocation23 + $0x11c] sm:$0xf]
    %v3341 = vld [vmem:[#allocation23 + $0x120] sm:$0xf]
    %v3342 = vld [vmem:[#allocation23 + $0x124] sm:$0xf]
    %v3343 = vld [vmem:[#allocation23 + $0x128] sm:$0xf]
    %v3344 = vld [vmem:[#allocation23 + $0x12c] sm:$0xf]
    %v3345 = vld [vmem:[#allocation23 + $0x130] sm:$0xf]
    %v3346 = vld [vmem:[#allocation23 + $0x134] sm:$0xf]
    %v3347 = vld [vmem:[#allocation23 + $0x138] sm:$0xf]
    %v3348 = vld [vmem:[#allocation23 + $0x13c] sm:$0xf]
    %v3349 = vld [vmem:[#allocation23 + $0x140] sm:$0xf]
    %v3350 = vld [vmem:[#allocation23 + $0x144] sm:$0xf]
    %v3351 = vld [vmem:[#allocation23 + $0x148] sm:$0xf]
    %v3352 = vld [vmem:[#allocation23 + $0x14c] sm:$0xf]
    %v3353 = vld [vmem:[#allocation23 + $0x150] sm:$0xf]
    %v3354 = vld [vmem:[#allocation23 + $0x154] sm:$0xf]
    %v3355 = vld [vmem:[#allocation23 + $0x158] sm:$0xf]
    %v3356 = vld [vmem:[#allocation23 + $0x15c] sm:$0xf]
    %v3357 = vld [vmem:[#allocation23 + $0x160] sm:$0xf]
    %v3358 = vld [vmem:[#allocation23 + $0x164] sm:$0xf]
    %v3359 = vld [vmem:[#allocation23 + $0x168] sm:$0xf]
    %v3360 = vld [vmem:[#allocation23 + $0x16c] sm:$0xf]
    %v3361 = vld [vmem:[#allocation23 + $0x170] sm:$0xf]
    %v3362 = vld [vmem:[#allocation23 + $0x174] sm:$0xf]
    %v3363 = vld [vmem:[#allocation23 + $0x178] sm:$0xf]
    %v3364 = vld [vmem:[#allocation23 + $0x17c] sm:$0xf]
    %v3365 = vld [vmem:[#allocation23 + $0x180] sm:$0xf]
    %v3366 = vld [vmem:[#allocation23 + $0x184] sm:$0xf]
    %v3367 = vld [vmem:[#allocation23 + $0x188] sm:$0xf]
    %v3368 = vld [vmem:[#allocation23 + $0x18c] sm:$0xf]
    %v3369 = vld [vmem:[#allocation23 + $0x190] sm:$0xf]
    %v3370 = vld [vmem:[#allocation23 + $0x194] sm:$0xf]
    %v3371 = vld [vmem:[#allocation23 + $0x198] sm:$0xf]
    %v3372 = vld [vmem:[#allocation23 + $0x19c] sm:$0xf]
    %v3373 = vld [vmem:[#allocation23 + $0x1a0] sm:$0xf]
    %v3374 = vld [vmem:[#allocation23 + $0x1a4] sm:$0xf]
    %v3375 = vld [vmem:[#allocation23 + $0x1a8] sm:$0xf]
    %v3376 = vld [vmem:[#allocation23 + $0x1ac] sm:$0xf]
    %v3377 = vld [vmem:[#allocation23 + $0x1b0] sm:$0xf]
    %v3378 = vld [vmem:[#allocation23 + $0x1b4] sm:$0xf]
    %v3379 = vld [vmem:[#allocation23 + $0x1b8] sm:$0xf]
    %v3380 = vld [vmem:[#allocation23 + $0x1bc] sm:$0xf]
    %v3381 = vld [vmem:[#allocation23 + $0x1c0] sm:$0xf]
    %v3382 = vld [vmem:[#allocation23 + $0x1c4] sm:$0xf]
    %v3383 = vld [vmem:[#allocation23 + $0x1c8] sm:$0xf]
    %v3384 = vld [vmem:[#allocation23 + $0x1cc] sm:$0xf]
    %v3385 = vld [vmem:[#allocation23 + $0x1d0] sm:$0xf]
    %v3386 = vld [vmem:[#allocation23 + $0x1d4] sm:$0xf]
    %v3387 = vld [vmem:[#allocation23 + $0x1d8] sm:$0xf]
    %v3388 = vld [vmem:[#allocation23 + $0x1dc] sm:$0xf]
    %v3389 = vld [vmem:[#allocation23 + $0x1e0] sm:$0xf]
    %v3390 = vld [vmem:[#allocation23 + $0x1e4] sm:$0xf]
    %v3391 = vld [vmem:[#allocation23 + $0x1e8] sm:$0xf]
    %v3392 = vld [vmem:[#allocation23 + $0x1ec] sm:$0xf]
    %v3393 = vld [vmem:[#allocation23 + $0x1f0] sm:$0xf]
    %v3394 = vld [vmem:[#allocation23 + $0x1f4] sm:$0xf]
    %v3395 = vld [vmem:[#allocation23 + $0x1f8] sm:$0xf]
    %v3396 = vld [vmem:[#allocation23 + $0x1fc] sm:$0xf]
    %v3397 = vld [vmem:[#allocation25] sm:$0x1]
    %v3399 = vlaneseq
    %v3400 = vshrl.u32 %v3399, 7
    %v3401 = vsub.s32 0, %v3400
    %v3402 = vrot.slane %v3397, %v3401
    %v3532 = vunpack.c.l.b16 %v3269
    %v3533 = vunpack.c.l.b16 %v3270
    %v3534 = vunpack.c.l.b16 %v3271
    %v3535 = vunpack.c.l.b16 %v3272
    %v3536 = vunpack.c.l.b16 %v3273
    %v3537 = vunpack.c.l.b16 %v3274
    %v3538 = vunpack.c.l.b16 %v3275
    %v3539 = vunpack.c.l.b16 %v3276
    %v3540 = vunpack.c.l.b16 %v3277
    %v3541 = vunpack.c.l.b16 %v3278
    %v3542 = vunpack.c.l.b16 %v3279
    %v3543 = vunpack.c.l.b16 %v3280
    %v3544 = vunpack.c.l.b16 %v3281
    %v3545 = vunpack.c.l.b16 %v3282
    %v3546 = vunpack.c.l.b16 %v3283
    %v3547 = vunpack.c.l.b16 %v3284
    %v3548 = vunpack.c.l.b16 %v3285
    %v3549 = vunpack.c.l.b16 %v3286
    %v3550 = vunpack.c.l.b16 %v3287
    %v3551 = vunpack.c.l.b16 %v3288
    %v3552 = vunpack.c.l.b16 %v3289
    %v3553 = vunpack.c.l.b16 %v3290
    %v3554 = vunpack.c.l.b16 %v3291
    %v3555 = vunpack.c.l.b16 %v3292
    %v3556 = vunpack.c.l.b16 %v3293
    %v3557 = vunpack.c.l.b16 %v3294
    %v3558 = vunpack.c.l.b16 %v3295
    %v3559 = vunpack.c.l.b16 %v3296
    %v3560 = vunpack.c.l.b16 %v3297
    %v3561 = vunpack.c.l.b16 %v3298
    %v3562 = vunpack.c.l.b16 %v3299
    %v3563 = vunpack.c.l.b16 %v3300
    %v3564 = vunpack.c.l.b16 %v3301
    %v3565 = vunpack.c.l.b16 %v3302
    %v3566 = vunpack.c.l.b16 %v3303
    %v3567 = vunpack.c.l.b16 %v3304
    %v3568 = vunpack.c.l.b16 %v3305
    %v3569 = vunpack.c.l.b16 %v3306
    %v3570 = vunpack.c.l.b16 %v3307
    %v3571 = vunpack.c.l.b16 %v3308
    %v3572 = vunpack.c.l.b16 %v3309
    %v3573 = vunpack.c.l.b16 %v3310
    %v3574 = vunpack.c.l.b16 %v3311
    %v3575 = vunpack.c.l.b16 %v3312
    %v3576 = vunpack.c.l.b16 %v3313
    %v3577 = vunpack.c.l.b16 %v3314
    %v3578 = vunpack.c.l.b16 %v3315
    %v3579 = vunpack.c.l.b16 %v3316
    %v3580 = vunpack.c.l.b16 %v3317
    %v3581 = vunpack.c.l.b16 %v3318
    %v3582 = vunpack.c.l.b16 %v3319
    %v3583 = vunpack.c.l.b16 %v3320
    %v3584 = vunpack.c.l.b16 %v3321
    %v3585 = vunpack.c.l.b16 %v3322
    %v3586 = vunpack.c.l.b16 %v3323
    %v3587 = vunpack.c.l.b16 %v3324
    %v3588 = vunpack.c.l.b16 %v3325
    %v3589 = vunpack.c.l.b16 %v3326
    %v3590 = vunpack.c.l.b16 %v3327
    %v3591 = vunpack.c.l.b16 %v3328
    %v3592 = vunpack.c.l.b16 %v3329
    %v3593 = vunpack.c.l.b16 %v3330
    %v3594 = vunpack.c.l.b16 %v3331
    %v3595 = vunpack.c.l.b16 %v3332
    %v3596 = vunpack.c.l.b16 %v3333
    %v3597 = vunpack.c.l.b16 %v3334
    %v3598 = vunpack.c.l.b16 %v3335
    %v3599 = vunpack.c.l.b16 %v3336
    %v3600 = vunpack.c.l.b16 %v3337
    %v3601 = vunpack.c.l.b16 %v3338
    %v3602 = vunpack.c.l.b16 %v3339
    %v3603 = vunpack.c.l.b16 %v3340
    %v3604 = vunpack.c.l.b16 %v3341
    %v3605 = vunpack.c.l.b16 %v3342
    %v3606 = vunpack.c.l.b16 %v3343
    %v3607 = vunpack.c.l.b16 %v3344
    %v3608 = vunpack.c.l.b16 %v3345
    %v3609 = vunpack.c.l.b16 %v3346
    %v3610 = vunpack.c.l.b16 %v3347
    %v3611 = vunpack.c.l.b16 %v3348
    %v3612 = vunpack.c.l.b16 %v3349
    %v3613 = vunpack.c.l.b16 %v3350
    %v3614 = vunpack.c.l.b16 %v3351
    %v3615 = vunpack.c.l.b16 %v3352
    %v3616 = vunpack.c.l.b16 %v3353
    %v3617 = vunpack.c.l.b16 %v3354
    %v3618 = vunpack.c.l.b16 %v3355
    %v3619 = vunpack.c.l.b16 %v3356
    %v3620 = vunpack.c.l.b16 %v3357
    %v3621 = vunpack.c.l.b16 %v3358
    %v3622 = vunpack.c.l.b16 %v3359
    %v3623 = vunpack.c.l.b16 %v3360
    %v3624 = vunpack.c.l.b16 %v3361
    %v3625 = vunpack.c.l.b16 %v3362
    %v3626 = vunpack.c.l.b16 %v3363
    %v3627 = vunpack.c.l.b16 %v3364
    %v3628 = vunpack.c.l.b16 %v3365
    %v3629 = vunpack.c.l.b16 %v3366
    %v3630 = vunpack.c.l.b16 %v3367
    %v3631 = vunpack.c.l.b16 %v3368
    %v3632 = vunpack.c.l.b16 %v3369
    %v3633 = vunpack.c.l.b16 %v3370
    %v3634 = vunpack.c.l.b16 %v3371
    %v3635 = vunpack.c.l.b16 %v3372
    %v3636 = vunpack.c.l.b16 %v3373
    %v3637 = vunpack.c.l.b16 %v3374
    %v3638 = vunpack.c.l.b16 %v3375
    %v3639 = vunpack.c.l.b16 %v3376
    %v3640 = vunpack.c.l.b16 %v3377
    %v3641 = vunpack.c.l.b16 %v3378
    %v3642 = vunpack.c.l.b16 %v3379
    %v3643 = vunpack.c.l.b16 %v3380
    %v3644 = vunpack.c.l.b16 %v3381
    %v3645 = vunpack.c.l.b16 %v3382
    %v3646 = vunpack.c.l.b16 %v3383
    %v3647 = vunpack.c.l.b16 %v3384
    %v3648 = vunpack.c.l.b16 %v3385
    %v3649 = vunpack.c.l.b16 %v3386
    %v3650 = vunpack.c.l.b16 %v3387
    %v3651 = vunpack.c.l.b16 %v3388
    %v3652 = vunpack.c.l.b16 %v3389
    %v3653 = vunpack.c.l.b16 %v3390
    %v3654 = vunpack.c.l.b16 %v3391
    %v3655 = vunpack.c.l.b16 %v3392
    %v3656 = vunpack.c.l.b16 %v3393
    %v3657 = vunpack.c.l.b16 %v3394
    %v3658 = vunpack.c.l.b16 %v3395
    %v3659 = vunpack.c.l.b16 %v3396
    %v3660 = vpack.c.b16 %v3533, %v3532
    %v3661 = vpack.c.b16 %v3535, %v3534
    %v3662 = vpack.c.b16 %v3537, %v3536
    %v3663 = vpack.c.b16 %v3539, %v3538
    %v3664 = vpack.c.b16 %v3541, %v3540
    %v3665 = vpack.c.b16 %v3543, %v3542
    %v3666 = vpack.c.b16 %v3545, %v3544
    %v3667 = vpack.c.b16 %v3547, %v3546
    %v3668 = vpack.c.b16 %v3549, %v3548
    %v3669 = vpack.c.b16 %v3551, %v3550
    %v3670 = vpack.c.b16 %v3553, %v3552
    %v3671 = vpack.c.b16 %v3555, %v3554
    %v3672 = vpack.c.b16 %v3557, %v3556
    %v3673 = vpack.c.b16 %v3559, %v3558
    %v3674 = vpack.c.b16 %v3561, %v3560
    %v3675 = vpack.c.b16 %v3563, %v3562
    %v3676 = vpack.c.b16 %v3565, %v3564
    %v3677 = vpack.c.b16 %v3567, %v3566
    %v3678 = vpack.c.b16 %v3569, %v3568
    %v3679 = vpack.c.b16 %v3571, %v3570
    %v3680 = vpack.c.b16 %v3573, %v3572
    %v3681 = vpack.c.b16 %v3575, %v3574
    %v3682 = vpack.c.b16 %v3577, %v3576
    %v3683 = vpack.c.b16 %v3579, %v3578
    %v3684 = vpack.c.b16 %v3581, %v3580
    %v3685 = vpack.c.b16 %v3583, %v3582
    %v3686 = vpack.c.b16 %v3585, %v3584
    %v3687 = vpack.c.b16 %v3587, %v3586
    %v3688 = vpack.c.b16 %v3589, %v3588
    %v3689 = vpack.c.b16 %v3591, %v3590
    %v3690 = vpack.c.b16 %v3593, %v3592
    %v3691 = vpack.c.b16 %v3595, %v3594
    %v3692 = vpack.c.b16 %v3597, %v3596
    %v3693 = vpack.c.b16 %v3599, %v3598
    %v3694 = vpack.c.b16 %v3601, %v3600
    %v3695 = vpack.c.b16 %v3603, %v3602
    %v3696 = vpack.c.b16 %v3605, %v3604
    %v3697 = vpack.c.b16 %v3607, %v3606
    %v3698 = vpack.c.b16 %v3609, %v3608
    %v3699 = vpack.c.b16 %v3611, %v3610
    %v3700 = vpack.c.b16 %v3613, %v3612
    %v3701 = vpack.c.b16 %v3615, %v3614
    %v3702 = vpack.c.b16 %v3617, %v3616
    %v3703 = vpack.c.b16 %v3619, %v3618
    %v3704 = vpack.c.b16 %v3621, %v3620
    %v3705 = vpack.c.b16 %v3623, %v3622
    %v3706 = vpack.c.b16 %v3625, %v3624
    %v3707 = vpack.c.b16 %v3627, %v3626
    %v3708 = vpack.c.b16 %v3629, %v3628
    %v3709 = vpack.c.b16 %v3631, %v3630
    %v3710 = vpack.c.b16 %v3633, %v3632
    %v3711 = vpack.c.b16 %v3635, %v3634
    %v3712 = vpack.c.b16 %v3637, %v3636
    %v3713 = vpack.c.b16 %v3639, %v3638
    %v3714 = vpack.c.b16 %v3641, %v3640
    %v3715 = vpack.c.b16 %v3643, %v3642
    %v3716 = vpack.c.b16 %v3645, %v3644
    %v3717 = vpack.c.b16 %v3647, %v3646
    %v3718 = vpack.c.b16 %v3649, %v3648
    %v3719 = vpack.c.b16 %v3651, %v3650
    %v3720 = vpack.c.b16 %v3653, %v3652
    %v3721 = vpack.c.b16 %v3655, %v3654
    %v3722 = vpack.c.b16 %v3657, %v3656
    %v3723 = vpack.c.b16 %v3659, %v3658
    %3788 = vmatprep.subr.bf16.mxu0 0
    %3789 = vmatpush1.bf16.msra.mxu0 %v3660
    %3790 = vmatprep.subr.bf16.mxu0 0
    %3791 = vmatpush1.bf16.msra.mxu0 %v3661
    %3792 = vmatprep.subr.bf16.mxu0 0
    %3793 = vmatpush1.bf16.msra.mxu0 %v3662
    %3794 = vmatprep.subr.bf16.mxu0 0
    %3795 = vmatpush1.bf16.msra.mxu0 %v3663
    %3796 = vmatprep.subr.bf16.mxu0 0
    %3797 = vmatpush1.bf16.msra.mxu0 %v3664
    %3798 = vmatprep.subr.bf16.mxu0 0
    %3799 = vmatpush1.bf16.msra.mxu0 %v3665
    %3800 = vmatprep.subr.bf16.mxu0 0
    %3801 = vmatpush1.bf16.msra.mxu0 %v3666
    %3802 = vmatprep.subr.bf16.mxu0 0
    %3803 = vmatpush1.bf16.msra.mxu0 %v3667
    %3804 = vmatprep.subr.bf16.mxu0 0
    %3805 = vmatpush1.bf16.msra.mxu0 %v3668
    %3806 = vmatprep.subr.bf16.mxu0 0
    %3807 = vmatpush1.bf16.msra.mxu0 %v3669
    %3808 = vmatprep.subr.bf16.mxu0 0
    %3809 = vmatpush1.bf16.msra.mxu0 %v3670
    %3810 = vmatprep.subr.bf16.mxu0 0
    %3811 = vmatpush1.bf16.msra.mxu0 %v3671
    %3812 = vmatprep.subr.bf16.mxu0 0
    %3813 = vmatpush1.bf16.msra.mxu0 %v3672
    %3814 = vmatprep.subr.bf16.mxu0 0
    %3815 = vmatpush1.bf16.msra.mxu0 %v3673
    %3816 = vmatprep.subr.bf16.mxu0 0
    %3817 = vmatpush1.bf16.msra.mxu0 %v3674
    %3818 = vmatprep.subr.bf16.mxu0 0
    %3819 = vmatpush1.bf16.msra.mxu0 %v3675
    %3820 = vmatprep.mubr.bf16.mxu0 %v3254
    %3821 = vmatmul.mubr.bf16.gmra.mrb[0].mxu0 %v3253
    %v3822 = vpop.f32.mrb[0].mxu0
    %v3823 = vadd.f32 %v3402, %v3822
    %v3824 = vpop.f32.mrb[0].mxu0
    %v3825 = vpop.f32.mrb[0].mxu0
    %v3826 = vadd.f32 %v3402, %v3825
    %v3827 = vpop.f32.mrb[0].mxu0
    %3828 = vmatprep.mubr.bf16.mxu0 %v3262
    %3829 = vmatmul.mubr.bf16.gmra.mrb[0].mxu0 %v3261
    %v3830 = vpop.f32.mrb[0].mxu0
    %v3831 = vadd.f32 %v3402, %v3830
    %v3832 = vpop.f32.mrb[0].mxu0
    %v3833 = vpop.f32.mrb[0].mxu0
    %v3834 = vadd.f32 %v3402, %v3833
    %v3835 = vpop.f32.mrb[0].mxu0
    %3836 = vdwg.mxu0
    %3837 = vmatprep.subr.bf16.mxu0 0
    %3838 = vmatpush1.bf16.msra.mxu0 %v3676
    %3839 = vmatprep.subr.bf16.mxu0 0
    %3840 = vmatpush1.bf16.msra.mxu0 %v3677
    %3841 = vmatprep.subr.bf16.mxu0 0
    %3842 = vmatpush1.bf16.msra.mxu0 %v3678
    %3843 = vmatprep.subr.bf16.mxu0 0
    %3844 = vmatpush1.bf16.msra.mxu0 %v3679
    %3845 = vmatprep.subr.bf16.mxu0 0
    %3846 = vmatpush1.bf16.msra.mxu0 %v3680
    %3847 = vmatprep.subr.bf16.mxu0 0
    %3848 = vmatpush1.bf16.msra.mxu0 %v3681
    %3849 = vmatprep.subr.bf16.mxu0 0
    %3850 = vmatpush1.bf16.msra.mxu0 %v3682
    %3851 = vmatprep.subr.bf16.mxu0 0
    %3852 = vmatpush1.bf16.msra.mxu0 %v3683
    %3853 = vmatprep.subr.bf16.mxu0 0
    %3854 = vmatpush1.bf16.msra.mxu0 %v3684
    %3855 = vmatprep.subr.bf16.mxu0 0
    %3856 = vmatpush1.bf16.msra.mxu0 %v3685
    %3857 = vmatprep.subr.bf16.mxu0 0
    %3858 = vmatpush1.bf16.msra.mxu0 %v3686
    %3859 = vmatprep.subr.bf16.mxu0 0
    %3860 = vmatpush1.bf16.msra.mxu0 %v3687
    %3861 = vmatprep.subr.bf16.mxu0 0
    %3862 = vmatpush1.bf16.msra.mxu0 %v3688
    %3863 = vmatprep.subr.bf16.mxu0 0
    %3864 = vmatpush1.bf16.msra.mxu0 %v3689
    %3865 = vmatprep.subr.bf16.mxu0 0
    %3866 = vmatpush1.bf16.msra.mxu0 %v3690
    %3867 = vmatprep.subr.bf16.mxu0 0
    %3868 = vmatpush1.bf16.msra.mxu0 %v3691
    %3869 = vmatprep.mubr.bf16.mxu0 %v3256
    %3870 = vmatmul.mubr.bf16.gmra.mrb[0].mxu0 %v3255
    %v3871 = vpop.f32.mrb[0].mxu0
    %v3872 = vadd.f32 %v3823, %v3871
    %v3873 = vpop.f32.mrb[0].mxu0
    %v3874 = vpop.f32.mrb[0].mxu0
    %v3875 = vadd.f32 %v3826, %v3874
    %v3876 = vpop.f32.mrb[0].mxu0
    %3877 = vmatprep.mubr.bf16.mxu0 %v3264
    %3878 = vmatmul.mubr.bf16.gmra.mrb[0].mxu0 %v3263
    %v3879 = vpop.f32.mrb[0].mxu0
    %v3880 = vadd.f32 %v3831, %v3879
    %v3881 = vpop.f32.mrb[0].mxu0
    %v3882 = vpop.f32.mrb[0].mxu0
    %v3883 = vadd.f32 %v3834, %v3882
    %v3884 = vpop.f32.mrb[0].mxu0
    %3885 = vdwg.mxu0
    %3886 = vmatprep.subr.bf16.mxu0 0
    %3887 = vmatpush1.bf16.msra.mxu0 %v3692
    %3888 = vmatprep.subr.bf16.mxu0 0
    %3889 = vmatpush1.bf16.msra.mxu0 %v3693
    %3890 = vmatprep.subr.bf16.mxu0 0
    %3891 = vmatpush1.bf16.msra.mxu0 %v3694
    %3892 = vmatprep.subr.bf16.mxu0 0
    %3893 = vmatpush1.bf16.msra.mxu0 %v3695
    %3894 = vmatprep.subr.bf16.mxu0 0
    %3895 = vmatpush1.bf16.msra.mxu0 %v3696
    %3896 = vmatprep.subr.bf16.mxu0 0
    %3897 = vmatpush1.bf16.msra.mxu0 %v3697
    %3898 = vmatprep.subr.bf16.mxu0 0
    %3899 = vmatpush1.bf16.msra.mxu0 %v3698
    %3900 = vmatprep.subr.bf16.mxu0 0
    %3901 = vmatpush1.bf16.msra.mxu0 %v3699
    %3902 = vmatprep.subr.bf16.mxu0 0
    %3903 = vmatpush1.bf16.msra.mxu0 %v3700
    %3904 = vmatprep.subr.bf16.mxu0 0
    %3905 = vmatpush1.bf16.msra.mxu0 %v3701
    %3906 = vmatprep.subr.bf16.mxu0 0
    %3907 = vmatpush1.bf16.msra.mxu0 %v3702
    %3908 = vmatprep.subr.bf16.mxu0 0
    %3909 = vmatpush1.bf16.msra.mxu0 %v3703
    %3910 = vmatprep.subr.bf16.mxu0 0
    %3911 = vmatpush1.bf16.msra.mxu0 %v3704
    %3912 = vmatprep.subr.bf16.mxu0 0
    %3913 = vmatpush1.bf16.msra.mxu0 %v3705
    %3914 = vmatprep.subr.bf16.mxu0 0
    %3915 = vmatpush1.bf16.msra.mxu0 %v3706
    %3916 = vmatprep.subr.bf16.mxu0 0
    %3917 = vmatpush1.bf16.msra.mxu0 %v3707
    %3918 = vmatprep.mubr.bf16.mxu0 %v3258
    %3919 = vmatmul.mubr.bf16.gmra.mrb[0].mxu0 %v3257
    %v3920 = vpop.f32.mrb[0].mxu0
    %v3921 = vadd.f32 %v3872, %v3920
    %v3922 = vpop.f32.mrb[0].mxu0
    %v3923 = vpop.f32.mrb[0].mxu0
    %v3924 = vadd.f32 %v3875, %v3923
    %v3925 = vpop.f32.mrb[0].mxu0
    %3926 = vmatprep.mubr.bf16.mxu0 %v3266
    %3927 = vmatmul.mubr.bf16.gmra.mrb[0].mxu0 %v3265
    %v3928 = vpop.f32.mrb[0].mxu0
    %v3929 = vadd.f32 %v3880, %v3928
    %v3930 = vpop.f32.mrb[0].mxu0
    %v3931 = vpop.f32.mrb[0].mxu0
    %v3932 = vadd.f32 %v3883, %v3931
    %v3933 = vpop.f32.mrb[0].mxu0
    %3934 = vdwg.mxu0
    %3935 = vmatprep.subr.bf16.mxu0 0
    %3936 = vmatpush1.bf16.msra.mxu0 %v3708
    %3937 = vmatprep.subr.bf16.mxu0 0
    %3938 = vmatpush1.bf16.msra.mxu0 %v3709
    %3939 = vmatprep.subr.bf16.mxu0 0
    %3940 = vmatpush1.bf16.msra.mxu0 %v3710
    %3941 = vmatprep.subr.bf16.mxu0 0
    %3942 = vmatpush1.bf16.msra.mxu0 %v3711
    %3943 = vmatprep.subr.bf16.mxu0 0
    %3944 = vmatpush1.bf16.msra.mxu0 %v3712
    %3945 = vmatprep.subr.bf16.mxu0 0
    %3946 = vmatpush1.bf16.msra.mxu0 %v3713
    %3947 = vmatprep.subr.bf16.mxu0 0
    %3948 = vmatpush1.bf16.msra.mxu0 %v3714
    %3949 = vmatprep.subr.bf16.mxu0 0
    %3950 = vmatpush1.bf16.msra.mxu0 %v3715
    %3951 = vmatprep.subr.bf16.mxu0 0
    %3952 = vmatpush1.bf16.msra.mxu0 %v3716
    %3953 = vmatprep.subr.bf16.mxu0 0
    %3954 = vmatpush1.bf16.msra.mxu0 %v3717
    %3955 = vmatprep.subr.bf16.mxu0 0
    %3956 = vmatpush1.bf16.msra.mxu0 %v3718
    %3957 = vmatprep.subr.bf16.mxu0 0
    %3958 = vmatpush1.bf16.msra.mxu0 %v3719
    %3959 = vmatprep.subr.bf16.mxu0 0
    %3960 = vmatpush1.bf16.msra.mxu0 %v3720
    %3961 = vmatprep.subr.bf16.mxu0 0
    %3962 = vmatpush1.bf16.msra.mxu0 %v3721
    %3963 = vmatprep.subr.bf16.mxu0 0
    %3964 = vmatpush1.bf16.msra.mxu0 %v3722
    %3965 = vmatprep.subr.bf16.mxu0 0
    %3966 = vmatpush1.bf16.msra.mxu0 %v3723
    %3967 = vmatprep.mubr.bf16.mxu0 %v3260
    %3968 = vmatmul.mubr.bf16.gmra.mrb[0].mxu0 %v3259
    %v3969 = vpop.f32.mrb[0].mxu0
    %v3970 = vadd.f32 %v3921, %v3969
    %v3971 = vpop.f32.mrb[0].mxu0
    %v3972 = vpop.f32.mrb[0].mxu0
    %v3973 = vadd.f32 %v3924, %v3972
    %v3974 = vpop.f32.mrb[0].mxu0
    %3975 = vmatprep.mubr.bf16.mxu0 %v3268
    %3976 = vmatmul.mubr.bf16.gmra.mrb[0].mxu0 %v3267
    %v3977 = vpop.f32.mrb[0].mxu0
    %v3978 = vadd.f32 %v3929, %v3977
    %v3979 = vpop.f32.mrb[0].mxu0
    %v3980 = vpop.f32.mrb[0].mxu0
    %v3981 = vadd.f32 %v3932, %v3980
    %v3982 = vpop.f32.mrb[0].mxu0
    %3983 = vdwg.mxu0
    %v3984 = vadd.f32 %v1745, %v3970
    %v3985 = vadd.f32 %v1746, %v3973
    %v3986 = vadd.f32 %v1747, %v3978
    %v3987 = vadd.f32 %v1748, %v3981
    %v3988 = vld [vmem:[#allocation26] sm:$0x1]
    %v3989 = vld [vmem:[#allocation28] sm:$0x1]
    %3990 = vadd.xlane.f32.xlu0 %v3984
    %v3991 = vpop.xlane.xlu0 %3990
    %3992 = vadd.xlane.f32.xlu0 %v3985
    %v3993 = vpop.xlane.xlu0 %3992
    %3994 = vadd.xlane.f32.xlu0 %v3986
    %v3995 = vpop.xlane.xlu0 %3994
    %3996 = vadd.xlane.f32.xlu0 %v3987
    %v3997 = vpop.xlane.xlu0 %3996
    %v3998 = vmul.f32 %v3991, %v1692
    %v3999 = vmul.f32 %v3993, %v1692
    %v4000 = vmul.f32 %v3995, %v1692
    %v4001 = vmul.f32 %v3997, %v1692
    %v4002 = vsub.f32 %v3984, %v3998
    %v4003 = vsub.f32 %v3985, %v3999
    %v4004 = vsub.f32 %v3986, %v4000
    %v4005 = vsub.f32 %v3987, %v4001
    %v4006 = vmul.f32 %v4002, %v4002
    %v4007 = vmul.f32 %v4003, %v4003
    %v4008 = vmul.f32 %v4004, %v4004
    %v4009 = vmul.f32 %v4005, %v4005
    %4010 = vadd.xlane.f32.xlu0 %v4006
    %v4011 = vpop.xlane.xlu0 %4010
    %4012 = vadd.xlane.f32.xlu0 %v4007
    %v4013 = vpop.xlane.xlu0 %4012
    %4014 = vadd.xlane.f32.xlu0 %v4008
    %v4015 = vpop.xlane.xlu0 %4014
    %4016 = vadd.xlane.f32.xlu0 %v4009
    %v4017 = vpop.xlane.xlu0 %4016
    %v4018 = vmul.f32 %v4011, %v1692
    %v4019 = vmul.f32 %v4013, %v1692
    %v4020 = vmul.f32 %v4015, %v1692
    %v4021 = vmul.f32 %v4017, %v1692
    %v4022 = vadd.f32 %v4018, 1e-05
    %v4023 = vadd.f32 %v4019, 1e-05
    %v4024 = vadd.f32 %v4020, 1e-05
    %v4025 = vadd.f32 %v4021, 1e-05
    %v4026 = vrsqrt.pop %v4022
    %v4027 = vrsqrt.pop %v4023
    %v4028 = vrsqrt.pop %v4024
    %v4029 = vrsqrt.pop %v4025
    %v4030 = vmul.f32 %v4002, %v4026
    %v4031 = vmul.f32 %v4003, %v4027
    %v4032 = vmul.f32 %v4004, %v4028
    %v4033 = vmul.f32 %v4005, %v4029
    %v4035 = vlaneseq
    %v4036 = vshrl.u32 %v4035, 7
    %v4037 = vsub.s32 0, %v4036
    %v4038 = vrot.slane %v3988, %v4037
    %v4040 = vmul.f32 %v4030, %v4038
    %v4041 = vmul.f32 %v4031, %v4038
    %v4042 = vmul.f32 %v4032, %v4038
    %v4043 = vmul.f32 %v4033, %v4038
    %v4045 = vlaneseq
    %v4046 = vshrl.u32 %v4045, 7
    %v4047 = vsub.s32 0, %v4046
    %v4048 = vrot.slane %v3989, %v4047
    %v4050 = vadd.f32 %v4040, %v4048
    %v4051 = vadd.f32 %v4041, %v4048
    %v4052 = vadd.f32 %v4042, %v4048
    %v4053 = vadd.f32 %v4043, %v4048
    %v4054 = vpack.c.bf16 %v4051, %v4050
    %v4055 = vpack.c.bf16 %v4053, %v4052
    %v4058 = vunpack.c.l.b16 %v4054
    %v4059 = vunpack.c.h.b16 %v4054
    %v4060 = vunpack.c.l.b16 %v4055
    %v4061 = vunpack.c.h.b16 %v4055
    %v4062 = vpack.c.b16 %v4058, %v4058
    %v4063 = vpack.c.b16 %v4059, %v4059
    %v4064 = vpack.c.b16 %v4060, %v4060
    %v4065 = vpack.c.b16 %v4061, %v4061
    %4070 = vst [vmem:[#allocation29] sm:$0xf] %v4062
    %4071 = vst [vmem:[#allocation29 + $0x4] sm:$0xf] %v4063
    %4072 = vst [vmem:[#allocation29 + $0x8] sm:$0xf] %v4064
    %4073 = vst [vmem:[#allocation29 + $0xc] sm:$0xf] %v4065
    // Predicated region
    $region138: #{bert_mlm_forward.6} parent=1 // pred_check
      _
    $region139: #{bert_mlm_forward.6} parent=1 // pred_check_branch
      %4075 = sbr.rel (0) target = $region141
    $region140: #{bert_mlm_forward.6} parent=1 // pred_region
      %s4077 = ssub.s32 256, 256
      %4078 = vsyncadd [#allocation4], %s4077
      %s4079 = sshll.u32 [#allocation29], 4
      %s4080 = int_to_ptr.vmem [resolvable:$true] %s4079
      %4085 = dma.vmem_to_hbm [thread:$0]  %s4080, 256, %s17, [#allocation4], 64, 64, 4
    $region141: #{bert_mlm_forward.6} parent=1 // pred_fallthru
      _
    // Predicated region
    $region142: #{bert_mlm_forward.6} parent=1 // pred_check
      _
    $region143: #{bert_mlm_forward.6} parent=1 // pred_check_branch
      %4087 = sbr.rel (0) target = $region145
    $region144: #{bert_mlm_forward.6} parent=1 // pred_region
      %4088 = dma.done [#allocation4], 256
    $region145: #{bert_mlm_forward.6} parent=1 // pred_fallthru
      _
    %4089 = vsyncpa [#allocation3], 1
    %4090 = vsyncpa [#allocation6], 1
    %4091 = vsyncpa [#allocation9], 1
    %4092 = vsyncpa [#allocation12], 1
    %4093 = vsyncpa [#allocation15], 1
    %4094 = vsyncpa [#allocation18], 1
    %4095 = vsyncpa [#allocation21], 1
    %4096 = vsyncpa [#allocation24], 1
    %4097 = vsyncpa [#allocation27], 1
    %4098 = vsyncpa [#allocation4], 1

</llo_original>
